<compile_context>
chip_gen: v7x
topology: tpu7x:2x2x1
jax: 0.10.0
libtpu: 0.0.40
codegen_flags: <defaults>
</compile_context>

<pallas_src>
import numpy as np
import jax
import jax.numpy as jnp
from jax import lax
from jax.experimental import pallas as pl
from jax.experimental.pallas import tpu as pltpu

VMEM = pl.BlockSpec(memory_space=pltpu.MemorySpace.VMEM)

BN_EPS = 1e-5

KV_FILTER = np.array(
    [[-1.0, 2.0, -2.0, 2.0, -1.0],
     [2.0, -6.0, 8.0, -6.0, 2.0],
     [-2.0, 8.0, -12.0, 8.0, -2.0],
     [2.0, -6.0, 8.0, -6.0, 2.0],
     [-1.0, 2.0, -2.0, 2.0, -1.0]], dtype=np.float32) / 12.0


# ---------------------------------------------------------------------------
# Host-side, data-independent parameter repacking.
# ---------------------------------------------------------------------------
def _banded_conv(w_taps, W):
    """5x5 'same' conv as 5 lane-dim matmuls.

    Returns B: (5, W*Cin, W*Cout) with
      B[dy, u*Cin+ci, w*Cout+co] = Wt[dy, u-w+2, ci, co]   (0 elsewhere),
    so that, with the activation laid out as rows (n*H+h, w*Cin+ci) and two
    zero rows appended top/bottom (height padding),
      conv[(n,h), w*Cout+co] = sum_dy  rows(h+dy) @ B[dy].
    Width zero-padding is implicit in the band structure.
    """
    k = 5
    Cin, Cout = int(w_taps.shape[1]), int(w_taps.shape[2])
    sel = np.zeros((k, W, W), np.float32)
    for dx in range(k):
        for w in range(W):
            u = w + dx - 2
            if 0 <= u < W:
                sel[dx, u, w] = 1.0
    wt = jnp.asarray(w_taps).reshape(k, k, Cin, Cout)          # (dy, dx, ci, co)
    b = jnp.einsum("xuw,yxio->yuiwo", jnp.asarray(sel), wt)    # (dy,u,ci,w,co)
    return b.reshape(k, W * Cin, W * Cout)


def _kron_1x1(w, W):
    """1x1 conv (Cin,Cout) as a block-diagonal lane matmul (W*Cin, W*Cout)."""
    return jnp.kron(jnp.eye(W, dtype=jnp.float32), w)


def _pool_mats(N, H, W, C):
    """AvgPool2d(k=5, s=2, p=2, count_include_pad=True) as two matmuls."""
    Ho, Wo = (H - 1) // 2 + 1, (W - 1) // 2 + 1
    Rh = np.zeros((Ho, H), np.float32)
    for i in range(Ho):
        for dy in range(5):
            h = 2 * i - 2 + dy
            if 0 <= h < H:
                Rh[i, h] = 1.0
    Rw = np.zeros((W, Wo), np.float32)
    for j in range(Wo):
        for dx in range(5):
            w = 2 * j - 2 + dx
            if 0 <= w < W:
                Rw[w, j] = 1.0
    rhn = np.kron(np.eye(N, dtype=np.float32), Rh)              # (N*Ho, N*H)
    pwc = np.kron(Rw, np.eye(C, dtype=np.float32)) / 25.0       # (W*C, Wo*C)
    return jnp.asarray(rhn), jnp.asarray(pwc)


def _chan_mats(W, C):
    """Per-channel reduce (W*C, C) and broadcast (C, W*C) matrices for the
    lane-dense (rows, W*C) layout."""
    er = np.kron(np.ones((W, 1), np.float32), np.eye(C, dtype=np.float32))
    return jnp.asarray(er), jnp.asarray(er.T.copy())


# ---------------------------------------------------------------------------
# Full XuNet forward as one fused Pallas kernel.
# ---------------------------------------------------------------------------
def xunet_forward(x_nchw, p):
    N, _, H, W = x_nchw.shape
    assert H == W, "square inputs expected"
    x = x_nchw[:, 0, :, :]                                      # (N, H, W)

    # spatial size at the input of each group
    s1 = H
    s2 = (s1 - 1) // 2 + 1
    s3 = (s2 - 1) // 2 + 1
    s4 = (s3 - 1) // 2 + 1
    s5 = (s4 - 1) // 2 + 1

    # ---- weight / constant repacking (independent of the image data) ----
    bh = _banded_conv(jnp.asarray(KV_FILTER).reshape(25, 1, 1), s1)   # (5, s1, s1)
    b1 = _banded_conv(p["g1_w"], s1)                                  # (5, s1, s1*8)
    b2 = _banded_conv(p["g2_w"], s2)                                  # (5, s2*8, s2*16)
    b3 = _kron_1x1(p["g3_w"][0], s3)                                  # (s3*16, s3*32)
    b4 = _kron_1x1(p["g4_w"][0], s4)                                  # (s4*32, s4*64)
    b5 = _kron_1x1(p["g5_w"][0], s5)                                  # (s5*64, s5*128)

    gb = [jnp.concatenate([p[f"g{i}_gamma"], p[f"g{i}_beta"]], axis=0)
          for i in range(1, 6)]                                       # (2, C) each

    er1, ee1 = _chan_mats(s1, 8)
    er2, ee2 = _chan_mats(s2, 16)
    er3, ee3 = _chan_mats(s3, 32)
    er4, ee4 = _chan_mats(s4, 64)
    er5, ee5 = _chan_mats(s5, 128)

    rhn1, pw1 = _pool_mats(N, s1, s1, 8)
    rhn2, pw2 = _pool_mats(N, s2, s2, 16)
    rhn3, pw3 = _pool_mats(N, s3, s3, 32)
    rhn4, pw4 = _pool_mats(N, s4, s4, 64)
    gr5 = jnp.asarray(np.kron(np.eye(N, dtype=np.float32),
                              np.ones((1, s5), np.float32)) / float(s5 * s5))

    def kernel(x_ref, bh_ref,
               b1_ref, gb1_ref, er1_ref, ee1_ref, rhn1_ref, pw1_ref,
               b2_ref, gb2_ref, er2_ref, ee2_ref, rhn2_ref, pw2_ref,
               b3_ref, gb3_ref, er3_ref, ee3_ref, rhn3_ref, pw3_ref,
               b4_ref, gb4_ref, er4_ref, ee4_ref, rhn4_ref, pw4_ref,
               b5_ref, gb5_ref, er5_ref, ee5_ref, gr5_ref,
               fcw_ref, fcb_ref,
               out_ref,
               pad_a, pad_b):

        def conv5(pad_ref, b_ref, rows, lanes_in, lanes_out, h):
            acc = jnp.zeros((rows, lanes_out), jnp.float32)
            for dy in range(5):
                r = pad_ref[:, dy:dy + h, :].reshape(rows, lanes_in)
                acc = acc + jnp.dot(r, b_ref[dy],
                                    preferred_element_type=jnp.float32)
            return acc

        def bn_act(z, gb_ref, er_ref, ee_ref, count, use_abs, act):
            # one-pass batch stats (training-mode BN, biased variance)
            cs = jnp.sum(z, axis=0, keepdims=True)
            css = jnp.sum(z * z, axis=0, keepdims=True)
            inv_n = 1.0 / count
            mean = jnp.dot(cs, er_ref[...],
                           preferred_element_type=jnp.float32) * inv_n
            mean_sq = jnp.dot(css, er_ref[...],
                              preferred_element_type=jnp.float32) * inv_n
            var = mean_sq - mean * mean
            scale = gb_ref[0:1, :] * lax.rsqrt(var + BN_EPS)
            shift = gb_ref[1:2, :] - mean * scale
            y = (z * jnp.dot(scale, ee_ref[...],
                             preferred_element_type=jnp.float32)
                 + jnp.dot(shift, ee_ref[...],
                           preferred_element_type=jnp.float32))
            if use_abs:
                y = jnp.abs(y)
            return jnp.tanh(y) if act == "tanh" else jnp.maximum(y, 0.0)

        def pool(y, rhn_ref, pw_ref):
            t = jnp.dot(rhn_ref[...], y, preferred_element_type=jnp.float32)
            return jnp.dot(t, pw_ref[...], preferred_element_type=jnp.float32)

        # ---- HPF: fixed 5x5 KV filter, zero 'same' padding ----
        pad_a[...] = jnp.zeros_like(pad_a)
        pad_a[:, 2:2 + s1, :] = x_ref[...]
        y0 = conv5(pad_a, bh_ref, N * s1, s1, s1, s1)            # (N*s1, s1)

        # ---- group 1: 5x5 conv (1->8) + BN + abs + tanh + avgpool ----
        pad_a[:, 2:2 + s1, :] = y0.reshape(N, s1, s1)            # ring stays zero
        z1 = conv5(pad_a, b1_ref, N * s1, s1, s1 * 8, s1)        # (N*s1, s1*8)
        y1 = bn_act(z1, gb1_ref, er1_ref, ee1_ref,
                    float(N * s1 * s1), True, "tanh")
        p1 = pool(y1, rhn1_ref, pw1_ref)                         # (N*s2, s2*8)

        # ---- group 2: 5x5 conv (8->16) + BN + tanh + avgpool ----
        pad_b[...] = jnp.zeros_like(pad_b)
        pad_b[:, 2:2 + s2, :] = p1.reshape(N, s2, s2 * 8)
        z2 = conv5(pad_b, b2_ref, N * s2, s2 * 8, s2 * 16, s2)   # (N*s2, s2*16)
        y2 = bn_act(z2, gb2_ref, er2_ref, ee2_ref,
                    float(N * s2 * s2), False, "tanh")
        p2 = pool(y2, rhn2_ref, pw2_ref)                         # (N*s3, s3*16)

        # ---- group 3: 1x1 conv (16->32) + BN + relu + avgpool ----
        z3 = jnp.dot(p2, b3_ref[...], preferred_element_type=jnp.float32)
        y3 = bn_act(z3, gb3_ref, er3_ref, ee3_ref,
                    float(N * s3 * s3), False, "relu")
        p3 = pool(y3, rhn3_ref, pw3_ref)                         # (N*s4, s4*32)

        # ---- group 4: 1x1 conv (32->64) + BN + relu + avgpool ----
        z4 = jnp.dot(p3, b4_ref[...], preferred_element_type=jnp.float32)
        y4 = bn_act(z4, gb4_ref, er4_ref, ee4_ref,
                    float(N * s4 * s4), False, "relu")
        p4 = pool(y4, rhn4_ref, pw4_ref)                         # (N*s5, s5*64)

        # ---- group 5: 1x1 conv (64->128) + BN + relu + global avgpool ----
        z5 = jnp.dot(p4, b5_ref[...], preferred_element_type=jnp.float32)
        y5 = bn_act(z5, gb5_ref, er5_ref, ee5_ref,
                    float(N * s5 * s5), False, "relu")
        g = jnp.dot(jnp.dot(gr5_ref[...], y5,
                            preferred_element_type=jnp.float32),
                    er5_ref[...], preferred_element_type=jnp.float32)  # (N, 128)

        # ---- fully connected head ----
        out_ref[...] = (jnp.dot(g, fcw_ref[...],
                                preferred_element_type=jnp.float32)
                        + fcb_ref[...])

    return pl.pallas_call(
        kernel,
        out_shape=jax.ShapeDtypeStruct((N, 2), jnp.float32),
        in_specs=[VMEM] * 33,
        out_specs=VMEM,
        scratch_shapes=[
            pltpu.VMEM((N, s1 + 4, s1), jnp.float32),        # row-padded HPF/g1 input
            pltpu.VMEM((N, s2 + 4, s2 * 8), jnp.float32),    # row-padded g2 input
        ],
    )(x, bh,
      b1, gb[0], er1, ee1, rhn1, pw1,
      b2, gb[1], er2, ee2, rhn2, pw2,
      b3, gb[2], er3, ee3, rhn3, pw3,
      b4, gb[3], er4, ee4, rhn4, pw4,
      b5, gb[4], er5, ee5, gr5,
      p["fc_w"], p["fc_b"])


# ---------------------------------------------------------------------------
# Pure-JAX reference (numerical validation of the Pallas path).
# ---------------------------------------------------------------------------
def _ref_group(x, w_taps, gamma, beta, *, k, use_abs, act, global_pool):
    Cin, Cout = x.shape[-1], w_taps.shape[-1]
    w = w_taps.reshape(k, k, Cin, Cout)
    y = lax.conv_general_dilated(x, w, (1, 1), "SAME",
                                 dimension_numbers=("NHWC", "HWIO", "NHWC"))
    mean = jnp.mean(y, axis=(0, 1, 2), keepdims=True)
    var = jnp.mean((y - mean) ** 2, axis=(0, 1, 2), keepdims=True)
    y = (y - mean) * lax.rsqrt(var + BN_EPS)
    y = y * gamma.reshape(1, 1, 1, -1) + beta.reshape(1, 1, 1, -1)
    if use_abs:
        y = jnp.abs(y)
    y = jnp.tanh(y) if act == "tanh" else jnp.maximum(y, 0.0)
    if global_pool:
        return jnp.mean(y, axis=(1, 2))
    s = lax.reduce_window(y, jnp.float32(0), lax.add, (1, 5, 5, 1),
                          (1, 2, 2, 1), ((0, 0), (2, 2), (2, 2), (0, 0)))
    return s / 25.0


def ref_forward(x_nchw, p):
    x = jnp.transpose(x_nchw, (0, 2, 3, 1))
    kv = jnp.asarray(KV_FILTER).reshape(5, 5, 1, 1)
    x = lax.conv_general_dilated(x, kv, (1, 1), "SAME",
                                 dimension_numbers=("NHWC", "HWIO", "NHWC"))
    x = _ref_group(x, p["g1_w"], p["g1_gamma"], p["g1_beta"],
                   k=5, use_abs=True, act="tanh", global_pool=False)
    x = _ref_group(x, p["g2_w"], p["g2_gamma"], p["g2_beta"],
                   k=5, use_abs=False, act="tanh", global_pool=False)
    x = _ref_group(x, p["g3_w"], p["g3_gamma"], p["g3_beta"],
                   k=1, use_abs=False, act="relu", global_pool=False)
    x = _ref_group(x, p["g4_w"], p["g4_gamma"], p["g4_beta"],
                   k=1, use_abs=False, act="relu", global_pool=False)
    x = _ref_group(x, p["g5_w"], p["g5_gamma"], p["g5_beta"],
                   k=1, use_abs=False, act="relu", global_pool=True)
    return x @ p["fc_w"] + p["fc_b"]


# ---------------------------------------------------------------------------
# Deterministic synthetic parameters (shapes follow XuNet.__init__).
# ---------------------------------------------------------------------------
def init_params(key):
    ks = jax.random.split(key, 7)

    def conv_w(k, kk, cin, cout):
        fan_in = cin * kk * kk
        return jax.random.normal(k, (kk * kk, cin, cout), jnp.float32) / np.sqrt(fan_in)

    p = {
        "g1_w": conv_w(ks[0], 5, 1, 8),
        "g2_w": conv_w(ks[1], 5, 8, 16),
        "g3_w": conv_w(ks[2], 1, 16, 32),
        "g4_w": conv_w(ks[3], 1, 32, 64),
        "g5_w": conv_w(ks[4], 1, 64, 128),
        "fc_w": jax.random.normal(ks[5], (128, 2), jnp.float32) / np.sqrt(128.0),
        "fc_b": jax.random.normal(ks[6], (1, 2), jnp.float32) * 0.01,
    }
    for i, c in zip(range(1, 6), (8, 16, 32, 64, 128)):
        p[f"g{i}_gamma"] = jnp.ones((1, c), jnp.float32)   # nn.BatchNorm2d defaults
        p[f"g{i}_beta"] = jnp.zeros((1, c), jnp.float32)
    return p


if __name__ == "__main__":
    key = jax.random.PRNGKey(0)
    kx, kp = jax.random.split(key)
    # PyTorch NCHW grayscale input: (batch=2, channels=1, 32, 32)
    x = jax.random.normal(kx, (2, 1, 32, 32), jnp.float32)
    params = init_params(kp)

    fwd = jax.jit(xunet_forward)
    out = jax.block_until_ready(fwd(x, params))
    assert out.shape == (2, 2)

    ref = ref_forward(x, params)
    np.testing.assert_allclose(np.asarray(out), np.asarray(ref),
                               rtol=2e-3, atol=2e-3)
    print("KERNEL_OK")
</pallas_src>

<mosaic_0001>
module attributes {stable_mosaic.version = 11 : i64} {
  func.func @kernel(%arg0: memref<2x32x32xf32, #tpu.memory_space<vmem>>, %arg1: memref<5x32x32xf32, #tpu.memory_space<vmem>>, %arg2: memref<5x32x256xf32, #tpu.memory_space<vmem>>, %arg3: memref<2x8xf32, #tpu.memory_space<vmem>>, %arg4: memref<256x8xf32, #tpu.memory_space<vmem>>, %arg5: memref<8x256xf32, #tpu.memory_space<vmem>>, %arg6: memref<32x64xf32, #tpu.memory_space<vmem>>, %arg7: memref<256x128xf32, #tpu.memory_space<vmem>>, %arg8: memref<5x128x256xf32, #tpu.memory_space<vmem>>, %arg9: memref<2x16xf32, #tpu.memory_space<vmem>>, %arg10: memref<256x16xf32, #tpu.memory_space<vmem>>, %arg11: memref<16x256xf32, #tpu.memory_space<vmem>>, %arg12: memref<16x32xf32, #tpu.memory_space<vmem>>, %arg13: memref<256x128xf32, #tpu.memory_space<vmem>>, %arg14: memref<128x256xf32, #tpu.memory_space<vmem>>, %arg15: memref<2x32xf32, #tpu.memory_space<vmem>>, %arg16: memref<256x32xf32, #tpu.memory_space<vmem>>, %arg17: memref<32x256xf32, #tpu.memory_space<vmem>>, %arg18: memref<8x16xf32, #tpu.memory_space<vmem>>, %arg19: memref<256x128xf32, #tpu.memory_space<vmem>>, %arg20: memref<128x256xf32, #tpu.memory_space<vmem>>, %arg21: memref<2x64xf32, #tpu.memory_space<vmem>>, %arg22: memref<256x64xf32, #tpu.memory_space<vmem>>, %arg23: memref<64x256xf32, #tpu.memory_space<vmem>>, %arg24: memref<4x8xf32, #tpu.memory_space<vmem>>, %arg25: memref<256x128xf32, #tpu.memory_space<vmem>>, %arg26: memref<128x256xf32, #tpu.memory_space<vmem>>, %arg27: memref<2x128xf32, #tpu.memory_space<vmem>>, %arg28: memref<256x128xf32, #tpu.memory_space<vmem>>, %arg29: memref<128x256xf32, #tpu.memory_space<vmem>>, %arg30: memref<2x4xf32, #tpu.memory_space<vmem>>, %arg31: memref<128x2xf32, #tpu.memory_space<vmem>>, %arg32: memref<1x2xf32, #tpu.memory_space<vmem>>, %arg33: memref<2x2xf32, #tpu.memory_space<vmem>>, %arg34: memref<2x36x32xf32, #tpu.memory_space<vmem>>, %arg35: memref<2x20x128xf32, #tpu.memory_space<vmem>>) attributes {dimension_semantics = [], scalar_prefetch = 0 : i64, scratch_operands = 2 : i64, tpu.core_type = #tpu.core_type<tc>} {
    %cst = arith.constant 0.000000e+00 : f32
    %0 = vector.broadcast %cst : f32 to vector<2x36x32xf32>
    %c0 = arith.constant 0 : index
    %c0_0 = arith.constant 0 : index
    %c0_1 = arith.constant 0 : index
    %1 = vector.load %arg34[%c0, %c0_0, %c0_1] : memref<2x36x32xf32, #tpu.memory_space<vmem>>, vector<2x36x32xf32>
    tpu.vector_store %arg34[%c0, %c0_0, %c0_1], %0 {strides = array<i32>} : memref<2x36x32xf32, #tpu.memory_space<vmem>>, vector<2x36x32xf32>,
    %c0_2 = arith.constant 0 : index
    %c0_3 = arith.constant 0 : index
    %c0_4 = arith.constant 0 : index
    %2 = vector.load %arg0[%c0_2, %c0_3, %c0_4] : memref<2x32x32xf32, #tpu.memory_space<vmem>>, vector<2x32x32xf32>
    %c0_5 = arith.constant 0 : index
    %c2 = arith.constant 2 : index
    %c0_6 = arith.constant 0 : index
    %3 = vector.load %arg34[%c0_5, %c2, %c0_6] : memref<2x36x32xf32, #tpu.memory_space<vmem>>, vector<2x32x32xf32>
    tpu.vector_store %arg34[%c0_5, %c2, %c0_6], %2 {strides = array<i32>} : memref<2x36x32xf32, #tpu.memory_space<vmem>>, vector<2x32x32xf32>,
    %cst_7 = arith.constant 0.000000e+00 : f32
    %4 = vector.broadcast %cst_7 : f32 to vector<64x32xf32>
    %c0_8 = arith.constant 0 : index
    %c0_9 = arith.constant 0 : index
    %c0_10 = arith.constant 0 : index
    %5 = vector.load %arg34[%c0_8, %c0_9, %c0_10] : memref<2x36x32xf32, #tpu.memory_space<vmem>>, vector<2x32x32xf32>
    %6 = vector.shape_cast %5 : vector<2x32x32xf32> to vector<64x32xf32>
    %c0_11 = arith.constant 0 : index
    %c0_12 = arith.constant 0 : index
    %c0_13 = arith.constant 0 : index
    %7 = vector.load %arg1[%c0_11, %c0_12, %c0_13] : memref<5x32x32xf32, #tpu.memory_space<vmem>>, vector<1x32x32xf32>
    %8 = vector.shape_cast %7 : vector<1x32x32xf32> to vector<32x32xf32>
    %cst_14 = arith.constant dense<0.000000e+00> : vector<64x32xf32>
    %9 = tpu.matmul %6, %8, %cst_14 {dimension_numbers = #tpu.dot_dimension_numbers<[1], [0], [0], [1], [0, 0, 1, 1], [], []>} : vector<64x32xf32>, vector<32x32xf32>, vector<64x32xf32> -> vector<64x32xf32>
    %10 = arith.addf %4, %9 : vector<64x32xf32>
    %c0_15 = arith.constant 0 : index
    %c1 = arith.constant 1 : index
    %c0_16 = arith.constant 0 : index
    %11 = vector.load %arg34[%c0_15, %c1, %c0_16] : memref<2x36x32xf32, #tpu.memory_space<vmem>>, vector<2x32x32xf32>
    %12 = vector.shape_cast %11 : vector<2x32x32xf32> to vector<64x32xf32>
    %c1_17 = arith.constant 1 : index
    %c0_18 = arith.constant 0 : index
    %c0_19 = arith.constant 0 : index
    %13 = vector.load %arg1[%c1_17, %c0_18, %c0_19] : memref<5x32x32xf32, #tpu.memory_space<vmem>>, vector<1x32x32xf32>
    %14 = vector.shape_cast %13 : vector<1x32x32xf32> to vector<32x32xf32>
    %cst_20 = arith.constant dense<0.000000e+00> : vector<64x32xf32>
    %15 = tpu.matmul %12, %14, %cst_20 {dimension_numbers = #tpu.dot_dimension_numbers<[1], [0], [0], [1], [0, 0, 1, 1], [], []>} : vector<64x32xf32>, vector<32x32xf32>, vector<64x32xf32> -> vector<64x32xf32>
    %16 = arith.addf %10, %15 : vector<64x32xf32>
    %c0_21 = arith.constant 0 : index
    %c2_22 = arith.constant 2 : index
    %c0_23 = arith.constant 0 : index
    %17 = vector.load %arg34[%c0_21, %c2_22, %c0_23] : memref<2x36x32xf32, #tpu.memory_space<vmem>>, vector<2x32x32xf32>
    %18 = vector.shape_cast %17 : vector<2x32x32xf32> to vector<64x32xf32>
    %c2_24 = arith.constant 2 : index
    %c0_25 = arith.constant 0 : index
    %c0_26 = arith.constant 0 : index
    %19 = vector.load %arg1[%c2_24, %c0_25, %c0_26] : memref<5x32x32xf32, #tpu.memory_space<vmem>>, vector<1x32x32xf32>
    %20 = vector.shape_cast %19 : vector<1x32x32xf32> to vector<32x32xf32>
    %cst_27 = arith.constant dense<0.000000e+00> : vector<64x32xf32>
    %21 = tpu.matmul %18, %20, %cst_27 {dimension_numbers = #tpu.dot_dimension_numbers<[1], [0], [0], [1], [0, 0, 1, 1], [], []>} : vector<64x32xf32>, vector<32x32xf32>, vector<64x32xf32> -> vector<64x32xf32>
    %22 = arith.addf %16, %21 : vector<64x32xf32>
    %c0_28 = arith.constant 0 : index
    %c3 = arith.constant 3 : index
    %c0_29 = arith.constant 0 : index
    %23 = vector.load %arg34[%c0_28, %c3, %c0_29] : memref<2x36x32xf32, #tpu.memory_space<vmem>>, vector<2x32x32xf32>
    %24 = vector.shape_cast %23 : vector<2x32x32xf32> to vector<64x32xf32>
    %c3_30 = arith.constant 3 : index
    %c0_31 = arith.constant 0 : index
    %c0_32 = arith.constant 0 : index
    %25 = vector.load %arg1[%c3_30, %c0_31, %c0_32] : memref<5x32x32xf32, #tpu.memory_space<vmem>>, vector<1x32x32xf32>
    %26 = vector.shape_cast %25 : vector<1x32x32xf32> to vector<32x32xf32>
    %cst_33 = arith.constant dense<0.000000e+00> : vector<64x32xf32>
    %27 = tpu.matmul %24, %26, %cst_33 {dimension_numbers = #tpu.dot_dimension_numbers<[1], [0], [0], [1], [0, 0, 1, 1], [], []>} : vector<64x32xf32>, vector<32x32xf32>, vector<64x32xf32> -> vector<64x32xf32>
    %28 = arith.addf %22, %27 : vector<64x32xf32>
    %c0_34 = arith.constant 0 : index
    %c4 = arith.constant 4 : index
    %c0_35 = arith.constant 0 : index
    %29 = vector.load %arg34[%c0_34, %c4, %c0_35] : memref<2x36x32xf32, #tpu.memory_space<vmem>>, vector<2x32x32xf32>
    %30 = vector.shape_cast %29 : vector<2x32x32xf32> to vector<64x32xf32>
    %c4_36 = arith.constant 4 : index
    %c0_37 = arith.constant 0 : index
    %c0_38 = arith.constant 0 : index
    %31 = vector.load %arg1[%c4_36, %c0_37, %c0_38] : memref<5x32x32xf32, #tpu.memory_space<vmem>>, vector<1x32x32xf32>
    %32 = vector.shape_cast %31 : vector<1x32x32xf32> to vector<32x32xf32>
    %cst_39 = arith.constant dense<0.000000e+00> : vector<64x32xf32>
    %33 = tpu.matmul %30, %32, %cst_39 {dimension_numbers = #tpu.dot_dimension_numbers<[1], [0], [0], [1], [0, 0, 1, 1], [], []>} : vector<64x32xf32>, vector<32x32xf32>, vector<64x32xf32> -> vector<64x32xf32>
    %34 = arith.addf %28, %33 : vector<64x32xf32>
    %35 = vector.shape_cast %34 : vector<64x32xf32> to vector<2x32x32xf32>
    %c0_40 = arith.constant 0 : index
    %c2_41 = arith.constant 2 : index
    %c0_42 = arith.constant 0 : index
    %36 = vector.load %arg34[%c0_40, %c2_41, %c0_42] : memref<2x36x32xf32, #tpu.memory_space<vmem>>, vector<2x32x32xf32>
    tpu.vector_store %arg34[%c0_40, %c2_41, %c0_42], %35 {strides = array<i32>} : memref<2x36x32xf32, #tpu.memory_space<vmem>>, vector<2x32x32xf32>,
    %cst_43 = arith.constant 0.000000e+00 : f32
    %37 = vector.broadcast %cst_43 : f32 to vector<64x256xf32>
    %c0_44 = arith.constant 0 : index
    %c0_45 = arith.constant 0 : index
    %c0_46 = arith.constant 0 : index
    %38 = vector.load %arg34[%c0_44, %c0_45, %c0_46] : memref<2x36x32xf32, #tpu.memory_space<vmem>>, vector<2x32x32xf32>
    %39 = vector.shape_cast %38 : vector<2x32x32xf32> to vector<64x32xf32>
    %c0_47 = arith.constant 0 : index
    %c0_48 = arith.constant 0 : index
    %c0_49 = arith.constant 0 : index
    %40 = vector.load %arg2[%c0_47, %c0_48, %c0_49] : memref<5x32x256xf32, #tpu.memory_space<vmem>>, vector<1x32x256xf32>
    %41 = vector.shape_cast %40 : vector<1x32x256xf32> to vector<32x256xf32>
    %cst_50 = arith.constant dense<0.000000e+00> : vector<64x256xf32>
    %42 = tpu.matmul %39, %41, %cst_50 {dimension_numbers = #tpu.dot_dimension_numbers<[1], [0], [0], [1], [0, 0, 1, 1], [], []>} : vector<64x32xf32>, vector<32x256xf32>, vector<64x256xf32> -> vector<64x256xf32>
    %43 = arith.addf %37, %42 : vector<64x256xf32>
    %c0_51 = arith.constant 0 : index
    %c1_52 = arith.constant 1 : index
    %c0_53 = arith.constant 0 : index
    %44 = vector.load %arg34[%c0_51, %c1_52, %c0_53] : memref<2x36x32xf32, #tpu.memory_space<vmem>>, vector<2x32x32xf32>
    %45 = vector.shape_cast %44 : vector<2x32x32xf32> to vector<64x32xf32>
    %c1_54 = arith.constant 1 : index
    %c0_55 = arith.constant 0 : index
    %c0_56 = arith.constant 0 : index
    %46 = vector.load %arg2[%c1_54, %c0_55, %c0_56] : memref<5x32x256xf32, #tpu.memory_space<vmem>>, vector<1x32x256xf32>
    %47 = vector.shape_cast %46 : vector<1x32x256xf32> to vector<32x256xf32>
    %cst_57 = arith.constant dense<0.000000e+00> : vector<64x256xf32>
    %48 = tpu.matmul %45, %47, %cst_57 {dimension_numbers = #tpu.dot_dimension_numbers<[1], [0], [0], [1], [0, 0, 1, 1], [], []>} : vector<64x32xf32>, vector<32x256xf32>, vector<64x256xf32> -> vector<64x256xf32>
    %49 = arith.addf %43, %48 : vector<64x256xf32>
    %c0_58 = arith.constant 0 : index
    %c2_59 = arith.constant 2 : index
    %c0_60 = arith.constant 0 : index
    %50 = vector.load %arg34[%c0_58, %c2_59, %c0_60] : memref<2x36x32xf32, #tpu.memory_space<vmem>>, vector<2x32x32xf32>
    %51 = vector.shape_cast %50 : vector<2x32x32xf32> to vector<64x32xf32>
    %c2_61 = arith.constant 2 : index
    %c0_62 = arith.constant 0 : index
    %c0_63 = arith.constant 0 : index
    %52 = vector.load %arg2[%c2_61, %c0_62, %c0_63] : memref<5x32x256xf32, #tpu.memory_space<vmem>>, vector<1x32x256xf32>
    %53 = vector.shape_cast %52 : vector<1x32x256xf32> to vector<32x256xf32>
    %cst_64 = arith.constant dense<0.000000e+00> : vector<64x256xf32>
    %54 = tpu.matmul %51, %53, %cst_64 {dimension_numbers = #tpu.dot_dimension_numbers<[1], [0], [0], [1], [0, 0, 1, 1], [], []>} : vector<64x32xf32>, vector<32x256xf32>, vector<64x256xf32> -> vector<64x256xf32>
    %55 = arith.addf %49, %54 : vector<64x256xf32>
    %c0_65 = arith.constant 0 : index
    %c3_66 = arith.constant 3 : index
    %c0_67 = arith.constant 0 : index
    %56 = vector.load %arg34[%c0_65, %c3_66, %c0_67] : memref<2x36x32xf32, #tpu.memory_space<vmem>>, vector<2x32x32xf32>
    %57 = vector.shape_cast %56 : vector<2x32x32xf32> to vector<64x32xf32>
    %c3_68 = arith.constant 3 : index
    %c0_69 = arith.constant 0 : index
    %c0_70 = arith.constant 0 : index
    %58 = vector.load %arg2[%c3_68, %c0_69, %c0_70] : memref<5x32x256xf32, #tpu.memory_space<vmem>>, vector<1x32x256xf32>
    %59 = vector.shape_cast %58 : vector<1x32x256xf32> to vector<32x256xf32>
    %cst_71 = arith.constant dense<0.000000e+00> : vector<64x256xf32>
    %60 = tpu.matmul %57, %59, %cst_71 {dimension_numbers = #tpu.dot_dimension_numbers<[1], [0], [0], [1], [0, 0, 1, 1], [], []>} : vector<64x32xf32>, vector<32x256xf32>, vector<64x256xf32> -> vector<64x256xf32>
    %61 = arith.addf %55, %60 : vector<64x256xf32>
    %c0_72 = arith.constant 0 : index
    %c4_73 = arith.constant 4 : index
    %c0_74 = arith.constant 0 : index
    %62 = vector.load %arg34[%c0_72, %c4_73, %c0_74] : memref<2x36x32xf32, #tpu.memory_space<vmem>>, vector<2x32x32xf32>
    %63 = vector.shape_cast %62 : vector<2x32x32xf32> to vector<64x32xf32>
    %c4_75 = arith.constant 4 : index
    %c0_76 = arith.constant 0 : index
    %c0_77 = arith.constant 0 : index
    %64 = vector.load %arg2[%c4_75, %c0_76, %c0_77] : memref<5x32x256xf32, #tpu.memory_space<vmem>>, vector<1x32x256xf32>
    %65 = vector.shape_cast %64 : vector<1x32x256xf32> to vector<32x256xf32>
    %cst_78 = arith.constant dense<0.000000e+00> : vector<64x256xf32>
    %66 = tpu.matmul %63, %65, %cst_78 {dimension_numbers = #tpu.dot_dimension_numbers<[1], [0], [0], [1], [0, 0, 1, 1], [], []>} : vector<64x32xf32>, vector<32x256xf32>, vector<64x256xf32> -> vector<64x256xf32>
    %67 = arith.addf %61, %66 : vector<64x256xf32>
    %cst_79 = arith.constant dense<0.000000e+00> : vector<256xf32>
    %68 = vector.multi_reduction <add>, %67, %cst_79 [0] : vector<64x256xf32> to vector<256xf32>
    %69 = vector.shape_cast %68 : vector<256xf32> to vector<1x256xf32>
    %70 = arith.mulf %67, %67 : vector<64x256xf32>
    %cst_80 = arith.constant dense<0.000000e+00> : vector<256xf32>
    %71 = vector.multi_reduction <add>, %70, %cst_80 [0] : vector<64x256xf32> to vector<256xf32>
    %72 = vector.shape_cast %71 : vector<256xf32> to vector<1x256xf32>
    %c0_81 = arith.constant 0 : index
    %c0_82 = arith.constant 0 : index
    %73 = vector.load %arg4[%c0_81, %c0_82] : memref<256x8xf32, #tpu.memory_space<vmem>>, vector<256x8xf32>
    %cst_83 = arith.constant dense<0.000000e+00> : vector<1x8xf32>
    %74 = tpu.matmul %69, %73, %cst_83 {dimension_numbers = #tpu.dot_dimension_numbers<[1], [0], [0], [1], [0, 0, 1, 1], [], []>} : vector<1x256xf32>, vector<256x8xf32>, vector<1x8xf32> -> vector<1x8xf32>
    %cst_84 = arith.constant 4.8828125E-4 : f32
    %75 = vector.broadcast %cst_84 : f32 to vector<1x8xf32>
    %76 = arith.mulf %74, %75 : vector<1x8xf32>
    %c0_85 = arith.constant 0 : index
    %c0_86 = arith.constant 0 : index
    %77 = vector.load %arg4[%c0_85, %c0_86] : memref<256x8xf32, #tpu.memory_space<vmem>>, vector<256x8xf32>
    %cst_87 = arith.constant dense<0.000000e+00> : vector<1x8xf32>
    %78 = tpu.matmul %72, %77, %cst_87 {dimension_numbers = #tpu.dot_dimension_numbers<[1], [0], [0], [1], [0, 0, 1, 1], [], []>} : vector<1x256xf32>, vector<256x8xf32>, vector<1x8xf32> -> vector<1x8xf32>
    %cst_88 = arith.constant 4.8828125E-4 : f32
    %79 = vector.broadcast %cst_88 : f32 to vector<1x8xf32>
    %80 = arith.mulf %78, %79 : vector<1x8xf32>
    %81 = arith.mulf %76, %76 : vector<1x8xf32>
    %82 = arith.subf %80, %81 : vector<1x8xf32>
    %c0_89 = arith.constant 0 : index
    %c0_90 = arith.constant 0 : index
    %83 = vector.load %arg3[%c0_89, %c0_90] : memref<2x8xf32, #tpu.memory_space<vmem>>, vector<1x8xf32>
    %cst_91 = arith.constant 9.99999974E-6 : f32
    %84 = vector.broadcast %cst_91 : f32 to vector<1x8xf32>
    %85 = arith.addf %82, %84 : vector<1x8xf32>
    %86 = math.rsqrt %85 : vector<1x8xf32>
    %87 = arith.mulf %83, %86 : vector<1x8xf32>
    %c1_92 = arith.constant 1 : index
    %c0_93 = arith.constant 0 : index
    %88 = vector.load %arg3[%c1_92, %c0_93] : memref<2x8xf32, #tpu.memory_space<vmem>>, vector<1x8xf32>
    %89 = arith.mulf %76, %87 : vector<1x8xf32>
    %90 = arith.subf %88, %89 : vector<1x8xf32>
    %c0_94 = arith.constant 0 : index
    %c0_95 = arith.constant 0 : index
    %91 = vector.load %arg5[%c0_94, %c0_95] : memref<8x256xf32, #tpu.memory_space<vmem>>, vector<8x256xf32>
    %cst_96 = arith.constant dense<0.000000e+00> : vector<1x256xf32>
    %92 = tpu.matmul %87, %91, %cst_96 {dimension_numbers = #tpu.dot_dimension_numbers<[1], [0], [0], [1], [0, 0, 1, 1], [], []>} : vector<1x8xf32>, vector<8x256xf32>, vector<1x256xf32> -> vector<1x256xf32>
    %93 = vector.broadcast %92 : vector<1x256xf32> to vector<64x256xf32>
    %94 = arith.mulf %67, %93 : vector<64x256xf32>
    %c0_97 = arith.constant 0 : index
    %c0_98 = arith.constant 0 : index
    %95 = vector.load %arg5[%c0_97, %c0_98] : memref<8x256xf32, #tpu.memory_space<vmem>>, vector<8x256xf32>
    %cst_99 = arith.constant dense<0.000000e+00> : vector<1x256xf32>
    %96 = tpu.matmul %90, %95, %cst_99 {dimension_numbers = #tpu.dot_dimension_numbers<[1], [0], [0], [1], [0, 0, 1, 1], [], []>} : vector<1x8xf32>, vector<8x256xf32>, vector<1x256xf32> -> vector<1x256xf32>
    %97 = vector.broadcast %96 : vector<1x256xf32> to vector<64x256xf32>
    %98 = arith.addf %94, %97 : vector<64x256xf32>
    %99 = math.absf %98 : vector<64x256xf32>
    %100 = math.tanh %99 : vector<64x256xf32>
    %c0_100 = arith.constant 0 : index
    %c0_101 = arith.constant 0 : index
    %101 = vector.load %arg6[%c0_100, %c0_101] : memref<32x64xf32, #tpu.memory_space<vmem>>, vector<32x64xf32>
    %cst_102 = arith.constant dense<0.000000e+00> : vector<32x256xf32>
    %102 = tpu.matmul %101, %100, %cst_102 {dimension_numbers = #tpu.dot_dimension_numbers<[1], [0], [0], [1], [0, 0, 1, 1], [], []>} : vector<32x64xf32>, vector<64x256xf32>, vector<32x256xf32> -> vector<32x256xf32>
    %c0_103 = arith.constant 0 : index
    %c0_104 = arith.constant 0 : index
    %103 = vector.load %arg7[%c0_103, %c0_104] : memref<256x128xf32, #tpu.memory_space<vmem>>, vector<256x128xf32>
    %cst_105 = arith.constant dense<0.000000e+00> : vector<32x128xf32>
    %104 = tpu.matmul %102, %103, %cst_105 {dimension_numbers = #tpu.dot_dimension_numbers<[1], [0], [0], [1], [0, 0, 1, 1], [], []>} : vector<32x256xf32>, vector<256x128xf32>, vector<32x128xf32> -> vector<32x128xf32>
    %cst_106 = arith.constant 0.000000e+00 : f32
    %105 = vector.broadcast %cst_106 : f32 to vector<2x20x128xf32>
    %c0_107 = arith.constant 0 : index
    %c0_108 = arith.constant 0 : index
    %c0_109 = arith.constant 0 : index
    %106 = vector.load %arg35[%c0_107, %c0_108, %c0_109] : memref<2x20x128xf32, #tpu.memory_space<vmem>>, vector<2x20x128xf32>
    tpu.vector_store %arg35[%c0_107, %c0_108, %c0_109], %105 {strides = array<i32>} : memref<2x20x128xf32, #tpu.memory_space<vmem>>, vector<2x20x128xf32>,
    %107 = vector.shape_cast %104 : vector<32x128xf32> to vector<2x16x128xf32>
    %c0_110 = arith.constant 0 : index
    %c2_111 = arith.constant 2 : index
    %c0_112 = arith.constant 0 : index
    %108 = vector.load %arg35[%c0_110, %c2_111, %c0_112] : memref<2x20x128xf32, #tpu.memory_space<vmem>>, vector<2x16x128xf32>
    tpu.vector_store %arg35[%c0_110, %c2_111, %c0_112], %107 {strides = array<i32>} : memref<2x20x128xf32, #tpu.memory_space<vmem>>, vector<2x16x128xf32>,
    %cst_113 = arith.constant 0.000000e+00 : f32
    %109 = vector.broadcast %cst_113 : f32 to vector<32x256xf32>
    %c0_114 = arith.constant 0 : index
    %c0_115 = arith.constant 0 : index
    %c0_116 = arith.constant 0 : index
    %110 = vector.load %arg35[%c0_114, %c0_115, %c0_116] : memref<2x20x128xf32, #tpu.memory_space<vmem>>, vector<2x16x128xf32>
    %111 = vector.shape_cast %110 : vector<2x16x128xf32> to vector<32x128xf32>
    %c0_117 = arith.constant 0 : index
    %c0_118 = arith.constant 0 : index
    %c0_119 = arith.constant 0 : index
    %112 = vector.load %arg8[%c0_117, %c0_118, %c0_119] : memref<5x128x256xf32, #tpu.memory_space<vmem>>, vector<1x128x256xf32>
    %113 = vector.shape_cast %112 : vector<1x128x256xf32> to vector<128x256xf32>
    %cst_120 = arith.constant dense<0.000000e+00> : vector<32x256xf32>
    %114 = tpu.matmul %111, %113, %cst_120 {dimension_numbers = #tpu.dot_dimension_numbers<[1], [0], [0], [1], [0, 0, 1, 1], [], []>} : vector<32x128xf32>, vector<128x256xf32>, vector<32x256xf32> -> vector<32x256xf32>
    %115 = arith.addf %109, %114 : vector<32x256xf32>
    %c0_121 = arith.constant 0 : index
    %c1_122 = arith.constant 1 : index
    %c0_123 = arith.constant 0 : index
    %116 = vector.load %arg35[%c0_121, %c1_122, %c0_123] : memref<2x20x128xf32, #tpu.memory_space<vmem>>, vector<2x16x128xf32>
    %117 = vector.shape_cast %116 : vector<2x16x128xf32> to vector<32x128xf32>
    %c1_124 = arith.constant 1 : index
    %c0_125 = arith.constant 0 : index
    %c0_126 = arith.constant 0 : index
    %118 = vector.load %arg8[%c1_124, %c0_125, %c0_126] : memref<5x128x256xf32, #tpu.memory_space<vmem>>, vector<1x128x256xf32>
    %119 = vector.shape_cast %118 : vector<1x128x256xf32> to vector<128x256xf32>
    %cst_127 = arith.constant dense<0.000000e+00> : vector<32x256xf32>
    %120 = tpu.matmul %117, %119, %cst_127 {dimension_numbers = #tpu.dot_dimension_numbers<[1], [0], [0], [1], [0, 0, 1, 1], [], []>} : vector<32x128xf32>, vector<128x256xf32>, vector<32x256xf32> -> vector<32x256xf32>
    %121 = arith.addf %115, %120 : vector<32x256xf32>
    %c0_128 = arith.constant 0 : index
    %c2_129 = arith.constant 2 : index
    %c0_130 = arith.constant 0 : index
    %122 = vector.load %arg35[%c0_128, %c2_129, %c0_130] : memref<2x20x128xf32, #tpu.memory_space<vmem>>, vector<2x16x128xf32>
    %123 = vector.shape_cast %122 : vector<2x16x128xf32> to vector<32x128xf32>
    %c2_131 = arith.constant 2 : index
    %c0_132 = arith.constant 0 : index
    %c0_133 = arith.constant 0 : index
    %124 = vector.load %arg8[%c2_131, %c0_132, %c0_133] : memref<5x128x256xf32, #tpu.memory_space<vmem>>, vector<1x128x256xf32>
    %125 = vector.shape_cast %124 : vector<1x128x256xf32> to vector<128x256xf32>
    %cst_134 = arith.constant dense<0.000000e+00> : vector<32x256xf32>
    %126 = tpu.matmul %123, %125, %cst_134 {dimension_numbers = #tpu.dot_dimension_numbers<[1], [0], [0], [1], [0, 0, 1, 1], [], []>} : vector<32x128xf32>, vector<128x256xf32>, vector<32x256xf32> -> vector<32x256xf32>
    %127 = arith.addf %121, %126 : vector<32x256xf32>
    %c0_135 = arith.constant 0 : index
    %c3_136 = arith.constant 3 : index
    %c0_137 = arith.constant 0 : index
    %128 = vector.load %arg35[%c0_135, %c3_136, %c0_137] : memref<2x20x128xf32, #tpu.memory_space<vmem>>, vector<2x16x128xf32>
    %129 = vector.shape_cast %128 : vector<2x16x128xf32> to vector<32x128xf32>
    %c3_138 = arith.constant 3 : index
    %c0_139 = arith.constant 0 : index
    %c0_140 = arith.constant 0 : index
    %130 = vector.load %arg8[%c3_138, %c0_139, %c0_140] : memref<5x128x256xf32, #tpu.memory_space<vmem>>, vector<1x128x256xf32>
    %131 = vector.shape_cast %130 : vector<1x128x256xf32> to vector<128x256xf32>
    %cst_141 = arith.constant dense<0.000000e+00> : vector<32x256xf32>
    %132 = tpu.matmul %129, %131, %cst_141 {dimension_numbers = #tpu.dot_dimension_numbers<[1], [0], [0], [1], [0, 0, 1, 1], [], []>} : vector<32x128xf32>, vector<128x256xf32>, vector<32x256xf32> -> vector<32x256xf32>
    %133 = arith.addf %127, %132 : vector<32x256xf32>
    %c0_142 = arith.constant 0 : index
    %c4_143 = arith.constant 4 : index
    %c0_144 = arith.constant 0 : index
    %134 = vector.load %arg35[%c0_142, %c4_143, %c0_144] : memref<2x20x128xf32, #tpu.memory_space<vmem>>, vector<2x16x128xf32>
    %135 = vector.shape_cast %134 : vector<2x16x128xf32> to vector<32x128xf32>
    %c4_145 = arith.constant 4 : index
    %c0_146 = arith.constant 0 : index
    %c0_147 = arith.constant 0 : index
    %136 = vector.load %arg8[%c4_145, %c0_146, %c0_147] : memref<5x128x256xf32, #tpu.memory_space<vmem>>, vector<1x128x256xf32>
    %137 = vector.shape_cast %136 : vector<1x128x256xf32> to vector<128x256xf32>
    %cst_148 = arith.constant dense<0.000000e+00> : vector<32x256xf32>
    %138 = tpu.matmul %135, %137, %cst_148 {dimension_numbers = #tpu.dot_dimension_numbers<[1], [0], [0], [1], [0, 0, 1, 1], [], []>} : vector<32x128xf32>, vector<128x256xf32>, vector<32x256xf32> -> vector<32x256xf32>
    %139 = arith.addf %133, %138 : vector<32x256xf32>
    %cst_149 = arith.constant dense<0.000000e+00> : vector<256xf32>
    %140 = vector.multi_reduction <add>, %139, %cst_149 [0] : vector<32x256xf32> to vector<256xf32>
    %141 = vector.shape_cast %140 : vector<256xf32> to vector<1x256xf32>
    %142 = arith.mulf %139, %139 : vector<32x256xf32>
    %cst_150 = arith.constant dense<0.000000e+00> : vector<256xf32>
    %143 = vector.multi_reduction <add>, %142, %cst_150 [0] : vector<32x256xf32> to vector<256xf32>
    %144 = vector.shape_cast %143 : vector<256xf32> to vector<1x256xf32>
    %c0_151 = arith.constant 0 : index
    %c0_152 = arith.constant 0 : index
    %145 = vector.load %arg10[%c0_151, %c0_152] : memref<256x16xf32, #tpu.memory_space<vmem>>, vector<256x16xf32>
    %cst_153 = arith.constant dense<0.000000e+00> : vector<1x16xf32>
    %146 = tpu.matmul %141, %145, %cst_153 {dimension_numbers = #tpu.dot_dimension_numbers<[1], [0], [0], [1], [0, 0, 1, 1], [], []>} : vector<1x256xf32>, vector<256x16xf32>, vector<1x16xf32> -> vector<1x16xf32>
    %cst_154 = arith.constant 0.001953125 : f32
    %147 = vector.broadcast %cst_154 : f32 to vector<1x16xf32>
    %148 = arith.mulf %146, %147 : vector<1x16xf32>
    %c0_155 = arith.constant 0 : index
    %c0_156 = arith.constant 0 : index
    %149 = vector.load %arg10[%c0_155, %c0_156] : memref<256x16xf32, #tpu.memory_space<vmem>>, vector<256x16xf32>
    %cst_157 = arith.constant dense<0.000000e+00> : vector<1x16xf32>
    %150 = tpu.matmul %144, %149, %cst_157 {dimension_numbers = #tpu.dot_dimension_numbers<[1], [0], [0], [1], [0, 0, 1, 1], [], []>} : vector<1x256xf32>, vector<256x16xf32>, vector<1x16xf32> -> vector<1x16xf32>
    %cst_158 = arith.constant 0.001953125 : f32
    %151 = vector.broadcast %cst_158 : f32 to vector<1x16xf32>
    %152 = arith.mulf %150, %151 : vector<1x16xf32>
    %153 = arith.mulf %148, %148 : vector<1x16xf32>
    %154 = arith.subf %152, %153 : vector<1x16xf32>
    %c0_159 = arith.constant 0 : index
    %c0_160 = arith.constant 0 : index
    %155 = vector.load %arg9[%c0_159, %c0_160] : memref<2x16xf32, #tpu.memory_space<vmem>>, vector<1x16xf32>
    %cst_161 = arith.constant 9.99999974E-6 : f32
    %156 = vector.broadcast %cst_161 : f32 to vector<1x16xf32>
    %157 = arith.addf %154, %156 : vector<1x16xf32>
    %158 = math.rsqrt %157 : vector<1x16xf32>
    %159 = arith.mulf %155, %158 : vector<1x16xf32>
    %c1_162 = arith.constant 1 : index
    %c0_163 = arith.constant 0 : index
    %160 = vector.load %arg9[%c1_162, %c0_163] : memref<2x16xf32, #tpu.memory_space<vmem>>, vector<1x16xf32>
    %161 = arith.mulf %148, %159 : vector<1x16xf32>
    %162 = arith.subf %160, %161 : vector<1x16xf32>
    %c0_164 = arith.constant 0 : index
    %c0_165 = arith.constant 0 : index
    %163 = vector.load %arg11[%c0_164, %c0_165] : memref<16x256xf32, #tpu.memory_space<vmem>>, vector<16x256xf32>
    %cst_166 = arith.constant dense<0.000000e+00> : vector<1x256xf32>
    %164 = tpu.matmul %159, %163, %cst_166 {dimension_numbers = #tpu.dot_dimension_numbers<[1], [0], [0], [1], [0, 0, 1, 1], [], []>} : vector<1x16xf32>, vector<16x256xf32>, vector<1x256xf32> -> vector<1x256xf32>
    %165 = vector.broadcast %164 : vector<1x256xf32> to vector<32x256xf32>
    %166 = arith.mulf %139, %165 : vector<32x256xf32>
    %c0_167 = arith.constant 0 : index
    %c0_168 = arith.constant 0 : index
    %167 = vector.load %arg11[%c0_167, %c0_168] : memref<16x256xf32, #tpu.memory_space<vmem>>, vector<16x256xf32>
    %cst_169 = arith.constant dense<0.000000e+00> : vector<1x256xf32>
    %168 = tpu.matmul %162, %167, %cst_169 {dimension_numbers = #tpu.dot_dimension_numbers<[1], [0], [0], [1], [0, 0, 1, 1], [], []>} : vector<1x16xf32>, vector<16x256xf32>, vector<1x256xf32> -> vector<1x256xf32>
    %169 = vector.broadcast %168 : vector<1x256xf32> to vector<32x256xf32>
    %170 = arith.addf %166, %169 : vector<32x256xf32>
    %171 = math.tanh %170 : vector<32x256xf32>
    %c0_170 = arith.constant 0 : index
    %c0_171 = arith.constant 0 : index
    %172 = vector.load %arg12[%c0_170, %c0_171] : memref<16x32xf32, #tpu.memory_space<vmem>>, vector<16x32xf32>
    %cst_172 = arith.constant dense<0.000000e+00> : vector<16x256xf32>
    %173 = tpu.matmul %172, %171, %cst_172 {dimension_numbers = #tpu.dot_dimension_numbers<[1], [0], [0], [1], [0, 0, 1, 1], [], []>} : vector<16x32xf32>, vector<32x256xf32>, vector<16x256xf32> -> vector<16x256xf32>
    %c0_173 = arith.constant 0 : index
    %c0_174 = arith.constant 0 : index
    %174 = vector.load %arg13[%c0_173, %c0_174] : memref<256x128xf32, #tpu.memory_space<vmem>>, vector<256x128xf32>
    %cst_175 = arith.constant dense<0.000000e+00> : vector<16x128xf32>
    %175 = tpu.matmul %173, %174, %cst_175 {dimension_numbers = #tpu.dot_dimension_numbers<[1], [0], [0], [1], [0, 0, 1, 1], [], []>} : vector<16x256xf32>, vector<256x128xf32>, vector<16x128xf32> -> vector<16x128xf32>
    %c0_176 = arith.constant 0 : index
    %c0_177 = arith.constant 0 : index
    %176 = vector.load %arg14[%c0_176, %c0_177] : memref<128x256xf32, #tpu.memory_space<vmem>>, vector<128x256xf32>
    %cst_178 = arith.constant dense<0.000000e+00> : vector<16x256xf32>
    %177 = tpu.matmul %175, %176, %cst_178 {dimension_numbers = #tpu.dot_dimension_numbers<[1], [0], [0], [1], [0, 0, 1, 1], [], []>} : vector<16x128xf32>, vector<128x256xf32>, vector<16x256xf32> -> vector<16x256xf32>
    %cst_179 = arith.constant dense<0.000000e+00> : vector<256xf32>
    %178 = vector.multi_reduction <add>, %177, %cst_179 [0] : vector<16x256xf32> to vector<256xf32>
    %179 = vector.shape_cast %178 : vector<256xf32> to vector<1x256xf32>
    %180 = arith.mulf %177, %177 : vector<16x256xf32>
    %cst_180 = arith.constant dense<0.000000e+00> : vector<256xf32>
    %181 = vector.multi_reduction <add>, %180, %cst_180 [0] : vector<16x256xf32> to vector<256xf32>
    %182 = vector.shape_cast %181 : vector<256xf32> to vector<1x256xf32>
    %c0_181 = arith.constant 0 : index
    %c0_182 = arith.constant 0 : index
    %183 = vector.load %arg16[%c0_181, %c0_182] : memref<256x32xf32, #tpu.memory_space<vmem>>, vector<256x32xf32>
    %cst_183 = arith.constant dense<0.000000e+00> : vector<1x32xf32>
    %184 = tpu.matmul %179, %183, %cst_183 {dimension_numbers = #tpu.dot_dimension_numbers<[1], [0], [0], [1], [0, 0, 1, 1], [], []>} : vector<1x256xf32>, vector<256x32xf32>, vector<1x32xf32> -> vector<1x32xf32>
    %cst_184 = arith.constant 7.812500e-03 : f32
    %185 = vector.broadcast %cst_184 : f32 to vector<1x32xf32>
    %186 = arith.mulf %184, %185 : vector<1x32xf32>
    %c0_185 = arith.constant 0 : index
    %c0_186 = arith.constant 0 : index
    %187 = vector.load %arg16[%c0_185, %c0_186] : memref<256x32xf32, #tpu.memory_space<vmem>>, vector<256x32xf32>
    %cst_187 = arith.constant dense<0.000000e+00> : vector<1x32xf32>
    %188 = tpu.matmul %182, %187, %cst_187 {dimension_numbers = #tpu.dot_dimension_numbers<[1], [0], [0], [1], [0, 0, 1, 1], [], []>} : vector<1x256xf32>, vector<256x32xf32>, vector<1x32xf32> -> vector<1x32xf32>
    %cst_188 = arith.constant 7.812500e-03 : f32
    %189 = vector.broadcast %cst_188 : f32 to vector<1x32xf32>
    %190 = arith.mulf %188, %189 : vector<1x32xf32>
    %191 = arith.mulf %186, %186 : vector<1x32xf32>
    %192 = arith.subf %190, %191 : vector<1x32xf32>
    %c0_189 = arith.constant 0 : index
    %c0_190 = arith.constant 0 : index
    %193 = vector.load %arg15[%c0_189, %c0_190] : memref<2x32xf32, #tpu.memory_space<vmem>>, vector<1x32xf32>
    %cst_191 = arith.constant 9.99999974E-6 : f32
    %194 = vector.broadcast %cst_191 : f32 to vector<1x32xf32>
    %195 = arith.addf %192, %194 : vector<1x32xf32>
    %196 = math.rsqrt %195 : vector<1x32xf32>
    %197 = arith.mulf %193, %196 : vector<1x32xf32>
    %c1_192 = arith.constant 1 : index
    %c0_193 = arith.constant 0 : index
    %198 = vector.load %arg15[%c1_192, %c0_193] : memref<2x32xf32, #tpu.memory_space<vmem>>, vector<1x32xf32>
    %199 = arith.mulf %186, %197 : vector<1x32xf32>
    %200 = arith.subf %198, %199 : vector<1x32xf32>
    %c0_194 = arith.constant 0 : index
    %c0_195 = arith.constant 0 : index
    %201 = vector.load %arg17[%c0_194, %c0_195] : memref<32x256xf32, #tpu.memory_space<vmem>>, vector<32x256xf32>
    %cst_196 = arith.constant dense<0.000000e+00> : vector<1x256xf32>
    %202 = tpu.matmul %197, %201, %cst_196 {dimension_numbers = #tpu.dot_dimension_numbers<[1], [0], [0], [1], [0, 0, 1, 1], [], []>} : vector<1x32xf32>, vector<32x256xf32>, vector<1x256xf32> -> vector<1x256xf32>
    %203 = vector.broadcast %202 : vector<1x256xf32> to vector<16x256xf32>
    %204 = arith.mulf %177, %203 : vector<16x256xf32>
    %c0_197 = arith.constant 0 : index
    %c0_198 = arith.constant 0 : index
    %205 = vector.load %arg17[%c0_197, %c0_198] : memref<32x256xf32, #tpu.memory_space<vmem>>, vector<32x256xf32>
    %cst_199 = arith.constant dense<0.000000e+00> : vector<1x256xf32>
    %206 = tpu.matmul %200, %205, %cst_199 {dimension_numbers = #tpu.dot_dimension_numbers<[1], [0], [0], [1], [0, 0, 1, 1], [], []>} : vector<1x32xf32>, vector<32x256xf32>, vector<1x256xf32> -> vector<1x256xf32>
    %207 = vector.broadcast %206 : vector<1x256xf32> to vector<16x256xf32>
    %208 = arith.addf %204, %207 : vector<16x256xf32>
    %cst_200 = arith.constant 0.000000e+00 : f32
    %209 = vector.broadcast %cst_200 : f32 to vector<16x256xf32>
    %210 = arith.maximumf %208, %209 : vector<16x256xf32>
    %c0_201 = arith.constant 0 : index
    %c0_202 = arith.constant 0 : index
    %211 = vector.load %arg18[%c0_201, %c0_202] : memref<8x16xf32, #tpu.memory_space<vmem>>, vector<8x16xf32>
    %cst_203 = arith.constant dense<0.000000e+00> : vector<8x256xf32>
    %212 = tpu.matmul %211, %210, %cst_203 {dimension_numbers = #tpu.dot_dimension_numbers<[1], [0], [0], [1], [0, 0, 1, 1], [], []>} : vector<8x16xf32>, vector<16x256xf32>, vector<8x256xf32> -> vector<8x256xf32>
    %c0_204 = arith.constant 0 : index
    %c0_205 = arith.constant 0 : index
    %213 = vector.load %arg19[%c0_204, %c0_205] : memref<256x128xf32, #tpu.memory_space<vmem>>, vector<256x128xf32>
    %cst_206 = arith.constant dense<0.000000e+00> : vector<8x128xf32>
    %214 = tpu.matmul %212, %213, %cst_206 {dimension_numbers = #tpu.dot_dimension_numbers<[1], [0], [0], [1], [0, 0, 1, 1], [], []>} : vector<8x256xf32>, vector<256x128xf32>, vector<8x128xf32> -> vector<8x128xf32>
    %c0_207 = arith.constant 0 : index
    %c0_208 = arith.constant 0 : index
    %215 = vector.load %arg20[%c0_207, %c0_208] : memref<128x256xf32, #tpu.memory_space<vmem>>, vector<128x256xf32>
    %cst_209 = arith.constant dense<0.000000e+00> : vector<8x256xf32>
    %216 = tpu.matmul %214, %215, %cst_209 {dimension_numbers = #tpu.dot_dimension_numbers<[1], [0], [0], [1], [0, 0, 1, 1], [], []>} : vector<8x128xf32>, vector<128x256xf32>, vector<8x256xf32> -> vector<8x256xf32>
    %cst_210 = arith.constant dense<0.000000e+00> : vector<256xf32>
    %217 = vector.multi_reduction <add>, %216, %cst_210 [0] : vector<8x256xf32> to vector<256xf32>
    %218 = vector.shape_cast %217 : vector<256xf32> to vector<1x256xf32>
    %219 = arith.mulf %216, %216 : vector<8x256xf32>
    %cst_211 = arith.constant dense<0.000000e+00> : vector<256xf32>
    %220 = vector.multi_reduction <add>, %219, %cst_211 [0] : vector<8x256xf32> to vector<256xf32>
    %221 = vector.shape_cast %220 : vector<256xf32> to vector<1x256xf32>
    %c0_212 = arith.constant 0 : index
    %c0_213 = arith.constant 0 : index
    %222 = vector.load %arg22[%c0_212, %c0_213] : memref<256x64xf32, #tpu.memory_space<vmem>>, vector<256x64xf32>
    %cst_214 = arith.constant dense<0.000000e+00> : vector<1x64xf32>
    %223 = tpu.matmul %218, %222, %cst_214 {dimension_numbers = #tpu.dot_dimension_numbers<[1], [0], [0], [1], [0, 0, 1, 1], [], []>} : vector<1x256xf32>, vector<256x64xf32>, vector<1x64xf32> -> vector<1x64xf32>
    %cst_215 = arith.constant 3.125000e-02 : f32
    %224 = vector.broadcast %cst_215 : f32 to vector<1x64xf32>
    %225 = arith.mulf %223, %224 : vector<1x64xf32>
    %c0_216 = arith.constant 0 : index
    %c0_217 = arith.constant 0 : index
    %226 = vector.load %arg22[%c0_216, %c0_217] : memref<256x64xf32, #tpu.memory_space<vmem>>, vector<256x64xf32>
    %cst_218 = arith.constant dense<0.000000e+00> : vector<1x64xf32>
    %227 = tpu.matmul %221, %226, %cst_218 {dimension_numbers = #tpu.dot_dimension_numbers<[1], [0], [0], [1], [0, 0, 1, 1], [], []>} : vector<1x256xf32>, vector<256x64xf32>, vector<1x64xf32> -> vector<1x64xf32>
    %cst_219 = arith.constant 3.125000e-02 : f32
    %228 = vector.broadcast %cst_219 : f32 to vector<1x64xf32>
    %229 = arith.mulf %227, %228 : vector<1x64xf32>
    %230 = arith.mulf %225, %225 : vector<1x64xf32>
    %231 = arith.subf %229, %230 : vector<1x64xf32>
    %c0_220 = arith.constant 0 : index
    %c0_221 = arith.constant 0 : index
    %232 = vector.load %arg21[%c0_220, %c0_221] : memref<2x64xf32, #tpu.memory_space<vmem>>, vector<1x64xf32>
    %cst_222 = arith.constant 9.99999974E-6 : f32
    %233 = vector.broadcast %cst_222 : f32 to vector<1x64xf32>
    %234 = arith.addf %231, %233 : vector<1x64xf32>
    %235 = math.rsqrt %234 : vector<1x64xf32>
    %236 = arith.mulf %232, %235 : vector<1x64xf32>
    %c1_223 = arith.constant 1 : index
    %c0_224 = arith.constant 0 : index
    %237 = vector.load %arg21[%c1_223, %c0_224] : memref<2x64xf32, #tpu.memory_space<vmem>>, vector<1x64xf32>
    %238 = arith.mulf %225, %236 : vector<1x64xf32>
    %239 = arith.subf %237, %238 : vector<1x64xf32>
    %c0_225 = arith.constant 0 : index
    %c0_226 = arith.constant 0 : index
    %240 = vector.load %arg23[%c0_225, %c0_226] : memref<64x256xf32, #tpu.memory_space<vmem>>, vector<64x256xf32>
    %cst_227 = arith.constant dense<0.000000e+00> : vector<1x256xf32>
    %241 = tpu.matmul %236, %240, %cst_227 {dimension_numbers = #tpu.dot_dimension_numbers<[1], [0], [0], [1], [0, 0, 1, 1], [], []>} : vector<1x64xf32>, vector<64x256xf32>, vector<1x256xf32> -> vector<1x256xf32>
    %242 = vector.broadcast %241 : vector<1x256xf32> to vector<8x256xf32>
    %243 = arith.mulf %216, %242 : vector<8x256xf32>
    %c0_228 = arith.constant 0 : index
    %c0_229 = arith.constant 0 : index
    %244 = vector.load %arg23[%c0_228, %c0_229] : memref<64x256xf32, #tpu.memory_space<vmem>>, vector<64x256xf32>
    %cst_230 = arith.constant dense<0.000000e+00> : vector<1x256xf32>
    %245 = tpu.matmul %239, %244, %cst_230 {dimension_numbers = #tpu.dot_dimension_numbers<[1], [0], [0], [1], [0, 0, 1, 1], [], []>} : vector<1x64xf32>, vector<64x256xf32>, vector<1x256xf32> -> vector<1x256xf32>
    %246 = vector.broadcast %245 : vector<1x256xf32> to vector<8x256xf32>
    %247 = arith.addf %243, %246 : vector<8x256xf32>
    %cst_231 = arith.constant 0.000000e+00 : f32
    %248 = vector.broadcast %cst_231 : f32 to vector<8x256xf32>
    %249 = arith.maximumf %247, %248 : vector<8x256xf32>
    %c0_232 = arith.constant 0 : index
    %c0_233 = arith.constant 0 : index
    %250 = vector.load %arg24[%c0_232, %c0_233] : memref<4x8xf32, #tpu.memory_space<vmem>>, vector<4x8xf32>
    %cst_234 = arith.constant dense<0.000000e+00> : vector<4x256xf32>
    %251 = tpu.matmul %250, %249, %cst_234 {dimension_numbers = #tpu.dot_dimension_numbers<[1], [0], [0], [1], [0, 0, 1, 1], [], []>} : vector<4x8xf32>, vector<8x256xf32>, vector<4x256xf32> -> vector<4x256xf32>
    %c0_235 = arith.constant 0 : index
    %c0_236 = arith.constant 0 : index
    %252 = vector.load %arg25[%c0_235, %c0_236] : memref<256x128xf32, #tpu.memory_space<vmem>>, vector<256x128xf32>
    %cst_237 = arith.constant dense<0.000000e+00> : vector<4x128xf32>
    %253 = tpu.matmul %251, %252, %cst_237 {dimension_numbers = #tpu.dot_dimension_numbers<[1], [0], [0], [1], [0, 0, 1, 1], [], []>} : vector<4x256xf32>, vector<256x128xf32>, vector<4x128xf32> -> vector<4x128xf32>
    %c0_238 = arith.constant 0 : index
    %c0_239 = arith.constant 0 : index
    %254 = vector.load %arg26[%c0_238, %c0_239] : memref<128x256xf32, #tpu.memory_space<vmem>>, vector<128x256xf32>
    %cst_240 = arith.constant dense<0.000000e+00> : vector<4x256xf32>
    %255 = tpu.matmul %253, %254, %cst_240 {dimension_numbers = #tpu.dot_dimension_numbers<[1], [0], [0], [1], [0, 0, 1, 1], [], []>} : vector<4x128xf32>, vector<128x256xf32>, vector<4x256xf32> -> vector<4x256xf32>
    %cst_241 = arith.constant dense<0.000000e+00> : vector<256xf32>
    %256 = vector.multi_reduction <add>, %255, %cst_241 [0] : vector<4x256xf32> to vector<256xf32>
    %257 = vector.shape_cast %256 : vector<256xf32> to vector<1x256xf32>
    %258 = arith.mulf %255, %255 : vector<4x256xf32>
    %cst_242 = arith.constant dense<0.000000e+00> : vector<256xf32>
    %259 = vector.multi_reduction <add>, %258, %cst_242 [0] : vector<4x256xf32> to vector<256xf32>
    %260 = vector.shape_cast %259 : vector<256xf32> to vector<1x256xf32>
    %c0_243 = arith.constant 0 : index
    %c0_244 = arith.constant 0 : index
    %261 = vector.load %arg28[%c0_243, %c0_244] : memref<256x128xf32, #tpu.memory_space<vmem>>, vector<256x128xf32>
    %cst_245 = arith.constant dense<0.000000e+00> : vector<1x128xf32>
    %262 = tpu.matmul %257, %261, %cst_245 {dimension_numbers = #tpu.dot_dimension_numbers<[1], [0], [0], [1], [0, 0, 1, 1], [], []>} : vector<1x256xf32>, vector<256x128xf32>, vector<1x128xf32> -> vector<1x128xf32>
    %cst_246 = arith.constant 1.250000e-01 : f32
    %263 = vector.broadcast %cst_246 : f32 to vector<1x128xf32>
    %264 = arith.mulf %262, %263 : vector<1x128xf32>
    %c0_247 = arith.constant 0 : index
    %c0_248 = arith.constant 0 : index
    %265 = vector.load %arg28[%c0_247, %c0_248] : memref<256x128xf32, #tpu.memory_space<vmem>>, vector<256x128xf32>
    %cst_249 = arith.constant dense<0.000000e+00> : vector<1x128xf32>
    %266 = tpu.matmul %260, %265, %cst_249 {dimension_numbers = #tpu.dot_dimension_numbers<[1], [0], [0], [1], [0, 0, 1, 1], [], []>} : vector<1x256xf32>, vector<256x128xf32>, vector<1x128xf32> -> vector<1x128xf32>
    %cst_250 = arith.constant 1.250000e-01 : f32
    %267 = vector.broadcast %cst_250 : f32 to vector<1x128xf32>
    %268 = arith.mulf %266, %267 : vector<1x128xf32>
    %269 = arith.mulf %264, %264 : vector<1x128xf32>
    %270 = arith.subf %268, %269 : vector<1x128xf32>
    %c0_251 = arith.constant 0 : index
    %c0_252 = arith.constant 0 : index
    %271 = vector.load %arg27[%c0_251, %c0_252] : memref<2x128xf32, #tpu.memory_space<vmem>>, vector<1x128xf32>
    %cst_253 = arith.constant 9.99999974E-6 : f32
    %272 = vector.broadcast %cst_253 : f32 to vector<1x128xf32>
    %273 = arith.addf %270, %272 : vector<1x128xf32>
    %274 = math.rsqrt %273 : vector<1x128xf32>
    %275 = arith.mulf %271, %274 : vector<1x128xf32>
    %c1_254 = arith.constant 1 : index
    %c0_255 = arith.constant 0 : index
    %276 = vector.load %arg27[%c1_254, %c0_255] : memref<2x128xf32, #tpu.memory_space<vmem>>, vector<1x128xf32>
    %277 = arith.mulf %264, %275 : vector<1x128xf32>
    %278 = arith.subf %276, %277 : vector<1x128xf32>
    %c0_256 = arith.constant 0 : index
    %c0_257 = arith.constant 0 : index
    %279 = vector.load %arg29[%c0_256, %c0_257] : memref<128x256xf32, #tpu.memory_space<vmem>>, vector<128x256xf32>
    %cst_258 = arith.constant dense<0.000000e+00> : vector<1x256xf32>
    %280 = tpu.matmul %275, %279, %cst_258 {dimension_numbers = #tpu.dot_dimension_numbers<[1], [0], [0], [1], [0, 0, 1, 1], [], []>} : vector<1x128xf32>, vector<128x256xf32>, vector<1x256xf32> -> vector<1x256xf32>
    %281 = vector.broadcast %280 : vector<1x256xf32> to vector<4x256xf32>
    %282 = arith.mulf %255, %281 : vector<4x256xf32>
    %c0_259 = arith.constant 0 : index
    %c0_260 = arith.constant 0 : index
    %283 = vector.load %arg29[%c0_259, %c0_260] : memref<128x256xf32, #tpu.memory_space<vmem>>, vector<128x256xf32>
    %cst_261 = arith.constant dense<0.000000e+00> : vector<1x256xf32>
    %284 = tpu.matmul %278, %283, %cst_261 {dimension_numbers = #tpu.dot_dimension_numbers<[1], [0], [0], [1], [0, 0, 1, 1], [], []>} : vector<1x128xf32>, vector<128x256xf32>, vector<1x256xf32> -> vector<1x256xf32>
    %285 = vector.broadcast %284 : vector<1x256xf32> to vector<4x256xf32>
    %286 = arith.addf %282, %285 : vector<4x256xf32>
    %cst_262 = arith.constant 0.000000e+00 : f32
    %287 = vector.broadcast %cst_262 : f32 to vector<4x256xf32>
    %288 = arith.maximumf %286, %287 : vector<4x256xf32>
    %c0_263 = arith.constant 0 : index
    %c0_264 = arith.constant 0 : index
    %289 = vector.load %arg30[%c0_263, %c0_264] : memref<2x4xf32, #tpu.memory_space<vmem>>, vector<2x4xf32>
    %cst_265 = arith.constant dense<0.000000e+00> : vector<2x256xf32>
    %290 = tpu.matmul %289, %288, %cst_265 {dimension_numbers = #tpu.dot_dimension_numbers<[1], [0], [0], [1], [0, 0, 1, 1], [], []>} : vector<2x4xf32>, vector<4x256xf32>, vector<2x256xf32> -> vector<2x256xf32>
    %c0_266 = arith.constant 0 : index
    %c0_267 = arith.constant 0 : index
    %291 = vector.load %arg28[%c0_266, %c0_267] : memref<256x128xf32, #tpu.memory_space<vmem>>, vector<256x128xf32>
    %cst_268 = arith.constant dense<0.000000e+00> : vector<2x128xf32>
    %292 = tpu.matmul %290, %291, %cst_268 {dimension_numbers = #tpu.dot_dimension_numbers<[1], [0], [0], [1], [0, 0, 1, 1], [], []>} : vector<2x256xf32>, vector<256x128xf32>, vector<2x128xf32> -> vector<2x128xf32>
    %c0_269 = arith.constant 0 : index
    %c0_270 = arith.constant 0 : index
    %293 = vector.load %arg31[%c0_269, %c0_270] : memref<128x2xf32, #tpu.memory_space<vmem>>, vector<128x2xf32>
    %cst_271 = arith.constant dense<0.000000e+00> : vector<2x2xf32>
    %294 = tpu.matmul %292, %293, %cst_271 {dimension_numbers = #tpu.dot_dimension_numbers<[1], [0], [0], [1], [0, 0, 1, 1], [], []>} : vector<2x128xf32>, vector<128x2xf32>, vector<2x2xf32> -> vector<2x2xf32>
    %c0_272 = arith.constant 0 : index
    %c0_273 = arith.constant 0 : index
    %295 = vector.load %arg32[%c0_272, %c0_273] : memref<1x2xf32, #tpu.memory_space<vmem>>, vector<1x2xf32>
    %296 = vector.broadcast %295 : vector<1x2xf32> to vector<2x2xf32>
    %297 = arith.addf %294, %296 : vector<2x2xf32>
    %c0_274 = arith.constant 0 : index
    %c0_275 = arith.constant 0 : index
    %298 = vector.load %arg33[%c0_274, %c0_275] : memref<2x2xf32, #tpu.memory_space<vmem>>, vector<2x2xf32>
    tpu.vector_store %arg33[%c0_274, %c0_275], %297 {strides = array<i32>} : memref<2x2xf32, #tpu.memory_space<vmem>>, vector<2x2xf32>,
    return
  }
}

</mosaic_0001>

<llo_original>
// kernel: xunet_forward.1
$region0: #{xunet_forward.1}
  #allocation0 [shape = 'u32[]', space=smem, size = 0x4, offset = 0x4, fixed_abs, tag = 'smem constant byte address 0x4 - core index']
  #allocation1 [shape = 'u32[144,128]{1,0:T(1,128)}', space=vmem, size = 0x12000, scoped, tag = 'internal scratch']
  #allocation2 [shape = 'f32[2,36,32]{2,1,0:T(8,128)}', space=vmem, size = 0xa000, scoped, tag = 'scratch operand']
  #allocation3 [shape = 'f32[2,20,128]{2,1,0:T(8,128)}', space=vmem, size = 0x6000, scoped, tag = 'scratch operand']
  %s0 = inlined_call_operand.smem [shape: u32[34], index: -1, kind: input, shape index: {}]
  %s1 = sld [smem:[%s0]]
  %s2 = scalar_lea.smem %s0, 1
  %s3 = sld [smem:[%s2]]
  %s4 = scalar_lea.smem %s0, 2
  %s5 = sld [smem:[%s4]]
  %s6 = scalar_lea.smem %s0, 3
  %s7 = sld [smem:[%s6]]
  %s8 = scalar_lea.smem %s0, 4
  %s9 = sld [smem:[%s8]]
  %s10 = scalar_lea.smem %s0, 5
  %s11 = sld [smem:[%s10]]
  %s12 = scalar_lea.smem %s0, 6
  %s13 = sld [smem:[%s12]]
  %s14 = scalar_lea.smem %s0, 7
  %s15 = sld [smem:[%s14]]
  %s16 = scalar_lea.smem %s0, 8
  %s17 = sld [smem:[%s16]]
  %s18 = scalar_lea.smem %s0, 9
  %s19 = sld [smem:[%s18]]
  %s20 = scalar_lea.smem %s0, 10
  %s21 = sld [smem:[%s20]]
  %s22 = scalar_lea.smem %s0, 11
  %s23 = sld [smem:[%s22]]
  %s24 = scalar_lea.smem %s0, 12
  %s25 = sld [smem:[%s24]]
  %s26 = scalar_lea.smem %s0, 13
  %s27 = sld [smem:[%s26]]
  %s28 = scalar_lea.smem %s0, 14
  %s29 = sld [smem:[%s28]]
  %s30 = scalar_lea.smem %s0, 15
  %s31 = sld [smem:[%s30]]
  %s32 = scalar_lea.smem %s0, 16
  %s33 = sld [smem:[%s32]]
  %s34 = scalar_lea.smem %s0, 17
  %s35 = sld [smem:[%s34]]
  %s36 = scalar_lea.smem %s0, 18
  %s37 = sld [smem:[%s36]]
  %s38 = scalar_lea.smem %s0, 19
  %s39 = sld [smem:[%s38]]
  %s40 = scalar_lea.smem %s0, 20
  %s41 = sld [smem:[%s40]]
  %s42 = scalar_lea.smem %s0, 21
  %s43 = sld [smem:[%s42]]
  %s44 = scalar_lea.smem %s0, 22
  %s45 = sld [smem:[%s44]]
  %s46 = scalar_lea.smem %s0, 23
  %s47 = sld [smem:[%s46]]
  %s48 = scalar_lea.smem %s0, 24
  %s49 = sld [smem:[%s48]]
  %s50 = scalar_lea.smem %s0, 25
  %s51 = sld [smem:[%s50]]
  %s52 = scalar_lea.smem %s0, 26
  %s53 = sld [smem:[%s52]]
  %s54 = scalar_lea.smem %s0, 27
  %s55 = sld [smem:[%s54]]
  %s56 = scalar_lea.smem %s0, 28
  %s57 = sld [smem:[%s56]]
  %s58 = scalar_lea.smem %s0, 29
  %s59 = sld [smem:[%s58]]
  %s60 = scalar_lea.smem %s0, 30
  %s61 = sld [smem:[%s60]]
  %s62 = scalar_lea.smem %s0, 31
  %s63 = sld [smem:[%s62]]
  %s64 = scalar_lea.smem %s0, 32
  %s65 = sld [smem:[%s64]]
  %s66 = scalar_lea.smem %s0, 33
  %s67 = sld [smem:[%s66]]
  %s68 = sld [smem:[#allocation0]]
  $region142: #{xunet_forward.1} parent=0
    _
  %s70 = ssub.s32 1, %s68
  %s71 = scalar_select 0, %s70, %s68
  $region1: #{xunet_forward.1} parent=0
    #allocation4 [shape = 'u8[1024]{0}', space=vmem, size = 0x400, scoped, tag = 'output window, operand 0, single buffered']
    #allocation5 [shape = 's32[1]{0}', space=sflag, size = 0x4, scoped, tag = 'scoped memory for xunet_forward.1']
    %72 = vsyncpa [#allocation5], 0
    // Predicated region
    $region2: #{xunet_forward.1} parent=1 // pred_check
      _
    $region3: #{xunet_forward.1} parent=1 // pred_check_branch
      %74 = sbr.rel (0) target = $region5
    $region4: #{xunet_forward.1} parent=1 // pred_region
      _
    $region5: #{xunet_forward.1} parent=1 // pred_fallthru
      _
    // Predicated region
    $region6: #{xunet_forward.1} parent=1 // pred_check
      _
    $region7: #{xunet_forward.1} parent=1 // pred_check_branch
      %76 = sbr.rel (0) target = $region9
    $region8: #{xunet_forward.1} parent=1 // pred_region
      _
    $region9: #{xunet_forward.1} parent=1 // pred_fallthru
      _
    // Predicated region
    $region10: #{xunet_forward.1} parent=1 // pred_check
      _
    $region11: #{xunet_forward.1} parent=1 // pred_check_branch
      %78 = sbr.rel (0) target = $region13
    $region12: #{xunet_forward.1} parent=1 // pred_region
      _
    $region13: #{xunet_forward.1} parent=1 // pred_fallthru
      _
    // Predicated region
    $region14: #{xunet_forward.1} parent=1 // pred_check
      _
    $region15: #{xunet_forward.1} parent=1 // pred_check_branch
      %80 = sbr.rel (0) target = $region17
    $region16: #{xunet_forward.1} parent=1 // pred_region
      _
    $region17: #{xunet_forward.1} parent=1 // pred_fallthru
      _
    // Predicated region
    $region18: #{xunet_forward.1} parent=1 // pred_check
      _
    $region19: #{xunet_forward.1} parent=1 // pred_check_branch
      %82 = sbr.rel (0) target = $region21
    $region20: #{xunet_forward.1} parent=1 // pred_region
      _
    $region21: #{xunet_forward.1} parent=1 // pred_fallthru
      _
    // Predicated region
    $region22: #{xunet_forward.1} parent=1 // pred_check
      _
    $region23: #{xunet_forward.1} parent=1 // pred_check_branch
      %84 = sbr.rel (0) target = $region25
    $region24: #{xunet_forward.1} parent=1 // pred_region
      _
    $region25: #{xunet_forward.1} parent=1 // pred_fallthru
      _
    // Predicated region
    $region26: #{xunet_forward.1} parent=1 // pred_check
      _
    $region27: #{xunet_forward.1} parent=1 // pred_check_branch
      %86 = sbr.rel (0) target = $region29
    $region28: #{xunet_forward.1} parent=1 // pred_region
      _
    $region29: #{xunet_forward.1} parent=1 // pred_fallthru
      _
    // Predicated region
    $region30: #{xunet_forward.1} parent=1 // pred_check
      _
    $region31: #{xunet_forward.1} parent=1 // pred_check_branch
      %88 = sbr.rel (0) target = $region33
    $region32: #{xunet_forward.1} parent=1 // pred_region
      _
    $region33: #{xunet_forward.1} parent=1 // pred_fallthru
      _
    // Predicated region
    $region34: #{xunet_forward.1} parent=1 // pred_check
      _
    $region35: #{xunet_forward.1} parent=1 // pred_check_branch
      %90 = sbr.rel (0) target = $region37
    $region36: #{xunet_forward.1} parent=1 // pred_region
      _
    $region37: #{xunet_forward.1} parent=1 // pred_fallthru
      _
    // Predicated region
    $region38: #{xunet_forward.1} parent=1 // pred_check
      _
    $region39: #{xunet_forward.1} parent=1 // pred_check_branch
      %92 = sbr.rel (0) target = $region41
    $region40: #{xunet_forward.1} parent=1 // pred_region
      _
    $region41: #{xunet_forward.1} parent=1 // pred_fallthru
      _
    // Predicated region
    $region42: #{xunet_forward.1} parent=1 // pred_check
      _
    $region43: #{xunet_forward.1} parent=1 // pred_check_branch
      %94 = sbr.rel (0) target = $region45
    $region44: #{xunet_forward.1} parent=1 // pred_region
      _
    $region45: #{xunet_forward.1} parent=1 // pred_fallthru
      _
    // Predicated region
    $region46: #{xunet_forward.1} parent=1 // pred_check
      _
    $region47: #{xunet_forward.1} parent=1 // pred_check_branch
      %96 = sbr.rel (0) target = $region49
    $region48: #{xunet_forward.1} parent=1 // pred_region
      _
    $region49: #{xunet_forward.1} parent=1 // pred_fallthru
      _
    // Predicated region
    $region50: #{xunet_forward.1} parent=1 // pred_check
      _
    $region51: #{xunet_forward.1} parent=1 // pred_check_branch
      %98 = sbr.rel (0) target = $region53
    $region52: #{xunet_forward.1} parent=1 // pred_region
      _
    $region53: #{xunet_forward.1} parent=1 // pred_fallthru
      _
    // Predicated region
    $region54: #{xunet_forward.1} parent=1 // pred_check
      _
    $region55: #{xunet_forward.1} parent=1 // pred_check_branch
      %100 = sbr.rel (0) target = $region57
    $region56: #{xunet_forward.1} parent=1 // pred_region
      _
    $region57: #{xunet_forward.1} parent=1 // pred_fallthru
      _
    // Predicated region
    $region58: #{xunet_forward.1} parent=1 // pred_check
      _
    $region59: #{xunet_forward.1} parent=1 // pred_check_branch
      %102 = sbr.rel (0) target = $region61
    $region60: #{xunet_forward.1} parent=1 // pred_region
      _
    $region61: #{xunet_forward.1} parent=1 // pred_fallthru
      _
    // Predicated region
    $region62: #{xunet_forward.1} parent=1 // pred_check
      _
    $region63: #{xunet_forward.1} parent=1 // pred_check_branch
      %104 = sbr.rel (0) target = $region65
    $region64: #{xunet_forward.1} parent=1 // pred_region
      _
    $region65: #{xunet_forward.1} parent=1 // pred_fallthru
      _
    // Predicated region
    $region66: #{xunet_forward.1} parent=1 // pred_check
      _
    $region67: #{xunet_forward.1} parent=1 // pred_check_branch
      %106 = sbr.rel (0) target = $region69
    $region68: #{xunet_forward.1} parent=1 // pred_region
      _
    $region69: #{xunet_forward.1} parent=1 // pred_fallthru
      _
    // Predicated region
    $region70: #{xunet_forward.1} parent=1 // pred_check
      _
    $region71: #{xunet_forward.1} parent=1 // pred_check_branch
      %108 = sbr.rel (0) target = $region73
    $region72: #{xunet_forward.1} parent=1 // pred_region
      _
    $region73: #{xunet_forward.1} parent=1 // pred_fallthru
      _
    // Predicated region
    $region74: #{xunet_forward.1} parent=1 // pred_check
      _
    $region75: #{xunet_forward.1} parent=1 // pred_check_branch
      %110 = sbr.rel (0) target = $region77
    $region76: #{xunet_forward.1} parent=1 // pred_region
      _
    $region77: #{xunet_forward.1} parent=1 // pred_fallthru
      _
    // Predicated region
    $region78: #{xunet_forward.1} parent=1 // pred_check
      _
    $region79: #{xunet_forward.1} parent=1 // pred_check_branch
      %112 = sbr.rel (0) target = $region81
    $region80: #{xunet_forward.1} parent=1 // pred_region
      _
    $region81: #{xunet_forward.1} parent=1 // pred_fallthru
      _
    // Predicated region
    $region82: #{xunet_forward.1} parent=1 // pred_check
      _
    $region83: #{xunet_forward.1} parent=1 // pred_check_branch
      %114 = sbr.rel (0) target = $region85
    $region84: #{xunet_forward.1} parent=1 // pred_region
      _
    $region85: #{xunet_forward.1} parent=1 // pred_fallthru
      _
    // Predicated region
    $region86: #{xunet_forward.1} parent=1 // pred_check
      _
    $region87: #{xunet_forward.1} parent=1 // pred_check_branch
      %116 = sbr.rel (0) target = $region89
    $region88: #{xunet_forward.1} parent=1 // pred_region
      _
    $region89: #{xunet_forward.1} parent=1 // pred_fallthru
      _
    // Predicated region
    $region90: #{xunet_forward.1} parent=1 // pred_check
      _
    $region91: #{xunet_forward.1} parent=1 // pred_check_branch
      %118 = sbr.rel (0) target = $region93
    $region92: #{xunet_forward.1} parent=1 // pred_region
      _
    $region93: #{xunet_forward.1} parent=1 // pred_fallthru
      _
    // Predicated region
    $region94: #{xunet_forward.1} parent=1 // pred_check
      _
    $region95: #{xunet_forward.1} parent=1 // pred_check_branch
      %120 = sbr.rel (0) target = $region97
    $region96: #{xunet_forward.1} parent=1 // pred_region
      _
    $region97: #{xunet_forward.1} parent=1 // pred_fallthru
      _
    // Predicated region
    $region98: #{xunet_forward.1} parent=1 // pred_check
      _
    $region99: #{xunet_forward.1} parent=1 // pred_check_branch
      %122 = sbr.rel (0) target = $region101
    $region100: #{xunet_forward.1} parent=1 // pred_region
      _
    $region101: #{xunet_forward.1} parent=1 // pred_fallthru
      _
    // Predicated region
    $region102: #{xunet_forward.1} parent=1 // pred_check
      _
    $region103: #{xunet_forward.1} parent=1 // pred_check_branch
      %124 = sbr.rel (0) target = $region105
    $region104: #{xunet_forward.1} parent=1 // pred_region
      _
    $region105: #{xunet_forward.1} parent=1 // pred_fallthru
      _
    // Predicated region
    $region106: #{xunet_forward.1} parent=1 // pred_check
      _
    $region107: #{xunet_forward.1} parent=1 // pred_check_branch
      %126 = sbr.rel (0) target = $region109
    $region108: #{xunet_forward.1} parent=1 // pred_region
      _
    $region109: #{xunet_forward.1} parent=1 // pred_fallthru
      _
    // Predicated region
    $region110: #{xunet_forward.1} parent=1 // pred_check
      _
    $region111: #{xunet_forward.1} parent=1 // pred_check_branch
      %128 = sbr.rel (0) target = $region113
    $region112: #{xunet_forward.1} parent=1 // pred_region
      _
    $region113: #{xunet_forward.1} parent=1 // pred_fallthru
      _
    // Predicated region
    $region114: #{xunet_forward.1} parent=1 // pred_check
      _
    $region115: #{xunet_forward.1} parent=1 // pred_check_branch
      %130 = sbr.rel (0) target = $region117
    $region116: #{xunet_forward.1} parent=1 // pred_region
      _
    $region117: #{xunet_forward.1} parent=1 // pred_fallthru
      _
    // Predicated region
    $region118: #{xunet_forward.1} parent=1 // pred_check
      _
    $region119: #{xunet_forward.1} parent=1 // pred_check_branch
      %132 = sbr.rel (0) target = $region121
    $region120: #{xunet_forward.1} parent=1 // pred_region
      _
    $region121: #{xunet_forward.1} parent=1 // pred_fallthru
      _
    // Predicated region
    $region122: #{xunet_forward.1} parent=1 // pred_check
      _
    $region123: #{xunet_forward.1} parent=1 // pred_check_branch
      %134 = sbr.rel (0) target = $region125
    $region124: #{xunet_forward.1} parent=1 // pred_region
      _
    $region125: #{xunet_forward.1} parent=1 // pred_fallthru
      _
    // Predicated region
    $region126: #{xunet_forward.1} parent=1 // pred_check
      _
    $region127: #{xunet_forward.1} parent=1 // pred_check_branch
      %136 = sbr.rel (0) target = $region129
    $region128: #{xunet_forward.1} parent=1 // pred_region
      _
    $region129: #{xunet_forward.1} parent=1 // pred_fallthru
      _
    // Predicated region
    $region130: #{xunet_forward.1} parent=1 // pred_check
      _
    $region131: #{xunet_forward.1} parent=1 // pred_check_branch
      %138 = sbr.rel (0) target = $region133
    $region132: #{xunet_forward.1} parent=1 // pred_region
      _
    $region133: #{xunet_forward.1} parent=1 // pred_fallthru
      _
    %vm139 = vcmask 261120
    %140 = vst.msk [vmem:[#allocation2] sm:$0xff] %vm139, 0.0
    %141 = vst.msk [vmem:[#allocation2 + $0x8] sm:$0xff] %vm139, 0.0
    %142 = vst.msk [vmem:[#allocation2 + $0x10] sm:$0xff] %vm139, 0.0
    %143 = vst.msk [vmem:[#allocation2 + $0x18] sm:$0xff] %vm139, 0.0
    %vm144 = vcmask 257024
    %145 = vst.msk [vmem:[#allocation2 + $0x20] sm:$0xf] %vm144, 0.0
    %146 = vst.msk [vmem:[#allocation2 + $0x28] sm:$0xff] %vm139, 0.0
    %147 = vst.msk [vmem:[#allocation2 + $0x30] sm:$0xff] %vm139, 0.0
    %148 = vst.msk [vmem:[#allocation2 + $0x38] sm:$0xff] %vm139, 0.0
    %149 = vst.msk [vmem:[#allocation2 + $0x40] sm:$0xff] %vm139, 0.0
    %150 = vst.msk [vmem:[#allocation2 + $0x48] sm:$0xf] %vm144, 0.0
    %v151 = vld [vmem:[%s1] sm:$0xff]
    %v152 = vld [vmem:[%s1 + $0x8] sm:$0xff]
    %v153 = vld [vmem:[%s1 + $0x10] sm:$0xff]
    %v154 = vld [vmem:[%s1 + $0x18] sm:$0xff]
    %v155 = vld [vmem:[%s1 + $0x20] sm:$0xff]
    %v156 = vld [vmem:[%s1 + $0x28] sm:$0xff]
    %v157 = vld [vmem:[%s1 + $0x30] sm:$0xff]
    %v158 = vld [vmem:[%s1 + $0x38] sm:$0xff]
    %159 = vst.msk [vmem:[#allocation2 + $0x2] sm:$0xff] %vm139, %v151
    %160 = vst.msk [vmem:[#allocation2 + $0xa] sm:$0xff] %vm139, %v152
    %161 = vst.msk [vmem:[#allocation2 + $0x12] sm:$0xff] %vm139, %v153
    %162 = vst.msk [vmem:[#allocation2 + $0x1a] sm:$0xff] %vm139, %v154
    %163 = vst.msk [vmem:[#allocation2 + $0x2a] sm:$0xff] %vm139, %v155
    %164 = vst.msk [vmem:[#allocation2 + $0x32] sm:$0xff] %vm139, %v156
    %165 = vst.msk [vmem:[#allocation2 + $0x3a] sm:$0xff] %vm139, %v157
    %166 = vst.msk [vmem:[#allocation2 + $0x42] sm:$0xff] %vm139, %v158
    %v167 = vld [vmem:[#allocation2] sm:$0xff]
    %v168 = vld [vmem:[#allocation2 + $0x8] sm:$0xff]
    %v169 = vld [vmem:[#allocation2 + $0x10] sm:$0xff]
    %v170 = vld [vmem:[#allocation2 + $0x18] sm:$0xff]
    %v171 = vld [vmem:[#allocation2 + $0x28] sm:$0xff]
    %v172 = vld [vmem:[#allocation2 + $0x30] sm:$0xff]
    %v173 = vld [vmem:[#allocation2 + $0x38] sm:$0xff]
    %v174 = vld [vmem:[#allocation2 + $0x40] sm:$0xff]
    %v175 = vld [vmem:[%s3] sm:$0xff]
    %v176 = vld [vmem:[%s3 + $0x8] sm:$0xff]
    %v177 = vld [vmem:[%s3 + $0x10] sm:$0xff]
    %v178 = vld [vmem:[%s3 + $0x18] sm:$0xff]
    %v179 = vld [vmem:[#allocation2 + $0x1] sm:$0xff]
    %v180 = vld [vmem:[#allocation2 + $0x9] sm:$0xff]
    %v181 = vld [vmem:[#allocation2 + $0x11] sm:$0xff]
    %v182 = vld [vmem:[#allocation2 + $0x19] sm:$0xff]
    %v183 = vld [vmem:[#allocation2 + $0x29] sm:$0xff]
    %v184 = vld [vmem:[#allocation2 + $0x31] sm:$0xff]
    %v185 = vld [vmem:[#allocation2 + $0x39] sm:$0xff]
    %v186 = vld [vmem:[#allocation2 + $0x41] sm:$0xff]
    %s187 = scalar_lea.vmem %s3, 32
    %v188 = vld [vmem:[%s187] sm:$0xff]
    %v189 = vld [vmem:[%s187 + $0x8] sm:$0xff]
    %v190 = vld [vmem:[%s187 + $0x10] sm:$0xff]
    %v191 = vld [vmem:[%s187 + $0x18] sm:$0xff]
    %v193 = vsel %vm139, %v179, 0
    %v196 = vsel %vm139, %v180, 0
    %v199 = vsel %vm139, %v181, 0
    %v202 = vsel %vm139, %v182, 0
    %v205 = vsel %vm139, %v183, 0
    %v208 = vsel %vm139, %v184, 0
    %v211 = vsel %vm139, %v185, 0
    %v214 = vsel %vm139, %v186, 0
    %216 = vmatprep.subr.mxu0 0.0
    %217 = vmatpush1.msra.mxu0 %v188
    %218 = vmatprep.subr.mxu0 0.0
    %219 = vmatpush1.msra.mxu0 %v189
    %220 = vmatprep.subr.mxu0 0.0
    %221 = vmatpush1.msra.mxu0 %v190
    %222 = vmatprep.subr.mxu0 0.0
    %223 = vmatpush1.msra.mxu0 %v191
    %224 = vmatprep.subr.mxu0 0.0
    %225 = vmatpush1.msra.mxu0 0.0
    %226 = vmatprep.subr.mxu0 0.0
    %227 = vmatpush1.msra.mxu0 0.0
    %228 = vmatprep.subr.mxu0 0.0
    %229 = vmatpush1.msra.mxu0 0.0
    %230 = vmatprep.subr.mxu0 0.0
    %231 = vmatpush1.msra.mxu0 0.0
    %232 = vmatprep.subr.mxu0 0.0
    %233 = vmatpush1.msra.mxu0 0.0
    %234 = vmatprep.subr.mxu0 0.0
    %235 = vmatpush1.msra.mxu0 0.0
    %236 = vmatprep.subr.mxu0 0.0
    %237 = vmatpush1.msra.mxu0 0.0
    %238 = vmatprep.subr.mxu0 0.0
    %239 = vmatpush1.msra.mxu0 0.0
    %240 = vmatprep.subr.mxu0 0.0
    %241 = vmatpush1.msra.mxu0 0.0
    %242 = vmatprep.subr.mxu0 0.0
    %243 = vmatpush1.msra.mxu0 0.0
    %244 = vmatprep.subr.mxu0 0.0
    %245 = vmatpush1.msra.mxu0 0.0
    %246 = vmatprep.subr.mxu0 0.0
    %247 = vmatpush1.msra.mxu0 0.0
    %248 = vmatprep.subr.mxu0 0.0
    %249 = vmatpush1.msra.mxu0 0.0
    %250 = vmatprep.subr.mxu0 0.0
    %251 = vmatpush1.msra.mxu0 0.0
    %252 = vmatprep.subr.mxu0 0.0
    %253 = vmatpush1.msra.mxu0 0.0
    %254 = vmatprep.subr.mxu0 0.0
    %255 = vmatpush1.msra.mxu0 0.0
    %256 = vmatprep.subr.mxu0 0.0
    %257 = vmatpush1.msra.mxu0 0.0
    %258 = vmatprep.subr.mxu0 0.0
    %259 = vmatpush1.msra.mxu0 0.0
    %260 = vmatprep.subr.mxu0 0.0
    %261 = vmatpush1.msra.mxu0 0.0
    %262 = vmatprep.subr.mxu0 0.0
    %263 = vmatpush1.msra.mxu0 0.0
    %264 = vmatprep.subr.mxu0 0.0
    %265 = vmatpush1.msra.mxu0 0.0
    %266 = vmatprep.subr.mxu0 0.0
    %267 = vmatpush1.msra.mxu0 0.0
    %268 = vmatprep.subr.mxu0 0.0
    %269 = vmatpush1.msra.mxu0 0.0
    %270 = vmatprep.subr.mxu0 0.0
    %271 = vmatpush1.msra.mxu0 0.0
    %272 = vmatprep.subr.mxu0 0.0
    %273 = vmatpush1.msra.mxu0 0.0
    %274 = vmatprep.subr.mxu0 0.0
    %275 = vmatpush1.msra.mxu0 0.0
    %276 = vmatprep.subr.mxu0 0.0
    %277 = vmatpush1.msra.mxu0 0.0
    %278 = vmatprep.subr.mxu0 0.0
    %279 = vmatpush1.msra.mxu0 0.0
    %280 = vmatprep.mubr.f32.mxu0 0.0
    %281 = vmatmul.mubr.f32.gmra.mrb[0].mxu0 %v193
    %v282 = vpop.f32.mrb[0].mxu0
    %v283 = vadd.f32 0.0, %v282
    %v284 = vpop.f32.mrb[0].mxu0
    %285 = vmatprep.mubr.f32.mxu0 0.0
    %286 = vmatmul.mubr.f32.gmra.mrb[0].mxu0 %v196
    %v287 = vpop.f32.mrb[0].mxu0
    %v288 = vadd.f32 0.0, %v287
    %v289 = vpop.f32.mrb[0].mxu0
    %290 = vmatprep.mubr.f32.mxu0 0.0
    %291 = vmatmul.mubr.f32.gmra.mrb[0].mxu0 %v199
    %v292 = vpop.f32.mrb[0].mxu0
    %v293 = vadd.f32 0.0, %v292
    %v294 = vpop.f32.mrb[0].mxu0
    %295 = vmatprep.mubr.f32.mxu0 0.0
    %296 = vmatmul.mubr.f32.gmra.mrb[0].mxu0 %v202
    %v297 = vpop.f32.mrb[0].mxu0
    %v298 = vadd.f32 0.0, %v297
    %v299 = vpop.f32.mrb[0].mxu0
    %300 = vmatprep.mubr.f32.mxu0 0.0
    %301 = vmatmul.mubr.f32.gmra.mrb[0].mxu0 %v205
    %v302 = vpop.f32.mrb[0].mxu0
    %v303 = vadd.f32 0.0, %v302
    %v304 = vpop.f32.mrb[0].mxu0
    %305 = vmatprep.mubr.f32.mxu0 0.0
    %306 = vmatmul.mubr.f32.gmra.mrb[0].mxu0 %v208
    %v307 = vpop.f32.mrb[0].mxu0
    %v308 = vadd.f32 0.0, %v307
    %v309 = vpop.f32.mrb[0].mxu0
    %310 = vmatprep.mubr.f32.mxu0 0.0
    %311 = vmatmul.mubr.f32.gmra.mrb[0].mxu0 %v211
    %v312 = vpop.f32.mrb[0].mxu0
    %v313 = vadd.f32 0.0, %v312
    %v314 = vpop.f32.mrb[0].mxu0
    %315 = vmatprep.mubr.f32.mxu0 0.0
    %316 = vmatmul.mubr.f32.gmra.mrb[0].mxu0 %v214
    %v317 = vpop.f32.mrb[0].mxu0
    %v318 = vadd.f32 0.0, %v317
    %v319 = vpop.f32.mrb[0].mxu0
    %320 = vdwg.mxu0
    %v322 = vsel %vm139, %v167, 0
    %v325 = vsel %vm139, %v168, 0
    %v328 = vsel %vm139, %v169, 0
    %v331 = vsel %vm139, %v170, 0
    %v334 = vsel %vm139, %v171, 0
    %v337 = vsel %vm139, %v172, 0
    %v340 = vsel %vm139, %v173, 0
    %v343 = vsel %vm139, %v174, 0
    %345 = vmatprep.subr.mxu0 0.0
    %346 = vmatpush1.msra.mxu0 %v175
    %347 = vmatprep.subr.mxu0 0.0
    %348 = vmatpush1.msra.mxu0 %v176
    %349 = vmatprep.subr.mxu0 0.0
    %350 = vmatpush1.msra.mxu0 %v177
    %351 = vmatprep.subr.mxu0 0.0
    %352 = vmatpush1.msra.mxu0 %v178
    %353 = vmatprep.subr.mxu0 0.0
    %354 = vmatpush1.msra.mxu0 0.0
    %355 = vmatprep.subr.mxu0 0.0
    %356 = vmatpush1.msra.mxu0 0.0
    %357 = vmatprep.subr.mxu0 0.0
    %358 = vmatpush1.msra.mxu0 0.0
    %359 = vmatprep.subr.mxu0 0.0
    %360 = vmatpush1.msra.mxu0 0.0
    %361 = vmatprep.subr.mxu0 0.0
    %362 = vmatpush1.msra.mxu0 0.0
    %363 = vmatprep.subr.mxu0 0.0
    %364 = vmatpush1.msra.mxu0 0.0
    %365 = vmatprep.subr.mxu0 0.0
    %366 = vmatpush1.msra.mxu0 0.0
    %367 = vmatprep.subr.mxu0 0.0
    %368 = vmatpush1.msra.mxu0 0.0
    %369 = vmatprep.subr.mxu0 0.0
    %370 = vmatpush1.msra.mxu0 0.0
    %371 = vmatprep.subr.mxu0 0.0
    %372 = vmatpush1.msra.mxu0 0.0
    %373 = vmatprep.subr.mxu0 0.0
    %374 = vmatpush1.msra.mxu0 0.0
    %375 = vmatprep.subr.mxu0 0.0
    %376 = vmatpush1.msra.mxu0 0.0
    %377 = vmatprep.subr.mxu0 0.0
    %378 = vmatpush1.msra.mxu0 0.0
    %379 = vmatprep.subr.mxu0 0.0
    %380 = vmatpush1.msra.mxu0 0.0
    %381 = vmatprep.subr.mxu0 0.0
    %382 = vmatpush1.msra.mxu0 0.0
    %383 = vmatprep.subr.mxu0 0.0
    %384 = vmatpush1.msra.mxu0 0.0
    %385 = vmatprep.subr.mxu0 0.0
    %386 = vmatpush1.msra.mxu0 0.0
    %387 = vmatprep.subr.mxu0 0.0
    %388 = vmatpush1.msra.mxu0 0.0
    %389 = vmatprep.subr.mxu0 0.0
    %390 = vmatpush1.msra.mxu0 0.0
    %391 = vmatprep.subr.mxu0 0.0
    %392 = vmatpush1.msra.mxu0 0.0
    %393 = vmatprep.subr.mxu0 0.0
    %394 = vmatpush1.msra.mxu0 0.0
    %395 = vmatprep.subr.mxu0 0.0
    %396 = vmatpush1.msra.mxu0 0.0
    %397 = vmatprep.subr.mxu0 0.0
    %398 = vmatpush1.msra.mxu0 0.0
    %399 = vmatprep.subr.mxu0 0.0
    %400 = vmatpush1.msra.mxu0 0.0
    %401 = vmatprep.subr.mxu0 0.0
    %402 = vmatpush1.msra.mxu0 0.0
    %403 = vmatprep.subr.mxu0 0.0
    %404 = vmatpush1.msra.mxu0 0.0
    %405 = vmatprep.subr.mxu0 0.0
    %406 = vmatpush1.msra.mxu0 0.0
    %407 = vmatprep.subr.mxu0 0.0
    %408 = vmatpush1.msra.mxu0 0.0
    %409 = vmatprep.mubr.f32.mxu0 0.0
    %410 = vmatmul.mubr.f32.gmra.mrb[0].mxu0 %v322
    %v411 = vpop.f32.mrb[0].mxu0
    %v412 = vadd.f32 %v283, %v411
    %v413 = vpop.f32.mrb[0].mxu0
    %414 = vmatprep.mubr.f32.mxu0 0.0
    %415 = vmatmul.mubr.f32.gmra.mrb[0].mxu0 %v325
    %v416 = vpop.f32.mrb[0].mxu0
    %v417 = vadd.f32 %v288, %v416
    %v418 = vpop.f32.mrb[0].mxu0
    %419 = vmatprep.mubr.f32.mxu0 0.0
    %420 = vmatmul.mubr.f32.gmra.mrb[0].mxu0 %v328
    %v421 = vpop.f32.mrb[0].mxu0
    %v422 = vadd.f32 %v293, %v421
    %v423 = vpop.f32.mrb[0].mxu0
    %424 = vmatprep.mubr.f32.mxu0 0.0
    %425 = vmatmul.mubr.f32.gmra.mrb[0].mxu0 %v331
    %v426 = vpop.f32.mrb[0].mxu0
    %v427 = vadd.f32 %v298, %v426
    %v428 = vpop.f32.mrb[0].mxu0
    %429 = vmatprep.mubr.f32.mxu0 0.0
    %430 = vmatmul.mubr.f32.gmra.mrb[0].mxu0 %v334
    %v431 = vpop.f32.mrb[0].mxu0
    %v432 = vadd.f32 %v303, %v431
    %v433 = vpop.f32.mrb[0].mxu0
    %434 = vmatprep.mubr.f32.mxu0 0.0
    %435 = vmatmul.mubr.f32.gmra.mrb[0].mxu0 %v337
    %v436 = vpop.f32.mrb[0].mxu0
    %v437 = vadd.f32 %v308, %v436
    %v438 = vpop.f32.mrb[0].mxu0
    %439 = vmatprep.mubr.f32.mxu0 0.0
    %440 = vmatmul.mubr.f32.gmra.mrb[0].mxu0 %v340
    %v441 = vpop.f32.mrb[0].mxu0
    %v442 = vadd.f32 %v313, %v441
    %v443 = vpop.f32.mrb[0].mxu0
    %444 = vmatprep.mubr.f32.mxu0 0.0
    %445 = vmatmul.mubr.f32.gmra.mrb[0].mxu0 %v343
    %v446 = vpop.f32.mrb[0].mxu0
    %v447 = vadd.f32 %v318, %v446
    %v448 = vpop.f32.mrb[0].mxu0
    %449 = vdwg.mxu0
    %v450 = vld [vmem:[#allocation2 + $0x2] sm:$0xff]
    %v451 = vld [vmem:[#allocation2 + $0xa] sm:$0xff]
    %v452 = vld [vmem:[#allocation2 + $0x12] sm:$0xff]
    %v453 = vld [vmem:[#allocation2 + $0x1a] sm:$0xff]
    %v454 = vld [vmem:[#allocation2 + $0x2a] sm:$0xff]
    %v455 = vld [vmem:[#allocation2 + $0x32] sm:$0xff]
    %v456 = vld [vmem:[#allocation2 + $0x3a] sm:$0xff]
    %v457 = vld [vmem:[#allocation2 + $0x42] sm:$0xff]
    %s458 = scalar_lea.vmem %s3, 64
    %v459 = vld [vmem:[%s458] sm:$0xff]
    %v460 = vld [vmem:[%s458 + $0x8] sm:$0xff]
    %v461 = vld [vmem:[%s458 + $0x10] sm:$0xff]
    %v462 = vld [vmem:[%s458 + $0x18] sm:$0xff]
    %v464 = vsel %vm139, %v450, 0
    %v467 = vsel %vm139, %v451, 0
    %v470 = vsel %vm139, %v452, 0
    %v473 = vsel %vm139, %v453, 0
    %v476 = vsel %vm139, %v454, 0
    %v479 = vsel %vm139, %v455, 0
    %v482 = vsel %vm139, %v456, 0
    %v485 = vsel %vm139, %v457, 0
    %487 = vmatprep.subr.mxu0 0.0
    %488 = vmatpush1.msra.mxu0 %v459
    %489 = vmatprep.subr.mxu0 0.0
    %490 = vmatpush1.msra.mxu0 %v460
    %491 = vmatprep.subr.mxu0 0.0
    %492 = vmatpush1.msra.mxu0 %v461
    %493 = vmatprep.subr.mxu0 0.0
    %494 = vmatpush1.msra.mxu0 %v462
    %495 = vmatprep.subr.mxu0 0.0
    %496 = vmatpush1.msra.mxu0 0.0
    %497 = vmatprep.subr.mxu0 0.0
    %498 = vmatpush1.msra.mxu0 0.0
    %499 = vmatprep.subr.mxu0 0.0
    %500 = vmatpush1.msra.mxu0 0.0
    %501 = vmatprep.subr.mxu0 0.0
    %502 = vmatpush1.msra.mxu0 0.0
    %503 = vmatprep.subr.mxu0 0.0
    %504 = vmatpush1.msra.mxu0 0.0
    %505 = vmatprep.subr.mxu0 0.0
    %506 = vmatpush1.msra.mxu0 0.0
    %507 = vmatprep.subr.mxu0 0.0
    %508 = vmatpush1.msra.mxu0 0.0
    %509 = vmatprep.subr.mxu0 0.0
    %510 = vmatpush1.msra.mxu0 0.0
    %511 = vmatprep.subr.mxu0 0.0
    %512 = vmatpush1.msra.mxu0 0.0
    %513 = vmatprep.subr.mxu0 0.0
    %514 = vmatpush1.msra.mxu0 0.0
    %515 = vmatprep.subr.mxu0 0.0
    %516 = vmatpush1.msra.mxu0 0.0
    %517 = vmatprep.subr.mxu0 0.0
    %518 = vmatpush1.msra.mxu0 0.0
    %519 = vmatprep.subr.mxu0 0.0
    %520 = vmatpush1.msra.mxu0 0.0
    %521 = vmatprep.subr.mxu0 0.0
    %522 = vmatpush1.msra.mxu0 0.0
    %523 = vmatprep.subr.mxu0 0.0
    %524 = vmatpush1.msra.mxu0 0.0
    %525 = vmatprep.subr.mxu0 0.0
    %526 = vmatpush1.msra.mxu0 0.0
    %527 = vmatprep.subr.mxu0 0.0
    %528 = vmatpush1.msra.mxu0 0.0
    %529 = vmatprep.subr.mxu0 0.0
    %530 = vmatpush1.msra.mxu0 0.0
    %531 = vmatprep.subr.mxu0 0.0
    %532 = vmatpush1.msra.mxu0 0.0
    %533 = vmatprep.subr.mxu0 0.0
    %534 = vmatpush1.msra.mxu0 0.0
    %535 = vmatprep.subr.mxu0 0.0
    %536 = vmatpush1.msra.mxu0 0.0
    %537 = vmatprep.subr.mxu0 0.0
    %538 = vmatpush1.msra.mxu0 0.0
    %539 = vmatprep.subr.mxu0 0.0
    %540 = vmatpush1.msra.mxu0 0.0
    %541 = vmatprep.subr.mxu0 0.0
    %542 = vmatpush1.msra.mxu0 0.0
    %543 = vmatprep.subr.mxu0 0.0
    %544 = vmatpush1.msra.mxu0 0.0
    %545 = vmatprep.subr.mxu0 0.0
    %546 = vmatpush1.msra.mxu0 0.0
    %547 = vmatprep.subr.mxu0 0.0
    %548 = vmatpush1.msra.mxu0 0.0
    %549 = vmatprep.subr.mxu0 0.0
    %550 = vmatpush1.msra.mxu0 0.0
    %551 = vmatprep.mubr.f32.mxu0 0.0
    %552 = vmatmul.mubr.f32.gmra.mrb[0].mxu0 %v464
    %v553 = vpop.f32.mrb[0].mxu0
    %v554 = vadd.f32 0.0, %v553
    %v555 = vpop.f32.mrb[0].mxu0
    %556 = vmatprep.mubr.f32.mxu0 0.0
    %557 = vmatmul.mubr.f32.gmra.mrb[0].mxu0 %v467
    %v558 = vpop.f32.mrb[0].mxu0
    %v559 = vadd.f32 0.0, %v558
    %v560 = vpop.f32.mrb[0].mxu0
    %561 = vmatprep.mubr.f32.mxu0 0.0
    %562 = vmatmul.mubr.f32.gmra.mrb[0].mxu0 %v470
    %v563 = vpop.f32.mrb[0].mxu0
    %v564 = vadd.f32 0.0, %v563
    %v565 = vpop.f32.mrb[0].mxu0
    %566 = vmatprep.mubr.f32.mxu0 0.0
    %567 = vmatmul.mubr.f32.gmra.mrb[0].mxu0 %v473
    %v568 = vpop.f32.mrb[0].mxu0
    %v569 = vadd.f32 0.0, %v568
    %v570 = vpop.f32.mrb[0].mxu0
    %571 = vmatprep.mubr.f32.mxu0 0.0
    %572 = vmatmul.mubr.f32.gmra.mrb[0].mxu0 %v476
    %v573 = vpop.f32.mrb[0].mxu0
    %v574 = vadd.f32 0.0, %v573
    %v575 = vpop.f32.mrb[0].mxu0
    %576 = vmatprep.mubr.f32.mxu0 0.0
    %577 = vmatmul.mubr.f32.gmra.mrb[0].mxu0 %v479
    %v578 = vpop.f32.mrb[0].mxu0
    %v579 = vadd.f32 0.0, %v578
    %v580 = vpop.f32.mrb[0].mxu0
    %581 = vmatprep.mubr.f32.mxu0 0.0
    %582 = vmatmul.mubr.f32.gmra.mrb[0].mxu0 %v482
    %v583 = vpop.f32.mrb[0].mxu0
    %v584 = vadd.f32 0.0, %v583
    %v585 = vpop.f32.mrb[0].mxu0
    %586 = vmatprep.mubr.f32.mxu0 0.0
    %587 = vmatmul.mubr.f32.gmra.mrb[0].mxu0 %v485
    %v588 = vpop.f32.mrb[0].mxu0
    %v589 = vadd.f32 0.0, %v588
    %v590 = vpop.f32.mrb[0].mxu0
    %591 = vdwg.mxu0
    %v592 = vadd.f32 %v412, %v554
    %v593 = vadd.f32 %v417, %v559
    %v594 = vadd.f32 %v422, %v564
    %v595 = vadd.f32 %v427, %v569
    %v596 = vadd.f32 %v432, %v574
    %v597 = vadd.f32 %v437, %v579
    %v598 = vadd.f32 %v442, %v584
    %v599 = vadd.f32 %v447, %v589
    %v600 = vld [vmem:[#allocation2 + $0x3] sm:$0xff]
    %v601 = vld [vmem:[#allocation2 + $0xb] sm:$0xff]
    %v602 = vld [vmem:[#allocation2 + $0x13] sm:$0xff]
    %v603 = vld [vmem:[#allocation2 + $0x1b] sm:$0xff]
    %v604 = vld [vmem:[#allocation2 + $0x2b] sm:$0xff]
    %v605 = vld [vmem:[#allocation2 + $0x33] sm:$0xff]
    %v606 = vld [vmem:[#allocation2 + $0x3b] sm:$0xff]
    %v607 = vld [vmem:[#allocation2 + $0x43] sm:$0xff]
    %s608 = scalar_lea.vmem %s3, 96
    %v609 = vld [vmem:[%s608] sm:$0xff]
    %v610 = vld [vmem:[%s608 + $0x8] sm:$0xff]
    %v611 = vld [vmem:[%s608 + $0x10] sm:$0xff]
    %v612 = vld [vmem:[%s608 + $0x18] sm:$0xff]
    %v614 = vsel %vm139, %v600, 0
    %v617 = vsel %vm139, %v601, 0
    %v620 = vsel %vm139, %v602, 0
    %v623 = vsel %vm139, %v603, 0
    %v626 = vsel %vm139, %v604, 0
    %v629 = vsel %vm139, %v605, 0
    %v632 = vsel %vm139, %v606, 0
    %v635 = vsel %vm139, %v607, 0
    %637 = vmatprep.subr.mxu0 0.0
    %638 = vmatpush1.msra.mxu0 %v609
    %639 = vmatprep.subr.mxu0 0.0
    %640 = vmatpush1.msra.mxu0 %v610
    %641 = vmatprep.subr.mxu0 0.0
    %642 = vmatpush1.msra.mxu0 %v611
    %643 = vmatprep.subr.mxu0 0.0
    %644 = vmatpush1.msra.mxu0 %v612
    %645 = vmatprep.subr.mxu0 0.0
    %646 = vmatpush1.msra.mxu0 0.0
    %647 = vmatprep.subr.mxu0 0.0
    %648 = vmatpush1.msra.mxu0 0.0
    %649 = vmatprep.subr.mxu0 0.0
    %650 = vmatpush1.msra.mxu0 0.0
    %651 = vmatprep.subr.mxu0 0.0
    %652 = vmatpush1.msra.mxu0 0.0
    %653 = vmatprep.subr.mxu0 0.0
    %654 = vmatpush1.msra.mxu0 0.0
    %655 = vmatprep.subr.mxu0 0.0
    %656 = vmatpush1.msra.mxu0 0.0
    %657 = vmatprep.subr.mxu0 0.0
    %658 = vmatpush1.msra.mxu0 0.0
    %659 = vmatprep.subr.mxu0 0.0
    %660 = vmatpush1.msra.mxu0 0.0
    %661 = vmatprep.subr.mxu0 0.0
    %662 = vmatpush1.msra.mxu0 0.0
    %663 = vmatprep.subr.mxu0 0.0
    %664 = vmatpush1.msra.mxu0 0.0
    %665 = vmatprep.subr.mxu0 0.0
    %666 = vmatpush1.msra.mxu0 0.0
    %667 = vmatprep.subr.mxu0 0.0
    %668 = vmatpush1.msra.mxu0 0.0
    %669 = vmatprep.subr.mxu0 0.0
    %670 = vmatpush1.msra.mxu0 0.0
    %671 = vmatprep.subr.mxu0 0.0
    %672 = vmatpush1.msra.mxu0 0.0
    %673 = vmatprep.subr.mxu0 0.0
    %674 = vmatpush1.msra.mxu0 0.0
    %675 = vmatprep.subr.mxu0 0.0
    %676 = vmatpush1.msra.mxu0 0.0
    %677 = vmatprep.subr.mxu0 0.0
    %678 = vmatpush1.msra.mxu0 0.0
    %679 = vmatprep.subr.mxu0 0.0
    %680 = vmatpush1.msra.mxu0 0.0
    %681 = vmatprep.subr.mxu0 0.0
    %682 = vmatpush1.msra.mxu0 0.0
    %683 = vmatprep.subr.mxu0 0.0
    %684 = vmatpush1.msra.mxu0 0.0
    %685 = vmatprep.subr.mxu0 0.0
    %686 = vmatpush1.msra.mxu0 0.0
    %687 = vmatprep.subr.mxu0 0.0
    %688 = vmatpush1.msra.mxu0 0.0
    %689 = vmatprep.subr.mxu0 0.0
    %690 = vmatpush1.msra.mxu0 0.0
    %691 = vmatprep.subr.mxu0 0.0
    %692 = vmatpush1.msra.mxu0 0.0
    %693 = vmatprep.subr.mxu0 0.0
    %694 = vmatpush1.msra.mxu0 0.0
    %695 = vmatprep.subr.mxu0 0.0
    %696 = vmatpush1.msra.mxu0 0.0
    %697 = vmatprep.subr.mxu0 0.0
    %698 = vmatpush1.msra.mxu0 0.0
    %699 = vmatprep.subr.mxu0 0.0
    %700 = vmatpush1.msra.mxu0 0.0
    %701 = vmatprep.mubr.f32.mxu0 0.0
    %702 = vmatmul.mubr.f32.gmra.mrb[0].mxu0 %v614
    %v703 = vpop.f32.mrb[0].mxu0
    %v704 = vadd.f32 0.0, %v703
    %v705 = vpop.f32.mrb[0].mxu0
    %706 = vmatprep.mubr.f32.mxu0 0.0
    %707 = vmatmul.mubr.f32.gmra.mrb[0].mxu0 %v617
    %v708 = vpop.f32.mrb[0].mxu0
    %v709 = vadd.f32 0.0, %v708
    %v710 = vpop.f32.mrb[0].mxu0
    %711 = vmatprep.mubr.f32.mxu0 0.0
    %712 = vmatmul.mubr.f32.gmra.mrb[0].mxu0 %v620
    %v713 = vpop.f32.mrb[0].mxu0
    %v714 = vadd.f32 0.0, %v713
    %v715 = vpop.f32.mrb[0].mxu0
    %716 = vmatprep.mubr.f32.mxu0 0.0
    %717 = vmatmul.mubr.f32.gmra.mrb[0].mxu0 %v623
    %v718 = vpop.f32.mrb[0].mxu0
    %v719 = vadd.f32 0.0, %v718
    %v720 = vpop.f32.mrb[0].mxu0
    %721 = vmatprep.mubr.f32.mxu0 0.0
    %722 = vmatmul.mubr.f32.gmra.mrb[0].mxu0 %v626
    %v723 = vpop.f32.mrb[0].mxu0
    %v724 = vadd.f32 0.0, %v723
    %v725 = vpop.f32.mrb[0].mxu0
    %726 = vmatprep.mubr.f32.mxu0 0.0
    %727 = vmatmul.mubr.f32.gmra.mrb[0].mxu0 %v629
    %v728 = vpop.f32.mrb[0].mxu0
    %v729 = vadd.f32 0.0, %v728
    %v730 = vpop.f32.mrb[0].mxu0
    %731 = vmatprep.mubr.f32.mxu0 0.0
    %732 = vmatmul.mubr.f32.gmra.mrb[0].mxu0 %v632
    %v733 = vpop.f32.mrb[0].mxu0
    %v734 = vadd.f32 0.0, %v733
    %v735 = vpop.f32.mrb[0].mxu0
    %736 = vmatprep.mubr.f32.mxu0 0.0
    %737 = vmatmul.mubr.f32.gmra.mrb[0].mxu0 %v635
    %v738 = vpop.f32.mrb[0].mxu0
    %v739 = vadd.f32 0.0, %v738
    %v740 = vpop.f32.mrb[0].mxu0
    %741 = vdwg.mxu0
    %v742 = vadd.f32 %v592, %v704
    %v743 = vadd.f32 %v593, %v709
    %v744 = vadd.f32 %v594, %v714
    %v745 = vadd.f32 %v595, %v719
    %v746 = vadd.f32 %v596, %v724
    %v747 = vadd.f32 %v597, %v729
    %v748 = vadd.f32 %v598, %v734
    %v749 = vadd.f32 %v599, %v739
    %v750 = vld [vmem:[#allocation2 + $0x4] sm:$0xff]
    %v751 = vld [vmem:[#allocation2 + $0xc] sm:$0xff]
    %v752 = vld [vmem:[#allocation2 + $0x14] sm:$0xff]
    %v753 = vld [vmem:[#allocation2 + $0x1c] sm:$0xff]
    %v754 = vld [vmem:[#allocation2 + $0x2c] sm:$0xff]
    %v755 = vld [vmem:[#allocation2 + $0x34] sm:$0xff]
    %v756 = vld [vmem:[#allocation2 + $0x3c] sm:$0xff]
    %v757 = vld [vmem:[#allocation2 + $0x44] sm:$0xff]
    %s758 = scalar_lea.vmem %s3, 128
    %v759 = vld [vmem:[%s758] sm:$0xff]
    %v760 = vld [vmem:[%s758 + $0x8] sm:$0xff]
    %v761 = vld [vmem:[%s758 + $0x10] sm:$0xff]
    %v762 = vld [vmem:[%s758 + $0x18] sm:$0xff]
    %v764 = vsel %vm139, %v750, 0
    %v767 = vsel %vm139, %v751, 0
    %v770 = vsel %vm139, %v752, 0
    %v773 = vsel %vm139, %v753, 0
    %v776 = vsel %vm139, %v754, 0
    %v779 = vsel %vm139, %v755, 0
    %v782 = vsel %vm139, %v756, 0
    %v785 = vsel %vm139, %v757, 0
    %787 = vmatprep.subr.mxu0 0.0
    %788 = vmatpush1.msra.mxu0 %v759
    %789 = vmatprep.subr.mxu0 0.0
    %790 = vmatpush1.msra.mxu0 %v760
    %791 = vmatprep.subr.mxu0 0.0
    %792 = vmatpush1.msra.mxu0 %v761
    %793 = vmatprep.subr.mxu0 0.0
    %794 = vmatpush1.msra.mxu0 %v762
    %795 = vmatprep.subr.mxu0 0.0
    %796 = vmatpush1.msra.mxu0 0.0
    %797 = vmatprep.subr.mxu0 0.0
    %798 = vmatpush1.msra.mxu0 0.0
    %799 = vmatprep.subr.mxu0 0.0
    %800 = vmatpush1.msra.mxu0 0.0
    %801 = vmatprep.subr.mxu0 0.0
    %802 = vmatpush1.msra.mxu0 0.0
    %803 = vmatprep.subr.mxu0 0.0
    %804 = vmatpush1.msra.mxu0 0.0
    %805 = vmatprep.subr.mxu0 0.0
    %806 = vmatpush1.msra.mxu0 0.0
    %807 = vmatprep.subr.mxu0 0.0
    %808 = vmatpush1.msra.mxu0 0.0
    %809 = vmatprep.subr.mxu0 0.0
    %810 = vmatpush1.msra.mxu0 0.0
    %811 = vmatprep.subr.mxu0 0.0
    %812 = vmatpush1.msra.mxu0 0.0
    %813 = vmatprep.subr.mxu0 0.0
    %814 = vmatpush1.msra.mxu0 0.0
    %815 = vmatprep.subr.mxu0 0.0
    %816 = vmatpush1.msra.mxu0 0.0
    %817 = vmatprep.subr.mxu0 0.0
    %818 = vmatpush1.msra.mxu0 0.0
    %819 = vmatprep.subr.mxu0 0.0
    %820 = vmatpush1.msra.mxu0 0.0
    %821 = vmatprep.subr.mxu0 0.0
    %822 = vmatpush1.msra.mxu0 0.0
    %823 = vmatprep.subr.mxu0 0.0
    %824 = vmatpush1.msra.mxu0 0.0
    %825 = vmatprep.subr.mxu0 0.0
    %826 = vmatpush1.msra.mxu0 0.0
    %827 = vmatprep.subr.mxu0 0.0
    %828 = vmatpush1.msra.mxu0 0.0
    %829 = vmatprep.subr.mxu0 0.0
    %830 = vmatpush1.msra.mxu0 0.0
    %831 = vmatprep.subr.mxu0 0.0
    %832 = vmatpush1.msra.mxu0 0.0
    %833 = vmatprep.subr.mxu0 0.0
    %834 = vmatpush1.msra.mxu0 0.0
    %835 = vmatprep.subr.mxu0 0.0
    %836 = vmatpush1.msra.mxu0 0.0
    %837 = vmatprep.subr.mxu0 0.0
    %838 = vmatpush1.msra.mxu0 0.0
    %839 = vmatprep.subr.mxu0 0.0
    %840 = vmatpush1.msra.mxu0 0.0
    %841 = vmatprep.subr.mxu0 0.0
    %842 = vmatpush1.msra.mxu0 0.0
    %843 = vmatprep.subr.mxu0 0.0
    %844 = vmatpush1.msra.mxu0 0.0
    %845 = vmatprep.subr.mxu0 0.0
    %846 = vmatpush1.msra.mxu0 0.0
    %847 = vmatprep.subr.mxu0 0.0
    %848 = vmatpush1.msra.mxu0 0.0
    %849 = vmatprep.subr.mxu0 0.0
    %850 = vmatpush1.msra.mxu0 0.0
    %851 = vmatprep.mubr.f32.mxu0 0.0
    %852 = vmatmul.mubr.f32.gmra.mrb[0].mxu0 %v764
    %v853 = vpop.f32.mrb[0].mxu0
    %v854 = vadd.f32 0.0, %v853
    %v855 = vpop.f32.mrb[0].mxu0
    %856 = vmatprep.mubr.f32.mxu0 0.0
    %857 = vmatmul.mubr.f32.gmra.mrb[0].mxu0 %v767
    %v858 = vpop.f32.mrb[0].mxu0
    %v859 = vadd.f32 0.0, %v858
    %v860 = vpop.f32.mrb[0].mxu0
    %861 = vmatprep.mubr.f32.mxu0 0.0
    %862 = vmatmul.mubr.f32.gmra.mrb[0].mxu0 %v770
    %v863 = vpop.f32.mrb[0].mxu0
    %v864 = vadd.f32 0.0, %v863
    %v865 = vpop.f32.mrb[0].mxu0
    %866 = vmatprep.mubr.f32.mxu0 0.0
    %867 = vmatmul.mubr.f32.gmra.mrb[0].mxu0 %v773
    %v868 = vpop.f32.mrb[0].mxu0
    %v869 = vadd.f32 0.0, %v868
    %v870 = vpop.f32.mrb[0].mxu0
    %871 = vmatprep.mubr.f32.mxu0 0.0
    %872 = vmatmul.mubr.f32.gmra.mrb[0].mxu0 %v776
    %v873 = vpop.f32.mrb[0].mxu0
    %v874 = vadd.f32 0.0, %v873
    %v875 = vpop.f32.mrb[0].mxu0
    %876 = vmatprep.mubr.f32.mxu0 0.0
    %877 = vmatmul.mubr.f32.gmra.mrb[0].mxu0 %v779
    %v878 = vpop.f32.mrb[0].mxu0
    %v879 = vadd.f32 0.0, %v878
    %v880 = vpop.f32.mrb[0].mxu0
    %881 = vmatprep.mubr.f32.mxu0 0.0
    %882 = vmatmul.mubr.f32.gmra.mrb[0].mxu0 %v782
    %v883 = vpop.f32.mrb[0].mxu0
    %v884 = vadd.f32 0.0, %v883
    %v885 = vpop.f32.mrb[0].mxu0
    %886 = vmatprep.mubr.f32.mxu0 0.0
    %887 = vmatmul.mubr.f32.gmra.mrb[0].mxu0 %v785
    %v888 = vpop.f32.mrb[0].mxu0
    %v889 = vadd.f32 0.0, %v888
    %v890 = vpop.f32.mrb[0].mxu0
    %891 = vdwg.mxu0
    %v892 = vadd.f32 %v742, %v854
    %v893 = vadd.f32 %v743, %v859
    %v894 = vadd.f32 %v744, %v864
    %v895 = vadd.f32 %v745, %v869
    %v896 = vadd.f32 %v746, %v874
    %v897 = vadd.f32 %v747, %v879
    %v898 = vadd.f32 %v748, %v884
    %v899 = vadd.f32 %v749, %v889
    %900 = vst.msk [vmem:[#allocation2 + $0x2] sm:$0xff] %vm139, %v892
    %901 = vst.msk [vmem:[#allocation2 + $0xa] sm:$0xff] %vm139, %v893
    %902 = vst.msk [vmem:[#allocation2 + $0x12] sm:$0xff] %vm139, %v894
    %903 = vst.msk [vmem:[#allocation2 + $0x1a] sm:$0xff] %vm139, %v895
    %904 = vst.msk [vmem:[#allocation2 + $0x2a] sm:$0xff] %vm139, %v896
    %905 = vst.msk [vmem:[#allocation2 + $0x32] sm:$0xff] %vm139, %v897
    %906 = vst.msk [vmem:[#allocation2 + $0x3a] sm:$0xff] %vm139, %v898
    %907 = vst.msk [vmem:[#allocation2 + $0x42] sm:$0xff] %vm139, %v899
    %v908 = vld [vmem:[#allocation2] sm:$0xff]
    %v909 = vld [vmem:[#allocation2 + $0x8] sm:$0xff]
    %v910 = vld [vmem:[#allocation2 + $0x10] sm:$0xff]
    %v911 = vld [vmem:[#allocation2 + $0x18] sm:$0xff]
    %v912 = vld [vmem:[#allocation2 + $0x28] sm:$0xff]
    %v913 = vld [vmem:[#allocation2 + $0x30] sm:$0xff]
    %v914 = vld [vmem:[#allocation2 + $0x38] sm:$0xff]
    %v915 = vld [vmem:[#allocation2 + $0x40] sm:$0xff]
    %v916 = vld [vmem:[%s5] sm:$0xff]
    %v917 = vld [vmem:[%s5 + $0x8] sm:$0xff]
    %v918 = vld [vmem:[%s5 + $0x10] sm:$0xff]
    %v919 = vld [vmem:[%s5 + $0x18] sm:$0xff]
    %v920 = vld [vmem:[%s5 + $0x20] sm:$0xff]
    %v921 = vld [vmem:[%s5 + $0x28] sm:$0xff]
    %v922 = vld [vmem:[%s5 + $0x30] sm:$0xff]
    %v923 = vld [vmem:[%s5 + $0x38] sm:$0xff]
    %v924 = vld [vmem:[#allocation2 + $0x1] sm:$0xff]
    %v925 = vld [vmem:[#allocation2 + $0x9] sm:$0xff]
    %v926 = vld [vmem:[#allocation2 + $0x11] sm:$0xff]
    %v927 = vld [vmem:[#allocation2 + $0x19] sm:$0xff]
    %v928 = vld [vmem:[#allocation2 + $0x29] sm:$0xff]
    %v929 = vld [vmem:[#allocation2 + $0x31] sm:$0xff]
    %v930 = vld [vmem:[#allocation2 + $0x39] sm:$0xff]
    %v931 = vld [vmem:[#allocation2 + $0x41] sm:$0xff]
    %s932 = scalar_lea.vmem %s5, 64
    %v933 = vld [vmem:[%s932] sm:$0xff]
    %v934 = vld [vmem:[%s932 + $0x8] sm:$0xff]
    %v935 = vld [vmem:[%s932 + $0x10] sm:$0xff]
    %v936 = vld [vmem:[%s932 + $0x18] sm:$0xff]
    %v937 = vld [vmem:[%s932 + $0x20] sm:$0xff]
    %v938 = vld [vmem:[%s932 + $0x28] sm:$0xff]
    %v939 = vld [vmem:[%s932 + $0x30] sm:$0xff]
    %v940 = vld [vmem:[%s932 + $0x38] sm:$0xff]
    %v942 = vsel %vm139, %v924, 0
    %v945 = vsel %vm139, %v925, 0
    %v948 = vsel %vm139, %v926, 0
    %v951 = vsel %vm139, %v927, 0
    %v954 = vsel %vm139, %v928, 0
    %v957 = vsel %vm139, %v929, 0
    %v960 = vsel %vm139, %v930, 0
    %v963 = vsel %vm139, %v931, 0
    %965 = vmatprep.subr.mxu0 %v934
    %966 = vmatpush1.msra.mxu0 %v933
    %967 = vmatprep.subr.mxu0 %v936
    %968 = vmatpush1.msra.mxu0 %v935
    %969 = vmatprep.subr.mxu0 %v938
    %970 = vmatpush1.msra.mxu0 %v937
    %971 = vmatprep.subr.mxu0 %v940
    %972 = vmatpush1.msra.mxu0 %v939
    %973 = vmatprep.subr.mxu0 0.0
    %974 = vmatpush1.msra.mxu0 0.0
    %975 = vmatprep.subr.mxu0 0.0
    %976 = vmatpush1.msra.mxu0 0.0
    %977 = vmatprep.subr.mxu0 0.0
    %978 = vmatpush1.msra.mxu0 0.0
    %979 = vmatprep.subr.mxu0 0.0
    %980 = vmatpush1.msra.mxu0 0.0
    %981 = vmatprep.subr.mxu0 0.0
    %982 = vmatpush1.msra.mxu0 0.0
    %983 = vmatprep.subr.mxu0 0.0
    %984 = vmatpush1.msra.mxu0 0.0
    %985 = vmatprep.subr.mxu0 0.0
    %986 = vmatpush1.msra.mxu0 0.0
    %987 = vmatprep.subr.mxu0 0.0
    %988 = vmatpush1.msra.mxu0 0.0
    %989 = vmatprep.subr.mxu0 0.0
    %990 = vmatpush1.msra.mxu0 0.0
    %991 = vmatprep.subr.mxu0 0.0
    %992 = vmatpush1.msra.mxu0 0.0
    %993 = vmatprep.subr.mxu0 0.0
    %994 = vmatpush1.msra.mxu0 0.0
    %995 = vmatprep.subr.mxu0 0.0
    %996 = vmatpush1.msra.mxu0 0.0
    %997 = vmatprep.subr.mxu0 0.0
    %998 = vmatpush1.msra.mxu0 0.0
    %999 = vmatprep.subr.mxu0 0.0
    %1000 = vmatpush1.msra.mxu0 0.0
    %1001 = vmatprep.subr.mxu0 0.0
    %1002 = vmatpush1.msra.mxu0 0.0
    %1003 = vmatprep.subr.mxu0 0.0
    %1004 = vmatpush1.msra.mxu0 0.0
    %1005 = vmatprep.subr.mxu0 0.0
    %1006 = vmatpush1.msra.mxu0 0.0
    %1007 = vmatprep.subr.mxu0 0.0
    %1008 = vmatpush1.msra.mxu0 0.0
    %1009 = vmatprep.subr.mxu0 0.0
    %1010 = vmatpush1.msra.mxu0 0.0
    %1011 = vmatprep.subr.mxu0 0.0
    %1012 = vmatpush1.msra.mxu0 0.0
    %1013 = vmatprep.subr.mxu0 0.0
    %1014 = vmatpush1.msra.mxu0 0.0
    %1015 = vmatprep.subr.mxu0 0.0
    %1016 = vmatpush1.msra.mxu0 0.0
    %1017 = vmatprep.subr.mxu0 0.0
    %1018 = vmatpush1.msra.mxu0 0.0
    %1019 = vmatprep.subr.mxu0 0.0
    %1020 = vmatpush1.msra.mxu0 0.0
    %1021 = vmatprep.subr.mxu0 0.0
    %1022 = vmatpush1.msra.mxu0 0.0
    %1023 = vmatprep.subr.mxu0 0.0
    %1024 = vmatpush1.msra.mxu0 0.0
    %1025 = vmatprep.subr.mxu0 0.0
    %1026 = vmatpush1.msra.mxu0 0.0
    %1027 = vmatprep.subr.mxu0 0.0
    %1028 = vmatpush1.msra.mxu0 0.0
    %1029 = vmatprep.mubr.f32.mxu0 0.0
    %1030 = vmatmul.mubr.f32.gmra.mrb[0].mxu0 %v942
    %v1031 = vpop.f32.mrb[0].mxu0
    %v1032 = vadd.f32 0.0, %v1031
    %v1033 = vpop.f32.mrb[0].mxu0
    %v1034 = vadd.f32 0.0, %v1033
    %1035 = vmatprep.mubr.f32.mxu0 0.0
    %1036 = vmatmul.mubr.f32.gmra.mrb[0].mxu0 %v945
    %v1037 = vpop.f32.mrb[0].mxu0
    %v1038 = vadd.f32 0.0, %v1037
    %v1039 = vpop.f32.mrb[0].mxu0
    %v1040 = vadd.f32 0.0, %v1039
    %1041 = vmatprep.mubr.f32.mxu0 0.0
    %1042 = vmatmul.mubr.f32.gmra.mrb[0].mxu0 %v948
    %v1043 = vpop.f32.mrb[0].mxu0
    %v1044 = vadd.f32 0.0, %v1043
    %v1045 = vpop.f32.mrb[0].mxu0
    %v1046 = vadd.f32 0.0, %v1045
    %1047 = vmatprep.mubr.f32.mxu0 0.0
    %1048 = vmatmul.mubr.f32.gmra.mrb[0].mxu0 %v951
    %v1049 = vpop.f32.mrb[0].mxu0
    %v1050 = vadd.f32 0.0, %v1049
    %v1051 = vpop.f32.mrb[0].mxu0
    %v1052 = vadd.f32 0.0, %v1051
    %1053 = vmatprep.mubr.f32.mxu0 0.0
    %1054 = vmatmul.mubr.f32.gmra.mrb[0].mxu0 %v954
    %v1055 = vpop.f32.mrb[0].mxu0
    %v1056 = vadd.f32 0.0, %v1055
    %v1057 = vpop.f32.mrb[0].mxu0
    %v1058 = vadd.f32 0.0, %v1057
    %1059 = vmatprep.mubr.f32.mxu0 0.0
    %1060 = vmatmul.mubr.f32.gmra.mrb[0].mxu0 %v957
    %v1061 = vpop.f32.mrb[0].mxu0
    %v1062 = vadd.f32 0.0, %v1061
    %v1063 = vpop.f32.mrb[0].mxu0
    %v1064 = vadd.f32 0.0, %v1063
    %1065 = vmatprep.mubr.f32.mxu0 0.0
    %1066 = vmatmul.mubr.f32.gmra.mrb[0].mxu0 %v960
    %v1067 = vpop.f32.mrb[0].mxu0
    %v1068 = vadd.f32 0.0, %v1067
    %v1069 = vpop.f32.mrb[0].mxu0
    %v1070 = vadd.f32 0.0, %v1069
    %1071 = vmatprep.mubr.f32.mxu0 0.0
    %1072 = vmatmul.mubr.f32.gmra.mrb[0].mxu0 %v963
    %v1073 = vpop.f32.mrb[0].mxu0
    %v1074 = vadd.f32 0.0, %v1073
    %v1075 = vpop.f32.mrb[0].mxu0
    %v1076 = vadd.f32 0.0, %v1075
    %1077 = vdwg.mxu0
    %v1079 = vsel %vm139, %v908, 0
    %v1082 = vsel %vm139, %v909, 0
    %v1085 = vsel %vm139, %v910, 0
    %v1088 = vsel %vm139, %v911, 0
    %v1091 = vsel %vm139, %v912, 0
    %v1094 = vsel %vm139, %v913, 0
    %v1097 = vsel %vm139, %v914, 0
    %v1100 = vsel %vm139, %v915, 0
    %1102 = vmatprep.subr.mxu0 %v917
    %1103 = vmatpush1.msra.mxu0 %v916
    %1104 = vmatprep.subr.mxu0 %v919
    %1105 = vmatpush1.msra.mxu0 %v918
    %1106 = vmatprep.subr.mxu0 %v921
    %1107 = vmatpush1.msra.mxu0 %v920
    %1108 = vmatprep.subr.mxu0 %v923
    %1109 = vmatpush1.msra.mxu0 %v922
    %1110 = vmatprep.subr.mxu0 0.0
    %1111 = vmatpush1.msra.mxu0 0.0
    %1112 = vmatprep.subr.mxu0 0.0
    %1113 = vmatpush1.msra.mxu0 0.0
    %1114 = vmatprep.subr.mxu0 0.0
    %1115 = vmatpush1.msra.mxu0 0.0
    %1116 = vmatprep.subr.mxu0 0.0
    %1117 = vmatpush1.msra.mxu0 0.0
    %1118 = vmatprep.subr.mxu0 0.0
    %1119 = vmatpush1.msra.mxu0 0.0
    %1120 = vmatprep.subr.mxu0 0.0
    %1121 = vmatpush1.msra.mxu0 0.0
    %1122 = vmatprep.subr.mxu0 0.0
    %1123 = vmatpush1.msra.mxu0 0.0
    %1124 = vmatprep.subr.mxu0 0.0
    %1125 = vmatpush1.msra.mxu0 0.0
    %1126 = vmatprep.subr.mxu0 0.0
    %1127 = vmatpush1.msra.mxu0 0.0
    %1128 = vmatprep.subr.mxu0 0.0
    %1129 = vmatpush1.msra.mxu0 0.0
    %1130 = vmatprep.subr.mxu0 0.0
    %1131 = vmatpush1.msra.mxu0 0.0
    %1132 = vmatprep.subr.mxu0 0.0
    %1133 = vmatpush1.msra.mxu0 0.0
    %1134 = vmatprep.subr.mxu0 0.0
    %1135 = vmatpush1.msra.mxu0 0.0
    %1136 = vmatprep.subr.mxu0 0.0
    %1137 = vmatpush1.msra.mxu0 0.0
    %1138 = vmatprep.subr.mxu0 0.0
    %1139 = vmatpush1.msra.mxu0 0.0
    %1140 = vmatprep.subr.mxu0 0.0
    %1141 = vmatpush1.msra.mxu0 0.0
    %1142 = vmatprep.subr.mxu0 0.0
    %1143 = vmatpush1.msra.mxu0 0.0
    %1144 = vmatprep.subr.mxu0 0.0
    %1145 = vmatpush1.msra.mxu0 0.0
    %1146 = vmatprep.subr.mxu0 0.0
    %1147 = vmatpush1.msra.mxu0 0.0
    %1148 = vmatprep.subr.mxu0 0.0
    %1149 = vmatpush1.msra.mxu0 0.0
    %1150 = vmatprep.subr.mxu0 0.0
    %1151 = vmatpush1.msra.mxu0 0.0
    %1152 = vmatprep.subr.mxu0 0.0
    %1153 = vmatpush1.msra.mxu0 0.0
    %1154 = vmatprep.subr.mxu0 0.0
    %1155 = vmatpush1.msra.mxu0 0.0
    %1156 = vmatprep.subr.mxu0 0.0
    %1157 = vmatpush1.msra.mxu0 0.0
    %1158 = vmatprep.subr.mxu0 0.0
    %1159 = vmatpush1.msra.mxu0 0.0
    %1160 = vmatprep.subr.mxu0 0.0
    %1161 = vmatpush1.msra.mxu0 0.0
    %1162 = vmatprep.subr.mxu0 0.0
    %1163 = vmatpush1.msra.mxu0 0.0
    %1164 = vmatprep.subr.mxu0 0.0
    %1165 = vmatpush1.msra.mxu0 0.0
    %1166 = vmatprep.mubr.f32.mxu0 0.0
    %1167 = vmatmul.mubr.f32.gmra.mrb[0].mxu0 %v1079
    %v1168 = vpop.f32.mrb[0].mxu0
    %v1169 = vadd.f32 %v1032, %v1168
    %v1170 = vpop.f32.mrb[0].mxu0
    %v1171 = vadd.f32 %v1034, %v1170
    %1172 = vmatprep.mubr.f32.mxu0 0.0
    %1173 = vmatmul.mubr.f32.gmra.mrb[0].mxu0 %v1082
    %v1174 = vpop.f32.mrb[0].mxu0
    %v1175 = vadd.f32 %v1038, %v1174
    %v1176 = vpop.f32.mrb[0].mxu0
    %v1177 = vadd.f32 %v1040, %v1176
    %1178 = vmatprep.mubr.f32.mxu0 0.0
    %1179 = vmatmul.mubr.f32.gmra.mrb[0].mxu0 %v1085
    %v1180 = vpop.f32.mrb[0].mxu0
    %v1181 = vadd.f32 %v1044, %v1180
    %v1182 = vpop.f32.mrb[0].mxu0
    %v1183 = vadd.f32 %v1046, %v1182
    %1184 = vmatprep.mubr.f32.mxu0 0.0
    %1185 = vmatmul.mubr.f32.gmra.mrb[0].mxu0 %v1088
    %v1186 = vpop.f32.mrb[0].mxu0
    %v1187 = vadd.f32 %v1050, %v1186
    %v1188 = vpop.f32.mrb[0].mxu0
    %v1189 = vadd.f32 %v1052, %v1188
    %1190 = vmatprep.mubr.f32.mxu0 0.0
    %1191 = vmatmul.mubr.f32.gmra.mrb[0].mxu0 %v1091
    %v1192 = vpop.f32.mrb[0].mxu0
    %v1193 = vadd.f32 %v1056, %v1192
    %v1194 = vpop.f32.mrb[0].mxu0
    %v1195 = vadd.f32 %v1058, %v1194
    %1196 = vmatprep.mubr.f32.mxu0 0.0
    %1197 = vmatmul.mubr.f32.gmra.mrb[0].mxu0 %v1094
    %v1198 = vpop.f32.mrb[0].mxu0
    %v1199 = vadd.f32 %v1062, %v1198
    %v1200 = vpop.f32.mrb[0].mxu0
    %v1201 = vadd.f32 %v1064, %v1200
    %1202 = vmatprep.mubr.f32.mxu0 0.0
    %1203 = vmatmul.mubr.f32.gmra.mrb[0].mxu0 %v1097
    %v1204 = vpop.f32.mrb[0].mxu0
    %v1205 = vadd.f32 %v1068, %v1204
    %v1206 = vpop.f32.mrb[0].mxu0
    %v1207 = vadd.f32 %v1070, %v1206
    %1208 = vmatprep.mubr.f32.mxu0 0.0
    %1209 = vmatmul.mubr.f32.gmra.mrb[0].mxu0 %v1100
    %v1210 = vpop.f32.mrb[0].mxu0
    %v1211 = vadd.f32 %v1074, %v1210
    %v1212 = vpop.f32.mrb[0].mxu0
    %v1213 = vadd.f32 %v1076, %v1212
    %1214 = vdwg.mxu0
    %v1215 = vld [vmem:[#allocation2 + $0x2] sm:$0xff]
    %v1216 = vld [vmem:[#allocation2 + $0xa] sm:$0xff]
    %v1217 = vld [vmem:[#allocation2 + $0x12] sm:$0xff]
    %v1218 = vld [vmem:[#allocation2 + $0x1a] sm:$0xff]
    %v1219 = vld [vmem:[#allocation2 + $0x2a] sm:$0xff]
    %v1220 = vld [vmem:[#allocation2 + $0x32] sm:$0xff]
    %v1221 = vld [vmem:[#allocation2 + $0x3a] sm:$0xff]
    %v1222 = vld [vmem:[#allocation2 + $0x42] sm:$0xff]
    %s1223 = scalar_lea.vmem %s5, 128
    %v1224 = vld [vmem:[%s1223] sm:$0xff]
    %v1225 = vld [vmem:[%s1223 + $0x8] sm:$0xff]
    %v1226 = vld [vmem:[%s1223 + $0x10] sm:$0xff]
    %v1227 = vld [vmem:[%s1223 + $0x18] sm:$0xff]
    %v1228 = vld [vmem:[%s1223 + $0x20] sm:$0xff]
    %v1229 = vld [vmem:[%s1223 + $0x28] sm:$0xff]
    %v1230 = vld [vmem:[%s1223 + $0x30] sm:$0xff]
    %v1231 = vld [vmem:[%s1223 + $0x38] sm:$0xff]
    %v1233 = vsel %vm139, %v1215, 0
    %v1236 = vsel %vm139, %v1216, 0
    %v1239 = vsel %vm139, %v1217, 0
    %v1242 = vsel %vm139, %v1218, 0
    %v1245 = vsel %vm139, %v1219, 0
    %v1248 = vsel %vm139, %v1220, 0
    %v1251 = vsel %vm139, %v1221, 0
    %v1254 = vsel %vm139, %v1222, 0
    %1256 = vmatprep.subr.mxu0 %v1225
    %1257 = vmatpush1.msra.mxu0 %v1224
    %1258 = vmatprep.subr.mxu0 %v1227
    %1259 = vmatpush1.msra.mxu0 %v1226
    %1260 = vmatprep.subr.mxu0 %v1229
    %1261 = vmatpush1.msra.mxu0 %v1228
    %1262 = vmatprep.subr.mxu0 %v1231
    %1263 = vmatpush1.msra.mxu0 %v1230
    %1264 = vmatprep.subr.mxu0 0.0
    %1265 = vmatpush1.msra.mxu0 0.0
    %1266 = vmatprep.subr.mxu0 0.0
    %1267 = vmatpush1.msra.mxu0 0.0
    %1268 = vmatprep.subr.mxu0 0.0
    %1269 = vmatpush1.msra.mxu0 0.0
    %1270 = vmatprep.subr.mxu0 0.0
    %1271 = vmatpush1.msra.mxu0 0.0
    %1272 = vmatprep.subr.mxu0 0.0
    %1273 = vmatpush1.msra.mxu0 0.0
    %1274 = vmatprep.subr.mxu0 0.0
    %1275 = vmatpush1.msra.mxu0 0.0
    %1276 = vmatprep.subr.mxu0 0.0
    %1277 = vmatpush1.msra.mxu0 0.0
    %1278 = vmatprep.subr.mxu0 0.0
    %1279 = vmatpush1.msra.mxu0 0.0
    %1280 = vmatprep.subr.mxu0 0.0
    %1281 = vmatpush1.msra.mxu0 0.0
    %1282 = vmatprep.subr.mxu0 0.0
    %1283 = vmatpush1.msra.mxu0 0.0
    %1284 = vmatprep.subr.mxu0 0.0
    %1285 = vmatpush1.msra.mxu0 0.0
    %1286 = vmatprep.subr.mxu0 0.0
    %1287 = vmatpush1.msra.mxu0 0.0
    %1288 = vmatprep.subr.mxu0 0.0
    %1289 = vmatpush1.msra.mxu0 0.0
    %1290 = vmatprep.subr.mxu0 0.0
    %1291 = vmatpush1.msra.mxu0 0.0
    %1292 = vmatprep.subr.mxu0 0.0
    %1293 = vmatpush1.msra.mxu0 0.0
    %1294 = vmatprep.subr.mxu0 0.0
    %1295 = vmatpush1.msra.mxu0 0.0
    %1296 = vmatprep.subr.mxu0 0.0
    %1297 = vmatpush1.msra.mxu0 0.0
    %1298 = vmatprep.subr.mxu0 0.0
    %1299 = vmatpush1.msra.mxu0 0.0
    %1300 = vmatprep.subr.mxu0 0.0
    %1301 = vmatpush1.msra.mxu0 0.0
    %1302 = vmatprep.subr.mxu0 0.0
    %1303 = vmatpush1.msra.mxu0 0.0
    %1304 = vmatprep.subr.mxu0 0.0
    %1305 = vmatpush1.msra.mxu0 0.0
    %1306 = vmatprep.subr.mxu0 0.0
    %1307 = vmatpush1.msra.mxu0 0.0
    %1308 = vmatprep.subr.mxu0 0.0
    %1309 = vmatpush1.msra.mxu0 0.0
    %1310 = vmatprep.subr.mxu0 0.0
    %1311 = vmatpush1.msra.mxu0 0.0
    %1312 = vmatprep.subr.mxu0 0.0
    %1313 = vmatpush1.msra.mxu0 0.0
    %1314 = vmatprep.subr.mxu0 0.0
    %1315 = vmatpush1.msra.mxu0 0.0
    %1316 = vmatprep.subr.mxu0 0.0
    %1317 = vmatpush1.msra.mxu0 0.0
    %1318 = vmatprep.subr.mxu0 0.0
    %1319 = vmatpush1.msra.mxu0 0.0
    %1320 = vmatprep.mubr.f32.mxu0 0.0
    %1321 = vmatmul.mubr.f32.gmra.mrb[0].mxu0 %v1233
    %v1322 = vpop.f32.mrb[0].mxu0
    %v1323 = vadd.f32 0.0, %v1322
    %v1324 = vpop.f32.mrb[0].mxu0
    %v1325 = vadd.f32 0.0, %v1324
    %1326 = vmatprep.mubr.f32.mxu0 0.0
    %1327 = vmatmul.mubr.f32.gmra.mrb[0].mxu0 %v1236
    %v1328 = vpop.f32.mrb[0].mxu0
    %v1329 = vadd.f32 0.0, %v1328
    %v1330 = vpop.f32.mrb[0].mxu0
    %v1331 = vadd.f32 0.0, %v1330
    %1332 = vmatprep.mubr.f32.mxu0 0.0
    %1333 = vmatmul.mubr.f32.gmra.mrb[0].mxu0 %v1239
    %v1334 = vpop.f32.mrb[0].mxu0
    %v1335 = vadd.f32 0.0, %v1334
    %v1336 = vpop.f32.mrb[0].mxu0
    %v1337 = vadd.f32 0.0, %v1336
    %1338 = vmatprep.mubr.f32.mxu0 0.0
    %1339 = vmatmul.mubr.f32.gmra.mrb[0].mxu0 %v1242
    %v1340 = vpop.f32.mrb[0].mxu0
    %v1341 = vadd.f32 0.0, %v1340
    %v1342 = vpop.f32.mrb[0].mxu0
    %v1343 = vadd.f32 0.0, %v1342
    %1344 = vmatprep.mubr.f32.mxu0 0.0
    %1345 = vmatmul.mubr.f32.gmra.mrb[0].mxu0 %v1245
    %v1346 = vpop.f32.mrb[0].mxu0
    %v1347 = vadd.f32 0.0, %v1346
    %v1348 = vpop.f32.mrb[0].mxu0
    %v1349 = vadd.f32 0.0, %v1348
    %1350 = vmatprep.mubr.f32.mxu0 0.0
    %1351 = vmatmul.mubr.f32.gmra.mrb[0].mxu0 %v1248
    %v1352 = vpop.f32.mrb[0].mxu0
    %v1353 = vadd.f32 0.0, %v1352
    %v1354 = vpop.f32.mrb[0].mxu0
    %v1355 = vadd.f32 0.0, %v1354
    %1356 = vmatprep.mubr.f32.mxu0 0.0
    %1357 = vmatmul.mubr.f32.gmra.mrb[0].mxu0 %v1251
    %v1358 = vpop.f32.mrb[0].mxu0
    %v1359 = vadd.f32 0.0, %v1358
    %v1360 = vpop.f32.mrb[0].mxu0
    %v1361 = vadd.f32 0.0, %v1360
    %1362 = vmatprep.mubr.f32.mxu0 0.0
    %1363 = vmatmul.mubr.f32.gmra.mrb[0].mxu0 %v1254
    %v1364 = vpop.f32.mrb[0].mxu0
    %v1365 = vadd.f32 0.0, %v1364
    %v1366 = vpop.f32.mrb[0].mxu0
    %v1367 = vadd.f32 0.0, %v1366
    %1368 = vdwg.mxu0
    %v1369 = vadd.f32 %v1169, %v1323
    %v1370 = vadd.f32 %v1171, %v1325
    %v1371 = vadd.f32 %v1175, %v1329
    %v1372 = vadd.f32 %v1177, %v1331
    %v1373 = vadd.f32 %v1181, %v1335
    %v1374 = vadd.f32 %v1183, %v1337
    %v1375 = vadd.f32 %v1187, %v1341
    %v1376 = vadd.f32 %v1189, %v1343
    %v1377 = vadd.f32 %v1193, %v1347
    %v1378 = vadd.f32 %v1195, %v1349
    %v1379 = vadd.f32 %v1199, %v1353
    %v1380 = vadd.f32 %v1201, %v1355
    %v1381 = vadd.f32 %v1205, %v1359
    %v1382 = vadd.f32 %v1207, %v1361
    %v1383 = vadd.f32 %v1211, %v1365
    %v1384 = vadd.f32 %v1213, %v1367
    %v1385 = vld [vmem:[#allocation2 + $0x3] sm:$0xff]
    %v1386 = vld [vmem:[#allocation2 + $0xb] sm:$0xff]
    %v1387 = vld [vmem:[#allocation2 + $0x13] sm:$0xff]
    %v1388 = vld [vmem:[#allocation2 + $0x1b] sm:$0xff]
    %v1389 = vld [vmem:[#allocation2 + $0x2b] sm:$0xff]
    %v1390 = vld [vmem:[#allocation2 + $0x33] sm:$0xff]
    %v1391 = vld [vmem:[#allocation2 + $0x3b] sm:$0xff]
    %v1392 = vld [vmem:[#allocation2 + $0x43] sm:$0xff]
    %s1393 = scalar_lea.vmem %s5, 192
    %v1394 = vld [vmem:[%s1393] sm:$0xff]
    %v1395 = vld [vmem:[%s1393 + $0x8] sm:$0xff]
    %v1396 = vld [vmem:[%s1393 + $0x10] sm:$0xff]
    %v1397 = vld [vmem:[%s1393 + $0x18] sm:$0xff]
    %v1398 = vld [vmem:[%s1393 + $0x20] sm:$0xff]
    %v1399 = vld [vmem:[%s1393 + $0x28] sm:$0xff]
    %v1400 = vld [vmem:[%s1393 + $0x30] sm:$0xff]
    %v1401 = vld [vmem:[%s1393 + $0x38] sm:$0xff]
    %v1403 = vsel %vm139, %v1385, 0
    %v1406 = vsel %vm139, %v1386, 0
    %v1409 = vsel %vm139, %v1387, 0
    %v1412 = vsel %vm139, %v1388, 0
    %v1415 = vsel %vm139, %v1389, 0
    %v1418 = vsel %vm139, %v1390, 0
    %v1421 = vsel %vm139, %v1391, 0
    %v1424 = vsel %vm139, %v1392, 0
    %1426 = vmatprep.subr.mxu0 %v1395
    %1427 = vmatpush1.msra.mxu0 %v1394
    %1428 = vmatprep.subr.mxu0 %v1397
    %1429 = vmatpush1.msra.mxu0 %v1396
    %1430 = vmatprep.subr.mxu0 %v1399
    %1431 = vmatpush1.msra.mxu0 %v1398
    %1432 = vmatprep.subr.mxu0 %v1401
    %1433 = vmatpush1.msra.mxu0 %v1400
    %1434 = vmatprep.subr.mxu0 0.0
    %1435 = vmatpush1.msra.mxu0 0.0
    %1436 = vmatprep.subr.mxu0 0.0
    %1437 = vmatpush1.msra.mxu0 0.0
    %1438 = vmatprep.subr.mxu0 0.0
    %1439 = vmatpush1.msra.mxu0 0.0
    %1440 = vmatprep.subr.mxu0 0.0
    %1441 = vmatpush1.msra.mxu0 0.0
    %1442 = vmatprep.subr.mxu0 0.0
    %1443 = vmatpush1.msra.mxu0 0.0
    %1444 = vmatprep.subr.mxu0 0.0
    %1445 = vmatpush1.msra.mxu0 0.0
    %1446 = vmatprep.subr.mxu0 0.0
    %1447 = vmatpush1.msra.mxu0 0.0
    %1448 = vmatprep.subr.mxu0 0.0
    %1449 = vmatpush1.msra.mxu0 0.0
    %1450 = vmatprep.subr.mxu0 0.0
    %1451 = vmatpush1.msra.mxu0 0.0
    %1452 = vmatprep.subr.mxu0 0.0
    %1453 = vmatpush1.msra.mxu0 0.0
    %1454 = vmatprep.subr.mxu0 0.0
    %1455 = vmatpush1.msra.mxu0 0.0
    %1456 = vmatprep.subr.mxu0 0.0
    %1457 = vmatpush1.msra.mxu0 0.0
    %1458 = vmatprep.subr.mxu0 0.0
    %1459 = vmatpush1.msra.mxu0 0.0
    %1460 = vmatprep.subr.mxu0 0.0
    %1461 = vmatpush1.msra.mxu0 0.0
    %1462 = vmatprep.subr.mxu0 0.0
    %1463 = vmatpush1.msra.mxu0 0.0
    %1464 = vmatprep.subr.mxu0 0.0
    %1465 = vmatpush1.msra.mxu0 0.0
    %1466 = vmatprep.subr.mxu0 0.0
    %1467 = vmatpush1.msra.mxu0 0.0
    %1468 = vmatprep.subr.mxu0 0.0
    %1469 = vmatpush1.msra.mxu0 0.0
    %1470 = vmatprep.subr.mxu0 0.0
    %1471 = vmatpush1.msra.mxu0 0.0
    %1472 = vmatprep.subr.mxu0 0.0
    %1473 = vmatpush1.msra.mxu0 0.0
    %1474 = vmatprep.subr.mxu0 0.0
    %1475 = vmatpush1.msra.mxu0 0.0
    %1476 = vmatprep.subr.mxu0 0.0
    %1477 = vmatpush1.msra.mxu0 0.0
    %1478 = vmatprep.subr.mxu0 0.0
    %1479 = vmatpush1.msra.mxu0 0.0
    %1480 = vmatprep.subr.mxu0 0.0
    %1481 = vmatpush1.msra.mxu0 0.0
    %1482 = vmatprep.subr.mxu0 0.0
    %1483 = vmatpush1.msra.mxu0 0.0
    %1484 = vmatprep.subr.mxu0 0.0
    %1485 = vmatpush1.msra.mxu0 0.0
    %1486 = vmatprep.subr.mxu0 0.0
    %1487 = vmatpush1.msra.mxu0 0.0
    %1488 = vmatprep.subr.mxu0 0.0
    %1489 = vmatpush1.msra.mxu0 0.0
    %1490 = vmatprep.mubr.f32.mxu0 0.0
    %1491 = vmatmul.mubr.f32.gmra.mrb[0].mxu0 %v1403
    %v1492 = vpop.f32.mrb[0].mxu0
    %v1493 = vadd.f32 0.0, %v1492
    %v1494 = vpop.f32.mrb[0].mxu0
    %v1495 = vadd.f32 0.0, %v1494
    %1496 = vmatprep.mubr.f32.mxu0 0.0
    %1497 = vmatmul.mubr.f32.gmra.mrb[0].mxu0 %v1406
    %v1498 = vpop.f32.mrb[0].mxu0
    %v1499 = vadd.f32 0.0, %v1498
    %v1500 = vpop.f32.mrb[0].mxu0
    %v1501 = vadd.f32 0.0, %v1500
    %1502 = vmatprep.mubr.f32.mxu0 0.0
    %1503 = vmatmul.mubr.f32.gmra.mrb[0].mxu0 %v1409
    %v1504 = vpop.f32.mrb[0].mxu0
    %v1505 = vadd.f32 0.0, %v1504
    %v1506 = vpop.f32.mrb[0].mxu0
    %v1507 = vadd.f32 0.0, %v1506
    %1508 = vmatprep.mubr.f32.mxu0 0.0
    %1509 = vmatmul.mubr.f32.gmra.mrb[0].mxu0 %v1412
    %v1510 = vpop.f32.mrb[0].mxu0
    %v1511 = vadd.f32 0.0, %v1510
    %v1512 = vpop.f32.mrb[0].mxu0
    %v1513 = vadd.f32 0.0, %v1512
    %1514 = vmatprep.mubr.f32.mxu0 0.0
    %1515 = vmatmul.mubr.f32.gmra.mrb[0].mxu0 %v1415
    %v1516 = vpop.f32.mrb[0].mxu0
    %v1517 = vadd.f32 0.0, %v1516
    %v1518 = vpop.f32.mrb[0].mxu0
    %v1519 = vadd.f32 0.0, %v1518
    %1520 = vmatprep.mubr.f32.mxu0 0.0
    %1521 = vmatmul.mubr.f32.gmra.mrb[0].mxu0 %v1418
    %v1522 = vpop.f32.mrb[0].mxu0
    %v1523 = vadd.f32 0.0, %v1522
    %v1524 = vpop.f32.mrb[0].mxu0
    %v1525 = vadd.f32 0.0, %v1524
    %1526 = vmatprep.mubr.f32.mxu0 0.0
    %1527 = vmatmul.mubr.f32.gmra.mrb[0].mxu0 %v1421
    %v1528 = vpop.f32.mrb[0].mxu0
    %v1529 = vadd.f32 0.0, %v1528
    %v1530 = vpop.f32.mrb[0].mxu0
    %v1531 = vadd.f32 0.0, %v1530
    %1532 = vmatprep.mubr.f32.mxu0 0.0
    %1533 = vmatmul.mubr.f32.gmra.mrb[0].mxu0 %v1424
    %v1534 = vpop.f32.mrb[0].mxu0
    %v1535 = vadd.f32 0.0, %v1534
    %v1536 = vpop.f32.mrb[0].mxu0
    %v1537 = vadd.f32 0.0, %v1536
    %1538 = vdwg.mxu0
    %v1539 = vadd.f32 %v1369, %v1493
    %v1540 = vadd.f32 %v1370, %v1495
    %v1541 = vadd.f32 %v1371, %v1499
    %v1542 = vadd.f32 %v1372, %v1501
    %v1543 = vadd.f32 %v1373, %v1505
    %v1544 = vadd.f32 %v1374, %v1507
    %v1545 = vadd.f32 %v1375, %v1511
    %v1546 = vadd.f32 %v1376, %v1513
    %v1547 = vadd.f32 %v1377, %v1517
    %v1548 = vadd.f32 %v1378, %v1519
    %v1549 = vadd.f32 %v1379, %v1523
    %v1550 = vadd.f32 %v1380, %v1525
    %v1551 = vadd.f32 %v1381, %v1529
    %v1552 = vadd.f32 %v1382, %v1531
    %v1553 = vadd.f32 %v1383, %v1535
    %v1554 = vadd.f32 %v1384, %v1537
    %v1555 = vld [vmem:[#allocation2 + $0x4] sm:$0xff]
    %v1556 = vld [vmem:[#allocation2 + $0xc] sm:$0xff]
    %v1557 = vld [vmem:[#allocation2 + $0x14] sm:$0xff]
    %v1558 = vld [vmem:[#allocation2 + $0x1c] sm:$0xff]
    %v1559 = vld [vmem:[#allocation2 + $0x2c] sm:$0xff]
    %v1560 = vld [vmem:[#allocation2 + $0x34] sm:$0xff]
    %v1561 = vld [vmem:[#allocation2 + $0x3c] sm:$0xff]
    %v1562 = vld [vmem:[#allocation2 + $0x44] sm:$0xff]
    %s1563 = scalar_lea.vmem %s5, 256
    %v1564 = vld [vmem:[%s1563] sm:$0xff]
    %v1565 = vld [vmem:[%s1563 + $0x8] sm:$0xff]
    %v1566 = vld [vmem:[%s1563 + $0x10] sm:$0xff]
    %v1567 = vld [vmem:[%s1563 + $0x18] sm:$0xff]
    %v1568 = vld [vmem:[%s1563 + $0x20] sm:$0xff]
    %v1569 = vld [vmem:[%s1563 + $0x28] sm:$0xff]
    %v1570 = vld [vmem:[%s1563 + $0x30] sm:$0xff]
    %v1571 = vld [vmem:[%s1563 + $0x38] sm:$0xff]
    %v1573 = vsel %vm139, %v1555, 0
    %v1576 = vsel %vm139, %v1556, 0
    %v1579 = vsel %vm139, %v1557, 0
    %v1582 = vsel %vm139, %v1558, 0
    %v1585 = vsel %vm139, %v1559, 0
    %v1588 = vsel %vm139, %v1560, 0
    %v1591 = vsel %vm139, %v1561, 0
    %v1594 = vsel %vm139, %v1562, 0
    %1596 = vmatprep.subr.mxu0 %v1565
    %1597 = vmatpush1.msra.mxu0 %v1564
    %1598 = vmatprep.subr.mxu0 %v1567
    %1599 = vmatpush1.msra.mxu0 %v1566
    %1600 = vmatprep.subr.mxu0 %v1569
    %1601 = vmatpush1.msra.mxu0 %v1568
    %1602 = vmatprep.subr.mxu0 %v1571
    %1603 = vmatpush1.msra.mxu0 %v1570
    %1604 = vmatprep.subr.mxu0 0.0
    %1605 = vmatpush1.msra.mxu0 0.0
    %1606 = vmatprep.subr.mxu0 0.0
    %1607 = vmatpush1.msra.mxu0 0.0
    %1608 = vmatprep.subr.mxu0 0.0
    %1609 = vmatpush1.msra.mxu0 0.0
    %1610 = vmatprep.subr.mxu0 0.0
    %1611 = vmatpush1.msra.mxu0 0.0
    %1612 = vmatprep.subr.mxu0 0.0
    %1613 = vmatpush1.msra.mxu0 0.0
    %1614 = vmatprep.subr.mxu0 0.0
    %1615 = vmatpush1.msra.mxu0 0.0
    %1616 = vmatprep.subr.mxu0 0.0
    %1617 = vmatpush1.msra.mxu0 0.0
    %1618 = vmatprep.subr.mxu0 0.0
    %1619 = vmatpush1.msra.mxu0 0.0
    %1620 = vmatprep.subr.mxu0 0.0
    %1621 = vmatpush1.msra.mxu0 0.0
    %1622 = vmatprep.subr.mxu0 0.0
    %1623 = vmatpush1.msra.mxu0 0.0
    %1624 = vmatprep.subr.mxu0 0.0
    %1625 = vmatpush1.msra.mxu0 0.0
    %1626 = vmatprep.subr.mxu0 0.0
    %1627 = vmatpush1.msra.mxu0 0.0
    %1628 = vmatprep.subr.mxu0 0.0
    %1629 = vmatpush1.msra.mxu0 0.0
    %1630 = vmatprep.subr.mxu0 0.0
    %1631 = vmatpush1.msra.mxu0 0.0
    %1632 = vmatprep.subr.mxu0 0.0
    %1633 = vmatpush1.msra.mxu0 0.0
    %1634 = vmatprep.subr.mxu0 0.0
    %1635 = vmatpush1.msra.mxu0 0.0
    %1636 = vmatprep.subr.mxu0 0.0
    %1637 = vmatpush1.msra.mxu0 0.0
    %1638 = vmatprep.subr.mxu0 0.0
    %1639 = vmatpush1.msra.mxu0 0.0
    %1640 = vmatprep.subr.mxu0 0.0
    %1641 = vmatpush1.msra.mxu0 0.0
    %1642 = vmatprep.subr.mxu0 0.0
    %1643 = vmatpush1.msra.mxu0 0.0
    %1644 = vmatprep.subr.mxu0 0.0
    %1645 = vmatpush1.msra.mxu0 0.0
    %1646 = vmatprep.subr.mxu0 0.0
    %1647 = vmatpush1.msra.mxu0 0.0
    %1648 = vmatprep.subr.mxu0 0.0
    %1649 = vmatpush1.msra.mxu0 0.0
    %1650 = vmatprep.subr.mxu0 0.0
    %1651 = vmatpush1.msra.mxu0 0.0
    %1652 = vmatprep.subr.mxu0 0.0
    %1653 = vmatpush1.msra.mxu0 0.0
    %1654 = vmatprep.subr.mxu0 0.0
    %1655 = vmatpush1.msra.mxu0 0.0
    %1656 = vmatprep.subr.mxu0 0.0
    %1657 = vmatpush1.msra.mxu0 0.0
    %1658 = vmatprep.subr.mxu0 0.0
    %1659 = vmatpush1.msra.mxu0 0.0
    %1660 = vmatprep.mubr.f32.mxu0 0.0
    %1661 = vmatmul.mubr.f32.gmra.mrb[0].mxu0 %v1573
    %v1662 = vpop.f32.mrb[0].mxu0
    %v1663 = vadd.f32 0.0, %v1662
    %v1664 = vpop.f32.mrb[0].mxu0
    %v1665 = vadd.f32 0.0, %v1664
    %1666 = vmatprep.mubr.f32.mxu0 0.0
    %1667 = vmatmul.mubr.f32.gmra.mrb[0].mxu0 %v1576
    %v1668 = vpop.f32.mrb[0].mxu0
    %v1669 = vadd.f32 0.0, %v1668
    %v1670 = vpop.f32.mrb[0].mxu0
    %v1671 = vadd.f32 0.0, %v1670
    %1672 = vmatprep.mubr.f32.mxu0 0.0
    %1673 = vmatmul.mubr.f32.gmra.mrb[0].mxu0 %v1579
    %v1674 = vpop.f32.mrb[0].mxu0
    %v1675 = vadd.f32 0.0, %v1674
    %v1676 = vpop.f32.mrb[0].mxu0
    %v1677 = vadd.f32 0.0, %v1676
    %1678 = vmatprep.mubr.f32.mxu0 0.0
    %1679 = vmatmul.mubr.f32.gmra.mrb[0].mxu0 %v1582
    %v1680 = vpop.f32.mrb[0].mxu0
    %v1681 = vadd.f32 0.0, %v1680
    %v1682 = vpop.f32.mrb[0].mxu0
    %v1683 = vadd.f32 0.0, %v1682
    %1684 = vmatprep.mubr.f32.mxu0 0.0
    %1685 = vmatmul.mubr.f32.gmra.mrb[0].mxu0 %v1585
    %v1686 = vpop.f32.mrb[0].mxu0
    %v1687 = vadd.f32 0.0, %v1686
    %v1688 = vpop.f32.mrb[0].mxu0
    %v1689 = vadd.f32 0.0, %v1688
    %1690 = vmatprep.mubr.f32.mxu0 0.0
    %1691 = vmatmul.mubr.f32.gmra.mrb[0].mxu0 %v1588
    %v1692 = vpop.f32.mrb[0].mxu0
    %v1693 = vadd.f32 0.0, %v1692
    %v1694 = vpop.f32.mrb[0].mxu0
    %v1695 = vadd.f32 0.0, %v1694
    %1696 = vmatprep.mubr.f32.mxu0 0.0
    %1697 = vmatmul.mubr.f32.gmra.mrb[0].mxu0 %v1591
    %v1698 = vpop.f32.mrb[0].mxu0
    %v1699 = vadd.f32 0.0, %v1698
    %v1700 = vpop.f32.mrb[0].mxu0
    %v1701 = vadd.f32 0.0, %v1700
    %1702 = vmatprep.mubr.f32.mxu0 0.0
    %1703 = vmatmul.mubr.f32.gmra.mrb[0].mxu0 %v1594
    %v1704 = vpop.f32.mrb[0].mxu0
    %v1705 = vadd.f32 0.0, %v1704
    %v1706 = vpop.f32.mrb[0].mxu0
    %v1707 = vadd.f32 0.0, %v1706
    %1708 = vdwg.mxu0
    %v1709 = vadd.f32 %v1539, %v1663
    %v1710 = vadd.f32 %v1540, %v1665
    %v1711 = vadd.f32 %v1541, %v1669
    %v1712 = vadd.f32 %v1542, %v1671
    %v1713 = vadd.f32 %v1543, %v1675
    %v1714 = vadd.f32 %v1544, %v1677
    %v1715 = vadd.f32 %v1545, %v1681
    %v1716 = vadd.f32 %v1546, %v1683
    %v1717 = vadd.f32 %v1547, %v1687
    %v1718 = vadd.f32 %v1548, %v1689
    %v1719 = vadd.f32 %v1549, %v1693
    %v1720 = vadd.f32 %v1550, %v1695
    %v1721 = vadd.f32 %v1551, %v1699
    %v1722 = vadd.f32 %v1552, %v1701
    %v1723 = vadd.f32 %v1553, %v1705
    %v1724 = vadd.f32 %v1554, %v1707
    %v1725 = vadd.f32 %v1709, %v1711
    %v1726 = vadd.f32 %v1725, %v1713
    %v1727 = vadd.f32 %v1726, %v1715
    %v1728 = vadd.f32 %v1727, %v1717
    %v1729 = vadd.f32 %v1728, %v1719
    %v1730 = vadd.f32 %v1729, %v1721
    %v1731 = vadd.f32 %v1730, %v1723
    %v1732 = vrot.slane %v1731, 4
    %v1733 = vadd.f32 %v1731, %v1732
    %v1734 = vrot.slane %v1733, 2
    %v1735 = vadd.f32 %v1733, %v1734
    %v1736 = vrot.slane %v1735, 1
    %v1737 = vadd.f32 %v1735, %v1736
    %v1738 = vadd.f32 %v1710, %v1712
    %v1739 = vadd.f32 %v1738, %v1714
    %v1740 = vadd.f32 %v1739, %v1716
    %v1741 = vadd.f32 %v1740, %v1718
    %v1742 = vadd.f32 %v1741, %v1720
    %v1743 = vadd.f32 %v1742, %v1722
    %v1744 = vadd.f32 %v1743, %v1724
    %v1745 = vrot.slane %v1744, 4
    %v1746 = vadd.f32 %v1744, %v1745
    %v1747 = vrot.slane %v1746, 2
    %v1748 = vadd.f32 %v1746, %v1747
    %v1749 = vrot.slane %v1748, 1
    %v1750 = vadd.f32 %v1748, %v1749
    %v1751 = vmul.f32 %v1709, %v1709
    %v1752 = vmul.f32 %v1710, %v1710
    %v1753 = vmul.f32 %v1711, %v1711
    %v1754 = vmul.f32 %v1712, %v1712
    %v1755 = vmul.f32 %v1713, %v1713
    %v1756 = vmul.f32 %v1714, %v1714
    %v1757 = vmul.f32 %v1715, %v1715
    %v1758 = vmul.f32 %v1716, %v1716
    %v1759 = vmul.f32 %v1717, %v1717
    %v1760 = vmul.f32 %v1718, %v1718
    %v1761 = vmul.f32 %v1719, %v1719
    %v1762 = vmul.f32 %v1720, %v1720
    %v1763 = vmul.f32 %v1721, %v1721
    %v1764 = vmul.f32 %v1722, %v1722
    %v1765 = vmul.f32 %v1723, %v1723
    %v1766 = vmul.f32 %v1724, %v1724
    %v1767 = vadd.f32 %v1751, %v1753
    %v1768 = vadd.f32 %v1767, %v1755
    %v1769 = vadd.f32 %v1768, %v1757
    %v1770 = vadd.f32 %v1769, %v1759
    %v1771 = vadd.f32 %v1770, %v1761
    %v1772 = vadd.f32 %v1771, %v1763
    %v1773 = vadd.f32 %v1772, %v1765
    %v1774 = vrot.slane %v1773, 4
    %v1775 = vadd.f32 %v1773, %v1774
    %v1776 = vrot.slane %v1775, 2
    %v1777 = vadd.f32 %v1775, %v1776
    %v1778 = vrot.slane %v1777, 1
    %v1779 = vadd.f32 %v1777, %v1778
    %v1780 = vadd.f32 %v1752, %v1754
    %v1781 = vadd.f32 %v1780, %v1756
    %v1782 = vadd.f32 %v1781, %v1758
    %v1783 = vadd.f32 %v1782, %v1760
    %v1784 = vadd.f32 %v1783, %v1762
    %v1785 = vadd.f32 %v1784, %v1764
    %v1786 = vadd.f32 %v1785, %v1766
    %v1787 = vrot.slane %v1786, 4
    %v1788 = vadd.f32 %v1786, %v1787
    %v1789 = vrot.slane %v1788, 2
    %v1790 = vadd.f32 %v1788, %v1789
    %v1791 = vrot.slane %v1790, 1
    %v1792 = vadd.f32 %v1790, %v1791
    %v1793 = vld [vmem:[%s9] sm:$0xff]
    %v1794 = vld [vmem:[%s9 + $0x8] sm:$0xff]
    %v1795 = vld [vmem:[%s9 + $0x10] sm:$0xff]
    %v1796 = vld [vmem:[%s9 + $0x18] sm:$0xff]
    %v1797 = vld [vmem:[%s9 + $0x20] sm:$0xff]
    %v1798 = vld [vmem:[%s9 + $0x28] sm:$0xff]
    %v1799 = vld [vmem:[%s9 + $0x30] sm:$0xff]
    %v1800 = vld [vmem:[%s9 + $0x38] sm:$0xff]
    %v1801 = vld [vmem:[%s9 + $0x40] sm:$0xff]
    %v1802 = vld [vmem:[%s9 + $0x48] sm:$0xff]
    %v1803 = vld [vmem:[%s9 + $0x50] sm:$0xff]
    %v1804 = vld [vmem:[%s9 + $0x58] sm:$0xff]
    %v1805 = vld [vmem:[%s9 + $0x60] sm:$0xff]
    %v1806 = vld [vmem:[%s9 + $0x68] sm:$0xff]
    %v1807 = vld [vmem:[%s9 + $0x70] sm:$0xff]
    %v1808 = vld [vmem:[%s9 + $0x78] sm:$0xff]
    %v1809 = vld [vmem:[%s9 + $0x80] sm:$0xff]
    %v1810 = vld [vmem:[%s9 + $0x88] sm:$0xff]
    %v1811 = vld [vmem:[%s9 + $0x90] sm:$0xff]
    %v1812 = vld [vmem:[%s9 + $0x98] sm:$0xff]
    %v1813 = vld [vmem:[%s9 + $0xa0] sm:$0xff]
    %v1814 = vld [vmem:[%s9 + $0xa8] sm:$0xff]
    %v1815 = vld [vmem:[%s9 + $0xb0] sm:$0xff]
    %v1816 = vld [vmem:[%s9 + $0xb8] sm:$0xff]
    %v1817 = vld [vmem:[%s9 + $0xc0] sm:$0xff]
    %v1818 = vld [vmem:[%s9 + $0xc8] sm:$0xff]
    %v1819 = vld [vmem:[%s9 + $0xd0] sm:$0xff]
    %v1820 = vld [vmem:[%s9 + $0xd8] sm:$0xff]
    %v1821 = vld [vmem:[%s9 + $0xe0] sm:$0xff]
    %v1822 = vld [vmem:[%s9 + $0xe8] sm:$0xff]
    %v1823 = vld [vmem:[%s9 + $0xf0] sm:$0xff]
    %v1824 = vld [vmem:[%s9 + $0xf8] sm:$0xff]
    %1825 = vmatprep.subr.mxu0 0.0
    %1826 = vmatpush1.msra.mxu0 %v1793
    %1827 = vmatprep.subr.mxu0 0.0
    %1828 = vmatpush1.msra.mxu0 %v1794
    %1829 = vmatprep.subr.mxu0 0.0
    %1830 = vmatpush1.msra.mxu0 %v1795
    %1831 = vmatprep.subr.mxu0 0.0
    %1832 = vmatpush1.msra.mxu0 %v1796
    %1833 = vmatprep.subr.mxu0 0.0
    %1834 = vmatpush1.msra.mxu0 %v1797
    %1835 = vmatprep.subr.mxu0 0.0
    %1836 = vmatpush1.msra.mxu0 %v1798
    %1837 = vmatprep.subr.mxu0 0.0
    %1838 = vmatpush1.msra.mxu0 %v1799
    %1839 = vmatprep.subr.mxu0 0.0
    %1840 = vmatpush1.msra.mxu0 %v1800
    %1841 = vmatprep.subr.mxu0 0.0
    %1842 = vmatpush1.msra.mxu0 %v1801
    %1843 = vmatprep.subr.mxu0 0.0
    %1844 = vmatpush1.msra.mxu0 %v1802
    %1845 = vmatprep.subr.mxu0 0.0
    %1846 = vmatpush1.msra.mxu0 %v1803
    %1847 = vmatprep.subr.mxu0 0.0
    %1848 = vmatpush1.msra.mxu0 %v1804
    %1849 = vmatprep.subr.mxu0 0.0
    %1850 = vmatpush1.msra.mxu0 %v1805
    %1851 = vmatprep.subr.mxu0 0.0
    %1852 = vmatpush1.msra.mxu0 %v1806
    %1853 = vmatprep.subr.mxu0 0.0
    %1854 = vmatpush1.msra.mxu0 %v1807
    %1855 = vmatprep.subr.mxu0 0.0
    %1856 = vmatpush1.msra.mxu0 %v1808
    %1857 = vmatprep.subr.mxu0 0.0
    %1858 = vmatpush1.msra.mxu0 %v1809
    %1859 = vmatprep.subr.mxu0 0.0
    %1860 = vmatpush1.msra.mxu0 %v1810
    %1861 = vmatprep.subr.mxu0 0.0
    %1862 = vmatpush1.msra.mxu0 %v1811
    %1863 = vmatprep.subr.mxu0 0.0
    %1864 = vmatpush1.msra.mxu0 %v1812
    %1865 = vmatprep.subr.mxu0 0.0
    %1866 = vmatpush1.msra.mxu0 %v1813
    %1867 = vmatprep.subr.mxu0 0.0
    %1868 = vmatpush1.msra.mxu0 %v1814
    %1869 = vmatprep.subr.mxu0 0.0
    %1870 = vmatpush1.msra.mxu0 %v1815
    %1871 = vmatprep.subr.mxu0 0.0
    %1872 = vmatpush1.msra.mxu0 %v1816
    %1873 = vmatprep.subr.mxu0 0.0
    %1874 = vmatpush1.msra.mxu0 %v1817
    %1875 = vmatprep.subr.mxu0 0.0
    %1876 = vmatpush1.msra.mxu0 %v1818
    %1877 = vmatprep.subr.mxu0 0.0
    %1878 = vmatpush1.msra.mxu0 %v1819
    %1879 = vmatprep.subr.mxu0 0.0
    %1880 = vmatpush1.msra.mxu0 %v1820
    %1881 = vmatprep.subr.mxu0 0.0
    %1882 = vmatpush1.msra.mxu0 %v1821
    %1883 = vmatprep.subr.mxu0 0.0
    %1884 = vmatpush1.msra.mxu0 %v1822
    %1885 = vmatprep.subr.mxu0 0.0
    %1886 = vmatpush1.msra.mxu0 %v1823
    %1887 = vmatprep.subr.mxu0 0.0
    %1888 = vmatpush1.msra.mxu0 %v1824
    %1889 = vmatprep.mubr.f32.mxu0 %v1750
    %1890 = vmatmul.mubr.f32.gmra.mrb[0].mxu0 %v1737
    %v1891 = vpop.f32.mrb[0].mxu0
    %v1892 = vadd.f32 0.0, %v1891
    %v1893 = vpop.f32.mrb[0].mxu0
    %1894 = vdwg.mxu0
    %v1895 = vmul.f32 %v1892, 0.00048828125
    %1896 = vmatprep.subr.mxu0 0.0
    %1897 = vmatpush1.msra.mxu0 %v1793
    %1898 = vmatprep.subr.mxu0 0.0
    %1899 = vmatpush1.msra.mxu0 %v1794
    %1900 = vmatprep.subr.mxu0 0.0
    %1901 = vmatpush1.msra.mxu0 %v1795
    %1902 = vmatprep.subr.mxu0 0.0
    %1903 = vmatpush1.msra.mxu0 %v1796
    %1904 = vmatprep.subr.mxu0 0.0
    %1905 = vmatpush1.msra.mxu0 %v1797
    %1906 = vmatprep.subr.mxu0 0.0
    %1907 = vmatpush1.msra.mxu0 %v1798
    %1908 = vmatprep.subr.mxu0 0.0
    %1909 = vmatpush1.msra.mxu0 %v1799
    %1910 = vmatprep.subr.mxu0 0.0
    %1911 = vmatpush1.msra.mxu0 %v1800
    %1912 = vmatprep.subr.mxu0 0.0
    %1913 = vmatpush1.msra.mxu0 %v1801
    %1914 = vmatprep.subr.mxu0 0.0
    %1915 = vmatpush1.msra.mxu0 %v1802
    %1916 = vmatprep.subr.mxu0 0.0
    %1917 = vmatpush1.msra.mxu0 %v1803
    %1918 = vmatprep.subr.mxu0 0.0
    %1919 = vmatpush1.msra.mxu0 %v1804
    %1920 = vmatprep.subr.mxu0 0.0
    %1921 = vmatpush1.msra.mxu0 %v1805
    %1922 = vmatprep.subr.mxu0 0.0
    %1923 = vmatpush1.msra.mxu0 %v1806
    %1924 = vmatprep.subr.mxu0 0.0
    %1925 = vmatpush1.msra.mxu0 %v1807
    %1926 = vmatprep.subr.mxu0 0.0
    %1927 = vmatpush1.msra.mxu0 %v1808
    %1928 = vmatprep.subr.mxu0 0.0
    %1929 = vmatpush1.msra.mxu0 %v1809
    %1930 = vmatprep.subr.mxu0 0.0
    %1931 = vmatpush1.msra.mxu0 %v1810
    %1932 = vmatprep.subr.mxu0 0.0
    %1933 = vmatpush1.msra.mxu0 %v1811
    %1934 = vmatprep.subr.mxu0 0.0
    %1935 = vmatpush1.msra.mxu0 %v1812
    %1936 = vmatprep.subr.mxu0 0.0
    %1937 = vmatpush1.msra.mxu0 %v1813
    %1938 = vmatprep.subr.mxu0 0.0
    %1939 = vmatpush1.msra.mxu0 %v1814
    %1940 = vmatprep.subr.mxu0 0.0
    %1941 = vmatpush1.msra.mxu0 %v1815
    %1942 = vmatprep.subr.mxu0 0.0
    %1943 = vmatpush1.msra.mxu0 %v1816
    %1944 = vmatprep.subr.mxu0 0.0
    %1945 = vmatpush1.msra.mxu0 %v1817
    %1946 = vmatprep.subr.mxu0 0.0
    %1947 = vmatpush1.msra.mxu0 %v1818
    %1948 = vmatprep.subr.mxu0 0.0
    %1949 = vmatpush1.msra.mxu0 %v1819
    %1950 = vmatprep.subr.mxu0 0.0
    %1951 = vmatpush1.msra.mxu0 %v1820
    %1952 = vmatprep.subr.mxu0 0.0
    %1953 = vmatpush1.msra.mxu0 %v1821
    %1954 = vmatprep.subr.mxu0 0.0
    %1955 = vmatpush1.msra.mxu0 %v1822
    %1956 = vmatprep.subr.mxu0 0.0
    %1957 = vmatpush1.msra.mxu0 %v1823
    %1958 = vmatprep.subr.mxu0 0.0
    %1959 = vmatpush1.msra.mxu0 %v1824
    %1960 = vmatprep.mubr.f32.mxu0 %v1792
    %1961 = vmatmul.mubr.f32.gmra.mrb[0].mxu0 %v1779
    %v1962 = vpop.f32.mrb[0].mxu0
    %v1963 = vadd.f32 0.0, %v1962
    %v1964 = vpop.f32.mrb[0].mxu0
    %1965 = vdwg.mxu0
    %v1966 = vmul.f32 %v1963, 0.00048828125
    %v1967 = vmul.f32 %v1895, %v1895
    %v1968 = vsub.f32 %v1966, %v1967
    %v1969 = vld [vmem:[%s7] sm:$0x1]
    %v1970 = vadd.f32 %v1968, 1e-05
    %v1971 = vrsqrt.pop %v1970
    %v1972 = vmul.f32 %v1969, %v1971
    %v1973 = vld [vmem:[%s7 + $0x1] sm:$0x1]
    %v1974 = vmul.f32 %v1895, %v1972
    %v1975 = vsub.f32 %v1973, %v1974
    %v1976 = vld [vmem:[%s11] sm:$0xff]
    %v1977 = vld [vmem:[%s11 + $0x8] sm:$0xff]
    %vm1978 = vcmask 64512
    %v1980 = vsel %vm1978, %v1972, 0
    %1982 = vmatprep.subr.mxu0 %v1977
    %1983 = vmatpush1.msra.mxu0 %v1976
    %1984 = vmatprep.subr.mxu0 0.0
    %1985 = vmatpush1.msra.mxu0 0.0
    %1986 = vmatprep.subr.mxu0 0.0
    %1987 = vmatpush1.msra.mxu0 0.0
    %1988 = vmatprep.subr.mxu0 0.0
    %1989 = vmatpush1.msra.mxu0 0.0
    %1990 = vmatprep.subr.mxu0 0.0
    %1991 = vmatpush1.msra.mxu0 0.0
    %1992 = vmatprep.subr.mxu0 0.0
    %1993 = vmatpush1.msra.mxu0 0.0
    %1994 = vmatprep.subr.mxu0 0.0
    %1995 = vmatpush1.msra.mxu0 0.0
    %1996 = vmatprep.subr.mxu0 0.0
    %1997 = vmatpush1.msra.mxu0 0.0
    %1998 = vmatprep.subr.mxu0 0.0
    %1999 = vmatpush1.msra.mxu0 0.0
    %2000 = vmatprep.subr.mxu0 0.0
    %2001 = vmatpush1.msra.mxu0 0.0
    %2002 = vmatprep.subr.mxu0 0.0
    %2003 = vmatpush1.msra.mxu0 0.0
    %2004 = vmatprep.subr.mxu0 0.0
    %2005 = vmatpush1.msra.mxu0 0.0
    %2006 = vmatprep.subr.mxu0 0.0
    %2007 = vmatpush1.msra.mxu0 0.0
    %2008 = vmatprep.subr.mxu0 0.0
    %2009 = vmatpush1.msra.mxu0 0.0
    %2010 = vmatprep.subr.mxu0 0.0
    %2011 = vmatpush1.msra.mxu0 0.0
    %2012 = vmatprep.subr.mxu0 0.0
    %2013 = vmatpush1.msra.mxu0 0.0
    %2014 = vmatprep.subr.mxu0 0.0
    %2015 = vmatpush1.msra.mxu0 0.0
    %2016 = vmatprep.subr.mxu0 0.0
    %2017 = vmatpush1.msra.mxu0 0.0
    %2018 = vmatprep.subr.mxu0 0.0
    %2019 = vmatpush1.msra.mxu0 0.0
    %2020 = vmatprep.subr.mxu0 0.0
    %2021 = vmatpush1.msra.mxu0 0.0
    %2022 = vmatprep.subr.mxu0 0.0
    %2023 = vmatpush1.msra.mxu0 0.0
    %2024 = vmatprep.subr.mxu0 0.0
    %2025 = vmatpush1.msra.mxu0 0.0
    %2026 = vmatprep.subr.mxu0 0.0
    %2027 = vmatpush1.msra.mxu0 0.0
    %2028 = vmatprep.subr.mxu0 0.0
    %2029 = vmatpush1.msra.mxu0 0.0
    %2030 = vmatprep.subr.mxu0 0.0
    %2031 = vmatpush1.msra.mxu0 0.0
    %2032 = vmatprep.subr.mxu0 0.0
    %2033 = vmatpush1.msra.mxu0 0.0
    %2034 = vmatprep.subr.mxu0 0.0
    %2035 = vmatpush1.msra.mxu0 0.0
    %2036 = vmatprep.subr.mxu0 0.0
    %2037 = vmatpush1.msra.mxu0 0.0
    %2038 = vmatprep.subr.mxu0 0.0
    %2039 = vmatpush1.msra.mxu0 0.0
    %2040 = vmatprep.subr.mxu0 0.0
    %2041 = vmatpush1.msra.mxu0 0.0
    %2042 = vmatprep.subr.mxu0 0.0
    %2043 = vmatpush1.msra.mxu0 0.0
    %2044 = vmatprep.subr.mxu0 0.0
    %2045 = vmatpush1.msra.mxu0 0.0
    %2046 = vmatprep.mubr.f32.mxu0 0.0
    %2047 = vmatmul.mubr.f32.gmra.mrb[0].mxu0 %v1980
    %v2048 = vpop.f32.mrb[0].mxu0
    %v2049 = vadd.f32 0.0, %v2048
    %v2050 = vpop.f32.mrb[0].mxu0
    %v2051 = vadd.f32 0.0, %v2050
    %2052 = vdwg.mxu0
    %v2053 = vlaneseq
    %v2054 = vshrl.u32 %v2053, 7
    %v2055 = vsub.s32 0, %v2054
    %v2056 = vrot.slane %v2049, %v2055
    %v2057 = vlaneseq
    %v2058 = vshrl.u32 %v2057, 7
    %v2059 = vsub.s32 0, %v2058
    %v2060 = vrot.slane %v2051, %v2059
    %v2061 = vmul.f32 %v1709, %v2056
    %v2062 = vmul.f32 %v1710, %v2060
    %v2063 = vmul.f32 %v1711, %v2056
    %v2064 = vmul.f32 %v1712, %v2060
    %v2065 = vmul.f32 %v1713, %v2056
    %v2066 = vmul.f32 %v1714, %v2060
    %v2067 = vmul.f32 %v1715, %v2056
    %v2068 = vmul.f32 %v1716, %v2060
    %v2069 = vmul.f32 %v1717, %v2056
    %v2070 = vmul.f32 %v1718, %v2060
    %v2071 = vmul.f32 %v1719, %v2056
    %v2072 = vmul.f32 %v1720, %v2060
    %v2073 = vmul.f32 %v1721, %v2056
    %v2074 = vmul.f32 %v1722, %v2060
    %v2075 = vmul.f32 %v1723, %v2056
    %v2076 = vmul.f32 %v1724, %v2060
    %v2078 = vsel %vm1978, %v1975, 0
    %2080 = vmatprep.subr.mxu0 %v1977
    %2081 = vmatpush1.msra.mxu0 %v1976
    %2082 = vmatprep.subr.mxu0 0.0
    %2083 = vmatpush1.msra.mxu0 0.0
    %2084 = vmatprep.subr.mxu0 0.0
    %2085 = vmatpush1.msra.mxu0 0.0
    %2086 = vmatprep.subr.mxu0 0.0
    %2087 = vmatpush1.msra.mxu0 0.0
    %2088 = vmatprep.subr.mxu0 0.0
    %2089 = vmatpush1.msra.mxu0 0.0
    %2090 = vmatprep.subr.mxu0 0.0
    %2091 = vmatpush1.msra.mxu0 0.0
    %2092 = vmatprep.subr.mxu0 0.0
    %2093 = vmatpush1.msra.mxu0 0.0
    %2094 = vmatprep.subr.mxu0 0.0
    %2095 = vmatpush1.msra.mxu0 0.0
    %2096 = vmatprep.subr.mxu0 0.0
    %2097 = vmatpush1.msra.mxu0 0.0
    %2098 = vmatprep.subr.mxu0 0.0
    %2099 = vmatpush1.msra.mxu0 0.0
    %2100 = vmatprep.subr.mxu0 0.0
    %2101 = vmatpush1.msra.mxu0 0.0
    %2102 = vmatprep.subr.mxu0 0.0
    %2103 = vmatpush1.msra.mxu0 0.0
    %2104 = vmatprep.subr.mxu0 0.0
    %2105 = vmatpush1.msra.mxu0 0.0
    %2106 = vmatprep.subr.mxu0 0.0
    %2107 = vmatpush1.msra.mxu0 0.0
    %2108 = vmatprep.subr.mxu0 0.0
    %2109 = vmatpush1.msra.mxu0 0.0
    %2110 = vmatprep.subr.mxu0 0.0
    %2111 = vmatpush1.msra.mxu0 0.0
    %2112 = vmatprep.subr.mxu0 0.0
    %2113 = vmatpush1.msra.mxu0 0.0
    %2114 = vmatprep.subr.mxu0 0.0
    %2115 = vmatpush1.msra.mxu0 0.0
    %2116 = vmatprep.subr.mxu0 0.0
    %2117 = vmatpush1.msra.mxu0 0.0
    %2118 = vmatprep.subr.mxu0 0.0
    %2119 = vmatpush1.msra.mxu0 0.0
    %2120 = vmatprep.subr.mxu0 0.0
    %2121 = vmatpush1.msra.mxu0 0.0
    %2122 = vmatprep.subr.mxu0 0.0
    %2123 = vmatpush1.msra.mxu0 0.0
    %2124 = vmatprep.subr.mxu0 0.0
    %2125 = vmatpush1.msra.mxu0 0.0
    %2126 = vmatprep.subr.mxu0 0.0
    %2127 = vmatpush1.msra.mxu0 0.0
    %2128 = vmatprep.subr.mxu0 0.0
    %2129 = vmatpush1.msra.mxu0 0.0
    %2130 = vmatprep.subr.mxu0 0.0
    %2131 = vmatpush1.msra.mxu0 0.0
    %2132 = vmatprep.subr.mxu0 0.0
    %2133 = vmatpush1.msra.mxu0 0.0
    %2134 = vmatprep.subr.mxu0 0.0
    %2135 = vmatpush1.msra.mxu0 0.0
    %2136 = vmatprep.subr.mxu0 0.0
    %2137 = vmatpush1.msra.mxu0 0.0
    %2138 = vmatprep.subr.mxu0 0.0
    %2139 = vmatpush1.msra.mxu0 0.0
    %2140 = vmatprep.subr.mxu0 0.0
    %2141 = vmatpush1.msra.mxu0 0.0
    %2142 = vmatprep.subr.mxu0 0.0
    %2143 = vmatpush1.msra.mxu0 0.0
    %2144 = vmatprep.mubr.f32.mxu0 0.0
    %2145 = vmatmul.mubr.f32.gmra.mrb[0].mxu0 %v2078
    %v2146 = vpop.f32.mrb[0].mxu0
    %v2147 = vadd.f32 0.0, %v2146
    %v2148 = vpop.f32.mrb[0].mxu0
    %v2149 = vadd.f32 0.0, %v2148
    %2150 = vdwg.mxu0
    %v2151 = vlaneseq
    %v2152 = vshrl.u32 %v2151, 7
    %v2153 = vsub.s32 0, %v2152
    %v2154 = vrot.slane %v2147, %v2153
    %v2155 = vlaneseq
    %v2156 = vshrl.u32 %v2155, 7
    %v2157 = vsub.s32 0, %v2156
    %v2158 = vrot.slane %v2149, %v2157
    %v2159 = vadd.f32 %v2061, %v2154
    %v2160 = vadd.f32 %v2062, %v2158
    %v2161 = vadd.f32 %v2063, %v2154
    %v2162 = vadd.f32 %v2064, %v2158
    %v2163 = vadd.f32 %v2065, %v2154
    %v2164 = vadd.f32 %v2066, %v2158
    %v2165 = vadd.f32 %v2067, %v2154
    %v2166 = vadd.f32 %v2068, %v2158
    %v2167 = vadd.f32 %v2069, %v2154
    %v2168 = vadd.f32 %v2070, %v2158
    %v2169 = vadd.f32 %v2071, %v2154
    %v2170 = vadd.f32 %v2072, %v2158
    %v2171 = vadd.f32 %v2073, %v2154
    %v2172 = vadd.f32 %v2074, %v2158
    %v2173 = vadd.f32 %v2075, %v2154
    %v2174 = vadd.f32 %v2076, %v2158
    %v2175 = vand.u32 2147483647, %v2159
    %v2176 = vand.u32 2147483647, %v2160
    %v2177 = vand.u32 2147483647, %v2161
    %v2178 = vand.u32 2147483647, %v2162
    %v2179 = vand.u32 2147483647, %v2163
    %v2180 = vand.u32 2147483647, %v2164
    %v2181 = vand.u32 2147483647, %v2165
    %v2182 = vand.u32 2147483647, %v2166
    %v2183 = vand.u32 2147483647, %v2167
    %v2184 = vand.u32 2147483647, %v2168
    %v2185 = vand.u32 2147483647, %v2169
    %v2186 = vand.u32 2147483647, %v2170
    %v2187 = vand.u32 2147483647, %v2171
    %v2188 = vand.u32 2147483647, %v2172
    %v2189 = vand.u32 2147483647, %v2173
    %v2190 = vand.u32 2147483647, %v2174
    %v2191 = vtanh.pop %v2175
    %v2192 = vtanh.pop %v2176
    %v2193 = vtanh.pop %v2177
    %v2194 = vtanh.pop %v2178
    %v2195 = vtanh.pop %v2179
    %v2196 = vtanh.pop %v2180
    %v2197 = vtanh.pop %v2181
    %v2198 = vtanh.pop %v2182
    %v2199 = vtanh.pop %v2183
    %v2200 = vtanh.pop %v2184
    %v2201 = vtanh.pop %v2185
    %v2202 = vtanh.pop %v2186
    %v2203 = vtanh.pop %v2187
    %v2204 = vtanh.pop %v2188
    %v2205 = vtanh.pop %v2189
    %v2206 = vtanh.pop %v2190
    %v2207 = vld [vmem:[%s13] sm:$0xff]
    %v2208 = vld [vmem:[%s13 + $0x8] sm:$0xff]
    %v2209 = vld [vmem:[%s13 + $0x10] sm:$0xff]
    %v2210 = vld [vmem:[%s13 + $0x18] sm:$0xff]
    %vm2211 = vcmask 523264
    %v2213 = vsel %vm2211, %v2207, 0
    %v2216 = vsel %vm2211, %v2208, 0
    %v2219 = vsel %vm2211, %v2209, 0
    %v2222 = vsel %vm2211, %v2210, 0
    %2224 = vmatprep.subr.mxu0 %v2192
    %2225 = vmatpush1.msra.mxu0 %v2191
    %2226 = vmatprep.subr.mxu0 %v2194
    %2227 = vmatpush1.msra.mxu0 %v2193
    %2228 = vmatprep.subr.mxu0 %v2196
    %2229 = vmatpush1.msra.mxu0 %v2195
    %2230 = vmatprep.subr.mxu0 %v2198
    %2231 = vmatpush1.msra.mxu0 %v2197
    %2232 = vmatprep.subr.mxu0 %v2200
    %2233 = vmatpush1.msra.mxu0 %v2199
    %2234 = vmatprep.subr.mxu0 %v2202
    %2235 = vmatpush1.msra.mxu0 %v2201
    %2236 = vmatprep.subr.mxu0 %v2204
    %2237 = vmatpush1.msra.mxu0 %v2203
    %2238 = vmatprep.subr.mxu0 %v2206
    %2239 = vmatpush1.msra.mxu0 %v2205
    %2240 = vmatprep.subr.mxu0 0.0
    %2241 = vmatpush1.msra.mxu0 0.0
    %2242 = vmatprep.subr.mxu0 0.0
    %2243 = vmatpush1.msra.mxu0 0.0
    %2244 = vmatprep.subr.mxu0 0.0
    %2245 = vmatpush1.msra.mxu0 0.0
    %2246 = vmatprep.subr.mxu0 0.0
    %2247 = vmatpush1.msra.mxu0 0.0
    %2248 = vmatprep.subr.mxu0 0.0
    %2249 = vmatpush1.msra.mxu0 0.0
    %2250 = vmatprep.subr.mxu0 0.0
    %2251 = vmatpush1.msra.mxu0 0.0
    %2252 = vmatprep.subr.mxu0 0.0
    %2253 = vmatpush1.msra.mxu0 0.0
    %2254 = vmatprep.subr.mxu0 0.0
    %2255 = vmatpush1.msra.mxu0 0.0
    %2256 = vmatprep.subr.mxu0 0.0
    %2257 = vmatpush1.msra.mxu0 0.0
    %2258 = vmatprep.subr.mxu0 0.0
    %2259 = vmatpush1.msra.mxu0 0.0
    %2260 = vmatprep.subr.mxu0 0.0
    %2261 = vmatpush1.msra.mxu0 0.0
    %2262 = vmatprep.subr.mxu0 0.0
    %2263 = vmatpush1.msra.mxu0 0.0
    %2264 = vmatprep.subr.mxu0 0.0
    %2265 = vmatpush1.msra.mxu0 0.0
    %2266 = vmatprep.subr.mxu0 0.0
    %2267 = vmatpush1.msra.mxu0 0.0
    %2268 = vmatprep.subr.mxu0 0.0
    %2269 = vmatpush1.msra.mxu0 0.0
    %2270 = vmatprep.subr.mxu0 0.0
    %2271 = vmatpush1.msra.mxu0 0.0
    %2272 = vmatprep.subr.mxu0 0.0
    %2273 = vmatpush1.msra.mxu0 0.0
    %2274 = vmatprep.subr.mxu0 0.0
    %2275 = vmatpush1.msra.mxu0 0.0
    %2276 = vmatprep.subr.mxu0 0.0
    %2277 = vmatpush1.msra.mxu0 0.0
    %2278 = vmatprep.subr.mxu0 0.0
    %2279 = vmatpush1.msra.mxu0 0.0
    %2280 = vmatprep.subr.mxu0 0.0
    %2281 = vmatpush1.msra.mxu0 0.0
    %2282 = vmatprep.subr.mxu0 0.0
    %2283 = vmatpush1.msra.mxu0 0.0
    %2284 = vmatprep.subr.mxu0 0.0
    %2285 = vmatpush1.msra.mxu0 0.0
    %2286 = vmatprep.subr.mxu0 0.0
    %2287 = vmatpush1.msra.mxu0 0.0
    %2288 = vmatprep.mubr.f32.mxu0 0.0
    %2289 = vmatmul.mubr.f32.gmra.mrb[0].mxu0 %v2213
    %v2290 = vpop.f32.mrb[0].mxu0
    %v2291 = vadd.f32 0.0, %v2290
    %v2292 = vpop.f32.mrb[0].mxu0
    %v2293 = vadd.f32 0.0, %v2292
    %2294 = vmatprep.mubr.f32.mxu0 0.0
    %2295 = vmatmul.mubr.f32.gmra.mrb[0].mxu0 %v2216
    %v2296 = vpop.f32.mrb[0].mxu0
    %v2297 = vadd.f32 0.0, %v2296
    %v2298 = vpop.f32.mrb[0].mxu0
    %v2299 = vadd.f32 0.0, %v2298
    %2300 = vmatprep.mubr.f32.mxu0 0.0
    %2301 = vmatmul.mubr.f32.gmra.mrb[0].mxu0 %v2219
    %v2302 = vpop.f32.mrb[0].mxu0
    %v2303 = vadd.f32 0.0, %v2302
    %v2304 = vpop.f32.mrb[0].mxu0
    %v2305 = vadd.f32 0.0, %v2304
    %2306 = vmatprep.mubr.f32.mxu0 0.0
    %2307 = vmatmul.mubr.f32.gmra.mrb[0].mxu0 %v2222
    %v2308 = vpop.f32.mrb[0].mxu0
    %v2309 = vadd.f32 0.0, %v2308
    %v2310 = vpop.f32.mrb[0].mxu0
    %v2311 = vadd.f32 0.0, %v2310
    %2312 = vdwg.mxu0
    %v2313 = vld [vmem:[%s15] sm:$0xff]
    %v2314 = vld [vmem:[%s15 + $0x8] sm:$0xff]
    %v2315 = vld [vmem:[%s15 + $0x10] sm:$0xff]
    %v2316 = vld [vmem:[%s15 + $0x18] sm:$0xff]
    %v2317 = vld [vmem:[%s15 + $0x20] sm:$0xff]
    %v2318 = vld [vmem:[%s15 + $0x28] sm:$0xff]
    %v2319 = vld [vmem:[%s15 + $0x30] sm:$0xff]
    %v2320 = vld [vmem:[%s15 + $0x38] sm:$0xff]
    %v2321 = vld [vmem:[%s15 + $0x40] sm:$0xff]
    %v2322 = vld [vmem:[%s15 + $0x48] sm:$0xff]
    %v2323 = vld [vmem:[%s15 + $0x50] sm:$0xff]
    %v2324 = vld [vmem:[%s15 + $0x58] sm:$0xff]
    %v2325 = vld [vmem:[%s15 + $0x60] sm:$0xff]
    %v2326 = vld [vmem:[%s15 + $0x68] sm:$0xff]
    %v2327 = vld [vmem:[%s15 + $0x70] sm:$0xff]
    %v2328 = vld [vmem:[%s15 + $0x78] sm:$0xff]
    %v2329 = vld [vmem:[%s15 + $0x80] sm:$0xff]
    %v2330 = vld [vmem:[%s15 + $0x88] sm:$0xff]
    %v2331 = vld [vmem:[%s15 + $0x90] sm:$0xff]
    %v2332 = vld [vmem:[%s15 + $0x98] sm:$0xff]
    %v2333 = vld [vmem:[%s15 + $0xa0] sm:$0xff]
    %v2334 = vld [vmem:[%s15 + $0xa8] sm:$0xff]
    %v2335 = vld [vmem:[%s15 + $0xb0] sm:$0xff]
    %v2336 = vld [vmem:[%s15 + $0xb8] sm:$0xff]
    %v2337 = vld [vmem:[%s15 + $0xc0] sm:$0xff]
    %v2338 = vld [vmem:[%s15 + $0xc8] sm:$0xff]
    %v2339 = vld [vmem:[%s15 + $0xd0] sm:$0xff]
    %v2340 = vld [vmem:[%s15 + $0xd8] sm:$0xff]
    %v2341 = vld [vmem:[%s15 + $0xe0] sm:$0xff]
    %v2342 = vld [vmem:[%s15 + $0xe8] sm:$0xff]
    %v2343 = vld [vmem:[%s15 + $0xf0] sm:$0xff]
    %v2344 = vld [vmem:[%s15 + $0xf8] sm:$0xff]
    %2345 = vmatprep.subr.mxu0 0.0
    %2346 = vmatpush1.msra.mxu0 %v2313
    %2347 = vmatprep.subr.mxu0 0.0
    %2348 = vmatpush1.msra.mxu0 %v2314
    %2349 = vmatprep.subr.mxu0 0.0
    %2350 = vmatpush1.msra.mxu0 %v2315
    %2351 = vmatprep.subr.mxu0 0.0
    %2352 = vmatpush1.msra.mxu0 %v2316
    %2353 = vmatprep.subr.mxu0 0.0
    %2354 = vmatpush1.msra.mxu0 %v2317
    %2355 = vmatprep.subr.mxu0 0.0
    %2356 = vmatpush1.msra.mxu0 %v2318
    %2357 = vmatprep.subr.mxu0 0.0
    %2358 = vmatpush1.msra.mxu0 %v2319
    %2359 = vmatprep.subr.mxu0 0.0
    %2360 = vmatpush1.msra.mxu0 %v2320
    %2361 = vmatprep.subr.mxu0 0.0
    %2362 = vmatpush1.msra.mxu0 %v2321
    %2363 = vmatprep.subr.mxu0 0.0
    %2364 = vmatpush1.msra.mxu0 %v2322
    %2365 = vmatprep.subr.mxu0 0.0
    %2366 = vmatpush1.msra.mxu0 %v2323
    %2367 = vmatprep.subr.mxu0 0.0
    %2368 = vmatpush1.msra.mxu0 %v2324
    %2369 = vmatprep.subr.mxu0 0.0
    %2370 = vmatpush1.msra.mxu0 %v2325
    %2371 = vmatprep.subr.mxu0 0.0
    %2372 = vmatpush1.msra.mxu0 %v2326
    %2373 = vmatprep.subr.mxu0 0.0
    %2374 = vmatpush1.msra.mxu0 %v2327
    %2375 = vmatprep.subr.mxu0 0.0
    %2376 = vmatpush1.msra.mxu0 %v2328
    %2377 = vmatprep.subr.mxu0 0.0
    %2378 = vmatpush1.msra.mxu0 %v2329
    %2379 = vmatprep.subr.mxu0 0.0
    %2380 = vmatpush1.msra.mxu0 %v2330
    %2381 = vmatprep.subr.mxu0 0.0
    %2382 = vmatpush1.msra.mxu0 %v2331
    %2383 = vmatprep.subr.mxu0 0.0
    %2384 = vmatpush1.msra.mxu0 %v2332
    %2385 = vmatprep.subr.mxu0 0.0
    %2386 = vmatpush1.msra.mxu0 %v2333
    %2387 = vmatprep.subr.mxu0 0.0
    %2388 = vmatpush1.msra.mxu0 %v2334
    %2389 = vmatprep.subr.mxu0 0.0
    %2390 = vmatpush1.msra.mxu0 %v2335
    %2391 = vmatprep.subr.mxu0 0.0
    %2392 = vmatpush1.msra.mxu0 %v2336
    %2393 = vmatprep.subr.mxu0 0.0
    %2394 = vmatpush1.msra.mxu0 %v2337
    %2395 = vmatprep.subr.mxu0 0.0
    %2396 = vmatpush1.msra.mxu0 %v2338
    %2397 = vmatprep.subr.mxu0 0.0
    %2398 = vmatpush1.msra.mxu0 %v2339
    %2399 = vmatprep.subr.mxu0 0.0
    %2400 = vmatpush1.msra.mxu0 %v2340
    %2401 = vmatprep.subr.mxu0 0.0
    %2402 = vmatpush1.msra.mxu0 %v2341
    %2403 = vmatprep.subr.mxu0 0.0
    %2404 = vmatpush1.msra.mxu0 %v2342
    %2405 = vmatprep.subr.mxu0 0.0
    %2406 = vmatpush1.msra.mxu0 %v2343
    %2407 = vmatprep.subr.mxu0 0.0
    %2408 = vmatpush1.msra.mxu0 %v2344
    %2409 = vmatprep.mubr.f32.mxu0 %v2293
    %2410 = vmatmul.mubr.f32.gmra.mrb[0].mxu0 %v2291
    %v2411 = vpop.f32.mrb[0].mxu0
    %v2412 = vadd.f32 0.0, %v2411
    %v2413 = vpop.f32.mrb[0].mxu0
    %2414 = vmatprep.mubr.f32.mxu0 %v2299
    %2415 = vmatmul.mubr.f32.gmra.mrb[0].mxu0 %v2297
    %v2416 = vpop.f32.mrb[0].mxu0
    %v2417 = vadd.f32 0.0, %v2416
    %v2418 = vpop.f32.mrb[0].mxu0
    %2419 = vmatprep.mubr.f32.mxu0 %v2305
    %2420 = vmatmul.mubr.f32.gmra.mrb[0].mxu0 %v2303
    %v2421 = vpop.f32.mrb[0].mxu0
    %v2422 = vadd.f32 0.0, %v2421
    %v2423 = vpop.f32.mrb[0].mxu0
    %2424 = vmatprep.mubr.f32.mxu0 %v2311
    %2425 = vmatmul.mubr.f32.gmra.mrb[0].mxu0 %v2309
    %v2426 = vpop.f32.mrb[0].mxu0
    %v2427 = vadd.f32 0.0, %v2426
    %v2428 = vpop.f32.mrb[0].mxu0
    %2429 = vdwg.mxu0
    %2430 = vst [vmem:[#allocation3] sm:$0xff] 0.0
    %2431 = vst [vmem:[#allocation3 + $0x8] sm:$0xff] 0.0
    %2432 = vst [vmem:[#allocation3 + $0x10] sm:$0xf] 0.0
    %2433 = vst [vmem:[#allocation3 + $0x18] sm:$0xff] 0.0
    %2434 = vst [vmem:[#allocation3 + $0x20] sm:$0xff] 0.0
    %2435 = vst [vmem:[#allocation3 + $0x28] sm:$0xf] 0.0
    %2436 = vst [vmem:[#allocation3 + $0x2] sm:$0xff] %v2412
    %2437 = vst [vmem:[#allocation3 + $0xa] sm:$0xff] %v2417
    %2438 = vst [vmem:[#allocation3 + $0x1a] sm:$0xff] %v2422
    %2439 = vst [vmem:[#allocation3 + $0x22] sm:$0xff] %v2427
    %v2440 = vld [vmem:[#allocation3] sm:$0xff]
    %v2441 = vld [vmem:[#allocation3 + $0x8] sm:$0xff]
    %v2442 = vld [vmem:[#allocation3 + $0x18] sm:$0xff]
    %v2443 = vld [vmem:[#allocation3 + $0x20] sm:$0xff]
    %v2444 = vld [vmem:[%s17] sm:$0xff]
    %v2445 = vld [vmem:[%s17 + $0x8] sm:$0xff]
    %v2446 = vld [vmem:[%s17 + $0x10] sm:$0xff]
    %v2447 = vld [vmem:[%s17 + $0x18] sm:$0xff]
    %v2448 = vld [vmem:[%s17 + $0x20] sm:$0xff]
    %v2449 = vld [vmem:[%s17 + $0x28] sm:$0xff]
    %v2450 = vld [vmem:[%s17 + $0x30] sm:$0xff]
    %v2451 = vld [vmem:[%s17 + $0x38] sm:$0xff]
    %v2452 = vld [vmem:[%s17 + $0x40] sm:$0xff]
    %v2453 = vld [vmem:[%s17 + $0x48] sm:$0xff]
    %v2454 = vld [vmem:[%s17 + $0x50] sm:$0xff]
    %v2455 = vld [vmem:[%s17 + $0x58] sm:$0xff]
    %v2456 = vld [vmem:[%s17 + $0x60] sm:$0xff]
    %v2457 = vld [vmem:[%s17 + $0x68] sm:$0xff]
    %v2458 = vld [vmem:[%s17 + $0x70] sm:$0xff]
    %v2459 = vld [vmem:[%s17 + $0x78] sm:$0xff]
    %v2460 = vld [vmem:[%s17 + $0x80] sm:$0xff]
    %v2461 = vld [vmem:[%s17 + $0x88] sm:$0xff]
    %v2462 = vld [vmem:[%s17 + $0x90] sm:$0xff]
    %v2463 = vld [vmem:[%s17 + $0x98] sm:$0xff]
    %v2464 = vld [vmem:[%s17 + $0xa0] sm:$0xff]
    %v2465 = vld [vmem:[%s17 + $0xa8] sm:$0xff]
    %v2466 = vld [vmem:[%s17 + $0xb0] sm:$0xff]
    %v2467 = vld [vmem:[%s17 + $0xb8] sm:$0xff]
    %v2468 = vld [vmem:[%s17 + $0xc0] sm:$0xff]
    %v2469 = vld [vmem:[%s17 + $0xc8] sm:$0xff]
    %v2470 = vld [vmem:[%s17 + $0xd0] sm:$0xff]
    %v2471 = vld [vmem:[%s17 + $0xd8] sm:$0xff]
    %v2472 = vld [vmem:[%s17 + $0xe0] sm:$0xff]
    %v2473 = vld [vmem:[%s17 + $0xe8] sm:$0xff]
    %v2474 = vld [vmem:[%s17 + $0xf0] sm:$0xff]
    %v2475 = vld [vmem:[%s17 + $0xf8] sm:$0xff]
    %v2476 = vld [vmem:[#allocation3 + $0x1] sm:$0xff]
    %v2477 = vld [vmem:[#allocation3 + $0x9] sm:$0xff]
    %v2478 = vld [vmem:[#allocation3 + $0x19] sm:$0xff]
    %v2479 = vld [vmem:[#allocation3 + $0x21] sm:$0xff]
    %s2480 = scalar_lea.vmem %s17, 256
    %v2481 = vld [vmem:[%s2480] sm:$0xff]
    %v2482 = vld [vmem:[%s2480 + $0x8] sm:$0xff]
    %v2483 = vld [vmem:[%s2480 + $0x10] sm:$0xff]
    %v2484 = vld [vmem:[%s2480 + $0x18] sm:$0xff]
    %v2485 = vld [vmem:[%s2480 + $0x20] sm:$0xff]
    %v2486 = vld [vmem:[%s2480 + $0x28] sm:$0xff]
    %v2487 = vld [vmem:[%s2480 + $0x30] sm:$0xff]
    %v2488 = vld [vmem:[%s2480 + $0x38] sm:$0xff]
    %v2489 = vld [vmem:[%s2480 + $0x40] sm:$0xff]
    %v2490 = vld [vmem:[%s2480 + $0x48] sm:$0xff]
    %v2491 = vld [vmem:[%s2480 + $0x50] sm:$0xff]
    %v2492 = vld [vmem:[%s2480 + $0x58] sm:$0xff]
    %v2493 = vld [vmem:[%s2480 + $0x60] sm:$0xff]
    %v2494 = vld [vmem:[%s2480 + $0x68] sm:$0xff]
    %v2495 = vld [vmem:[%s2480 + $0x70] sm:$0xff]
    %v2496 = vld [vmem:[%s2480 + $0x78] sm:$0xff]
    %v2497 = vld [vmem:[%s2480 + $0x80] sm:$0xff]
    %v2498 = vld [vmem:[%s2480 + $0x88] sm:$0xff]
    %v2499 = vld [vmem:[%s2480 + $0x90] sm:$0xff]
    %v2500 = vld [vmem:[%s2480 + $0x98] sm:$0xff]
    %v2501 = vld [vmem:[%s2480 + $0xa0] sm:$0xff]
    %v2502 = vld [vmem:[%s2480 + $0xa8] sm:$0xff]
    %v2503 = vld [vmem:[%s2480 + $0xb0] sm:$0xff]
    %v2504 = vld [vmem:[%s2480 + $0xb8] sm:$0xff]
    %v2505 = vld [vmem:[%s2480 + $0xc0] sm:$0xff]
    %v2506 = vld [vmem:[%s2480 + $0xc8] sm:$0xff]
    %v2507 = vld [vmem:[%s2480 + $0xd0] sm:$0xff]
    %v2508 = vld [vmem:[%s2480 + $0xd8] sm:$0xff]
    %v2509 = vld [vmem:[%s2480 + $0xe0] sm:$0xff]
    %v2510 = vld [vmem:[%s2480 + $0xe8] sm:$0xff]
    %v2511 = vld [vmem:[%s2480 + $0xf0] sm:$0xff]
    %v2512 = vld [vmem:[%s2480 + $0xf8] sm:$0xff]
    %2513 = vmatprep.subr.mxu0 %v2482
    %2514 = vmatpush1.msra.mxu0 %v2481
    %2515 = vmatprep.subr.mxu0 %v2484
    %2516 = vmatpush1.msra.mxu0 %v2483
    %2517 = vmatprep.subr.mxu0 %v2486
    %2518 = vmatpush1.msra.mxu0 %v2485
    %2519 = vmatprep.subr.mxu0 %v2488
    %2520 = vmatpush1.msra.mxu0 %v2487
    %2521 = vmatprep.subr.mxu0 %v2490
    %2522 = vmatpush1.msra.mxu0 %v2489
    %2523 = vmatprep.subr.mxu0 %v2492
    %2524 = vmatpush1.msra.mxu0 %v2491
    %2525 = vmatprep.subr.mxu0 %v2494
    %2526 = vmatpush1.msra.mxu0 %v2493
    %2527 = vmatprep.subr.mxu0 %v2496
    %2528 = vmatpush1.msra.mxu0 %v2495
    %2529 = vmatprep.subr.mxu0 %v2498
    %2530 = vmatpush1.msra.mxu0 %v2497
    %2531 = vmatprep.subr.mxu0 %v2500
    %2532 = vmatpush1.msra.mxu0 %v2499
    %2533 = vmatprep.subr.mxu0 %v2502
    %2534 = vmatpush1.msra.mxu0 %v2501
    %2535 = vmatprep.subr.mxu0 %v2504
    %2536 = vmatpush1.msra.mxu0 %v2503
    %2537 = vmatprep.subr.mxu0 %v2506
    %2538 = vmatpush1.msra.mxu0 %v2505
    %2539 = vmatprep.subr.mxu0 %v2508
    %2540 = vmatpush1.msra.mxu0 %v2507
    %2541 = vmatprep.subr.mxu0 %v2510
    %2542 = vmatpush1.msra.mxu0 %v2509
    %2543 = vmatprep.subr.mxu0 %v2512
    %2544 = vmatpush1.msra.mxu0 %v2511
    %2545 = vmatprep.subr.mxu0 0.0
    %2546 = vmatpush1.msra.mxu0 0.0
    %2547 = vmatprep.subr.mxu0 0.0
    %2548 = vmatpush1.msra.mxu0 0.0
    %2549 = vmatprep.subr.mxu0 0.0
    %2550 = vmatpush1.msra.mxu0 0.0
    %2551 = vmatprep.subr.mxu0 0.0
    %2552 = vmatpush1.msra.mxu0 0.0
    %2553 = vmatprep.subr.mxu0 0.0
    %2554 = vmatpush1.msra.mxu0 0.0
    %2555 = vmatprep.subr.mxu0 0.0
    %2556 = vmatpush1.msra.mxu0 0.0
    %2557 = vmatprep.subr.mxu0 0.0
    %2558 = vmatpush1.msra.mxu0 0.0
    %2559 = vmatprep.subr.mxu0 0.0
    %2560 = vmatpush1.msra.mxu0 0.0
    %2561 = vmatprep.subr.mxu0 0.0
    %2562 = vmatpush1.msra.mxu0 0.0
    %2563 = vmatprep.subr.mxu0 0.0
    %2564 = vmatpush1.msra.mxu0 0.0
    %2565 = vmatprep.subr.mxu0 0.0
    %2566 = vmatpush1.msra.mxu0 0.0
    %2567 = vmatprep.subr.mxu0 0.0
    %2568 = vmatpush1.msra.mxu0 0.0
    %2569 = vmatprep.subr.mxu0 0.0
    %2570 = vmatpush1.msra.mxu0 0.0
    %2571 = vmatprep.subr.mxu0 0.0
    %2572 = vmatpush1.msra.mxu0 0.0
    %2573 = vmatprep.subr.mxu0 0.0
    %2574 = vmatpush1.msra.mxu0 0.0
    %2575 = vmatprep.subr.mxu0 0.0
    %2576 = vmatpush1.msra.mxu0 0.0
    %2577 = vmatprep.mubr.f32.mxu0 0.0
    %2578 = vmatmul.mubr.f32.gmra.mrb[0].mxu0 %v2476
    %v2579 = vpop.f32.mrb[0].mxu0
    %v2580 = vadd.f32 0.0, %v2579
    %v2581 = vpop.f32.mrb[0].mxu0
    %v2582 = vadd.f32 0.0, %v2581
    %2583 = vmatprep.mubr.f32.mxu0 0.0
    %2584 = vmatmul.mubr.f32.gmra.mrb[0].mxu0 %v2477
    %v2585 = vpop.f32.mrb[0].mxu0
    %v2586 = vadd.f32 0.0, %v2585
    %v2587 = vpop.f32.mrb[0].mxu0
    %v2588 = vadd.f32 0.0, %v2587
    %2589 = vmatprep.mubr.f32.mxu0 0.0
    %2590 = vmatmul.mubr.f32.gmra.mrb[0].mxu0 %v2478
    %v2591 = vpop.f32.mrb[0].mxu0
    %v2592 = vadd.f32 0.0, %v2591
    %v2593 = vpop.f32.mrb[0].mxu0
    %v2594 = vadd.f32 0.0, %v2593
    %2595 = vmatprep.mubr.f32.mxu0 0.0
    %2596 = vmatmul.mubr.f32.gmra.mrb[0].mxu0 %v2479
    %v2597 = vpop.f32.mrb[0].mxu0
    %v2598 = vadd.f32 0.0, %v2597
    %v2599 = vpop.f32.mrb[0].mxu0
    %v2600 = vadd.f32 0.0, %v2599
    %2601 = vdwg.mxu0
    %2602 = vmatprep.subr.mxu0 %v2445
    %2603 = vmatpush1.msra.mxu0 %v2444
    %2604 = vmatprep.subr.mxu0 %v2447
    %2605 = vmatpush1.msra.mxu0 %v2446
    %2606 = vmatprep.subr.mxu0 %v2449
    %2607 = vmatpush1.msra.mxu0 %v2448
    %2608 = vmatprep.subr.mxu0 %v2451
    %2609 = vmatpush1.msra.mxu0 %v2450
    %2610 = vmatprep.subr.mxu0 %v2453
    %2611 = vmatpush1.msra.mxu0 %v2452
    %2612 = vmatprep.subr.mxu0 %v2455
    %2613 = vmatpush1.msra.mxu0 %v2454
    %2614 = vmatprep.subr.mxu0 %v2457
    %2615 = vmatpush1.msra.mxu0 %v2456
    %2616 = vmatprep.subr.mxu0 %v2459
    %2617 = vmatpush1.msra.mxu0 %v2458
    %2618 = vmatprep.subr.mxu0 %v2461
    %2619 = vmatpush1.msra.mxu0 %v2460
    %2620 = vmatprep.subr.mxu0 %v2463
    %2621 = vmatpush1.msra.mxu0 %v2462
    %2622 = vmatprep.subr.mxu0 %v2465
    %2623 = vmatpush1.msra.mxu0 %v2464
    %2624 = vmatprep.subr.mxu0 %v2467
    %2625 = vmatpush1.msra.mxu0 %v2466
    %2626 = vmatprep.subr.mxu0 %v2469
    %2627 = vmatpush1.msra.mxu0 %v2468
    %2628 = vmatprep.subr.mxu0 %v2471
    %2629 = vmatpush1.msra.mxu0 %v2470
    %2630 = vmatprep.subr.mxu0 %v2473
    %2631 = vmatpush1.msra.mxu0 %v2472
    %2632 = vmatprep.subr.mxu0 %v2475
    %2633 = vmatpush1.msra.mxu0 %v2474
    %2634 = vmatprep.subr.mxu0 0.0
    %2635 = vmatpush1.msra.mxu0 0.0
    %2636 = vmatprep.subr.mxu0 0.0
    %2637 = vmatpush1.msra.mxu0 0.0
    %2638 = vmatprep.subr.mxu0 0.0
    %2639 = vmatpush1.msra.mxu0 0.0
    %2640 = vmatprep.subr.mxu0 0.0
    %2641 = vmatpush1.msra.mxu0 0.0
    %2642 = vmatprep.subr.mxu0 0.0
    %2643 = vmatpush1.msra.mxu0 0.0
    %2644 = vmatprep.subr.mxu0 0.0
    %2645 = vmatpush1.msra.mxu0 0.0
    %2646 = vmatprep.subr.mxu0 0.0
    %2647 = vmatpush1.msra.mxu0 0.0
    %2648 = vmatprep.subr.mxu0 0.0
    %2649 = vmatpush1.msra.mxu0 0.0
    %2650 = vmatprep.subr.mxu0 0.0
    %2651 = vmatpush1.msra.mxu0 0.0
    %2652 = vmatprep.subr.mxu0 0.0
    %2653 = vmatpush1.msra.mxu0 0.0
    %2654 = vmatprep.subr.mxu0 0.0
    %2655 = vmatpush1.msra.mxu0 0.0
    %2656 = vmatprep.subr.mxu0 0.0
    %2657 = vmatpush1.msra.mxu0 0.0
    %2658 = vmatprep.subr.mxu0 0.0
    %2659 = vmatpush1.msra.mxu0 0.0
    %2660 = vmatprep.subr.mxu0 0.0
    %2661 = vmatpush1.msra.mxu0 0.0
    %2662 = vmatprep.subr.mxu0 0.0
    %2663 = vmatpush1.msra.mxu0 0.0
    %2664 = vmatprep.subr.mxu0 0.0
    %2665 = vmatpush1.msra.mxu0 0.0
    %2666 = vmatprep.mubr.f32.mxu0 0.0
    %2667 = vmatmul.mubr.f32.gmra.mrb[0].mxu0 %v2440
    %v2668 = vpop.f32.mrb[0].mxu0
    %v2669 = vadd.f32 %v2580, %v2668
    %v2670 = vpop.f32.mrb[0].mxu0
    %v2671 = vadd.f32 %v2582, %v2670
    %2672 = vmatprep.mubr.f32.mxu0 0.0
    %2673 = vmatmul.mubr.f32.gmra.mrb[0].mxu0 %v2441
    %v2674 = vpop.f32.mrb[0].mxu0
    %v2675 = vadd.f32 %v2586, %v2674
    %v2676 = vpop.f32.mrb[0].mxu0
    %v2677 = vadd.f32 %v2588, %v2676
    %2678 = vmatprep.mubr.f32.mxu0 0.0
    %2679 = vmatmul.mubr.f32.gmra.mrb[0].mxu0 %v2442
    %v2680 = vpop.f32.mrb[0].mxu0
    %v2681 = vadd.f32 %v2592, %v2680
    %v2682 = vpop.f32.mrb[0].mxu0
    %v2683 = vadd.f32 %v2594, %v2682
    %2684 = vmatprep.mubr.f32.mxu0 0.0
    %2685 = vmatmul.mubr.f32.gmra.mrb[0].mxu0 %v2443
    %v2686 = vpop.f32.mrb[0].mxu0
    %v2687 = vadd.f32 %v2598, %v2686
    %v2688 = vpop.f32.mrb[0].mxu0
    %v2689 = vadd.f32 %v2600, %v2688
    %2690 = vdwg.mxu0
    %v2691 = vld [vmem:[#allocation3 + $0x2] sm:$0xff]
    %v2692 = vld [vmem:[#allocation3 + $0xa] sm:$0xff]
    %v2693 = vld [vmem:[#allocation3 + $0x1a] sm:$0xff]
    %v2694 = vld [vmem:[#allocation3 + $0x22] sm:$0xff]
    %s2695 = scalar_lea.vmem %s17, 512
    %v2696 = vld [vmem:[%s2695] sm:$0xff]
    %v2697 = vld [vmem:[%s2695 + $0x8] sm:$0xff]
    %v2698 = vld [vmem:[%s2695 + $0x10] sm:$0xff]
    %v2699 = vld [vmem:[%s2695 + $0x18] sm:$0xff]
    %v2700 = vld [vmem:[%s2695 + $0x20] sm:$0xff]
    %v2701 = vld [vmem:[%s2695 + $0x28] sm:$0xff]
    %v2702 = vld [vmem:[%s2695 + $0x30] sm:$0xff]
    %v2703 = vld [vmem:[%s2695 + $0x38] sm:$0xff]
    %v2704 = vld [vmem:[%s2695 + $0x40] sm:$0xff]
    %v2705 = vld [vmem:[%s2695 + $0x48] sm:$0xff]
    %v2706 = vld [vmem:[%s2695 + $0x50] sm:$0xff]
    %v2707 = vld [vmem:[%s2695 + $0x58] sm:$0xff]
    %v2708 = vld [vmem:[%s2695 + $0x60] sm:$0xff]
    %v2709 = vld [vmem:[%s2695 + $0x68] sm:$0xff]
    %v2710 = vld [vmem:[%s2695 + $0x70] sm:$0xff]
    %v2711 = vld [vmem:[%s2695 + $0x78] sm:$0xff]
    %v2712 = vld [vmem:[%s2695 + $0x80] sm:$0xff]
    %v2713 = vld [vmem:[%s2695 + $0x88] sm:$0xff]
    %v2714 = vld [vmem:[%s2695 + $0x90] sm:$0xff]
    %v2715 = vld [vmem:[%s2695 + $0x98] sm:$0xff]
    %v2716 = vld [vmem:[%s2695 + $0xa0] sm:$0xff]
    %v2717 = vld [vmem:[%s2695 + $0xa8] sm:$0xff]
    %v2718 = vld [vmem:[%s2695 + $0xb0] sm:$0xff]
    %v2719 = vld [vmem:[%s2695 + $0xb8] sm:$0xff]
    %v2720 = vld [vmem:[%s2695 + $0xc0] sm:$0xff]
    %v2721 = vld [vmem:[%s2695 + $0xc8] sm:$0xff]
    %v2722 = vld [vmem:[%s2695 + $0xd0] sm:$0xff]
    %v2723 = vld [vmem:[%s2695 + $0xd8] sm:$0xff]
    %v2724 = vld [vmem:[%s2695 + $0xe0] sm:$0xff]
    %v2725 = vld [vmem:[%s2695 + $0xe8] sm:$0xff]
    %v2726 = vld [vmem:[%s2695 + $0xf0] sm:$0xff]
    %v2727 = vld [vmem:[%s2695 + $0xf8] sm:$0xff]
    %2728 = vmatprep.subr.mxu0 %v2697
    %2729 = vmatpush1.msra.mxu0 %v2696
    %2730 = vmatprep.subr.mxu0 %v2699
    %2731 = vmatpush1.msra.mxu0 %v2698
    %2732 = vmatprep.subr.mxu0 %v2701
    %2733 = vmatpush1.msra.mxu0 %v2700
    %2734 = vmatprep.subr.mxu0 %v2703
    %2735 = vmatpush1.msra.mxu0 %v2702
    %2736 = vmatprep.subr.mxu0 %v2705
    %2737 = vmatpush1.msra.mxu0 %v2704
    %2738 = vmatprep.subr.mxu0 %v2707
    %2739 = vmatpush1.msra.mxu0 %v2706
    %2740 = vmatprep.subr.mxu0 %v2709
    %2741 = vmatpush1.msra.mxu0 %v2708
    %2742 = vmatprep.subr.mxu0 %v2711
    %2743 = vmatpush1.msra.mxu0 %v2710
    %2744 = vmatprep.subr.mxu0 %v2713
    %2745 = vmatpush1.msra.mxu0 %v2712
    %2746 = vmatprep.subr.mxu0 %v2715
    %2747 = vmatpush1.msra.mxu0 %v2714
    %2748 = vmatprep.subr.mxu0 %v2717
    %2749 = vmatpush1.msra.mxu0 %v2716
    %2750 = vmatprep.subr.mxu0 %v2719
    %2751 = vmatpush1.msra.mxu0 %v2718
    %2752 = vmatprep.subr.mxu0 %v2721
    %2753 = vmatpush1.msra.mxu0 %v2720
    %2754 = vmatprep.subr.mxu0 %v2723
    %2755 = vmatpush1.msra.mxu0 %v2722
    %2756 = vmatprep.subr.mxu0 %v2725
    %2757 = vmatpush1.msra.mxu0 %v2724
    %2758 = vmatprep.subr.mxu0 %v2727
    %2759 = vmatpush1.msra.mxu0 %v2726
    %2760 = vmatprep.subr.mxu0 0.0
    %2761 = vmatpush1.msra.mxu0 0.0
    %2762 = vmatprep.subr.mxu0 0.0
    %2763 = vmatpush1.msra.mxu0 0.0
    %2764 = vmatprep.subr.mxu0 0.0
    %2765 = vmatpush1.msra.mxu0 0.0
    %2766 = vmatprep.subr.mxu0 0.0
    %2767 = vmatpush1.msra.mxu0 0.0
    %2768 = vmatprep.subr.mxu0 0.0
    %2769 = vmatpush1.msra.mxu0 0.0
    %2770 = vmatprep.subr.mxu0 0.0
    %2771 = vmatpush1.msra.mxu0 0.0
    %2772 = vmatprep.subr.mxu0 0.0
    %2773 = vmatpush1.msra.mxu0 0.0
    %2774 = vmatprep.subr.mxu0 0.0
    %2775 = vmatpush1.msra.mxu0 0.0
    %2776 = vmatprep.subr.mxu0 0.0
    %2777 = vmatpush1.msra.mxu0 0.0
    %2778 = vmatprep.subr.mxu0 0.0
    %2779 = vmatpush1.msra.mxu0 0.0
    %2780 = vmatprep.subr.mxu0 0.0
    %2781 = vmatpush1.msra.mxu0 0.0
    %2782 = vmatprep.subr.mxu0 0.0
    %2783 = vmatpush1.msra.mxu0 0.0
    %2784 = vmatprep.subr.mxu0 0.0
    %2785 = vmatpush1.msra.mxu0 0.0
    %2786 = vmatprep.subr.mxu0 0.0
    %2787 = vmatpush1.msra.mxu0 0.0
    %2788 = vmatprep.subr.mxu0 0.0
    %2789 = vmatpush1.msra.mxu0 0.0
    %2790 = vmatprep.subr.mxu0 0.0
    %2791 = vmatpush1.msra.mxu0 0.0
    %2792 = vmatprep.mubr.f32.mxu0 0.0
    %2793 = vmatmul.mubr.f32.gmra.mrb[0].mxu0 %v2691
    %v2794 = vpop.f32.mrb[0].mxu0
    %v2795 = vadd.f32 0.0, %v2794
    %v2796 = vpop.f32.mrb[0].mxu0
    %v2797 = vadd.f32 0.0, %v2796
    %2798 = vmatprep.mubr.f32.mxu0 0.0
    %2799 = vmatmul.mubr.f32.gmra.mrb[0].mxu0 %v2692
    %v2800 = vpop.f32.mrb[0].mxu0
    %v2801 = vadd.f32 0.0, %v2800
    %v2802 = vpop.f32.mrb[0].mxu0
    %v2803 = vadd.f32 0.0, %v2802
    %2804 = vmatprep.mubr.f32.mxu0 0.0
    %2805 = vmatmul.mubr.f32.gmra.mrb[0].mxu0 %v2693
    %v2806 = vpop.f32.mrb[0].mxu0
    %v2807 = vadd.f32 0.0, %v2806
    %v2808 = vpop.f32.mrb[0].mxu0
    %v2809 = vadd.f32 0.0, %v2808
    %2810 = vmatprep.mubr.f32.mxu0 0.0
    %2811 = vmatmul.mubr.f32.gmra.mrb[0].mxu0 %v2694
    %v2812 = vpop.f32.mrb[0].mxu0
    %v2813 = vadd.f32 0.0, %v2812
    %v2814 = vpop.f32.mrb[0].mxu0
    %v2815 = vadd.f32 0.0, %v2814
    %2816 = vdwg.mxu0
    %v2817 = vadd.f32 %v2669, %v2795
    %v2818 = vadd.f32 %v2671, %v2797
    %v2819 = vadd.f32 %v2675, %v2801
    %v2820 = vadd.f32 %v2677, %v2803
    %v2821 = vadd.f32 %v2681, %v2807
    %v2822 = vadd.f32 %v2683, %v2809
    %v2823 = vadd.f32 %v2687, %v2813
    %v2824 = vadd.f32 %v2689, %v2815
    %v2825 = vld [vmem:[#allocation3 + $0x3] sm:$0xff]
    %v2826 = vld [vmem:[#allocation3 + $0xb] sm:$0xff]
    %v2827 = vld [vmem:[#allocation3 + $0x1b] sm:$0xff]
    %v2828 = vld [vmem:[#allocation3 + $0x23] sm:$0xff]
    %s2829 = scalar_lea.vmem %s17, 768
    %v2830 = vld [vmem:[%s2829] sm:$0xff]
    %v2831 = vld [vmem:[%s2829 + $0x8] sm:$0xff]
    %v2832 = vld [vmem:[%s2829 + $0x10] sm:$0xff]
    %v2833 = vld [vmem:[%s2829 + $0x18] sm:$0xff]
    %v2834 = vld [vmem:[%s2829 + $0x20] sm:$0xff]
    %v2835 = vld [vmem:[%s2829 + $0x28] sm:$0xff]
    %v2836 = vld [vmem:[%s2829 + $0x30] sm:$0xff]
    %v2837 = vld [vmem:[%s2829 + $0x38] sm:$0xff]
    %v2838 = vld [vmem:[%s2829 + $0x40] sm:$0xff]
    %v2839 = vld [vmem:[%s2829 + $0x48] sm:$0xff]
    %v2840 = vld [vmem:[%s2829 + $0x50] sm:$0xff]
    %v2841 = vld [vmem:[%s2829 + $0x58] sm:$0xff]
    %v2842 = vld [vmem:[%s2829 + $0x60] sm:$0xff]
    %v2843 = vld [vmem:[%s2829 + $0x68] sm:$0xff]
    %v2844 = vld [vmem:[%s2829 + $0x70] sm:$0xff]
    %v2845 = vld [vmem:[%s2829 + $0x78] sm:$0xff]
    %v2846 = vld [vmem:[%s2829 + $0x80] sm:$0xff]
    %v2847 = vld [vmem:[%s2829 + $0x88] sm:$0xff]
    %v2848 = vld [vmem:[%s2829 + $0x90] sm:$0xff]
    %v2849 = vld [vmem:[%s2829 + $0x98] sm:$0xff]
    %v2850 = vld [vmem:[%s2829 + $0xa0] sm:$0xff]
    %v2851 = vld [vmem:[%s2829 + $0xa8] sm:$0xff]
    %v2852 = vld [vmem:[%s2829 + $0xb0] sm:$0xff]
    %v2853 = vld [vmem:[%s2829 + $0xb8] sm:$0xff]
    %v2854 = vld [vmem:[%s2829 + $0xc0] sm:$0xff]
    %v2855 = vld [vmem:[%s2829 + $0xc8] sm:$0xff]
    %v2856 = vld [vmem:[%s2829 + $0xd0] sm:$0xff]
    %v2857 = vld [vmem:[%s2829 + $0xd8] sm:$0xff]
    %v2858 = vld [vmem:[%s2829 + $0xe0] sm:$0xff]
    %v2859 = vld [vmem:[%s2829 + $0xe8] sm:$0xff]
    %v2860 = vld [vmem:[%s2829 + $0xf0] sm:$0xff]
    %v2861 = vld [vmem:[%s2829 + $0xf8] sm:$0xff]
    %2862 = vmatprep.subr.mxu0 %v2831
    %2863 = vmatpush1.msra.mxu0 %v2830
    %2864 = vmatprep.subr.mxu0 %v2833
    %2865 = vmatpush1.msra.mxu0 %v2832
    %2866 = vmatprep.subr.mxu0 %v2835
    %2867 = vmatpush1.msra.mxu0 %v2834
    %2868 = vmatprep.subr.mxu0 %v2837
    %2869 = vmatpush1.msra.mxu0 %v2836
    %2870 = vmatprep.subr.mxu0 %v2839
    %2871 = vmatpush1.msra.mxu0 %v2838
    %2872 = vmatprep.subr.mxu0 %v2841
    %2873 = vmatpush1.msra.mxu0 %v2840
    %2874 = vmatprep.subr.mxu0 %v2843
    %2875 = vmatpush1.msra.mxu0 %v2842
    %2876 = vmatprep.subr.mxu0 %v2845
    %2877 = vmatpush1.msra.mxu0 %v2844
    %2878 = vmatprep.subr.mxu0 %v2847
    %2879 = vmatpush1.msra.mxu0 %v2846
    %2880 = vmatprep.subr.mxu0 %v2849
    %2881 = vmatpush1.msra.mxu0 %v2848
    %2882 = vmatprep.subr.mxu0 %v2851
    %2883 = vmatpush1.msra.mxu0 %v2850
    %2884 = vmatprep.subr.mxu0 %v2853
    %2885 = vmatpush1.msra.mxu0 %v2852
    %2886 = vmatprep.subr.mxu0 %v2855
    %2887 = vmatpush1.msra.mxu0 %v2854
    %2888 = vmatprep.subr.mxu0 %v2857
    %2889 = vmatpush1.msra.mxu0 %v2856
    %2890 = vmatprep.subr.mxu0 %v2859
    %2891 = vmatpush1.msra.mxu0 %v2858
    %2892 = vmatprep.subr.mxu0 %v2861
    %2893 = vmatpush1.msra.mxu0 %v2860
    %2894 = vmatprep.subr.mxu0 0.0
    %2895 = vmatpush1.msra.mxu0 0.0
    %2896 = vmatprep.subr.mxu0 0.0
    %2897 = vmatpush1.msra.mxu0 0.0
    %2898 = vmatprep.subr.mxu0 0.0
    %2899 = vmatpush1.msra.mxu0 0.0
    %2900 = vmatprep.subr.mxu0 0.0
    %2901 = vmatpush1.msra.mxu0 0.0
    %2902 = vmatprep.subr.mxu0 0.0
    %2903 = vmatpush1.msra.mxu0 0.0
    %2904 = vmatprep.subr.mxu0 0.0
    %2905 = vmatpush1.msra.mxu0 0.0
    %2906 = vmatprep.subr.mxu0 0.0
    %2907 = vmatpush1.msra.mxu0 0.0
    %2908 = vmatprep.subr.mxu0 0.0
    %2909 = vmatpush1.msra.mxu0 0.0
    %2910 = vmatprep.subr.mxu0 0.0
    %2911 = vmatpush1.msra.mxu0 0.0
    %2912 = vmatprep.subr.mxu0 0.0
    %2913 = vmatpush1.msra.mxu0 0.0
    %2914 = vmatprep.subr.mxu0 0.0
    %2915 = vmatpush1.msra.mxu0 0.0
    %2916 = vmatprep.subr.mxu0 0.0
    %2917 = vmatpush1.msra.mxu0 0.0
    %2918 = vmatprep.subr.mxu0 0.0
    %2919 = vmatpush1.msra.mxu0 0.0
    %2920 = vmatprep.subr.mxu0 0.0
    %2921 = vmatpush1.msra.mxu0 0.0
    %2922 = vmatprep.subr.mxu0 0.0
    %2923 = vmatpush1.msra.mxu0 0.0
    %2924 = vmatprep.subr.mxu0 0.0
    %2925 = vmatpush1.msra.mxu0 0.0
    %2926 = vmatprep.mubr.f32.mxu0 0.0
    %2927 = vmatmul.mubr.f32.gmra.mrb[0].mxu0 %v2825
    %v2928 = vpop.f32.mrb[0].mxu0
    %v2929 = vadd.f32 0.0, %v2928
    %v2930 = vpop.f32.mrb[0].mxu0
    %v2931 = vadd.f32 0.0, %v2930
    %2932 = vmatprep.mubr.f32.mxu0 0.0
    %2933 = vmatmul.mubr.f32.gmra.mrb[0].mxu0 %v2826
    %v2934 = vpop.f32.mrb[0].mxu0
    %v2935 = vadd.f32 0.0, %v2934
    %v2936 = vpop.f32.mrb[0].mxu0
    %v2937 = vadd.f32 0.0, %v2936
    %2938 = vmatprep.mubr.f32.mxu0 0.0
    %2939 = vmatmul.mubr.f32.gmra.mrb[0].mxu0 %v2827
    %v2940 = vpop.f32.mrb[0].mxu0
    %v2941 = vadd.f32 0.0, %v2940
    %v2942 = vpop.f32.mrb[0].mxu0
    %v2943 = vadd.f32 0.0, %v2942
    %2944 = vmatprep.mubr.f32.mxu0 0.0
    %2945 = vmatmul.mubr.f32.gmra.mrb[0].mxu0 %v2828
    %v2946 = vpop.f32.mrb[0].mxu0
    %v2947 = vadd.f32 0.0, %v2946
    %v2948 = vpop.f32.mrb[0].mxu0
    %v2949 = vadd.f32 0.0, %v2948
    %2950 = vdwg.mxu0
    %v2951 = vadd.f32 %v2817, %v2929
    %v2952 = vadd.f32 %v2818, %v2931
    %v2953 = vadd.f32 %v2819, %v2935
    %v2954 = vadd.f32 %v2820, %v2937
    %v2955 = vadd.f32 %v2821, %v2941
    %v2956 = vadd.f32 %v2822, %v2943
    %v2957 = vadd.f32 %v2823, %v2947
    %v2958 = vadd.f32 %v2824, %v2949
    %v2959 = vld [vmem:[#allocation3 + $0x4] sm:$0xff]
    %v2960 = vld [vmem:[#allocation3 + $0xc] sm:$0xff]
    %v2961 = vld [vmem:[#allocation3 + $0x1c] sm:$0xff]
    %v2962 = vld [vmem:[#allocation3 + $0x24] sm:$0xff]
    %s2963 = scalar_lea.vmem %s17, 1024
    %v2964 = vld [vmem:[%s2963] sm:$0xff]
    %v2965 = vld [vmem:[%s2963 + $0x8] sm:$0xff]
    %v2966 = vld [vmem:[%s2963 + $0x10] sm:$0xff]
    %v2967 = vld [vmem:[%s2963 + $0x18] sm:$0xff]
    %v2968 = vld [vmem:[%s2963 + $0x20] sm:$0xff]
    %v2969 = vld [vmem:[%s2963 + $0x28] sm:$0xff]
    %v2970 = vld [vmem:[%s2963 + $0x30] sm:$0xff]
    %v2971 = vld [vmem:[%s2963 + $0x38] sm:$0xff]
    %v2972 = vld [vmem:[%s2963 + $0x40] sm:$0xff]
    %v2973 = vld [vmem:[%s2963 + $0x48] sm:$0xff]
    %v2974 = vld [vmem:[%s2963 + $0x50] sm:$0xff]
    %v2975 = vld [vmem:[%s2963 + $0x58] sm:$0xff]
    %v2976 = vld [vmem:[%s2963 + $0x60] sm:$0xff]
    %v2977 = vld [vmem:[%s2963 + $0x68] sm:$0xff]
    %v2978 = vld [vmem:[%s2963 + $0x70] sm:$0xff]
    %v2979 = vld [vmem:[%s2963 + $0x78] sm:$0xff]
    %v2980 = vld [vmem:[%s2963 + $0x80] sm:$0xff]
    %v2981 = vld [vmem:[%s2963 + $0x88] sm:$0xff]
    %v2982 = vld [vmem:[%s2963 + $0x90] sm:$0xff]
    %v2983 = vld [vmem:[%s2963 + $0x98] sm:$0xff]
    %v2984 = vld [vmem:[%s2963 + $0xa0] sm:$0xff]
    %v2985 = vld [vmem:[%s2963 + $0xa8] sm:$0xff]
    %v2986 = vld [vmem:[%s2963 + $0xb0] sm:$0xff]
    %v2987 = vld [vmem:[%s2963 + $0xb8] sm:$0xff]
    %v2988 = vld [vmem:[%s2963 + $0xc0] sm:$0xff]
    %v2989 = vld [vmem:[%s2963 + $0xc8] sm:$0xff]
    %v2990 = vld [vmem:[%s2963 + $0xd0] sm:$0xff]
    %v2991 = vld [vmem:[%s2963 + $0xd8] sm:$0xff]
    %v2992 = vld [vmem:[%s2963 + $0xe0] sm:$0xff]
    %v2993 = vld [vmem:[%s2963 + $0xe8] sm:$0xff]
    %v2994 = vld [vmem:[%s2963 + $0xf0] sm:$0xff]
    %v2995 = vld [vmem:[%s2963 + $0xf8] sm:$0xff]
    %2996 = vmatprep.subr.mxu0 %v2965
    %2997 = vmatpush1.msra.mxu0 %v2964
    %2998 = vmatprep.subr.mxu0 %v2967
    %2999 = vmatpush1.msra.mxu0 %v2966
    %3000 = vmatprep.subr.mxu0 %v2969
    %3001 = vmatpush1.msra.mxu0 %v2968
    %3002 = vmatprep.subr.mxu0 %v2971
    %3003 = vmatpush1.msra.mxu0 %v2970
    %3004 = vmatprep.subr.mxu0 %v2973
    %3005 = vmatpush1.msra.mxu0 %v2972
    %3006 = vmatprep.subr.mxu0 %v2975
    %3007 = vmatpush1.msra.mxu0 %v2974
    %3008 = vmatprep.subr.mxu0 %v2977
    %3009 = vmatpush1.msra.mxu0 %v2976
    %3010 = vmatprep.subr.mxu0 %v2979
    %3011 = vmatpush1.msra.mxu0 %v2978
    %3012 = vmatprep.subr.mxu0 %v2981
    %3013 = vmatpush1.msra.mxu0 %v2980
    %3014 = vmatprep.subr.mxu0 %v2983
    %3015 = vmatpush1.msra.mxu0 %v2982
    %3016 = vmatprep.subr.mxu0 %v2985
    %3017 = vmatpush1.msra.mxu0 %v2984
    %3018 = vmatprep.subr.mxu0 %v2987
    %3019 = vmatpush1.msra.mxu0 %v2986
    %3020 = vmatprep.subr.mxu0 %v2989
    %3021 = vmatpush1.msra.mxu0 %v2988
    %3022 = vmatprep.subr.mxu0 %v2991
    %3023 = vmatpush1.msra.mxu0 %v2990
    %3024 = vmatprep.subr.mxu0 %v2993
    %3025 = vmatpush1.msra.mxu0 %v2992
    %3026 = vmatprep.subr.mxu0 %v2995
    %3027 = vmatpush1.msra.mxu0 %v2994
    %3028 = vmatprep.subr.mxu0 0.0
    %3029 = vmatpush1.msra.mxu0 0.0
    %3030 = vmatprep.subr.mxu0 0.0
    %3031 = vmatpush1.msra.mxu0 0.0
    %3032 = vmatprep.subr.mxu0 0.0
    %3033 = vmatpush1.msra.mxu0 0.0
    %3034 = vmatprep.subr.mxu0 0.0
    %3035 = vmatpush1.msra.mxu0 0.0
    %3036 = vmatprep.subr.mxu0 0.0
    %3037 = vmatpush1.msra.mxu0 0.0
    %3038 = vmatprep.subr.mxu0 0.0
    %3039 = vmatpush1.msra.mxu0 0.0
    %3040 = vmatprep.subr.mxu0 0.0
    %3041 = vmatpush1.msra.mxu0 0.0
    %3042 = vmatprep.subr.mxu0 0.0
    %3043 = vmatpush1.msra.mxu0 0.0
    %3044 = vmatprep.subr.mxu0 0.0
    %3045 = vmatpush1.msra.mxu0 0.0
    %3046 = vmatprep.subr.mxu0 0.0
    %3047 = vmatpush1.msra.mxu0 0.0
    %3048 = vmatprep.subr.mxu0 0.0
    %3049 = vmatpush1.msra.mxu0 0.0
    %3050 = vmatprep.subr.mxu0 0.0
    %3051 = vmatpush1.msra.mxu0 0.0
    %3052 = vmatprep.subr.mxu0 0.0
    %3053 = vmatpush1.msra.mxu0 0.0
    %3054 = vmatprep.subr.mxu0 0.0
    %3055 = vmatpush1.msra.mxu0 0.0
    %3056 = vmatprep.subr.mxu0 0.0
    %3057 = vmatpush1.msra.mxu0 0.0
    %3058 = vmatprep.subr.mxu0 0.0
    %3059 = vmatpush1.msra.mxu0 0.0
    %3060 = vmatprep.mubr.f32.mxu0 0.0
    %3061 = vmatmul.mubr.f32.gmra.mrb[0].mxu0 %v2959
    %v3062 = vpop.f32.mrb[0].mxu0
    %v3063 = vadd.f32 0.0, %v3062
    %v3064 = vpop.f32.mrb[0].mxu0
    %v3065 = vadd.f32 0.0, %v3064
    %3066 = vmatprep.mubr.f32.mxu0 0.0
    %3067 = vmatmul.mubr.f32.gmra.mrb[0].mxu0 %v2960
    %v3068 = vpop.f32.mrb[0].mxu0
    %v3069 = vadd.f32 0.0, %v3068
    %v3070 = vpop.f32.mrb[0].mxu0
    %v3071 = vadd.f32 0.0, %v3070
    %3072 = vmatprep.mubr.f32.mxu0 0.0
    %3073 = vmatmul.mubr.f32.gmra.mrb[0].mxu0 %v2961
    %v3074 = vpop.f32.mrb[0].mxu0
    %v3075 = vadd.f32 0.0, %v3074
    %v3076 = vpop.f32.mrb[0].mxu0
    %v3077 = vadd.f32 0.0, %v3076
    %3078 = vmatprep.mubr.f32.mxu0 0.0
    %3079 = vmatmul.mubr.f32.gmra.mrb[0].mxu0 %v2962
    %v3080 = vpop.f32.mrb[0].mxu0
    %v3081 = vadd.f32 0.0, %v3080
    %v3082 = vpop.f32.mrb[0].mxu0
    %v3083 = vadd.f32 0.0, %v3082
    %3084 = vdwg.mxu0
    %v3085 = vadd.f32 %v2951, %v3063
    %v3086 = vadd.f32 %v2952, %v3065
    %v3087 = vadd.f32 %v2953, %v3069
    %v3088 = vadd.f32 %v2954, %v3071
    %v3089 = vadd.f32 %v2955, %v3075
    %v3090 = vadd.f32 %v2956, %v3077
    %v3091 = vadd.f32 %v2957, %v3081
    %v3092 = vadd.f32 %v2958, %v3083
    %v3093 = vadd.f32 %v3085, %v3087
    %v3094 = vadd.f32 %v3093, %v3089
    %v3095 = vadd.f32 %v3094, %v3091
    %v3096 = vrot.slane %v3095, 4
    %v3097 = vadd.f32 %v3095, %v3096
    %v3098 = vrot.slane %v3097, 2
    %v3099 = vadd.f32 %v3097, %v3098
    %v3100 = vrot.slane %v3099, 1
    %v3101 = vadd.f32 %v3099, %v3100
    %v3102 = vadd.f32 %v3086, %v3088
    %v3103 = vadd.f32 %v3102, %v3090
    %v3104 = vadd.f32 %v3103, %v3092
    %v3105 = vrot.slane %v3104, 4
    %v3106 = vadd.f32 %v3104, %v3105
    %v3107 = vrot.slane %v3106, 2
    %v3108 = vadd.f32 %v3106, %v3107
    %v3109 = vrot.slane %v3108, 1
    %v3110 = vadd.f32 %v3108, %v3109
    %v3111 = vmul.f32 %v3085, %v3085
    %v3112 = vmul.f32 %v3086, %v3086
    %v3113 = vmul.f32 %v3087, %v3087
    %v3114 = vmul.f32 %v3088, %v3088
    %v3115 = vmul.f32 %v3089, %v3089
    %v3116 = vmul.f32 %v3090, %v3090
    %v3117 = vmul.f32 %v3091, %v3091
    %v3118 = vmul.f32 %v3092, %v3092
    %v3119 = vadd.f32 %v3111, %v3113
    %v3120 = vadd.f32 %v3119, %v3115
    %v3121 = vadd.f32 %v3120, %v3117
    %v3122 = vrot.slane %v3121, 4
    %v3123 = vadd.f32 %v3121, %v3122
    %v3124 = vrot.slane %v3123, 2
    %v3125 = vadd.f32 %v3123, %v3124
    %v3126 = vrot.slane %v3125, 1
    %v3127 = vadd.f32 %v3125, %v3126
    %v3128 = vadd.f32 %v3112, %v3114
    %v3129 = vadd.f32 %v3128, %v3116
    %v3130 = vadd.f32 %v3129, %v3118
    %v3131 = vrot.slane %v3130, 4
    %v3132 = vadd.f32 %v3130, %v3131
    %v3133 = vrot.slane %v3132, 2
    %v3134 = vadd.f32 %v3132, %v3133
    %v3135 = vrot.slane %v3134, 1
    %v3136 = vadd.f32 %v3134, %v3135
    %v3137 = vld [vmem:[%s21] sm:$0xff]
    %v3138 = vld [vmem:[%s21 + $0x8] sm:$0xff]
    %v3139 = vld [vmem:[%s21 + $0x10] sm:$0xff]
    %v3140 = vld [vmem:[%s21 + $0x18] sm:$0xff]
    %v3141 = vld [vmem:[%s21 + $0x20] sm:$0xff]
    %v3142 = vld [vmem:[%s21 + $0x28] sm:$0xff]
    %v3143 = vld [vmem:[%s21 + $0x30] sm:$0xff]
    %v3144 = vld [vmem:[%s21 + $0x38] sm:$0xff]
    %v3145 = vld [vmem:[%s21 + $0x40] sm:$0xff]
    %v3146 = vld [vmem:[%s21 + $0x48] sm:$0xff]
    %v3147 = vld [vmem:[%s21 + $0x50] sm:$0xff]
    %v3148 = vld [vmem:[%s21 + $0x58] sm:$0xff]
    %v3149 = vld [vmem:[%s21 + $0x60] sm:$0xff]
    %v3150 = vld [vmem:[%s21 + $0x68] sm:$0xff]
    %v3151 = vld [vmem:[%s21 + $0x70] sm:$0xff]
    %v3152 = vld [vmem:[%s21 + $0x78] sm:$0xff]
    %v3153 = vld [vmem:[%s21 + $0x80] sm:$0xff]
    %v3154 = vld [vmem:[%s21 + $0x88] sm:$0xff]
    %v3155 = vld [vmem:[%s21 + $0x90] sm:$0xff]
    %v3156 = vld [vmem:[%s21 + $0x98] sm:$0xff]
    %v3157 = vld [vmem:[%s21 + $0xa0] sm:$0xff]
    %v3158 = vld [vmem:[%s21 + $0xa8] sm:$0xff]
    %v3159 = vld [vmem:[%s21 + $0xb0] sm:$0xff]
    %v3160 = vld [vmem:[%s21 + $0xb8] sm:$0xff]
    %v3161 = vld [vmem:[%s21 + $0xc0] sm:$0xff]
    %v3162 = vld [vmem:[%s21 + $0xc8] sm:$0xff]
    %v3163 = vld [vmem:[%s21 + $0xd0] sm:$0xff]
    %v3164 = vld [vmem:[%s21 + $0xd8] sm:$0xff]
    %v3165 = vld [vmem:[%s21 + $0xe0] sm:$0xff]
    %v3166 = vld [vmem:[%s21 + $0xe8] sm:$0xff]
    %v3167 = vld [vmem:[%s21 + $0xf0] sm:$0xff]
    %v3168 = vld [vmem:[%s21 + $0xf8] sm:$0xff]
    %3169 = vmatprep.subr.mxu0 0.0
    %3170 = vmatpush1.msra.mxu0 %v3137
    %3171 = vmatprep.subr.mxu0 0.0
    %3172 = vmatpush1.msra.mxu0 %v3138
    %3173 = vmatprep.subr.mxu0 0.0
    %3174 = vmatpush1.msra.mxu0 %v3139
    %3175 = vmatprep.subr.mxu0 0.0
    %3176 = vmatpush1.msra.mxu0 %v3140
    %3177 = vmatprep.subr.mxu0 0.0
    %3178 = vmatpush1.msra.mxu0 %v3141
    %3179 = vmatprep.subr.mxu0 0.0
    %3180 = vmatpush1.msra.mxu0 %v3142
    %3181 = vmatprep.subr.mxu0 0.0
    %3182 = vmatpush1.msra.mxu0 %v3143
    %3183 = vmatprep.subr.mxu0 0.0
    %3184 = vmatpush1.msra.mxu0 %v3144
    %3185 = vmatprep.subr.mxu0 0.0
    %3186 = vmatpush1.msra.mxu0 %v3145
    %3187 = vmatprep.subr.mxu0 0.0
    %3188 = vmatpush1.msra.mxu0 %v3146
    %3189 = vmatprep.subr.mxu0 0.0
    %3190 = vmatpush1.msra.mxu0 %v3147
    %3191 = vmatprep.subr.mxu0 0.0
    %3192 = vmatpush1.msra.mxu0 %v3148
    %3193 = vmatprep.subr.mxu0 0.0
    %3194 = vmatpush1.msra.mxu0 %v3149
    %3195 = vmatprep.subr.mxu0 0.0
    %3196 = vmatpush1.msra.mxu0 %v3150
    %3197 = vmatprep.subr.mxu0 0.0
    %3198 = vmatpush1.msra.mxu0 %v3151
    %3199 = vmatprep.subr.mxu0 0.0
    %3200 = vmatpush1.msra.mxu0 %v3152
    %3201 = vmatprep.subr.mxu0 0.0
    %3202 = vmatpush1.msra.mxu0 %v3153
    %3203 = vmatprep.subr.mxu0 0.0
    %3204 = vmatpush1.msra.mxu0 %v3154
    %3205 = vmatprep.subr.mxu0 0.0
    %3206 = vmatpush1.msra.mxu0 %v3155
    %3207 = vmatprep.subr.mxu0 0.0
    %3208 = vmatpush1.msra.mxu0 %v3156
    %3209 = vmatprep.subr.mxu0 0.0
    %3210 = vmatpush1.msra.mxu0 %v3157
    %3211 = vmatprep.subr.mxu0 0.0
    %3212 = vmatpush1.msra.mxu0 %v3158
    %3213 = vmatprep.subr.mxu0 0.0
    %3214 = vmatpush1.msra.mxu0 %v3159
    %3215 = vmatprep.subr.mxu0 0.0
    %3216 = vmatpush1.msra.mxu0 %v3160
    %3217 = vmatprep.subr.mxu0 0.0
    %3218 = vmatpush1.msra.mxu0 %v3161
    %3219 = vmatprep.subr.mxu0 0.0
    %3220 = vmatpush1.msra.mxu0 %v3162
    %3221 = vmatprep.subr.mxu0 0.0
    %3222 = vmatpush1.msra.mxu0 %v3163
    %3223 = vmatprep.subr.mxu0 0.0
    %3224 = vmatpush1.msra.mxu0 %v3164
    %3225 = vmatprep.subr.mxu0 0.0
    %3226 = vmatpush1.msra.mxu0 %v3165
    %3227 = vmatprep.subr.mxu0 0.0
    %3228 = vmatpush1.msra.mxu0 %v3166
    %3229 = vmatprep.subr.mxu0 0.0
    %3230 = vmatpush1.msra.mxu0 %v3167
    %3231 = vmatprep.subr.mxu0 0.0
    %3232 = vmatpush1.msra.mxu0 %v3168
    %3233 = vmatprep.mubr.f32.mxu0 %v3110
    %3234 = vmatmul.mubr.f32.gmra.mrb[0].mxu0 %v3101
    %v3235 = vpop.f32.mrb[0].mxu0
    %v3236 = vadd.f32 0.0, %v3235
    %v3237 = vpop.f32.mrb[0].mxu0
    %3238 = vdwg.mxu0
    %v3239 = vmul.f32 %v3236, 0.001953125
    %3240 = vmatprep.subr.mxu0 0.0
    %3241 = vmatpush1.msra.mxu0 %v3137
    %3242 = vmatprep.subr.mxu0 0.0
    %3243 = vmatpush1.msra.mxu0 %v3138
    %3244 = vmatprep.subr.mxu0 0.0
    %3245 = vmatpush1.msra.mxu0 %v3139
    %3246 = vmatprep.subr.mxu0 0.0
    %3247 = vmatpush1.msra.mxu0 %v3140
    %3248 = vmatprep.subr.mxu0 0.0
    %3249 = vmatpush1.msra.mxu0 %v3141
    %3250 = vmatprep.subr.mxu0 0.0
    %3251 = vmatpush1.msra.mxu0 %v3142
    %3252 = vmatprep.subr.mxu0 0.0
    %3253 = vmatpush1.msra.mxu0 %v3143
    %3254 = vmatprep.subr.mxu0 0.0
    %3255 = vmatpush1.msra.mxu0 %v3144
    %3256 = vmatprep.subr.mxu0 0.0
    %3257 = vmatpush1.msra.mxu0 %v3145
    %3258 = vmatprep.subr.mxu0 0.0
    %3259 = vmatpush1.msra.mxu0 %v3146
    %3260 = vmatprep.subr.mxu0 0.0
    %3261 = vmatpush1.msra.mxu0 %v3147
    %3262 = vmatprep.subr.mxu0 0.0
    %3263 = vmatpush1.msra.mxu0 %v3148
    %3264 = vmatprep.subr.mxu0 0.0
    %3265 = vmatpush1.msra.mxu0 %v3149
    %3266 = vmatprep.subr.mxu0 0.0
    %3267 = vmatpush1.msra.mxu0 %v3150
    %3268 = vmatprep.subr.mxu0 0.0
    %3269 = vmatpush1.msra.mxu0 %v3151
    %3270 = vmatprep.subr.mxu0 0.0
    %3271 = vmatpush1.msra.mxu0 %v3152
    %3272 = vmatprep.subr.mxu0 0.0
    %3273 = vmatpush1.msra.mxu0 %v3153
    %3274 = vmatprep.subr.mxu0 0.0
    %3275 = vmatpush1.msra.mxu0 %v3154
    %3276 = vmatprep.subr.mxu0 0.0
    %3277 = vmatpush1.msra.mxu0 %v3155
    %3278 = vmatprep.subr.mxu0 0.0
    %3279 = vmatpush1.msra.mxu0 %v3156
    %3280 = vmatprep.subr.mxu0 0.0
    %3281 = vmatpush1.msra.mxu0 %v3157
    %3282 = vmatprep.subr.mxu0 0.0
    %3283 = vmatpush1.msra.mxu0 %v3158
    %3284 = vmatprep.subr.mxu0 0.0
    %3285 = vmatpush1.msra.mxu0 %v3159
    %3286 = vmatprep.subr.mxu0 0.0
    %3287 = vmatpush1.msra.mxu0 %v3160
    %3288 = vmatprep.subr.mxu0 0.0
    %3289 = vmatpush1.msra.mxu0 %v3161
    %3290 = vmatprep.subr.mxu0 0.0
    %3291 = vmatpush1.msra.mxu0 %v3162
    %3292 = vmatprep.subr.mxu0 0.0
    %3293 = vmatpush1.msra.mxu0 %v3163
    %3294 = vmatprep.subr.mxu0 0.0
    %3295 = vmatpush1.msra.mxu0 %v3164
    %3296 = vmatprep.subr.mxu0 0.0
    %3297 = vmatpush1.msra.mxu0 %v3165
    %3298 = vmatprep.subr.mxu0 0.0
    %3299 = vmatpush1.msra.mxu0 %v3166
    %3300 = vmatprep.subr.mxu0 0.0
    %3301 = vmatpush1.msra.mxu0 %v3167
    %3302 = vmatprep.subr.mxu0 0.0
    %3303 = vmatpush1.msra.mxu0 %v3168
    %3304 = vmatprep.mubr.f32.mxu0 %v3136
    %3305 = vmatmul.mubr.f32.gmra.mrb[0].mxu0 %v3127
    %v3306 = vpop.f32.mrb[0].mxu0
    %v3307 = vadd.f32 0.0, %v3306
    %v3308 = vpop.f32.mrb[0].mxu0
    %3309 = vdwg.mxu0
    %v3310 = vmul.f32 %v3307, 0.001953125
    %v3311 = vmul.f32 %v3239, %v3239
    %v3312 = vsub.f32 %v3310, %v3311
    %v3313 = vld [vmem:[%s19] sm:$0x1]
    %v3314 = vadd.f32 %v3312, 1e-05
    %v3315 = vrsqrt.pop %v3314
    %v3316 = vmul.f32 %v3313, %v3315
    %v3317 = vld [vmem:[%s19 + $0x1] sm:$0x1]
    %v3318 = vmul.f32 %v3239, %v3316
    %v3319 = vsub.f32 %v3317, %v3318
    %v3320 = vld [vmem:[%s23] sm:$0xff]
    %v3321 = vld [vmem:[%s23 + $0x8] sm:$0xff]
    %v3322 = vld [vmem:[%s23 + $0x10] sm:$0xff]
    %v3323 = vld [vmem:[%s23 + $0x18] sm:$0xff]
    %vm3324 = vcmask 130048
    %v3326 = vsel %vm3324, %v3316, 0
    %3328 = vmatprep.subr.mxu0 %v3321
    %3329 = vmatpush1.msra.mxu0 %v3320
    %3330 = vmatprep.subr.mxu0 %v3323
    %3331 = vmatpush1.msra.mxu0 %v3322
    %3332 = vmatprep.subr.mxu0 0.0
    %3333 = vmatpush1.msra.mxu0 0.0
    %3334 = vmatprep.subr.mxu0 0.0
    %3335 = vmatpush1.msra.mxu0 0.0
    %3336 = vmatprep.subr.mxu0 0.0
    %3337 = vmatpush1.msra.mxu0 0.0
    %3338 = vmatprep.subr.mxu0 0.0
    %3339 = vmatpush1.msra.mxu0 0.0
    %3340 = vmatprep.subr.mxu0 0.0
    %3341 = vmatpush1.msra.mxu0 0.0
    %3342 = vmatprep.subr.mxu0 0.0
    %3343 = vmatpush1.msra.mxu0 0.0
    %3344 = vmatprep.subr.mxu0 0.0
    %3345 = vmatpush1.msra.mxu0 0.0
    %3346 = vmatprep.subr.mxu0 0.0
    %3347 = vmatpush1.msra.mxu0 0.0
    %3348 = vmatprep.subr.mxu0 0.0
    %3349 = vmatpush1.msra.mxu0 0.0
    %3350 = vmatprep.subr.mxu0 0.0
    %3351 = vmatpush1.msra.mxu0 0.0
    %3352 = vmatprep.subr.mxu0 0.0
    %3353 = vmatpush1.msra.mxu0 0.0
    %3354 = vmatprep.subr.mxu0 0.0
    %3355 = vmatpush1.msra.mxu0 0.0
    %3356 = vmatprep.subr.mxu0 0.0
    %3357 = vmatpush1.msra.mxu0 0.0
    %3358 = vmatprep.subr.mxu0 0.0
    %3359 = vmatpush1.msra.mxu0 0.0
    %3360 = vmatprep.subr.mxu0 0.0
    %3361 = vmatpush1.msra.mxu0 0.0
    %3362 = vmatprep.subr.mxu0 0.0
    %3363 = vmatpush1.msra.mxu0 0.0
    %3364 = vmatprep.subr.mxu0 0.0
    %3365 = vmatpush1.msra.mxu0 0.0
    %3366 = vmatprep.subr.mxu0 0.0
    %3367 = vmatpush1.msra.mxu0 0.0
    %3368 = vmatprep.subr.mxu0 0.0
    %3369 = vmatpush1.msra.mxu0 0.0
    %3370 = vmatprep.subr.mxu0 0.0
    %3371 = vmatpush1.msra.mxu0 0.0
    %3372 = vmatprep.subr.mxu0 0.0
    %3373 = vmatpush1.msra.mxu0 0.0
    %3374 = vmatprep.subr.mxu0 0.0
    %3375 = vmatpush1.msra.mxu0 0.0
    %3376 = vmatprep.subr.mxu0 0.0
    %3377 = vmatpush1.msra.mxu0 0.0
    %3378 = vmatprep.subr.mxu0 0.0
    %3379 = vmatpush1.msra.mxu0 0.0
    %3380 = vmatprep.subr.mxu0 0.0
    %3381 = vmatpush1.msra.mxu0 0.0
    %3382 = vmatprep.subr.mxu0 0.0
    %3383 = vmatpush1.msra.mxu0 0.0
    %3384 = vmatprep.subr.mxu0 0.0
    %3385 = vmatpush1.msra.mxu0 0.0
    %3386 = vmatprep.subr.mxu0 0.0
    %3387 = vmatpush1.msra.mxu0 0.0
    %3388 = vmatprep.subr.mxu0 0.0
    %3389 = vmatpush1.msra.mxu0 0.0
    %3390 = vmatprep.subr.mxu0 0.0
    %3391 = vmatpush1.msra.mxu0 0.0
    %3392 = vmatprep.mubr.f32.mxu0 0.0
    %3393 = vmatmul.mubr.f32.gmra.mrb[0].mxu0 %v3326
    %v3394 = vpop.f32.mrb[0].mxu0
    %v3395 = vadd.f32 0.0, %v3394
    %v3396 = vpop.f32.mrb[0].mxu0
    %v3397 = vadd.f32 0.0, %v3396
    %3398 = vdwg.mxu0
    %v3399 = vlaneseq
    %v3400 = vshrl.u32 %v3399, 7
    %v3401 = vsub.s32 0, %v3400
    %v3402 = vrot.slane %v3395, %v3401
    %v3403 = vlaneseq
    %v3404 = vshrl.u32 %v3403, 7
    %v3405 = vsub.s32 0, %v3404
    %v3406 = vrot.slane %v3397, %v3405
    %v3407 = vmul.f32 %v3085, %v3402
    %v3408 = vmul.f32 %v3086, %v3406
    %v3409 = vmul.f32 %v3087, %v3402
    %v3410 = vmul.f32 %v3088, %v3406
    %v3411 = vmul.f32 %v3089, %v3402
    %v3412 = vmul.f32 %v3090, %v3406
    %v3413 = vmul.f32 %v3091, %v3402
    %v3414 = vmul.f32 %v3092, %v3406
    %v3416 = vsel %vm3324, %v3319, 0
    %3418 = vmatprep.subr.mxu0 %v3321
    %3419 = vmatpush1.msra.mxu0 %v3320
    %3420 = vmatprep.subr.mxu0 %v3323
    %3421 = vmatpush1.msra.mxu0 %v3322
    %3422 = vmatprep.subr.mxu0 0.0
    %3423 = vmatpush1.msra.mxu0 0.0
    %3424 = vmatprep.subr.mxu0 0.0
    %3425 = vmatpush1.msra.mxu0 0.0
    %3426 = vmatprep.subr.mxu0 0.0
    %3427 = vmatpush1.msra.mxu0 0.0
    %3428 = vmatprep.subr.mxu0 0.0
    %3429 = vmatpush1.msra.mxu0 0.0
    %3430 = vmatprep.subr.mxu0 0.0
    %3431 = vmatpush1.msra.mxu0 0.0
    %3432 = vmatprep.subr.mxu0 0.0
    %3433 = vmatpush1.msra.mxu0 0.0
    %3434 = vmatprep.subr.mxu0 0.0
    %3435 = vmatpush1.msra.mxu0 0.0
    %3436 = vmatprep.subr.mxu0 0.0
    %3437 = vmatpush1.msra.mxu0 0.0
    %3438 = vmatprep.subr.mxu0 0.0
    %3439 = vmatpush1.msra.mxu0 0.0
    %3440 = vmatprep.subr.mxu0 0.0
    %3441 = vmatpush1.msra.mxu0 0.0
    %3442 = vmatprep.subr.mxu0 0.0
    %3443 = vmatpush1.msra.mxu0 0.0
    %3444 = vmatprep.subr.mxu0 0.0
    %3445 = vmatpush1.msra.mxu0 0.0
    %3446 = vmatprep.subr.mxu0 0.0
    %3447 = vmatpush1.msra.mxu0 0.0
    %3448 = vmatprep.subr.mxu0 0.0
    %3449 = vmatpush1.msra.mxu0 0.0
    %3450 = vmatprep.subr.mxu0 0.0
    %3451 = vmatpush1.msra.mxu0 0.0
    %3452 = vmatprep.subr.mxu0 0.0
    %3453 = vmatpush1.msra.mxu0 0.0
    %3454 = vmatprep.subr.mxu0 0.0
    %3455 = vmatpush1.msra.mxu0 0.0
    %3456 = vmatprep.subr.mxu0 0.0
    %3457 = vmatpush1.msra.mxu0 0.0
    %3458 = vmatprep.subr.mxu0 0.0
    %3459 = vmatpush1.msra.mxu0 0.0
    %3460 = vmatprep.subr.mxu0 0.0
    %3461 = vmatpush1.msra.mxu0 0.0
    %3462 = vmatprep.subr.mxu0 0.0
    %3463 = vmatpush1.msra.mxu0 0.0
    %3464 = vmatprep.subr.mxu0 0.0
    %3465 = vmatpush1.msra.mxu0 0.0
    %3466 = vmatprep.subr.mxu0 0.0
    %3467 = vmatpush1.msra.mxu0 0.0
    %3468 = vmatprep.subr.mxu0 0.0
    %3469 = vmatpush1.msra.mxu0 0.0
    %3470 = vmatprep.subr.mxu0 0.0
    %3471 = vmatpush1.msra.mxu0 0.0
    %3472 = vmatprep.subr.mxu0 0.0
    %3473 = vmatpush1.msra.mxu0 0.0
    %3474 = vmatprep.subr.mxu0 0.0
    %3475 = vmatpush1.msra.mxu0 0.0
    %3476 = vmatprep.subr.mxu0 0.0
    %3477 = vmatpush1.msra.mxu0 0.0
    %3478 = vmatprep.subr.mxu0 0.0
    %3479 = vmatpush1.msra.mxu0 0.0
    %3480 = vmatprep.subr.mxu0 0.0
    %3481 = vmatpush1.msra.mxu0 0.0
    %3482 = vmatprep.mubr.f32.mxu0 0.0
    %3483 = vmatmul.mubr.f32.gmra.mrb[0].mxu0 %v3416
    %v3484 = vpop.f32.mrb[0].mxu0
    %v3485 = vadd.f32 0.0, %v3484
    %v3486 = vpop.f32.mrb[0].mxu0
    %v3487 = vadd.f32 0.0, %v3486
    %3488 = vdwg.mxu0
    %v3489 = vlaneseq
    %v3490 = vshrl.u32 %v3489, 7
    %v3491 = vsub.s32 0, %v3490
    %v3492 = vrot.slane %v3485, %v3491
    %v3493 = vlaneseq
    %v3494 = vshrl.u32 %v3493, 7
    %v3495 = vsub.s32 0, %v3494
    %v3496 = vrot.slane %v3487, %v3495
    %v3497 = vadd.f32 %v3407, %v3492
    %v3498 = vadd.f32 %v3408, %v3496
    %v3499 = vadd.f32 %v3409, %v3492
    %v3500 = vadd.f32 %v3410, %v3496
    %v3501 = vadd.f32 %v3411, %v3492
    %v3502 = vadd.f32 %v3412, %v3496
    %v3503 = vadd.f32 %v3413, %v3492
    %v3504 = vadd.f32 %v3414, %v3496
    %v3505 = vtanh.pop %v3497
    %v3506 = vtanh.pop %v3498
    %v3507 = vtanh.pop %v3499
    %v3508 = vtanh.pop %v3500
    %v3509 = vtanh.pop %v3501
    %v3510 = vtanh.pop %v3502
    %v3511 = vtanh.pop %v3503
    %v3512 = vtanh.pop %v3504
    %v3513 = vld [vmem:[%s25] sm:$0xff]
    %v3514 = vld [vmem:[%s25 + $0x8] sm:$0xff]
    %v3516 = vsel %vm139, %v3513, 0
    %v3519 = vsel %vm139, %v3514, 0
    %3521 = vmatprep.subr.mxu0 %v3506
    %3522 = vmatpush1.msra.mxu0 %v3505
    %3523 = vmatprep.subr.mxu0 %v3508
    %3524 = vmatpush1.msra.mxu0 %v3507
    %3525 = vmatprep.subr.mxu0 %v3510
    %3526 = vmatpush1.msra.mxu0 %v3509
    %3527 = vmatprep.subr.mxu0 %v3512
    %3528 = vmatpush1.msra.mxu0 %v3511
    %3529 = vmatprep.subr.mxu0 0.0
    %3530 = vmatpush1.msra.mxu0 0.0
    %3531 = vmatprep.subr.mxu0 0.0
    %3532 = vmatpush1.msra.mxu0 0.0
    %3533 = vmatprep.subr.mxu0 0.0
    %3534 = vmatpush1.msra.mxu0 0.0
    %3535 = vmatprep.subr.mxu0 0.0
    %3536 = vmatpush1.msra.mxu0 0.0
    %3537 = vmatprep.subr.mxu0 0.0
    %3538 = vmatpush1.msra.mxu0 0.0
    %3539 = vmatprep.subr.mxu0 0.0
    %3540 = vmatpush1.msra.mxu0 0.0
    %3541 = vmatprep.subr.mxu0 0.0
    %3542 = vmatpush1.msra.mxu0 0.0
    %3543 = vmatprep.subr.mxu0 0.0
    %3544 = vmatpush1.msra.mxu0 0.0
    %3545 = vmatprep.subr.mxu0 0.0
    %3546 = vmatpush1.msra.mxu0 0.0
    %3547 = vmatprep.subr.mxu0 0.0
    %3548 = vmatpush1.msra.mxu0 0.0
    %3549 = vmatprep.subr.mxu0 0.0
    %3550 = vmatpush1.msra.mxu0 0.0
    %3551 = vmatprep.subr.mxu0 0.0
    %3552 = vmatpush1.msra.mxu0 0.0
    %3553 = vmatprep.subr.mxu0 0.0
    %3554 = vmatpush1.msra.mxu0 0.0
    %3555 = vmatprep.subr.mxu0 0.0
    %3556 = vmatpush1.msra.mxu0 0.0
    %3557 = vmatprep.subr.mxu0 0.0
    %3558 = vmatpush1.msra.mxu0 0.0
    %3559 = vmatprep.subr.mxu0 0.0
    %3560 = vmatpush1.msra.mxu0 0.0
    %3561 = vmatprep.subr.mxu0 0.0
    %3562 = vmatpush1.msra.mxu0 0.0
    %3563 = vmatprep.subr.mxu0 0.0
    %3564 = vmatpush1.msra.mxu0 0.0
    %3565 = vmatprep.subr.mxu0 0.0
    %3566 = vmatpush1.msra.mxu0 0.0
    %3567 = vmatprep.subr.mxu0 0.0
    %3568 = vmatpush1.msra.mxu0 0.0
    %3569 = vmatprep.subr.mxu0 0.0
    %3570 = vmatpush1.msra.mxu0 0.0
    %3571 = vmatprep.subr.mxu0 0.0
    %3572 = vmatpush1.msra.mxu0 0.0
    %3573 = vmatprep.subr.mxu0 0.0
    %3574 = vmatpush1.msra.mxu0 0.0
    %3575 = vmatprep.subr.mxu0 0.0
    %3576 = vmatpush1.msra.mxu0 0.0
    %3577 = vmatprep.subr.mxu0 0.0
    %3578 = vmatpush1.msra.mxu0 0.0
    %3579 = vmatprep.subr.mxu0 0.0
    %3580 = vmatpush1.msra.mxu0 0.0
    %3581 = vmatprep.subr.mxu0 0.0
    %3582 = vmatpush1.msra.mxu0 0.0
    %3583 = vmatprep.subr.mxu0 0.0
    %3584 = vmatpush1.msra.mxu0 0.0
    %3585 = vmatprep.mubr.f32.mxu0 0.0
    %3586 = vmatmul.mubr.f32.gmra.mrb[0].mxu0 %v3516
    %v3587 = vpop.f32.mrb[0].mxu0
    %v3588 = vadd.f32 0.0, %v3587
    %v3589 = vpop.f32.mrb[0].mxu0
    %v3590 = vadd.f32 0.0, %v3589
    %3591 = vmatprep.mubr.f32.mxu0 0.0
    %3592 = vmatmul.mubr.f32.gmra.mrb[0].mxu0 %v3519
    %v3593 = vpop.f32.mrb[0].mxu0
    %v3594 = vadd.f32 0.0, %v3593
    %v3595 = vpop.f32.mrb[0].mxu0
    %v3596 = vadd.f32 0.0, %v3595
    %3597 = vdwg.mxu0
    %v3598 = vld [vmem:[%s27] sm:$0xff]
    %v3599 = vld [vmem:[%s27 + $0x8] sm:$0xff]
    %v3600 = vld [vmem:[%s27 + $0x10] sm:$0xff]
    %v3601 = vld [vmem:[%s27 + $0x18] sm:$0xff]
    %v3602 = vld [vmem:[%s27 + $0x20] sm:$0xff]
    %v3603 = vld [vmem:[%s27 + $0x28] sm:$0xff]
    %v3604 = vld [vmem:[%s27 + $0x30] sm:$0xff]
    %v3605 = vld [vmem:[%s27 + $0x38] sm:$0xff]
    %v3606 = vld [vmem:[%s27 + $0x40] sm:$0xff]
    %v3607 = vld [vmem:[%s27 + $0x48] sm:$0xff]
    %v3608 = vld [vmem:[%s27 + $0x50] sm:$0xff]
    %v3609 = vld [vmem:[%s27 + $0x58] sm:$0xff]
    %v3610 = vld [vmem:[%s27 + $0x60] sm:$0xff]
    %v3611 = vld [vmem:[%s27 + $0x68] sm:$0xff]
    %v3612 = vld [vmem:[%s27 + $0x70] sm:$0xff]
    %v3613 = vld [vmem:[%s27 + $0x78] sm:$0xff]
    %v3614 = vld [vmem:[%s27 + $0x80] sm:$0xff]
    %v3615 = vld [vmem:[%s27 + $0x88] sm:$0xff]
    %v3616 = vld [vmem:[%s27 + $0x90] sm:$0xff]
    %v3617 = vld [vmem:[%s27 + $0x98] sm:$0xff]
    %v3618 = vld [vmem:[%s27 + $0xa0] sm:$0xff]
    %v3619 = vld [vmem:[%s27 + $0xa8] sm:$0xff]
    %v3620 = vld [vmem:[%s27 + $0xb0] sm:$0xff]
    %v3621 = vld [vmem:[%s27 + $0xb8] sm:$0xff]
    %v3622 = vld [vmem:[%s27 + $0xc0] sm:$0xff]
    %v3623 = vld [vmem:[%s27 + $0xc8] sm:$0xff]
    %v3624 = vld [vmem:[%s27 + $0xd0] sm:$0xff]
    %v3625 = vld [vmem:[%s27 + $0xd8] sm:$0xff]
    %v3626 = vld [vmem:[%s27 + $0xe0] sm:$0xff]
    %v3627 = vld [vmem:[%s27 + $0xe8] sm:$0xff]
    %v3628 = vld [vmem:[%s27 + $0xf0] sm:$0xff]
    %v3629 = vld [vmem:[%s27 + $0xf8] sm:$0xff]
    %3630 = vmatprep.subr.mxu0 0.0
    %3631 = vmatpush1.msra.mxu0 %v3598
    %3632 = vmatprep.subr.mxu0 0.0
    %3633 = vmatpush1.msra.mxu0 %v3599
    %3634 = vmatprep.subr.mxu0 0.0
    %3635 = vmatpush1.msra.mxu0 %v3600
    %3636 = vmatprep.subr.mxu0 0.0
    %3637 = vmatpush1.msra.mxu0 %v3601
    %3638 = vmatprep.subr.mxu0 0.0
    %3639 = vmatpush1.msra.mxu0 %v3602
    %3640 = vmatprep.subr.mxu0 0.0
    %3641 = vmatpush1.msra.mxu0 %v3603
    %3642 = vmatprep.subr.mxu0 0.0
    %3643 = vmatpush1.msra.mxu0 %v3604
    %3644 = vmatprep.subr.mxu0 0.0
    %3645 = vmatpush1.msra.mxu0 %v3605
    %3646 = vmatprep.subr.mxu0 0.0
    %3647 = vmatpush1.msra.mxu0 %v3606
    %3648 = vmatprep.subr.mxu0 0.0
    %3649 = vmatpush1.msra.mxu0 %v3607
    %3650 = vmatprep.subr.mxu0 0.0
    %3651 = vmatpush1.msra.mxu0 %v3608
    %3652 = vmatprep.subr.mxu0 0.0
    %3653 = vmatpush1.msra.mxu0 %v3609
    %3654 = vmatprep.subr.mxu0 0.0
    %3655 = vmatpush1.msra.mxu0 %v3610
    %3656 = vmatprep.subr.mxu0 0.0
    %3657 = vmatpush1.msra.mxu0 %v3611
    %3658 = vmatprep.subr.mxu0 0.0
    %3659 = vmatpush1.msra.mxu0 %v3612
    %3660 = vmatprep.subr.mxu0 0.0
    %3661 = vmatpush1.msra.mxu0 %v3613
    %3662 = vmatprep.subr.mxu0 0.0
    %3663 = vmatpush1.msra.mxu0 %v3614
    %3664 = vmatprep.subr.mxu0 0.0
    %3665 = vmatpush1.msra.mxu0 %v3615
    %3666 = vmatprep.subr.mxu0 0.0
    %3667 = vmatpush1.msra.mxu0 %v3616
    %3668 = vmatprep.subr.mxu0 0.0
    %3669 = vmatpush1.msra.mxu0 %v3617
    %3670 = vmatprep.subr.mxu0 0.0
    %3671 = vmatpush1.msra.mxu0 %v3618
    %3672 = vmatprep.subr.mxu0 0.0
    %3673 = vmatpush1.msra.mxu0 %v3619
    %3674 = vmatprep.subr.mxu0 0.0
    %3675 = vmatpush1.msra.mxu0 %v3620
    %3676 = vmatprep.subr.mxu0 0.0
    %3677 = vmatpush1.msra.mxu0 %v3621
    %3678 = vmatprep.subr.mxu0 0.0
    %3679 = vmatpush1.msra.mxu0 %v3622
    %3680 = vmatprep.subr.mxu0 0.0
    %3681 = vmatpush1.msra.mxu0 %v3623
    %3682 = vmatprep.subr.mxu0 0.0
    %3683 = vmatpush1.msra.mxu0 %v3624
    %3684 = vmatprep.subr.mxu0 0.0
    %3685 = vmatpush1.msra.mxu0 %v3625
    %3686 = vmatprep.subr.mxu0 0.0
    %3687 = vmatpush1.msra.mxu0 %v3626
    %3688 = vmatprep.subr.mxu0 0.0
    %3689 = vmatpush1.msra.mxu0 %v3627
    %3690 = vmatprep.subr.mxu0 0.0
    %3691 = vmatpush1.msra.mxu0 %v3628
    %3692 = vmatprep.subr.mxu0 0.0
    %3693 = vmatpush1.msra.mxu0 %v3629
    %3694 = vmatprep.mubr.f32.mxu0 %v3590
    %3695 = vmatmul.mubr.f32.gmra.mrb[0].mxu0 %v3588
    %v3696 = vpop.f32.mrb[0].mxu0
    %v3697 = vadd.f32 0.0, %v3696
    %v3698 = vpop.f32.mrb[0].mxu0
    %3699 = vmatprep.mubr.f32.mxu0 %v3596
    %3700 = vmatmul.mubr.f32.gmra.mrb[0].mxu0 %v3594
    %v3701 = vpop.f32.mrb[0].mxu0
    %v3702 = vadd.f32 0.0, %v3701
    %v3703 = vpop.f32.mrb[0].mxu0
    %3704 = vdwg.mxu0
    %v3705 = vld [vmem:[%s29] sm:$0xff]
    %v3706 = vld [vmem:[%s29 + $0x8] sm:$0xff]
    %v3707 = vld [vmem:[%s29 + $0x10] sm:$0xff]
    %v3708 = vld [vmem:[%s29 + $0x18] sm:$0xff]
    %v3709 = vld [vmem:[%s29 + $0x20] sm:$0xff]
    %v3710 = vld [vmem:[%s29 + $0x28] sm:$0xff]
    %v3711 = vld [vmem:[%s29 + $0x30] sm:$0xff]
    %v3712 = vld [vmem:[%s29 + $0x38] sm:$0xff]
    %v3713 = vld [vmem:[%s29 + $0x40] sm:$0xff]
    %v3714 = vld [vmem:[%s29 + $0x48] sm:$0xff]
    %v3715 = vld [vmem:[%s29 + $0x50] sm:$0xff]
    %v3716 = vld [vmem:[%s29 + $0x58] sm:$0xff]
    %v3717 = vld [vmem:[%s29 + $0x60] sm:$0xff]
    %v3718 = vld [vmem:[%s29 + $0x68] sm:$0xff]
    %v3719 = vld [vmem:[%s29 + $0x70] sm:$0xff]
    %v3720 = vld [vmem:[%s29 + $0x78] sm:$0xff]
    %v3721 = vld [vmem:[%s29 + $0x80] sm:$0xff]
    %v3722 = vld [vmem:[%s29 + $0x88] sm:$0xff]
    %v3723 = vld [vmem:[%s29 + $0x90] sm:$0xff]
    %v3724 = vld [vmem:[%s29 + $0x98] sm:$0xff]
    %v3725 = vld [vmem:[%s29 + $0xa0] sm:$0xff]
    %v3726 = vld [vmem:[%s29 + $0xa8] sm:$0xff]
    %v3727 = vld [vmem:[%s29 + $0xb0] sm:$0xff]
    %v3728 = vld [vmem:[%s29 + $0xb8] sm:$0xff]
    %v3729 = vld [vmem:[%s29 + $0xc0] sm:$0xff]
    %v3730 = vld [vmem:[%s29 + $0xc8] sm:$0xff]
    %v3731 = vld [vmem:[%s29 + $0xd0] sm:$0xff]
    %v3732 = vld [vmem:[%s29 + $0xd8] sm:$0xff]
    %v3733 = vld [vmem:[%s29 + $0xe0] sm:$0xff]
    %v3734 = vld [vmem:[%s29 + $0xe8] sm:$0xff]
    %v3735 = vld [vmem:[%s29 + $0xf0] sm:$0xff]
    %v3736 = vld [vmem:[%s29 + $0xf8] sm:$0xff]
    %3737 = vmatprep.subr.mxu0 %v3706
    %3738 = vmatpush1.msra.mxu0 %v3705
    %3739 = vmatprep.subr.mxu0 %v3708
    %3740 = vmatpush1.msra.mxu0 %v3707
    %3741 = vmatprep.subr.mxu0 %v3710
    %3742 = vmatpush1.msra.mxu0 %v3709
    %3743 = vmatprep.subr.mxu0 %v3712
    %3744 = vmatpush1.msra.mxu0 %v3711
    %3745 = vmatprep.subr.mxu0 %v3714
    %3746 = vmatpush1.msra.mxu0 %v3713
    %3747 = vmatprep.subr.mxu0 %v3716
    %3748 = vmatpush1.msra.mxu0 %v3715
    %3749 = vmatprep.subr.mxu0 %v3718
    %3750 = vmatpush1.msra.mxu0 %v3717
    %3751 = vmatprep.subr.mxu0 %v3720
    %3752 = vmatpush1.msra.mxu0 %v3719
    %3753 = vmatprep.subr.mxu0 %v3722
    %3754 = vmatpush1.msra.mxu0 %v3721
    %3755 = vmatprep.subr.mxu0 %v3724
    %3756 = vmatpush1.msra.mxu0 %v3723
    %3757 = vmatprep.subr.mxu0 %v3726
    %3758 = vmatpush1.msra.mxu0 %v3725
    %3759 = vmatprep.subr.mxu0 %v3728
    %3760 = vmatpush1.msra.mxu0 %v3727
    %3761 = vmatprep.subr.mxu0 %v3730
    %3762 = vmatpush1.msra.mxu0 %v3729
    %3763 = vmatprep.subr.mxu0 %v3732
    %3764 = vmatpush1.msra.mxu0 %v3731
    %3765 = vmatprep.subr.mxu0 %v3734
    %3766 = vmatpush1.msra.mxu0 %v3733
    %3767 = vmatprep.subr.mxu0 %v3736
    %3768 = vmatpush1.msra.mxu0 %v3735
    %3769 = vmatprep.subr.mxu0 0.0
    %3770 = vmatpush1.msra.mxu0 0.0
    %3771 = vmatprep.subr.mxu0 0.0
    %3772 = vmatpush1.msra.mxu0 0.0
    %3773 = vmatprep.subr.mxu0 0.0
    %3774 = vmatpush1.msra.mxu0 0.0
    %3775 = vmatprep.subr.mxu0 0.0
    %3776 = vmatpush1.msra.mxu0 0.0
    %3777 = vmatprep.subr.mxu0 0.0
    %3778 = vmatpush1.msra.mxu0 0.0
    %3779 = vmatprep.subr.mxu0 0.0
    %3780 = vmatpush1.msra.mxu0 0.0
    %3781 = vmatprep.subr.mxu0 0.0
    %3782 = vmatpush1.msra.mxu0 0.0
    %3783 = vmatprep.subr.mxu0 0.0
    %3784 = vmatpush1.msra.mxu0 0.0
    %3785 = vmatprep.subr.mxu0 0.0
    %3786 = vmatpush1.msra.mxu0 0.0
    %3787 = vmatprep.subr.mxu0 0.0
    %3788 = vmatpush1.msra.mxu0 0.0
    %3789 = vmatprep.subr.mxu0 0.0
    %3790 = vmatpush1.msra.mxu0 0.0
    %3791 = vmatprep.subr.mxu0 0.0
    %3792 = vmatpush1.msra.mxu0 0.0
    %3793 = vmatprep.subr.mxu0 0.0
    %3794 = vmatpush1.msra.mxu0 0.0
    %3795 = vmatprep.subr.mxu0 0.0
    %3796 = vmatpush1.msra.mxu0 0.0
    %3797 = vmatprep.subr.mxu0 0.0
    %3798 = vmatpush1.msra.mxu0 0.0
    %3799 = vmatprep.subr.mxu0 0.0
    %3800 = vmatpush1.msra.mxu0 0.0
    %3801 = vmatprep.mubr.f32.mxu0 0.0
    %3802 = vmatmul.mubr.f32.gmra.mrb[0].mxu0 %v3697
    %v3803 = vpop.f32.mrb[0].mxu0
    %v3804 = vadd.f32 0.0, %v3803
    %v3805 = vpop.f32.mrb[0].mxu0
    %v3806 = vadd.f32 0.0, %v3805
    %3807 = vmatprep.mubr.f32.mxu0 0.0
    %3808 = vmatmul.mubr.f32.gmra.mrb[0].mxu0 %v3702
    %v3809 = vpop.f32.mrb[0].mxu0
    %v3810 = vadd.f32 0.0, %v3809
    %v3811 = vpop.f32.mrb[0].mxu0
    %v3812 = vadd.f32 0.0, %v3811
    %3813 = vdwg.mxu0
    %v3814 = vadd.f32 %v3804, %v3810
    %v3815 = vrot.slane %v3814, 4
    %v3816 = vadd.f32 %v3814, %v3815
    %v3817 = vrot.slane %v3816, 2
    %v3818 = vadd.f32 %v3816, %v3817
    %v3819 = vrot.slane %v3818, 1
    %v3820 = vadd.f32 %v3818, %v3819
    %v3821 = vadd.f32 %v3806, %v3812
    %v3822 = vrot.slane %v3821, 4
    %v3823 = vadd.f32 %v3821, %v3822
    %v3824 = vrot.slane %v3823, 2
    %v3825 = vadd.f32 %v3823, %v3824
    %v3826 = vrot.slane %v3825, 1
    %v3827 = vadd.f32 %v3825, %v3826
    %v3828 = vmul.f32 %v3804, %v3804
    %v3829 = vmul.f32 %v3806, %v3806
    %v3830 = vmul.f32 %v3810, %v3810
    %v3831 = vmul.f32 %v3812, %v3812
    %v3832 = vadd.f32 %v3828, %v3830
    %v3833 = vrot.slane %v3832, 4
    %v3834 = vadd.f32 %v3832, %v3833
    %v3835 = vrot.slane %v3834, 2
    %v3836 = vadd.f32 %v3834, %v3835
    %v3837 = vrot.slane %v3836, 1
    %v3838 = vadd.f32 %v3836, %v3837
    %v3839 = vadd.f32 %v3829, %v3831
    %v3840 = vrot.slane %v3839, 4
    %v3841 = vadd.f32 %v3839, %v3840
    %v3842 = vrot.slane %v3841, 2
    %v3843 = vadd.f32 %v3841, %v3842
    %v3844 = vrot.slane %v3843, 1
    %v3845 = vadd.f32 %v3843, %v3844
    %v3846 = vld [vmem:[%s33] sm:$0xff]
    %v3847 = vld [vmem:[%s33 + $0x8] sm:$0xff]
    %v3848 = vld [vmem:[%s33 + $0x10] sm:$0xff]
    %v3849 = vld [vmem:[%s33 + $0x18] sm:$0xff]
    %v3850 = vld [vmem:[%s33 + $0x20] sm:$0xff]
    %v3851 = vld [vmem:[%s33 + $0x28] sm:$0xff]
    %v3852 = vld [vmem:[%s33 + $0x30] sm:$0xff]
    %v3853 = vld [vmem:[%s33 + $0x38] sm:$0xff]
    %v3854 = vld [vmem:[%s33 + $0x40] sm:$0xff]
    %v3855 = vld [vmem:[%s33 + $0x48] sm:$0xff]
    %v3856 = vld [vmem:[%s33 + $0x50] sm:$0xff]
    %v3857 = vld [vmem:[%s33 + $0x58] sm:$0xff]
    %v3858 = vld [vmem:[%s33 + $0x60] sm:$0xff]
    %v3859 = vld [vmem:[%s33 + $0x68] sm:$0xff]
    %v3860 = vld [vmem:[%s33 + $0x70] sm:$0xff]
    %v3861 = vld [vmem:[%s33 + $0x78] sm:$0xff]
    %v3862 = vld [vmem:[%s33 + $0x80] sm:$0xff]
    %v3863 = vld [vmem:[%s33 + $0x88] sm:$0xff]
    %v3864 = vld [vmem:[%s33 + $0x90] sm:$0xff]
    %v3865 = vld [vmem:[%s33 + $0x98] sm:$0xff]
    %v3866 = vld [vmem:[%s33 + $0xa0] sm:$0xff]
    %v3867 = vld [vmem:[%s33 + $0xa8] sm:$0xff]
    %v3868 = vld [vmem:[%s33 + $0xb0] sm:$0xff]
    %v3869 = vld [vmem:[%s33 + $0xb8] sm:$0xff]
    %v3870 = vld [vmem:[%s33 + $0xc0] sm:$0xff]
    %v3871 = vld [vmem:[%s33 + $0xc8] sm:$0xff]
    %v3872 = vld [vmem:[%s33 + $0xd0] sm:$0xff]
    %v3873 = vld [vmem:[%s33 + $0xd8] sm:$0xff]
    %v3874 = vld [vmem:[%s33 + $0xe0] sm:$0xff]
    %v3875 = vld [vmem:[%s33 + $0xe8] sm:$0xff]
    %v3876 = vld [vmem:[%s33 + $0xf0] sm:$0xff]
    %v3877 = vld [vmem:[%s33 + $0xf8] sm:$0xff]
    %3878 = vmatprep.subr.mxu0 0.0
    %3879 = vmatpush1.msra.mxu0 %v3846
    %3880 = vmatprep.subr.mxu0 0.0
    %3881 = vmatpush1.msra.mxu0 %v3847
    %3882 = vmatprep.subr.mxu0 0.0
    %3883 = vmatpush1.msra.mxu0 %v3848
    %3884 = vmatprep.subr.mxu0 0.0
    %3885 = vmatpush1.msra.mxu0 %v3849
    %3886 = vmatprep.subr.mxu0 0.0
    %3887 = vmatpush1.msra.mxu0 %v3850
    %3888 = vmatprep.subr.mxu0 0.0
    %3889 = vmatpush1.msra.mxu0 %v3851
    %3890 = vmatprep.subr.mxu0 0.0
    %3891 = vmatpush1.msra.mxu0 %v3852
    %3892 = vmatprep.subr.mxu0 0.0
    %3893 = vmatpush1.msra.mxu0 %v3853
    %3894 = vmatprep.subr.mxu0 0.0
    %3895 = vmatpush1.msra.mxu0 %v3854
    %3896 = vmatprep.subr.mxu0 0.0
    %3897 = vmatpush1.msra.mxu0 %v3855
    %3898 = vmatprep.subr.mxu0 0.0
    %3899 = vmatpush1.msra.mxu0 %v3856
    %3900 = vmatprep.subr.mxu0 0.0
    %3901 = vmatpush1.msra.mxu0 %v3857
    %3902 = vmatprep.subr.mxu0 0.0
    %3903 = vmatpush1.msra.mxu0 %v3858
    %3904 = vmatprep.subr.mxu0 0.0
    %3905 = vmatpush1.msra.mxu0 %v3859
    %3906 = vmatprep.subr.mxu0 0.0
    %3907 = vmatpush1.msra.mxu0 %v3860
    %3908 = vmatprep.subr.mxu0 0.0
    %3909 = vmatpush1.msra.mxu0 %v3861
    %3910 = vmatprep.subr.mxu0 0.0
    %3911 = vmatpush1.msra.mxu0 %v3862
    %3912 = vmatprep.subr.mxu0 0.0
    %3913 = vmatpush1.msra.mxu0 %v3863
    %3914 = vmatprep.subr.mxu0 0.0
    %3915 = vmatpush1.msra.mxu0 %v3864
    %3916 = vmatprep.subr.mxu0 0.0
    %3917 = vmatpush1.msra.mxu0 %v3865
    %3918 = vmatprep.subr.mxu0 0.0
    %3919 = vmatpush1.msra.mxu0 %v3866
    %3920 = vmatprep.subr.mxu0 0.0
    %3921 = vmatpush1.msra.mxu0 %v3867
    %3922 = vmatprep.subr.mxu0 0.0
    %3923 = vmatpush1.msra.mxu0 %v3868
    %3924 = vmatprep.subr.mxu0 0.0
    %3925 = vmatpush1.msra.mxu0 %v3869
    %3926 = vmatprep.subr.mxu0 0.0
    %3927 = vmatpush1.msra.mxu0 %v3870
    %3928 = vmatprep.subr.mxu0 0.0
    %3929 = vmatpush1.msra.mxu0 %v3871
    %3930 = vmatprep.subr.mxu0 0.0
    %3931 = vmatpush1.msra.mxu0 %v3872
    %3932 = vmatprep.subr.mxu0 0.0
    %3933 = vmatpush1.msra.mxu0 %v3873
    %3934 = vmatprep.subr.mxu0 0.0
    %3935 = vmatpush1.msra.mxu0 %v3874
    %3936 = vmatprep.subr.mxu0 0.0
    %3937 = vmatpush1.msra.mxu0 %v3875
    %3938 = vmatprep.subr.mxu0 0.0
    %3939 = vmatpush1.msra.mxu0 %v3876
    %3940 = vmatprep.subr.mxu0 0.0
    %3941 = vmatpush1.msra.mxu0 %v3877
    %3942 = vmatprep.mubr.f32.mxu0 %v3827
    %3943 = vmatmul.mubr.f32.gmra.mrb[0].mxu0 %v3820
    %v3944 = vpop.f32.mrb[0].mxu0
    %v3945 = vadd.f32 0.0, %v3944
    %v3946 = vpop.f32.mrb[0].mxu0
    %3947 = vdwg.mxu0
    %v3948 = vmul.f32 %v3945, 0.0078125
    %3949 = vmatprep.subr.mxu0 0.0
    %3950 = vmatpush1.msra.mxu0 %v3846
    %3951 = vmatprep.subr.mxu0 0.0
    %3952 = vmatpush1.msra.mxu0 %v3847
    %3953 = vmatprep.subr.mxu0 0.0
    %3954 = vmatpush1.msra.mxu0 %v3848
    %3955 = vmatprep.subr.mxu0 0.0
    %3956 = vmatpush1.msra.mxu0 %v3849
    %3957 = vmatprep.subr.mxu0 0.0
    %3958 = vmatpush1.msra.mxu0 %v3850
    %3959 = vmatprep.subr.mxu0 0.0
    %3960 = vmatpush1.msra.mxu0 %v3851
    %3961 = vmatprep.subr.mxu0 0.0
    %3962 = vmatpush1.msra.mxu0 %v3852
    %3963 = vmatprep.subr.mxu0 0.0
    %3964 = vmatpush1.msra.mxu0 %v3853
    %3965 = vmatprep.subr.mxu0 0.0
    %3966 = vmatpush1.msra.mxu0 %v3854
    %3967 = vmatprep.subr.mxu0 0.0
    %3968 = vmatpush1.msra.mxu0 %v3855
    %3969 = vmatprep.subr.mxu0 0.0
    %3970 = vmatpush1.msra.mxu0 %v3856
    %3971 = vmatprep.subr.mxu0 0.0
    %3972 = vmatpush1.msra.mxu0 %v3857
    %3973 = vmatprep.subr.mxu0 0.0
    %3974 = vmatpush1.msra.mxu0 %v3858
    %3975 = vmatprep.subr.mxu0 0.0
    %3976 = vmatpush1.msra.mxu0 %v3859
    %3977 = vmatprep.subr.mxu0 0.0
    %3978 = vmatpush1.msra.mxu0 %v3860
    %3979 = vmatprep.subr.mxu0 0.0
    %3980 = vmatpush1.msra.mxu0 %v3861
    %3981 = vmatprep.subr.mxu0 0.0
    %3982 = vmatpush1.msra.mxu0 %v3862
    %3983 = vmatprep.subr.mxu0 0.0
    %3984 = vmatpush1.msra.mxu0 %v3863
    %3985 = vmatprep.subr.mxu0 0.0
    %3986 = vmatpush1.msra.mxu0 %v3864
    %3987 = vmatprep.subr.mxu0 0.0
    %3988 = vmatpush1.msra.mxu0 %v3865
    %3989 = vmatprep.subr.mxu0 0.0
    %3990 = vmatpush1.msra.mxu0 %v3866
    %3991 = vmatprep.subr.mxu0 0.0
    %3992 = vmatpush1.msra.mxu0 %v3867
    %3993 = vmatprep.subr.mxu0 0.0
    %3994 = vmatpush1.msra.mxu0 %v3868
    %3995 = vmatprep.subr.mxu0 0.0
    %3996 = vmatpush1.msra.mxu0 %v3869
    %3997 = vmatprep.subr.mxu0 0.0
    %3998 = vmatpush1.msra.mxu0 %v3870
    %3999 = vmatprep.subr.mxu0 0.0
    %4000 = vmatpush1.msra.mxu0 %v3871
    %4001 = vmatprep.subr.mxu0 0.0
    %4002 = vmatpush1.msra.mxu0 %v3872
    %4003 = vmatprep.subr.mxu0 0.0
    %4004 = vmatpush1.msra.mxu0 %v3873
    %4005 = vmatprep.subr.mxu0 0.0
    %4006 = vmatpush1.msra.mxu0 %v3874
    %4007 = vmatprep.subr.mxu0 0.0
    %4008 = vmatpush1.msra.mxu0 %v3875
    %4009 = vmatprep.subr.mxu0 0.0
    %4010 = vmatpush1.msra.mxu0 %v3876
    %4011 = vmatprep.subr.mxu0 0.0
    %4012 = vmatpush1.msra.mxu0 %v3877
    %4013 = vmatprep.mubr.f32.mxu0 %v3845
    %4014 = vmatmul.mubr.f32.gmra.mrb[0].mxu0 %v3838
    %v4015 = vpop.f32.mrb[0].mxu0
    %v4016 = vadd.f32 0.0, %v4015
    %v4017 = vpop.f32.mrb[0].mxu0
    %4018 = vdwg.mxu0
    %v4019 = vmul.f32 %v4016, 0.0078125
    %v4020 = vmul.f32 %v3948, %v3948
    %v4021 = vsub.f32 %v4019, %v4020
    %v4022 = vld [vmem:[%s31] sm:$0x1]
    %v4023 = vadd.f32 %v4021, 1e-05
    %v4024 = vrsqrt.pop %v4023
    %v4025 = vmul.f32 %v4022, %v4024
    %v4026 = vld [vmem:[%s31 + $0x1] sm:$0x1]
    %v4027 = vmul.f32 %v3948, %v4025
    %v4028 = vsub.f32 %v4026, %v4027
    %v4029 = vld [vmem:[%s35] sm:$0xff]
    %v4030 = vld [vmem:[%s35 + $0x8] sm:$0xff]
    %v4031 = vld [vmem:[%s35 + $0x10] sm:$0xff]
    %v4032 = vld [vmem:[%s35 + $0x18] sm:$0xff]
    %v4033 = vld [vmem:[%s35 + $0x20] sm:$0xff]
    %v4034 = vld [vmem:[%s35 + $0x28] sm:$0xff]
    %v4035 = vld [vmem:[%s35 + $0x30] sm:$0xff]
    %v4036 = vld [vmem:[%s35 + $0x38] sm:$0xff]
    %v4038 = vsel %vm139, %v4025, 0
    %4040 = vmatprep.subr.mxu0 %v4030
    %4041 = vmatpush1.msra.mxu0 %v4029
    %4042 = vmatprep.subr.mxu0 %v4032
    %4043 = vmatpush1.msra.mxu0 %v4031
    %4044 = vmatprep.subr.mxu0 %v4034
    %4045 = vmatpush1.msra.mxu0 %v4033
    %4046 = vmatprep.subr.mxu0 %v4036
    %4047 = vmatpush1.msra.mxu0 %v4035
    %4048 = vmatprep.subr.mxu0 0.0
    %4049 = vmatpush1.msra.mxu0 0.0
    %4050 = vmatprep.subr.mxu0 0.0
    %4051 = vmatpush1.msra.mxu0 0.0
    %4052 = vmatprep.subr.mxu0 0.0
    %4053 = vmatpush1.msra.mxu0 0.0
    %4054 = vmatprep.subr.mxu0 0.0
    %4055 = vmatpush1.msra.mxu0 0.0
    %4056 = vmatprep.subr.mxu0 0.0
    %4057 = vmatpush1.msra.mxu0 0.0
    %4058 = vmatprep.subr.mxu0 0.0
    %4059 = vmatpush1.msra.mxu0 0.0
    %4060 = vmatprep.subr.mxu0 0.0
    %4061 = vmatpush1.msra.mxu0 0.0
    %4062 = vmatprep.subr.mxu0 0.0
    %4063 = vmatpush1.msra.mxu0 0.0
    %4064 = vmatprep.subr.mxu0 0.0
    %4065 = vmatpush1.msra.mxu0 0.0
    %4066 = vmatprep.subr.mxu0 0.0
    %4067 = vmatpush1.msra.mxu0 0.0
    %4068 = vmatprep.subr.mxu0 0.0
    %4069 = vmatpush1.msra.mxu0 0.0
    %4070 = vmatprep.subr.mxu0 0.0
    %4071 = vmatpush1.msra.mxu0 0.0
    %4072 = vmatprep.subr.mxu0 0.0
    %4073 = vmatpush1.msra.mxu0 0.0
    %4074 = vmatprep.subr.mxu0 0.0
    %4075 = vmatpush1.msra.mxu0 0.0
    %4076 = vmatprep.subr.mxu0 0.0
    %4077 = vmatpush1.msra.mxu0 0.0
    %4078 = vmatprep.subr.mxu0 0.0
    %4079 = vmatpush1.msra.mxu0 0.0
    %4080 = vmatprep.subr.mxu0 0.0
    %4081 = vmatpush1.msra.mxu0 0.0
    %4082 = vmatprep.subr.mxu0 0.0
    %4083 = vmatpush1.msra.mxu0 0.0
    %4084 = vmatprep.subr.mxu0 0.0
    %4085 = vmatpush1.msra.mxu0 0.0
    %4086 = vmatprep.subr.mxu0 0.0
    %4087 = vmatpush1.msra.mxu0 0.0
    %4088 = vmatprep.subr.mxu0 0.0
    %4089 = vmatpush1.msra.mxu0 0.0
    %4090 = vmatprep.subr.mxu0 0.0
    %4091 = vmatpush1.msra.mxu0 0.0
    %4092 = vmatprep.subr.mxu0 0.0
    %4093 = vmatpush1.msra.mxu0 0.0
    %4094 = vmatprep.subr.mxu0 0.0
    %4095 = vmatpush1.msra.mxu0 0.0
    %4096 = vmatprep.subr.mxu0 0.0
    %4097 = vmatpush1.msra.mxu0 0.0
    %4098 = vmatprep.subr.mxu0 0.0
    %4099 = vmatpush1.msra.mxu0 0.0
    %4100 = vmatprep.subr.mxu0 0.0
    %4101 = vmatpush1.msra.mxu0 0.0
    %4102 = vmatprep.subr.mxu0 0.0
    %4103 = vmatpush1.msra.mxu0 0.0
    %4104 = vmatprep.mubr.f32.mxu0 0.0
    %4105 = vmatmul.mubr.f32.gmra.mrb[0].mxu0 %v4038
    %v4106 = vpop.f32.mrb[0].mxu0
    %v4107 = vadd.f32 0.0, %v4106
    %v4108 = vpop.f32.mrb[0].mxu0
    %v4109 = vadd.f32 0.0, %v4108
    %4110 = vdwg.mxu0
    %v4111 = vlaneseq
    %v4112 = vshrl.u32 %v4111, 7
    %v4113 = vsub.s32 0, %v4112
    %v4114 = vrot.slane %v4107, %v4113
    %v4115 = vlaneseq
    %v4116 = vshrl.u32 %v4115, 7
    %v4117 = vsub.s32 0, %v4116
    %v4118 = vrot.slane %v4109, %v4117
    %v4119 = vmul.f32 %v3804, %v4114
    %v4120 = vmul.f32 %v3806, %v4118
    %v4121 = vmul.f32 %v3810, %v4114
    %v4122 = vmul.f32 %v3812, %v4118
    %v4124 = vsel %vm139, %v4028, 0
    %4126 = vmatprep.subr.mxu0 %v4030
    %4127 = vmatpush1.msra.mxu0 %v4029
    %4128 = vmatprep.subr.mxu0 %v4032
    %4129 = vmatpush1.msra.mxu0 %v4031
    %4130 = vmatprep.subr.mxu0 %v4034
    %4131 = vmatpush1.msra.mxu0 %v4033
    %4132 = vmatprep.subr.mxu0 %v4036
    %4133 = vmatpush1.msra.mxu0 %v4035
    %4134 = vmatprep.subr.mxu0 0.0
    %4135 = vmatpush1.msra.mxu0 0.0
    %4136 = vmatprep.subr.mxu0 0.0
    %4137 = vmatpush1.msra.mxu0 0.0
    %4138 = vmatprep.subr.mxu0 0.0
    %4139 = vmatpush1.msra.mxu0 0.0
    %4140 = vmatprep.subr.mxu0 0.0
    %4141 = vmatpush1.msra.mxu0 0.0
    %4142 = vmatprep.subr.mxu0 0.0
    %4143 = vmatpush1.msra.mxu0 0.0
    %4144 = vmatprep.subr.mxu0 0.0
    %4145 = vmatpush1.msra.mxu0 0.0
    %4146 = vmatprep.subr.mxu0 0.0
    %4147 = vmatpush1.msra.mxu0 0.0
    %4148 = vmatprep.subr.mxu0 0.0
    %4149 = vmatpush1.msra.mxu0 0.0
    %4150 = vmatprep.subr.mxu0 0.0
    %4151 = vmatpush1.msra.mxu0 0.0
    %4152 = vmatprep.subr.mxu0 0.0
    %4153 = vmatpush1.msra.mxu0 0.0
    %4154 = vmatprep.subr.mxu0 0.0
    %4155 = vmatpush1.msra.mxu0 0.0
    %4156 = vmatprep.subr.mxu0 0.0
    %4157 = vmatpush1.msra.mxu0 0.0
    %4158 = vmatprep.subr.mxu0 0.0
    %4159 = vmatpush1.msra.mxu0 0.0
    %4160 = vmatprep.subr.mxu0 0.0
    %4161 = vmatpush1.msra.mxu0 0.0
    %4162 = vmatprep.subr.mxu0 0.0
    %4163 = vmatpush1.msra.mxu0 0.0
    %4164 = vmatprep.subr.mxu0 0.0
    %4165 = vmatpush1.msra.mxu0 0.0
    %4166 = vmatprep.subr.mxu0 0.0
    %4167 = vmatpush1.msra.mxu0 0.0
    %4168 = vmatprep.subr.mxu0 0.0
    %4169 = vmatpush1.msra.mxu0 0.0
    %4170 = vmatprep.subr.mxu0 0.0
    %4171 = vmatpush1.msra.mxu0 0.0
    %4172 = vmatprep.subr.mxu0 0.0
    %4173 = vmatpush1.msra.mxu0 0.0
    %4174 = vmatprep.subr.mxu0 0.0
    %4175 = vmatpush1.msra.mxu0 0.0
    %4176 = vmatprep.subr.mxu0 0.0
    %4177 = vmatpush1.msra.mxu0 0.0
    %4178 = vmatprep.subr.mxu0 0.0
    %4179 = vmatpush1.msra.mxu0 0.0
    %4180 = vmatprep.subr.mxu0 0.0
    %4181 = vmatpush1.msra.mxu0 0.0
    %4182 = vmatprep.subr.mxu0 0.0
    %4183 = vmatpush1.msra.mxu0 0.0
    %4184 = vmatprep.subr.mxu0 0.0
    %4185 = vmatpush1.msra.mxu0 0.0
    %4186 = vmatprep.subr.mxu0 0.0
    %4187 = vmatpush1.msra.mxu0 0.0
    %4188 = vmatprep.subr.mxu0 0.0
    %4189 = vmatpush1.msra.mxu0 0.0
    %4190 = vmatprep.mubr.f32.mxu0 0.0
    %4191 = vmatmul.mubr.f32.gmra.mrb[0].mxu0 %v4124
    %v4192 = vpop.f32.mrb[0].mxu0
    %v4193 = vadd.f32 0.0, %v4192
    %v4194 = vpop.f32.mrb[0].mxu0
    %v4195 = vadd.f32 0.0, %v4194
    %4196 = vdwg.mxu0
    %v4197 = vlaneseq
    %v4198 = vshrl.u32 %v4197, 7
    %v4199 = vsub.s32 0, %v4198
    %v4200 = vrot.slane %v4193, %v4199
    %v4201 = vlaneseq
    %v4202 = vshrl.u32 %v4201, 7
    %v4203 = vsub.s32 0, %v4202
    %v4204 = vrot.slane %v4195, %v4203
    %v4205 = vadd.f32 %v4119, %v4200
    %v4206 = vadd.f32 %v4120, %v4204
    %v4207 = vadd.f32 %v4121, %v4200
    %v4208 = vadd.f32 %v4122, %v4204
    %v4209 = vmax.f32 %v4205, 0.0
    %v4210 = vmax.f32 %v4206, 0.0
    %v4211 = vmax.f32 %v4207, 0.0
    %v4212 = vmax.f32 %v4208, 0.0
    %v4213 = vld [vmem:[%s37] sm:$0xff]
    %v4215 = vsel %vm3324, %v4213, 0
    %4217 = vmatprep.subr.mxu0 %v4210
    %4218 = vmatpush1.msra.mxu0 %v4209
    %4219 = vmatprep.subr.mxu0 %v4212
    %4220 = vmatpush1.msra.mxu0 %v4211
    %4221 = vmatprep.subr.mxu0 0.0
    %4222 = vmatpush1.msra.mxu0 0.0
    %4223 = vmatprep.subr.mxu0 0.0
    %4224 = vmatpush1.msra.mxu0 0.0
    %4225 = vmatprep.subr.mxu0 0.0
    %4226 = vmatpush1.msra.mxu0 0.0
    %4227 = vmatprep.subr.mxu0 0.0
    %4228 = vmatpush1.msra.mxu0 0.0
    %4229 = vmatprep.subr.mxu0 0.0
    %4230 = vmatpush1.msra.mxu0 0.0
    %4231 = vmatprep.subr.mxu0 0.0
    %4232 = vmatpush1.msra.mxu0 0.0
    %4233 = vmatprep.subr.mxu0 0.0
    %4234 = vmatpush1.msra.mxu0 0.0
    %4235 = vmatprep.subr.mxu0 0.0
    %4236 = vmatpush1.msra.mxu0 0.0
    %4237 = vmatprep.subr.mxu0 0.0
    %4238 = vmatpush1.msra.mxu0 0.0
    %4239 = vmatprep.subr.mxu0 0.0
    %4240 = vmatpush1.msra.mxu0 0.0
    %4241 = vmatprep.subr.mxu0 0.0
    %4242 = vmatpush1.msra.mxu0 0.0
    %4243 = vmatprep.subr.mxu0 0.0
    %4244 = vmatpush1.msra.mxu0 0.0
    %4245 = vmatprep.subr.mxu0 0.0
    %4246 = vmatpush1.msra.mxu0 0.0
    %4247 = vmatprep.subr.mxu0 0.0
    %4248 = vmatpush1.msra.mxu0 0.0
    %4249 = vmatprep.subr.mxu0 0.0
    %4250 = vmatpush1.msra.mxu0 0.0
    %4251 = vmatprep.subr.mxu0 0.0
    %4252 = vmatpush1.msra.mxu0 0.0
    %4253 = vmatprep.subr.mxu0 0.0
    %4254 = vmatpush1.msra.mxu0 0.0
    %4255 = vmatprep.subr.mxu0 0.0
    %4256 = vmatpush1.msra.mxu0 0.0
    %4257 = vmatprep.subr.mxu0 0.0
    %4258 = vmatpush1.msra.mxu0 0.0
    %4259 = vmatprep.subr.mxu0 0.0
    %4260 = vmatpush1.msra.mxu0 0.0
    %4261 = vmatprep.subr.mxu0 0.0
    %4262 = vmatpush1.msra.mxu0 0.0
    %4263 = vmatprep.subr.mxu0 0.0
    %4264 = vmatpush1.msra.mxu0 0.0
    %4265 = vmatprep.subr.mxu0 0.0
    %4266 = vmatpush1.msra.mxu0 0.0
    %4267 = vmatprep.subr.mxu0 0.0
    %4268 = vmatpush1.msra.mxu0 0.0
    %4269 = vmatprep.subr.mxu0 0.0
    %4270 = vmatpush1.msra.mxu0 0.0
    %4271 = vmatprep.subr.mxu0 0.0
    %4272 = vmatpush1.msra.mxu0 0.0
    %4273 = vmatprep.subr.mxu0 0.0
    %4274 = vmatpush1.msra.mxu0 0.0
    %4275 = vmatprep.subr.mxu0 0.0
    %4276 = vmatpush1.msra.mxu0 0.0
    %4277 = vmatprep.subr.mxu0 0.0
    %4278 = vmatpush1.msra.mxu0 0.0
    %4279 = vmatprep.subr.mxu0 0.0
    %4280 = vmatpush1.msra.mxu0 0.0
    %4281 = vmatprep.mubr.f32.mxu0 0.0
    %4282 = vmatmul.mubr.f32.gmra.mrb[0].mxu0 %v4215
    %v4283 = vpop.f32.mrb[0].mxu0
    %v4284 = vadd.f32 0.0, %v4283
    %v4285 = vpop.f32.mrb[0].mxu0
    %v4286 = vadd.f32 0.0, %v4285
    %4287 = vdwg.mxu0
    %v4288 = vld [vmem:[%s39] sm:$0xff]
    %v4289 = vld [vmem:[%s39 + $0x8] sm:$0xff]
    %v4290 = vld [vmem:[%s39 + $0x10] sm:$0xff]
    %v4291 = vld [vmem:[%s39 + $0x18] sm:$0xff]
    %v4292 = vld [vmem:[%s39 + $0x20] sm:$0xff]
    %v4293 = vld [vmem:[%s39 + $0x28] sm:$0xff]
    %v4294 = vld [vmem:[%s39 + $0x30] sm:$0xff]
    %v4295 = vld [vmem:[%s39 + $0x38] sm:$0xff]
    %v4296 = vld [vmem:[%s39 + $0x40] sm:$0xff]
    %v4297 = vld [vmem:[%s39 + $0x48] sm:$0xff]
    %v4298 = vld [vmem:[%s39 + $0x50] sm:$0xff]
    %v4299 = vld [vmem:[%s39 + $0x58] sm:$0xff]
    %v4300 = vld [vmem:[%s39 + $0x60] sm:$0xff]
    %v4301 = vld [vmem:[%s39 + $0x68] sm:$0xff]
    %v4302 = vld [vmem:[%s39 + $0x70] sm:$0xff]
    %v4303 = vld [vmem:[%s39 + $0x78] sm:$0xff]
    %v4304 = vld [vmem:[%s39 + $0x80] sm:$0xff]
    %v4305 = vld [vmem:[%s39 + $0x88] sm:$0xff]
    %v4306 = vld [vmem:[%s39 + $0x90] sm:$0xff]
    %v4307 = vld [vmem:[%s39 + $0x98] sm:$0xff]
    %v4308 = vld [vmem:[%s39 + $0xa0] sm:$0xff]
    %v4309 = vld [vmem:[%s39 + $0xa8] sm:$0xff]
    %v4310 = vld [vmem:[%s39 + $0xb0] sm:$0xff]
    %v4311 = vld [vmem:[%s39 + $0xb8] sm:$0xff]
    %v4312 = vld [vmem:[%s39 + $0xc0] sm:$0xff]
    %v4313 = vld [vmem:[%s39 + $0xc8] sm:$0xff]
    %v4314 = vld [vmem:[%s39 + $0xd0] sm:$0xff]
    %v4315 = vld [vmem:[%s39 + $0xd8] sm:$0xff]
    %v4316 = vld [vmem:[%s39 + $0xe0] sm:$0xff]
    %v4317 = vld [vmem:[%s39 + $0xe8] sm:$0xff]
    %v4318 = vld [vmem:[%s39 + $0xf0] sm:$0xff]
    %v4319 = vld [vmem:[%s39 + $0xf8] sm:$0xff]
    %4320 = vmatprep.subr.mxu0 0.0
    %4321 = vmatpush1.msra.mxu0 %v4288
    %4322 = vmatprep.subr.mxu0 0.0
    %4323 = vmatpush1.msra.mxu0 %v4289
    %4324 = vmatprep.subr.mxu0 0.0
    %4325 = vmatpush1.msra.mxu0 %v4290
    %4326 = vmatprep.subr.mxu0 0.0
    %4327 = vmatpush1.msra.mxu0 %v4291
    %4328 = vmatprep.subr.mxu0 0.0
    %4329 = vmatpush1.msra.mxu0 %v4292
    %4330 = vmatprep.subr.mxu0 0.0
    %4331 = vmatpush1.msra.mxu0 %v4293
    %4332 = vmatprep.subr.mxu0 0.0
    %4333 = vmatpush1.msra.mxu0 %v4294
    %4334 = vmatprep.subr.mxu0 0.0
    %4335 = vmatpush1.msra.mxu0 %v4295
    %4336 = vmatprep.subr.mxu0 0.0
    %4337 = vmatpush1.msra.mxu0 %v4296
    %4338 = vmatprep.subr.mxu0 0.0
    %4339 = vmatpush1.msra.mxu0 %v4297
    %4340 = vmatprep.subr.mxu0 0.0
    %4341 = vmatpush1.msra.mxu0 %v4298
    %4342 = vmatprep.subr.mxu0 0.0
    %4343 = vmatpush1.msra.mxu0 %v4299
    %4344 = vmatprep.subr.mxu0 0.0
    %4345 = vmatpush1.msra.mxu0 %v4300
    %4346 = vmatprep.subr.mxu0 0.0
    %4347 = vmatpush1.msra.mxu0 %v4301
    %4348 = vmatprep.subr.mxu0 0.0
    %4349 = vmatpush1.msra.mxu0 %v4302
    %4350 = vmatprep.subr.mxu0 0.0
    %4351 = vmatpush1.msra.mxu0 %v4303
    %4352 = vmatprep.subr.mxu0 0.0
    %4353 = vmatpush1.msra.mxu0 %v4304
    %4354 = vmatprep.subr.mxu0 0.0
    %4355 = vmatpush1.msra.mxu0 %v4305
    %4356 = vmatprep.subr.mxu0 0.0
    %4357 = vmatpush1.msra.mxu0 %v4306
    %4358 = vmatprep.subr.mxu0 0.0
    %4359 = vmatpush1.msra.mxu0 %v4307
    %4360 = vmatprep.subr.mxu0 0.0
    %4361 = vmatpush1.msra.mxu0 %v4308
    %4362 = vmatprep.subr.mxu0 0.0
    %4363 = vmatpush1.msra.mxu0 %v4309
    %4364 = vmatprep.subr.mxu0 0.0
    %4365 = vmatpush1.msra.mxu0 %v4310
    %4366 = vmatprep.subr.mxu0 0.0
    %4367 = vmatpush1.msra.mxu0 %v4311
    %4368 = vmatprep.subr.mxu0 0.0
    %4369 = vmatpush1.msra.mxu0 %v4312
    %4370 = vmatprep.subr.mxu0 0.0
    %4371 = vmatpush1.msra.mxu0 %v4313
    %4372 = vmatprep.subr.mxu0 0.0
    %4373 = vmatpush1.msra.mxu0 %v4314
    %4374 = vmatprep.subr.mxu0 0.0
    %4375 = vmatpush1.msra.mxu0 %v4315
    %4376 = vmatprep.subr.mxu0 0.0
    %4377 = vmatpush1.msra.mxu0 %v4316
    %4378 = vmatprep.subr.mxu0 0.0
    %4379 = vmatpush1.msra.mxu0 %v4317
    %4380 = vmatprep.subr.mxu0 0.0
    %4381 = vmatpush1.msra.mxu0 %v4318
    %4382 = vmatprep.subr.mxu0 0.0
    %4383 = vmatpush1.msra.mxu0 %v4319
    %4384 = vmatprep.mubr.f32.mxu0 %v4286
    %4385 = vmatmul.mubr.f32.gmra.mrb[0].mxu0 %v4284
    %v4386 = vpop.f32.mrb[0].mxu0
    %v4387 = vadd.f32 0.0, %v4386
    %v4388 = vpop.f32.mrb[0].mxu0
    %4389 = vdwg.mxu0
    %v4390 = vld [vmem:[%s41] sm:$0xff]
    %v4391 = vld [vmem:[%s41 + $0x8] sm:$0xff]
    %v4392 = vld [vmem:[%s41 + $0x10] sm:$0xff]
    %v4393 = vld [vmem:[%s41 + $0x18] sm:$0xff]
    %v4394 = vld [vmem:[%s41 + $0x20] sm:$0xff]
    %v4395 = vld [vmem:[%s41 + $0x28] sm:$0xff]
    %v4396 = vld [vmem:[%s41 + $0x30] sm:$0xff]
    %v4397 = vld [vmem:[%s41 + $0x38] sm:$0xff]
    %v4398 = vld [vmem:[%s41 + $0x40] sm:$0xff]
    %v4399 = vld [vmem:[%s41 + $0x48] sm:$0xff]
    %v4400 = vld [vmem:[%s41 + $0x50] sm:$0xff]
    %v4401 = vld [vmem:[%s41 + $0x58] sm:$0xff]
    %v4402 = vld [vmem:[%s41 + $0x60] sm:$0xff]
    %v4403 = vld [vmem:[%s41 + $0x68] sm:$0xff]
    %v4404 = vld [vmem:[%s41 + $0x70] sm:$0xff]
    %v4405 = vld [vmem:[%s41 + $0x78] sm:$0xff]
    %v4406 = vld [vmem:[%s41 + $0x80] sm:$0xff]
    %v4407 = vld [vmem:[%s41 + $0x88] sm:$0xff]
    %v4408 = vld [vmem:[%s41 + $0x90] sm:$0xff]
    %v4409 = vld [vmem:[%s41 + $0x98] sm:$0xff]
    %v4410 = vld [vmem:[%s41 + $0xa0] sm:$0xff]
    %v4411 = vld [vmem:[%s41 + $0xa8] sm:$0xff]
    %v4412 = vld [vmem:[%s41 + $0xb0] sm:$0xff]
    %v4413 = vld [vmem:[%s41 + $0xb8] sm:$0xff]
    %v4414 = vld [vmem:[%s41 + $0xc0] sm:$0xff]
    %v4415 = vld [vmem:[%s41 + $0xc8] sm:$0xff]
    %v4416 = vld [vmem:[%s41 + $0xd0] sm:$0xff]
    %v4417 = vld [vmem:[%s41 + $0xd8] sm:$0xff]
    %v4418 = vld [vmem:[%s41 + $0xe0] sm:$0xff]
    %v4419 = vld [vmem:[%s41 + $0xe8] sm:$0xff]
    %v4420 = vld [vmem:[%s41 + $0xf0] sm:$0xff]
    %v4421 = vld [vmem:[%s41 + $0xf8] sm:$0xff]
    %4422 = vmatprep.subr.mxu0 %v4391
    %4423 = vmatpush1.msra.mxu0 %v4390
    %4424 = vmatprep.subr.mxu0 %v4393
    %4425 = vmatpush1.msra.mxu0 %v4392
    %4426 = vmatprep.subr.mxu0 %v4395
    %4427 = vmatpush1.msra.mxu0 %v4394
    %4428 = vmatprep.subr.mxu0 %v4397
    %4429 = vmatpush1.msra.mxu0 %v4396
    %4430 = vmatprep.subr.mxu0 %v4399
    %4431 = vmatpush1.msra.mxu0 %v4398
    %4432 = vmatprep.subr.mxu0 %v4401
    %4433 = vmatpush1.msra.mxu0 %v4400
    %4434 = vmatprep.subr.mxu0 %v4403
    %4435 = vmatpush1.msra.mxu0 %v4402
    %4436 = vmatprep.subr.mxu0 %v4405
    %4437 = vmatpush1.msra.mxu0 %v4404
    %4438 = vmatprep.subr.mxu0 %v4407
    %4439 = vmatpush1.msra.mxu0 %v4406
    %4440 = vmatprep.subr.mxu0 %v4409
    %4441 = vmatpush1.msra.mxu0 %v4408
    %4442 = vmatprep.subr.mxu0 %v4411
    %4443 = vmatpush1.msra.mxu0 %v4410
    %4444 = vmatprep.subr.mxu0 %v4413
    %4445 = vmatpush1.msra.mxu0 %v4412
    %4446 = vmatprep.subr.mxu0 %v4415
    %4447 = vmatpush1.msra.mxu0 %v4414
    %4448 = vmatprep.subr.mxu0 %v4417
    %4449 = vmatpush1.msra.mxu0 %v4416
    %4450 = vmatprep.subr.mxu0 %v4419
    %4451 = vmatpush1.msra.mxu0 %v4418
    %4452 = vmatprep.subr.mxu0 %v4421
    %4453 = vmatpush1.msra.mxu0 %v4420
    %4454 = vmatprep.subr.mxu0 0.0
    %4455 = vmatpush1.msra.mxu0 0.0
    %4456 = vmatprep.subr.mxu0 0.0
    %4457 = vmatpush1.msra.mxu0 0.0
    %4458 = vmatprep.subr.mxu0 0.0
    %4459 = vmatpush1.msra.mxu0 0.0
    %4460 = vmatprep.subr.mxu0 0.0
    %4461 = vmatpush1.msra.mxu0 0.0
    %4462 = vmatprep.subr.mxu0 0.0
    %4463 = vmatpush1.msra.mxu0 0.0
    %4464 = vmatprep.subr.mxu0 0.0
    %4465 = vmatpush1.msra.mxu0 0.0
    %4466 = vmatprep.subr.mxu0 0.0
    %4467 = vmatpush1.msra.mxu0 0.0
    %4468 = vmatprep.subr.mxu0 0.0
    %4469 = vmatpush1.msra.mxu0 0.0
    %4470 = vmatprep.subr.mxu0 0.0
    %4471 = vmatpush1.msra.mxu0 0.0
    %4472 = vmatprep.subr.mxu0 0.0
    %4473 = vmatpush1.msra.mxu0 0.0
    %4474 = vmatprep.subr.mxu0 0.0
    %4475 = vmatpush1.msra.mxu0 0.0
    %4476 = vmatprep.subr.mxu0 0.0
    %4477 = vmatpush1.msra.mxu0 0.0
    %4478 = vmatprep.subr.mxu0 0.0
    %4479 = vmatpush1.msra.mxu0 0.0
    %4480 = vmatprep.subr.mxu0 0.0
    %4481 = vmatpush1.msra.mxu0 0.0
    %4482 = vmatprep.subr.mxu0 0.0
    %4483 = vmatpush1.msra.mxu0 0.0
    %4484 = vmatprep.subr.mxu0 0.0
    %4485 = vmatpush1.msra.mxu0 0.0
    %4486 = vmatprep.mubr.f32.mxu0 0.0
    %4487 = vmatmul.mubr.f32.gmra.mrb[0].mxu0 %v4387
    %v4488 = vpop.f32.mrb[0].mxu0
    %v4489 = vadd.f32 0.0, %v4488
    %v4490 = vpop.f32.mrb[0].mxu0
    %v4491 = vadd.f32 0.0, %v4490
    %4492 = vdwg.mxu0
    %v4493 = vrot.slane %v4489, 4
    %v4494 = vadd.f32 %v4489, %v4493
    %v4495 = vrot.slane %v4494, 2
    %v4496 = vadd.f32 %v4494, %v4495
    %v4497 = vrot.slane %v4496, 1
    %v4498 = vadd.f32 %v4496, %v4497
    %v4499 = vrot.slane %v4491, 4
    %v4500 = vadd.f32 %v4491, %v4499
    %v4501 = vrot.slane %v4500, 2
    %v4502 = vadd.f32 %v4500, %v4501
    %v4503 = vrot.slane %v4502, 1
    %v4504 = vadd.f32 %v4502, %v4503
    %v4505 = vmul.f32 %v4489, %v4489
    %v4506 = vmul.f32 %v4491, %v4491
    %v4507 = vrot.slane %v4505, 4
    %v4508 = vadd.f32 %v4505, %v4507
    %v4509 = vrot.slane %v4508, 2
    %v4510 = vadd.f32 %v4508, %v4509
    %v4511 = vrot.slane %v4510, 1
    %v4512 = vadd.f32 %v4510, %v4511
    %v4513 = vrot.slane %v4506, 4
    %v4514 = vadd.f32 %v4506, %v4513
    %v4515 = vrot.slane %v4514, 2
    %v4516 = vadd.f32 %v4514, %v4515
    %v4517 = vrot.slane %v4516, 1
    %v4518 = vadd.f32 %v4516, %v4517
    %v4519 = vld [vmem:[%s45] sm:$0xff]
    %v4520 = vld [vmem:[%s45 + $0x8] sm:$0xff]
    %v4521 = vld [vmem:[%s45 + $0x10] sm:$0xff]
    %v4522 = vld [vmem:[%s45 + $0x18] sm:$0xff]
    %v4523 = vld [vmem:[%s45 + $0x20] sm:$0xff]
    %v4524 = vld [vmem:[%s45 + $0x28] sm:$0xff]
    %v4525 = vld [vmem:[%s45 + $0x30] sm:$0xff]
    %v4526 = vld [vmem:[%s45 + $0x38] sm:$0xff]
    %v4527 = vld [vmem:[%s45 + $0x40] sm:$0xff]
    %v4528 = vld [vmem:[%s45 + $0x48] sm:$0xff]
    %v4529 = vld [vmem:[%s45 + $0x50] sm:$0xff]
    %v4530 = vld [vmem:[%s45 + $0x58] sm:$0xff]
    %v4531 = vld [vmem:[%s45 + $0x60] sm:$0xff]
    %v4532 = vld [vmem:[%s45 + $0x68] sm:$0xff]
    %v4533 = vld [vmem:[%s45 + $0x70] sm:$0xff]
    %v4534 = vld [vmem:[%s45 + $0x78] sm:$0xff]
    %v4535 = vld [vmem:[%s45 + $0x80] sm:$0xff]
    %v4536 = vld [vmem:[%s45 + $0x88] sm:$0xff]
    %v4537 = vld [vmem:[%s45 + $0x90] sm:$0xff]
    %v4538 = vld [vmem:[%s45 + $0x98] sm:$0xff]
    %v4539 = vld [vmem:[%s45 + $0xa0] sm:$0xff]
    %v4540 = vld [vmem:[%s45 + $0xa8] sm:$0xff]
    %v4541 = vld [vmem:[%s45 + $0xb0] sm:$0xff]
    %v4542 = vld [vmem:[%s45 + $0xb8] sm:$0xff]
    %v4543 = vld [vmem:[%s45 + $0xc0] sm:$0xff]
    %v4544 = vld [vmem:[%s45 + $0xc8] sm:$0xff]
    %v4545 = vld [vmem:[%s45 + $0xd0] sm:$0xff]
    %v4546 = vld [vmem:[%s45 + $0xd8] sm:$0xff]
    %v4547 = vld [vmem:[%s45 + $0xe0] sm:$0xff]
    %v4548 = vld [vmem:[%s45 + $0xe8] sm:$0xff]
    %v4549 = vld [vmem:[%s45 + $0xf0] sm:$0xff]
    %v4550 = vld [vmem:[%s45 + $0xf8] sm:$0xff]
    %4551 = vmatprep.subr.mxu0 0.0
    %4552 = vmatpush1.msra.mxu0 %v4519
    %4553 = vmatprep.subr.mxu0 0.0
    %4554 = vmatpush1.msra.mxu0 %v4520
    %4555 = vmatprep.subr.mxu0 0.0
    %4556 = vmatpush1.msra.mxu0 %v4521
    %4557 = vmatprep.subr.mxu0 0.0
    %4558 = vmatpush1.msra.mxu0 %v4522
    %4559 = vmatprep.subr.mxu0 0.0
    %4560 = vmatpush1.msra.mxu0 %v4523
    %4561 = vmatprep.subr.mxu0 0.0
    %4562 = vmatpush1.msra.mxu0 %v4524
    %4563 = vmatprep.subr.mxu0 0.0
    %4564 = vmatpush1.msra.mxu0 %v4525
    %4565 = vmatprep.subr.mxu0 0.0
    %4566 = vmatpush1.msra.mxu0 %v4526
    %4567 = vmatprep.subr.mxu0 0.0
    %4568 = vmatpush1.msra.mxu0 %v4527
    %4569 = vmatprep.subr.mxu0 0.0
    %4570 = vmatpush1.msra.mxu0 %v4528
    %4571 = vmatprep.subr.mxu0 0.0
    %4572 = vmatpush1.msra.mxu0 %v4529
    %4573 = vmatprep.subr.mxu0 0.0
    %4574 = vmatpush1.msra.mxu0 %v4530
    %4575 = vmatprep.subr.mxu0 0.0
    %4576 = vmatpush1.msra.mxu0 %v4531
    %4577 = vmatprep.subr.mxu0 0.0
    %4578 = vmatpush1.msra.mxu0 %v4532
    %4579 = vmatprep.subr.mxu0 0.0
    %4580 = vmatpush1.msra.mxu0 %v4533
    %4581 = vmatprep.subr.mxu0 0.0
    %4582 = vmatpush1.msra.mxu0 %v4534
    %4583 = vmatprep.subr.mxu0 0.0
    %4584 = vmatpush1.msra.mxu0 %v4535
    %4585 = vmatprep.subr.mxu0 0.0
    %4586 = vmatpush1.msra.mxu0 %v4536
    %4587 = vmatprep.subr.mxu0 0.0
    %4588 = vmatpush1.msra.mxu0 %v4537
    %4589 = vmatprep.subr.mxu0 0.0
    %4590 = vmatpush1.msra.mxu0 %v4538
    %4591 = vmatprep.subr.mxu0 0.0
    %4592 = vmatpush1.msra.mxu0 %v4539
    %4593 = vmatprep.subr.mxu0 0.0
    %4594 = vmatpush1.msra.mxu0 %v4540
    %4595 = vmatprep.subr.mxu0 0.0
    %4596 = vmatpush1.msra.mxu0 %v4541
    %4597 = vmatprep.subr.mxu0 0.0
    %4598 = vmatpush1.msra.mxu0 %v4542
    %4599 = vmatprep.subr.mxu0 0.0
    %4600 = vmatpush1.msra.mxu0 %v4543
    %4601 = vmatprep.subr.mxu0 0.0
    %4602 = vmatpush1.msra.mxu0 %v4544
    %4603 = vmatprep.subr.mxu0 0.0
    %4604 = vmatpush1.msra.mxu0 %v4545
    %4605 = vmatprep.subr.mxu0 0.0
    %4606 = vmatpush1.msra.mxu0 %v4546
    %4607 = vmatprep.subr.mxu0 0.0
    %4608 = vmatpush1.msra.mxu0 %v4547
    %4609 = vmatprep.subr.mxu0 0.0
    %4610 = vmatpush1.msra.mxu0 %v4548
    %4611 = vmatprep.subr.mxu0 0.0
    %4612 = vmatpush1.msra.mxu0 %v4549
    %4613 = vmatprep.subr.mxu0 0.0
    %4614 = vmatpush1.msra.mxu0 %v4550
    %4615 = vmatprep.mubr.f32.mxu0 %v4504
    %4616 = vmatmul.mubr.f32.gmra.mrb[0].mxu0 %v4498
    %v4617 = vpop.f32.mrb[0].mxu0
    %v4618 = vadd.f32 0.0, %v4617
    %v4619 = vpop.f32.mrb[0].mxu0
    %4620 = vdwg.mxu0
    %v4621 = vmul.f32 %v4618, 0.03125
    %4622 = vmatprep.subr.mxu0 0.0
    %4623 = vmatpush1.msra.mxu0 %v4519
    %4624 = vmatprep.subr.mxu0 0.0
    %4625 = vmatpush1.msra.mxu0 %v4520
    %4626 = vmatprep.subr.mxu0 0.0
    %4627 = vmatpush1.msra.mxu0 %v4521
    %4628 = vmatprep.subr.mxu0 0.0
    %4629 = vmatpush1.msra.mxu0 %v4522
    %4630 = vmatprep.subr.mxu0 0.0
    %4631 = vmatpush1.msra.mxu0 %v4523
    %4632 = vmatprep.subr.mxu0 0.0
    %4633 = vmatpush1.msra.mxu0 %v4524
    %4634 = vmatprep.subr.mxu0 0.0
    %4635 = vmatpush1.msra.mxu0 %v4525
    %4636 = vmatprep.subr.mxu0 0.0
    %4637 = vmatpush1.msra.mxu0 %v4526
    %4638 = vmatprep.subr.mxu0 0.0
    %4639 = vmatpush1.msra.mxu0 %v4527
    %4640 = vmatprep.subr.mxu0 0.0
    %4641 = vmatpush1.msra.mxu0 %v4528
    %4642 = vmatprep.subr.mxu0 0.0
    %4643 = vmatpush1.msra.mxu0 %v4529
    %4644 = vmatprep.subr.mxu0 0.0
    %4645 = vmatpush1.msra.mxu0 %v4530
    %4646 = vmatprep.subr.mxu0 0.0
    %4647 = vmatpush1.msra.mxu0 %v4531
    %4648 = vmatprep.subr.mxu0 0.0
    %4649 = vmatpush1.msra.mxu0 %v4532
    %4650 = vmatprep.subr.mxu0 0.0
    %4651 = vmatpush1.msra.mxu0 %v4533
    %4652 = vmatprep.subr.mxu0 0.0
    %4653 = vmatpush1.msra.mxu0 %v4534
    %4654 = vmatprep.subr.mxu0 0.0
    %4655 = vmatpush1.msra.mxu0 %v4535
    %4656 = vmatprep.subr.mxu0 0.0
    %4657 = vmatpush1.msra.mxu0 %v4536
    %4658 = vmatprep.subr.mxu0 0.0
    %4659 = vmatpush1.msra.mxu0 %v4537
    %4660 = vmatprep.subr.mxu0 0.0
    %4661 = vmatpush1.msra.mxu0 %v4538
    %4662 = vmatprep.subr.mxu0 0.0
    %4663 = vmatpush1.msra.mxu0 %v4539
    %4664 = vmatprep.subr.mxu0 0.0
    %4665 = vmatpush1.msra.mxu0 %v4540
    %4666 = vmatprep.subr.mxu0 0.0
    %4667 = vmatpush1.msra.mxu0 %v4541
    %4668 = vmatprep.subr.mxu0 0.0
    %4669 = vmatpush1.msra.mxu0 %v4542
    %4670 = vmatprep.subr.mxu0 0.0
    %4671 = vmatpush1.msra.mxu0 %v4543
    %4672 = vmatprep.subr.mxu0 0.0
    %4673 = vmatpush1.msra.mxu0 %v4544
    %4674 = vmatprep.subr.mxu0 0.0
    %4675 = vmatpush1.msra.mxu0 %v4545
    %4676 = vmatprep.subr.mxu0 0.0
    %4677 = vmatpush1.msra.mxu0 %v4546
    %4678 = vmatprep.subr.mxu0 0.0
    %4679 = vmatpush1.msra.mxu0 %v4547
    %4680 = vmatprep.subr.mxu0 0.0
    %4681 = vmatpush1.msra.mxu0 %v4548
    %4682 = vmatprep.subr.mxu0 0.0
    %4683 = vmatpush1.msra.mxu0 %v4549
    %4684 = vmatprep.subr.mxu0 0.0
    %4685 = vmatpush1.msra.mxu0 %v4550
    %4686 = vmatprep.mubr.f32.mxu0 %v4518
    %4687 = vmatmul.mubr.f32.gmra.mrb[0].mxu0 %v4512
    %v4688 = vpop.f32.mrb[0].mxu0
    %v4689 = vadd.f32 0.0, %v4688
    %v4690 = vpop.f32.mrb[0].mxu0
    %4691 = vdwg.mxu0
    %v4692 = vmul.f32 %v4689, 0.03125
    %v4693 = vmul.f32 %v4621, %v4621
    %v4694 = vsub.f32 %v4692, %v4693
    %v4695 = vld [vmem:[%s43] sm:$0x1]
    %v4696 = vadd.f32 %v4694, 1e-05
    %v4697 = vrsqrt.pop %v4696
    %v4698 = vmul.f32 %v4695, %v4697
    %v4699 = vld [vmem:[%s43 + $0x1] sm:$0x1]
    %v4700 = vmul.f32 %v4621, %v4698
    %v4701 = vsub.f32 %v4699, %v4700
    %v4702 = vld [vmem:[%s47] sm:$0xff]
    %v4703 = vld [vmem:[%s47 + $0x8] sm:$0xff]
    %v4704 = vld [vmem:[%s47 + $0x10] sm:$0xff]
    %v4705 = vld [vmem:[%s47 + $0x18] sm:$0xff]
    %v4706 = vld [vmem:[%s47 + $0x20] sm:$0xff]
    %v4707 = vld [vmem:[%s47 + $0x28] sm:$0xff]
    %v4708 = vld [vmem:[%s47 + $0x30] sm:$0xff]
    %v4709 = vld [vmem:[%s47 + $0x38] sm:$0xff]
    %v4710 = vld [vmem:[%s47 + $0x40] sm:$0xff]
    %v4711 = vld [vmem:[%s47 + $0x48] sm:$0xff]
    %v4712 = vld [vmem:[%s47 + $0x50] sm:$0xff]
    %v4713 = vld [vmem:[%s47 + $0x58] sm:$0xff]
    %v4714 = vld [vmem:[%s47 + $0x60] sm:$0xff]
    %v4715 = vld [vmem:[%s47 + $0x68] sm:$0xff]
    %v4716 = vld [vmem:[%s47 + $0x70] sm:$0xff]
    %v4717 = vld [vmem:[%s47 + $0x78] sm:$0xff]
    %v4719 = vsel %vm2211, %v4698, 0
    %4721 = vmatprep.subr.mxu0 %v4703
    %4722 = vmatpush1.msra.mxu0 %v4702
    %4723 = vmatprep.subr.mxu0 %v4705
    %4724 = vmatpush1.msra.mxu0 %v4704
    %4725 = vmatprep.subr.mxu0 %v4707
    %4726 = vmatpush1.msra.mxu0 %v4706
    %4727 = vmatprep.subr.mxu0 %v4709
    %4728 = vmatpush1.msra.mxu0 %v4708
    %4729 = vmatprep.subr.mxu0 %v4711
    %4730 = vmatpush1.msra.mxu0 %v4710
    %4731 = vmatprep.subr.mxu0 %v4713
    %4732 = vmatpush1.msra.mxu0 %v4712
    %4733 = vmatprep.subr.mxu0 %v4715
    %4734 = vmatpush1.msra.mxu0 %v4714
    %4735 = vmatprep.subr.mxu0 %v4717
    %4736 = vmatpush1.msra.mxu0 %v4716
    %4737 = vmatprep.subr.mxu0 0.0
    %4738 = vmatpush1.msra.mxu0 0.0
    %4739 = vmatprep.subr.mxu0 0.0
    %4740 = vmatpush1.msra.mxu0 0.0
    %4741 = vmatprep.subr.mxu0 0.0
    %4742 = vmatpush1.msra.mxu0 0.0
    %4743 = vmatprep.subr.mxu0 0.0
    %4744 = vmatpush1.msra.mxu0 0.0
    %4745 = vmatprep.subr.mxu0 0.0
    %4746 = vmatpush1.msra.mxu0 0.0
    %4747 = vmatprep.subr.mxu0 0.0
    %4748 = vmatpush1.msra.mxu0 0.0
    %4749 = vmatprep.subr.mxu0 0.0
    %4750 = vmatpush1.msra.mxu0 0.0
    %4751 = vmatprep.subr.mxu0 0.0
    %4752 = vmatpush1.msra.mxu0 0.0
    %4753 = vmatprep.subr.mxu0 0.0
    %4754 = vmatpush1.msra.mxu0 0.0
    %4755 = vmatprep.subr.mxu0 0.0
    %4756 = vmatpush1.msra.mxu0 0.0
    %4757 = vmatprep.subr.mxu0 0.0
    %4758 = vmatpush1.msra.mxu0 0.0
    %4759 = vmatprep.subr.mxu0 0.0
    %4760 = vmatpush1.msra.mxu0 0.0
    %4761 = vmatprep.subr.mxu0 0.0
    %4762 = vmatpush1.msra.mxu0 0.0
    %4763 = vmatprep.subr.mxu0 0.0
    %4764 = vmatpush1.msra.mxu0 0.0
    %4765 = vmatprep.subr.mxu0 0.0
    %4766 = vmatpush1.msra.mxu0 0.0
    %4767 = vmatprep.subr.mxu0 0.0
    %4768 = vmatpush1.msra.mxu0 0.0
    %4769 = vmatprep.subr.mxu0 0.0
    %4770 = vmatpush1.msra.mxu0 0.0
    %4771 = vmatprep.subr.mxu0 0.0
    %4772 = vmatpush1.msra.mxu0 0.0
    %4773 = vmatprep.subr.mxu0 0.0
    %4774 = vmatpush1.msra.mxu0 0.0
    %4775 = vmatprep.subr.mxu0 0.0
    %4776 = vmatpush1.msra.mxu0 0.0
    %4777 = vmatprep.subr.mxu0 0.0
    %4778 = vmatpush1.msra.mxu0 0.0
    %4779 = vmatprep.subr.mxu0 0.0
    %4780 = vmatpush1.msra.mxu0 0.0
    %4781 = vmatprep.subr.mxu0 0.0
    %4782 = vmatpush1.msra.mxu0 0.0
    %4783 = vmatprep.subr.mxu0 0.0
    %4784 = vmatpush1.msra.mxu0 0.0
    %4785 = vmatprep.mubr.f32.mxu0 0.0
    %4786 = vmatmul.mubr.f32.gmra.mrb[0].mxu0 %v4719
    %v4787 = vpop.f32.mrb[0].mxu0
    %v4788 = vadd.f32 0.0, %v4787
    %v4789 = vpop.f32.mrb[0].mxu0
    %v4790 = vadd.f32 0.0, %v4789
    %4791 = vdwg.mxu0
    %v4792 = vlaneseq
    %v4793 = vshrl.u32 %v4792, 7
    %v4794 = vsub.s32 0, %v4793
    %v4795 = vrot.slane %v4788, %v4794
    %v4796 = vlaneseq
    %v4797 = vshrl.u32 %v4796, 7
    %v4798 = vsub.s32 0, %v4797
    %v4799 = vrot.slane %v4790, %v4798
    %v4800 = vmul.f32 %v4489, %v4795
    %v4801 = vmul.f32 %v4491, %v4799
    %v4803 = vsel %vm2211, %v4701, 0
    %4805 = vmatprep.subr.mxu0 %v4703
    %4806 = vmatpush1.msra.mxu0 %v4702
    %4807 = vmatprep.subr.mxu0 %v4705
    %4808 = vmatpush1.msra.mxu0 %v4704
    %4809 = vmatprep.subr.mxu0 %v4707
    %4810 = vmatpush1.msra.mxu0 %v4706
    %4811 = vmatprep.subr.mxu0 %v4709
    %4812 = vmatpush1.msra.mxu0 %v4708
    %4813 = vmatprep.subr.mxu0 %v4711
    %4814 = vmatpush1.msra.mxu0 %v4710
    %4815 = vmatprep.subr.mxu0 %v4713
    %4816 = vmatpush1.msra.mxu0 %v4712
    %4817 = vmatprep.subr.mxu0 %v4715
    %4818 = vmatpush1.msra.mxu0 %v4714
    %4819 = vmatprep.subr.mxu0 %v4717
    %4820 = vmatpush1.msra.mxu0 %v4716
    %4821 = vmatprep.subr.mxu0 0.0
    %4822 = vmatpush1.msra.mxu0 0.0
    %4823 = vmatprep.subr.mxu0 0.0
    %4824 = vmatpush1.msra.mxu0 0.0
    %4825 = vmatprep.subr.mxu0 0.0
    %4826 = vmatpush1.msra.mxu0 0.0
    %4827 = vmatprep.subr.mxu0 0.0
    %4828 = vmatpush1.msra.mxu0 0.0
    %4829 = vmatprep.subr.mxu0 0.0
    %4830 = vmatpush1.msra.mxu0 0.0
    %4831 = vmatprep.subr.mxu0 0.0
    %4832 = vmatpush1.msra.mxu0 0.0
    %4833 = vmatprep.subr.mxu0 0.0
    %4834 = vmatpush1.msra.mxu0 0.0
    %4835 = vmatprep.subr.mxu0 0.0
    %4836 = vmatpush1.msra.mxu0 0.0
    %4837 = vmatprep.subr.mxu0 0.0
    %4838 = vmatpush1.msra.mxu0 0.0
    %4839 = vmatprep.subr.mxu0 0.0
    %4840 = vmatpush1.msra.mxu0 0.0
    %4841 = vmatprep.subr.mxu0 0.0
    %4842 = vmatpush1.msra.mxu0 0.0
    %4843 = vmatprep.subr.mxu0 0.0
    %4844 = vmatpush1.msra.mxu0 0.0
    %4845 = vmatprep.subr.mxu0 0.0
    %4846 = vmatpush1.msra.mxu0 0.0
    %4847 = vmatprep.subr.mxu0 0.0
    %4848 = vmatpush1.msra.mxu0 0.0
    %4849 = vmatprep.subr.mxu0 0.0
    %4850 = vmatpush1.msra.mxu0 0.0
    %4851 = vmatprep.subr.mxu0 0.0
    %4852 = vmatpush1.msra.mxu0 0.0
    %4853 = vmatprep.subr.mxu0 0.0
    %4854 = vmatpush1.msra.mxu0 0.0
    %4855 = vmatprep.subr.mxu0 0.0
    %4856 = vmatpush1.msra.mxu0 0.0
    %4857 = vmatprep.subr.mxu0 0.0
    %4858 = vmatpush1.msra.mxu0 0.0
    %4859 = vmatprep.subr.mxu0 0.0
    %4860 = vmatpush1.msra.mxu0 0.0
    %4861 = vmatprep.subr.mxu0 0.0
    %4862 = vmatpush1.msra.mxu0 0.0
    %4863 = vmatprep.subr.mxu0 0.0
    %4864 = vmatpush1.msra.mxu0 0.0
    %4865 = vmatprep.subr.mxu0 0.0
    %4866 = vmatpush1.msra.mxu0 0.0
    %4867 = vmatprep.subr.mxu0 0.0
    %4868 = vmatpush1.msra.mxu0 0.0
    %4869 = vmatprep.mubr.f32.mxu0 0.0
    %4870 = vmatmul.mubr.f32.gmra.mrb[0].mxu0 %v4803
    %v4871 = vpop.f32.mrb[0].mxu0
    %v4872 = vadd.f32 0.0, %v4871
    %v4873 = vpop.f32.mrb[0].mxu0
    %v4874 = vadd.f32 0.0, %v4873
    %4875 = vdwg.mxu0
    %v4876 = vlaneseq
    %v4877 = vshrl.u32 %v4876, 7
    %v4878 = vsub.s32 0, %v4877
    %v4879 = vrot.slane %v4872, %v4878
    %v4880 = vlaneseq
    %v4881 = vshrl.u32 %v4880, 7
    %v4882 = vsub.s32 0, %v4881
    %v4883 = vrot.slane %v4874, %v4882
    %v4884 = vadd.f32 %v4800, %v4879
    %v4885 = vadd.f32 %v4801, %v4883
    %v4886 = vmax.f32 %v4884, 0.0
    %v4887 = vmax.f32 %v4885, 0.0
    %v4888 = vld [vmem:[%s49] sm:$0xf]
    %v4890 = vsel %vm1978, %v4888, 0
    %4892 = vmatprep.subr.mxu0 %v4887
    %4893 = vmatpush1.msra.mxu0 %v4886
    %4894 = vmatprep.subr.mxu0 0.0
    %4895 = vmatpush1.msra.mxu0 0.0
    %4896 = vmatprep.subr.mxu0 0.0
    %4897 = vmatpush1.msra.mxu0 0.0
    %4898 = vmatprep.subr.mxu0 0.0
    %4899 = vmatpush1.msra.mxu0 0.0
    %4900 = vmatprep.subr.mxu0 0.0
    %4901 = vmatpush1.msra.mxu0 0.0
    %4902 = vmatprep.subr.mxu0 0.0
    %4903 = vmatpush1.msra.mxu0 0.0
    %4904 = vmatprep.subr.mxu0 0.0
    %4905 = vmatpush1.msra.mxu0 0.0
    %4906 = vmatprep.subr.mxu0 0.0
    %4907 = vmatpush1.msra.mxu0 0.0
    %4908 = vmatprep.subr.mxu0 0.0
    %4909 = vmatpush1.msra.mxu0 0.0
    %4910 = vmatprep.subr.mxu0 0.0
    %4911 = vmatpush1.msra.mxu0 0.0
    %4912 = vmatprep.subr.mxu0 0.0
    %4913 = vmatpush1.msra.mxu0 0.0
    %4914 = vmatprep.subr.mxu0 0.0
    %4915 = vmatpush1.msra.mxu0 0.0
    %4916 = vmatprep.subr.mxu0 0.0
    %4917 = vmatpush1.msra.mxu0 0.0
    %4918 = vmatprep.subr.mxu0 0.0
    %4919 = vmatpush1.msra.mxu0 0.0
    %4920 = vmatprep.subr.mxu0 0.0
    %4921 = vmatpush1.msra.mxu0 0.0
    %4922 = vmatprep.subr.mxu0 0.0
    %4923 = vmatpush1.msra.mxu0 0.0
    %4924 = vmatprep.subr.mxu0 0.0
    %4925 = vmatpush1.msra.mxu0 0.0
    %4926 = vmatprep.subr.mxu0 0.0
    %4927 = vmatpush1.msra.mxu0 0.0
    %4928 = vmatprep.subr.mxu0 0.0
    %4929 = vmatpush1.msra.mxu0 0.0
    %4930 = vmatprep.subr.mxu0 0.0
    %4931 = vmatpush1.msra.mxu0 0.0
    %4932 = vmatprep.subr.mxu0 0.0
    %4933 = vmatpush1.msra.mxu0 0.0
    %4934 = vmatprep.subr.mxu0 0.0
    %4935 = vmatpush1.msra.mxu0 0.0
    %4936 = vmatprep.subr.mxu0 0.0
    %4937 = vmatpush1.msra.mxu0 0.0
    %4938 = vmatprep.subr.mxu0 0.0
    %4939 = vmatpush1.msra.mxu0 0.0
    %4940 = vmatprep.subr.mxu0 0.0
    %4941 = vmatpush1.msra.mxu0 0.0
    %4942 = vmatprep.subr.mxu0 0.0
    %4943 = vmatpush1.msra.mxu0 0.0
    %4944 = vmatprep.subr.mxu0 0.0
    %4945 = vmatpush1.msra.mxu0 0.0
    %4946 = vmatprep.subr.mxu0 0.0
    %4947 = vmatpush1.msra.mxu0 0.0
    %4948 = vmatprep.subr.mxu0 0.0
    %4949 = vmatpush1.msra.mxu0 0.0
    %4950 = vmatprep.subr.mxu0 0.0
    %4951 = vmatpush1.msra.mxu0 0.0
    %4952 = vmatprep.subr.mxu0 0.0
    %4953 = vmatpush1.msra.mxu0 0.0
    %4954 = vmatprep.subr.mxu0 0.0
    %4955 = vmatpush1.msra.mxu0 0.0
    %4956 = vmatprep.mubr.f32.mxu0 0.0
    %4957 = vmatmul.mubr.f32.gmra.mrb[0].mxu0 %v4890
    %v4958 = vpop.f32.mrb[0].mxu0
    %v4959 = vadd.f32 0.0, %v4958
    %v4960 = vpop.f32.mrb[0].mxu0
    %v4961 = vadd.f32 0.0, %v4960
    %4962 = vdwg.mxu0
    %v4963 = vld [vmem:[%s51] sm:$0xff]
    %v4964 = vld [vmem:[%s51 + $0x8] sm:$0xff]
    %v4965 = vld [vmem:[%s51 + $0x10] sm:$0xff]
    %v4966 = vld [vmem:[%s51 + $0x18] sm:$0xff]
    %v4967 = vld [vmem:[%s51 + $0x20] sm:$0xff]
    %v4968 = vld [vmem:[%s51 + $0x28] sm:$0xff]
    %v4969 = vld [vmem:[%s51 + $0x30] sm:$0xff]
    %v4970 = vld [vmem:[%s51 + $0x38] sm:$0xff]
    %v4971 = vld [vmem:[%s51 + $0x40] sm:$0xff]
    %v4972 = vld [vmem:[%s51 + $0x48] sm:$0xff]
    %v4973 = vld [vmem:[%s51 + $0x50] sm:$0xff]
    %v4974 = vld [vmem:[%s51 + $0x58] sm:$0xff]
    %v4975 = vld [vmem:[%s51 + $0x60] sm:$0xff]
    %v4976 = vld [vmem:[%s51 + $0x68] sm:$0xff]
    %v4977 = vld [vmem:[%s51 + $0x70] sm:$0xff]
    %v4978 = vld [vmem:[%s51 + $0x78] sm:$0xff]
    %v4979 = vld [vmem:[%s51 + $0x80] sm:$0xff]
    %v4980 = vld [vmem:[%s51 + $0x88] sm:$0xff]
    %v4981 = vld [vmem:[%s51 + $0x90] sm:$0xff]
    %v4982 = vld [vmem:[%s51 + $0x98] sm:$0xff]
    %v4983 = vld [vmem:[%s51 + $0xa0] sm:$0xff]
    %v4984 = vld [vmem:[%s51 + $0xa8] sm:$0xff]
    %v4985 = vld [vmem:[%s51 + $0xb0] sm:$0xff]
    %v4986 = vld [vmem:[%s51 + $0xb8] sm:$0xff]
    %v4987 = vld [vmem:[%s51 + $0xc0] sm:$0xff]
    %v4988 = vld [vmem:[%s51 + $0xc8] sm:$0xff]
    %v4989 = vld [vmem:[%s51 + $0xd0] sm:$0xff]
    %v4990 = vld [vmem:[%s51 + $0xd8] sm:$0xff]
    %v4991 = vld [vmem:[%s51 + $0xe0] sm:$0xff]
    %v4992 = vld [vmem:[%s51 + $0xe8] sm:$0xff]
    %v4993 = vld [vmem:[%s51 + $0xf0] sm:$0xff]
    %v4994 = vld [vmem:[%s51 + $0xf8] sm:$0xff]
    %4995 = vmatprep.subr.mxu0 0.0
    %4996 = vmatpush1.msra.mxu0 %v4963
    %4997 = vmatprep.subr.mxu0 0.0
    %4998 = vmatpush1.msra.mxu0 %v4964
    %4999 = vmatprep.subr.mxu0 0.0
    %5000 = vmatpush1.msra.mxu0 %v4965
    %5001 = vmatprep.subr.mxu0 0.0
    %5002 = vmatpush1.msra.mxu0 %v4966
    %5003 = vmatprep.subr.mxu0 0.0
    %5004 = vmatpush1.msra.mxu0 %v4967
    %5005 = vmatprep.subr.mxu0 0.0
    %5006 = vmatpush1.msra.mxu0 %v4968
    %5007 = vmatprep.subr.mxu0 0.0
    %5008 = vmatpush1.msra.mxu0 %v4969
    %5009 = vmatprep.subr.mxu0 0.0
    %5010 = vmatpush1.msra.mxu0 %v4970
    %5011 = vmatprep.subr.mxu0 0.0
    %5012 = vmatpush1.msra.mxu0 %v4971
    %5013 = vmatprep.subr.mxu0 0.0
    %5014 = vmatpush1.msra.mxu0 %v4972
    %5015 = vmatprep.subr.mxu0 0.0
    %5016 = vmatpush1.msra.mxu0 %v4973
    %5017 = vmatprep.subr.mxu0 0.0
    %5018 = vmatpush1.msra.mxu0 %v4974
    %5019 = vmatprep.subr.mxu0 0.0
    %5020 = vmatpush1.msra.mxu0 %v4975
    %5021 = vmatprep.subr.mxu0 0.0
    %5022 = vmatpush1.msra.mxu0 %v4976
    %5023 = vmatprep.subr.mxu0 0.0
    %5024 = vmatpush1.msra.mxu0 %v4977
    %5025 = vmatprep.subr.mxu0 0.0
    %5026 = vmatpush1.msra.mxu0 %v4978
    %5027 = vmatprep.subr.mxu0 0.0
    %5028 = vmatpush1.msra.mxu0 %v4979
    %5029 = vmatprep.subr.mxu0 0.0
    %5030 = vmatpush1.msra.mxu0 %v4980
    %5031 = vmatprep.subr.mxu0 0.0
    %5032 = vmatpush1.msra.mxu0 %v4981
    %5033 = vmatprep.subr.mxu0 0.0
    %5034 = vmatpush1.msra.mxu0 %v4982
    %5035 = vmatprep.subr.mxu0 0.0
    %5036 = vmatpush1.msra.mxu0 %v4983
    %5037 = vmatprep.subr.mxu0 0.0
    %5038 = vmatpush1.msra.mxu0 %v4984
    %5039 = vmatprep.subr.mxu0 0.0
    %5040 = vmatpush1.msra.mxu0 %v4985
    %5041 = vmatprep.subr.mxu0 0.0
    %5042 = vmatpush1.msra.mxu0 %v4986
    %5043 = vmatprep.subr.mxu0 0.0
    %5044 = vmatpush1.msra.mxu0 %v4987
    %5045 = vmatprep.subr.mxu0 0.0
    %5046 = vmatpush1.msra.mxu0 %v4988
    %5047 = vmatprep.subr.mxu0 0.0
    %5048 = vmatpush1.msra.mxu0 %v4989
    %5049 = vmatprep.subr.mxu0 0.0
    %5050 = vmatpush1.msra.mxu0 %v4990
    %5051 = vmatprep.subr.mxu0 0.0
    %5052 = vmatpush1.msra.mxu0 %v4991
    %5053 = vmatprep.subr.mxu0 0.0
    %5054 = vmatpush1.msra.mxu0 %v4992
    %5055 = vmatprep.subr.mxu0 0.0
    %5056 = vmatpush1.msra.mxu0 %v4993
    %5057 = vmatprep.subr.mxu0 0.0
    %5058 = vmatpush1.msra.mxu0 %v4994
    %5059 = vmatprep.mubr.f32.mxu0 %v4961
    %5060 = vmatmul.mubr.f32.gmra.mrb[0].mxu0 %v4959
    %v5061 = vpop.f32.mrb[0].mxu0
    %v5062 = vadd.f32 0.0, %v5061
    %v5063 = vpop.f32.mrb[0].mxu0
    %5064 = vdwg.mxu0
    %v5065 = vld [vmem:[%s53] sm:$0xff]
    %v5066 = vld [vmem:[%s53 + $0x8] sm:$0xff]
    %v5067 = vld [vmem:[%s53 + $0x10] sm:$0xff]
    %v5068 = vld [vmem:[%s53 + $0x18] sm:$0xff]
    %v5069 = vld [vmem:[%s53 + $0x20] sm:$0xff]
    %v5070 = vld [vmem:[%s53 + $0x28] sm:$0xff]
    %v5071 = vld [vmem:[%s53 + $0x30] sm:$0xff]
    %v5072 = vld [vmem:[%s53 + $0x38] sm:$0xff]
    %v5073 = vld [vmem:[%s53 + $0x40] sm:$0xff]
    %v5074 = vld [vmem:[%s53 + $0x48] sm:$0xff]
    %v5075 = vld [vmem:[%s53 + $0x50] sm:$0xff]
    %v5076 = vld [vmem:[%s53 + $0x58] sm:$0xff]
    %v5077 = vld [vmem:[%s53 + $0x60] sm:$0xff]
    %v5078 = vld [vmem:[%s53 + $0x68] sm:$0xff]
    %v5079 = vld [vmem:[%s53 + $0x70] sm:$0xff]
    %v5080 = vld [vmem:[%s53 + $0x78] sm:$0xff]
    %v5081 = vld [vmem:[%s53 + $0x80] sm:$0xff]
    %v5082 = vld [vmem:[%s53 + $0x88] sm:$0xff]
    %v5083 = vld [vmem:[%s53 + $0x90] sm:$0xff]
    %v5084 = vld [vmem:[%s53 + $0x98] sm:$0xff]
    %v5085 = vld [vmem:[%s53 + $0xa0] sm:$0xff]
    %v5086 = vld [vmem:[%s53 + $0xa8] sm:$0xff]
    %v5087 = vld [vmem:[%s53 + $0xb0] sm:$0xff]
    %v5088 = vld [vmem:[%s53 + $0xb8] sm:$0xff]
    %v5089 = vld [vmem:[%s53 + $0xc0] sm:$0xff]
    %v5090 = vld [vmem:[%s53 + $0xc8] sm:$0xff]
    %v5091 = vld [vmem:[%s53 + $0xd0] sm:$0xff]
    %v5092 = vld [vmem:[%s53 + $0xd8] sm:$0xff]
    %v5093 = vld [vmem:[%s53 + $0xe0] sm:$0xff]
    %v5094 = vld [vmem:[%s53 + $0xe8] sm:$0xff]
    %v5095 = vld [vmem:[%s53 + $0xf0] sm:$0xff]
    %v5096 = vld [vmem:[%s53 + $0xf8] sm:$0xff]
    %5097 = vmatprep.subr.mxu0 %v5066
    %5098 = vmatpush1.msra.mxu0 %v5065
    %5099 = vmatprep.subr.mxu0 %v5068
    %5100 = vmatpush1.msra.mxu0 %v5067
    %5101 = vmatprep.subr.mxu0 %v5070
    %5102 = vmatpush1.msra.mxu0 %v5069
    %5103 = vmatprep.subr.mxu0 %v5072
    %5104 = vmatpush1.msra.mxu0 %v5071
    %5105 = vmatprep.subr.mxu0 %v5074
    %5106 = vmatpush1.msra.mxu0 %v5073
    %5107 = vmatprep.subr.mxu0 %v5076
    %5108 = vmatpush1.msra.mxu0 %v5075
    %5109 = vmatprep.subr.mxu0 %v5078
    %5110 = vmatpush1.msra.mxu0 %v5077
    %5111 = vmatprep.subr.mxu0 %v5080
    %5112 = vmatpush1.msra.mxu0 %v5079
    %5113 = vmatprep.subr.mxu0 %v5082
    %5114 = vmatpush1.msra.mxu0 %v5081
    %5115 = vmatprep.subr.mxu0 %v5084
    %5116 = vmatpush1.msra.mxu0 %v5083
    %5117 = vmatprep.subr.mxu0 %v5086
    %5118 = vmatpush1.msra.mxu0 %v5085
    %5119 = vmatprep.subr.mxu0 %v5088
    %5120 = vmatpush1.msra.mxu0 %v5087
    %5121 = vmatprep.subr.mxu0 %v5090
    %5122 = vmatpush1.msra.mxu0 %v5089
    %5123 = vmatprep.subr.mxu0 %v5092
    %5124 = vmatpush1.msra.mxu0 %v5091
    %5125 = vmatprep.subr.mxu0 %v5094
    %5126 = vmatpush1.msra.mxu0 %v5093
    %5127 = vmatprep.subr.mxu0 %v5096
    %5128 = vmatpush1.msra.mxu0 %v5095
    %5129 = vmatprep.subr.mxu0 0.0
    %5130 = vmatpush1.msra.mxu0 0.0
    %5131 = vmatprep.subr.mxu0 0.0
    %5132 = vmatpush1.msra.mxu0 0.0
    %5133 = vmatprep.subr.mxu0 0.0
    %5134 = vmatpush1.msra.mxu0 0.0
    %5135 = vmatprep.subr.mxu0 0.0
    %5136 = vmatpush1.msra.mxu0 0.0
    %5137 = vmatprep.subr.mxu0 0.0
    %5138 = vmatpush1.msra.mxu0 0.0
    %5139 = vmatprep.subr.mxu0 0.0
    %5140 = vmatpush1.msra.mxu0 0.0
    %5141 = vmatprep.subr.mxu0 0.0
    %5142 = vmatpush1.msra.mxu0 0.0
    %5143 = vmatprep.subr.mxu0 0.0
    %5144 = vmatpush1.msra.mxu0 0.0
    %5145 = vmatprep.subr.mxu0 0.0
    %5146 = vmatpush1.msra.mxu0 0.0
    %5147 = vmatprep.subr.mxu0 0.0
    %5148 = vmatpush1.msra.mxu0 0.0
    %5149 = vmatprep.subr.mxu0 0.0
    %5150 = vmatpush1.msra.mxu0 0.0
    %5151 = vmatprep.subr.mxu0 0.0
    %5152 = vmatpush1.msra.mxu0 0.0
    %5153 = vmatprep.subr.mxu0 0.0
    %5154 = vmatpush1.msra.mxu0 0.0
    %5155 = vmatprep.subr.mxu0 0.0
    %5156 = vmatpush1.msra.mxu0 0.0
    %5157 = vmatprep.subr.mxu0 0.0
    %5158 = vmatpush1.msra.mxu0 0.0
    %5159 = vmatprep.subr.mxu0 0.0
    %5160 = vmatpush1.msra.mxu0 0.0
    %5161 = vmatprep.mubr.f32.mxu0 0.0
    %5162 = vmatmul.mubr.f32.gmra.mrb[0].mxu0 %v5062
    %v5163 = vpop.f32.mrb[0].mxu0
    %v5164 = vadd.f32 0.0, %v5163
    %v5165 = vpop.f32.mrb[0].mxu0
    %v5166 = vadd.f32 0.0, %v5165
    %5167 = vdwg.mxu0
    %vm5168 = vcmask 1043456
    %v5169 = vsel %vm5168, %v5164, 0.0
    %v5170 = vrot.slane %v5169, 4
    %v5171 = vadd.f32 %v5169, %v5170
    %v5172 = vrot.slane %v5171, 2
    %v5173 = vadd.f32 %v5171, %v5172
    %v5174 = vrot.slane %v5173, 1
    %v5175 = vadd.f32 %v5173, %v5174
    %v5176 = vsel %vm5168, %v5166, 0.0
    %v5177 = vrot.slane %v5176, 4
    %v5178 = vadd.f32 %v5176, %v5177
    %v5179 = vrot.slane %v5178, 2
    %v5180 = vadd.f32 %v5178, %v5179
    %v5181 = vrot.slane %v5180, 1
    %v5182 = vadd.f32 %v5180, %v5181
    %v5183 = vmul.f32 %v5164, %v5164
    %v5184 = vmul.f32 %v5166, %v5166
    %v5185 = vsel %vm5168, %v5183, 0.0
    %v5186 = vrot.slane %v5185, 4
    %v5187 = vadd.f32 %v5185, %v5186
    %v5188 = vrot.slane %v5187, 2
    %v5189 = vadd.f32 %v5187, %v5188
    %v5190 = vrot.slane %v5189, 1
    %v5191 = vadd.f32 %v5189, %v5190
    %v5192 = vsel %vm5168, %v5184, 0.0
    %v5193 = vrot.slane %v5192, 4
    %v5194 = vadd.f32 %v5192, %v5193
    %v5195 = vrot.slane %v5194, 2
    %v5196 = vadd.f32 %v5194, %v5195
    %v5197 = vrot.slane %v5196, 1
    %v5198 = vadd.f32 %v5196, %v5197
    %v5199 = vld [vmem:[%s57] sm:$0xff]
    %v5200 = vld [vmem:[%s57 + $0x8] sm:$0xff]
    %v5201 = vld [vmem:[%s57 + $0x10] sm:$0xff]
    %v5202 = vld [vmem:[%s57 + $0x18] sm:$0xff]
    %v5203 = vld [vmem:[%s57 + $0x20] sm:$0xff]
    %v5204 = vld [vmem:[%s57 + $0x28] sm:$0xff]
    %v5205 = vld [vmem:[%s57 + $0x30] sm:$0xff]
    %v5206 = vld [vmem:[%s57 + $0x38] sm:$0xff]
    %v5207 = vld [vmem:[%s57 + $0x40] sm:$0xff]
    %v5208 = vld [vmem:[%s57 + $0x48] sm:$0xff]
    %v5209 = vld [vmem:[%s57 + $0x50] sm:$0xff]
    %v5210 = vld [vmem:[%s57 + $0x58] sm:$0xff]
    %v5211 = vld [vmem:[%s57 + $0x60] sm:$0xff]
    %v5212 = vld [vmem:[%s57 + $0x68] sm:$0xff]
    %v5213 = vld [vmem:[%s57 + $0x70] sm:$0xff]
    %v5214 = vld [vmem:[%s57 + $0x78] sm:$0xff]
    %v5215 = vld [vmem:[%s57 + $0x80] sm:$0xff]
    %v5216 = vld [vmem:[%s57 + $0x88] sm:$0xff]
    %v5217 = vld [vmem:[%s57 + $0x90] sm:$0xff]
    %v5218 = vld [vmem:[%s57 + $0x98] sm:$0xff]
    %v5219 = vld [vmem:[%s57 + $0xa0] sm:$0xff]
    %v5220 = vld [vmem:[%s57 + $0xa8] sm:$0xff]
    %v5221 = vld [vmem:[%s57 + $0xb0] sm:$0xff]
    %v5222 = vld [vmem:[%s57 + $0xb8] sm:$0xff]
    %v5223 = vld [vmem:[%s57 + $0xc0] sm:$0xff]
    %v5224 = vld [vmem:[%s57 + $0xc8] sm:$0xff]
    %v5225 = vld [vmem:[%s57 + $0xd0] sm:$0xff]
    %v5226 = vld [vmem:[%s57 + $0xd8] sm:$0xff]
    %v5227 = vld [vmem:[%s57 + $0xe0] sm:$0xff]
    %v5228 = vld [vmem:[%s57 + $0xe8] sm:$0xff]
    %v5229 = vld [vmem:[%s57 + $0xf0] sm:$0xff]
    %v5230 = vld [vmem:[%s57 + $0xf8] sm:$0xff]
    %5231 = vmatprep.subr.mxu0 0.0
    %5232 = vmatpush1.msra.mxu0 %v5199
    %5233 = vmatprep.subr.mxu0 0.0
    %5234 = vmatpush1.msra.mxu0 %v5200
    %5235 = vmatprep.subr.mxu0 0.0
    %5236 = vmatpush1.msra.mxu0 %v5201
    %5237 = vmatprep.subr.mxu0 0.0
    %5238 = vmatpush1.msra.mxu0 %v5202
    %5239 = vmatprep.subr.mxu0 0.0
    %5240 = vmatpush1.msra.mxu0 %v5203
    %5241 = vmatprep.subr.mxu0 0.0
    %5242 = vmatpush1.msra.mxu0 %v5204
    %5243 = vmatprep.subr.mxu0 0.0
    %5244 = vmatpush1.msra.mxu0 %v5205
    %5245 = vmatprep.subr.mxu0 0.0
    %5246 = vmatpush1.msra.mxu0 %v5206
    %5247 = vmatprep.subr.mxu0 0.0
    %5248 = vmatpush1.msra.mxu0 %v5207
    %5249 = vmatprep.subr.mxu0 0.0
    %5250 = vmatpush1.msra.mxu0 %v5208
    %5251 = vmatprep.subr.mxu0 0.0
    %5252 = vmatpush1.msra.mxu0 %v5209
    %5253 = vmatprep.subr.mxu0 0.0
    %5254 = vmatpush1.msra.mxu0 %v5210
    %5255 = vmatprep.subr.mxu0 0.0
    %5256 = vmatpush1.msra.mxu0 %v5211
    %5257 = vmatprep.subr.mxu0 0.0
    %5258 = vmatpush1.msra.mxu0 %v5212
    %5259 = vmatprep.subr.mxu0 0.0
    %5260 = vmatpush1.msra.mxu0 %v5213
    %5261 = vmatprep.subr.mxu0 0.0
    %5262 = vmatpush1.msra.mxu0 %v5214
    %5263 = vmatprep.subr.mxu0 0.0
    %5264 = vmatpush1.msra.mxu0 %v5215
    %5265 = vmatprep.subr.mxu0 0.0
    %5266 = vmatpush1.msra.mxu0 %v5216
    %5267 = vmatprep.subr.mxu0 0.0
    %5268 = vmatpush1.msra.mxu0 %v5217
    %5269 = vmatprep.subr.mxu0 0.0
    %5270 = vmatpush1.msra.mxu0 %v5218
    %5271 = vmatprep.subr.mxu0 0.0
    %5272 = vmatpush1.msra.mxu0 %v5219
    %5273 = vmatprep.subr.mxu0 0.0
    %5274 = vmatpush1.msra.mxu0 %v5220
    %5275 = vmatprep.subr.mxu0 0.0
    %5276 = vmatpush1.msra.mxu0 %v5221
    %5277 = vmatprep.subr.mxu0 0.0
    %5278 = vmatpush1.msra.mxu0 %v5222
    %5279 = vmatprep.subr.mxu0 0.0
    %5280 = vmatpush1.msra.mxu0 %v5223
    %5281 = vmatprep.subr.mxu0 0.0
    %5282 = vmatpush1.msra.mxu0 %v5224
    %5283 = vmatprep.subr.mxu0 0.0
    %5284 = vmatpush1.msra.mxu0 %v5225
    %5285 = vmatprep.subr.mxu0 0.0
    %5286 = vmatpush1.msra.mxu0 %v5226
    %5287 = vmatprep.subr.mxu0 0.0
    %5288 = vmatpush1.msra.mxu0 %v5227
    %5289 = vmatprep.subr.mxu0 0.0
    %5290 = vmatpush1.msra.mxu0 %v5228
    %5291 = vmatprep.subr.mxu0 0.0
    %5292 = vmatpush1.msra.mxu0 %v5229
    %5293 = vmatprep.subr.mxu0 0.0
    %5294 = vmatpush1.msra.mxu0 %v5230
    %5295 = vmatprep.mubr.f32.mxu0 %v5182
    %5296 = vmatmul.mubr.f32.gmra.mrb[0].mxu0 %v5175
    %v5297 = vpop.f32.mrb[0].mxu0
    %v5298 = vadd.f32 0.0, %v5297
    %v5299 = vpop.f32.mrb[0].mxu0
    %5300 = vdwg.mxu0
    %v5301 = vmul.f32 %v5298, 0.125
    %5302 = vmatprep.subr.mxu0 0.0
    %5303 = vmatpush1.msra.mxu0 %v5199
    %5304 = vmatprep.subr.mxu0 0.0
    %5305 = vmatpush1.msra.mxu0 %v5200
    %5306 = vmatprep.subr.mxu0 0.0
    %5307 = vmatpush1.msra.mxu0 %v5201
    %5308 = vmatprep.subr.mxu0 0.0
    %5309 = vmatpush1.msra.mxu0 %v5202
    %5310 = vmatprep.subr.mxu0 0.0
    %5311 = vmatpush1.msra.mxu0 %v5203
    %5312 = vmatprep.subr.mxu0 0.0
    %5313 = vmatpush1.msra.mxu0 %v5204
    %5314 = vmatprep.subr.mxu0 0.0
    %5315 = vmatpush1.msra.mxu0 %v5205
    %5316 = vmatprep.subr.mxu0 0.0
    %5317 = vmatpush1.msra.mxu0 %v5206
    %5318 = vmatprep.subr.mxu0 0.0
    %5319 = vmatpush1.msra.mxu0 %v5207
    %5320 = vmatprep.subr.mxu0 0.0
    %5321 = vmatpush1.msra.mxu0 %v5208
    %5322 = vmatprep.subr.mxu0 0.0
    %5323 = vmatpush1.msra.mxu0 %v5209
    %5324 = vmatprep.subr.mxu0 0.0
    %5325 = vmatpush1.msra.mxu0 %v5210
    %5326 = vmatprep.subr.mxu0 0.0
    %5327 = vmatpush1.msra.mxu0 %v5211
    %5328 = vmatprep.subr.mxu0 0.0
    %5329 = vmatpush1.msra.mxu0 %v5212
    %5330 = vmatprep.subr.mxu0 0.0
    %5331 = vmatpush1.msra.mxu0 %v5213
    %5332 = vmatprep.subr.mxu0 0.0
    %5333 = vmatpush1.msra.mxu0 %v5214
    %5334 = vmatprep.subr.mxu0 0.0
    %5335 = vmatpush1.msra.mxu0 %v5215
    %5336 = vmatprep.subr.mxu0 0.0
    %5337 = vmatpush1.msra.mxu0 %v5216
    %5338 = vmatprep.subr.mxu0 0.0
    %5339 = vmatpush1.msra.mxu0 %v5217
    %5340 = vmatprep.subr.mxu0 0.0
    %5341 = vmatpush1.msra.mxu0 %v5218
    %5342 = vmatprep.subr.mxu0 0.0
    %5343 = vmatpush1.msra.mxu0 %v5219
    %5344 = vmatprep.subr.mxu0 0.0
    %5345 = vmatpush1.msra.mxu0 %v5220
    %5346 = vmatprep.subr.mxu0 0.0
    %5347 = vmatpush1.msra.mxu0 %v5221
    %5348 = vmatprep.subr.mxu0 0.0
    %5349 = vmatpush1.msra.mxu0 %v5222
    %5350 = vmatprep.subr.mxu0 0.0
    %5351 = vmatpush1.msra.mxu0 %v5223
    %5352 = vmatprep.subr.mxu0 0.0
    %5353 = vmatpush1.msra.mxu0 %v5224
    %5354 = vmatprep.subr.mxu0 0.0
    %5355 = vmatpush1.msra.mxu0 %v5225
    %5356 = vmatprep.subr.mxu0 0.0
    %5357 = vmatpush1.msra.mxu0 %v5226
    %5358 = vmatprep.subr.mxu0 0.0
    %5359 = vmatpush1.msra.mxu0 %v5227
    %5360 = vmatprep.subr.mxu0 0.0
    %5361 = vmatpush1.msra.mxu0 %v5228
    %5362 = vmatprep.subr.mxu0 0.0
    %5363 = vmatpush1.msra.mxu0 %v5229
    %5364 = vmatprep.subr.mxu0 0.0
    %5365 = vmatpush1.msra.mxu0 %v5230
    %5366 = vmatprep.mubr.f32.mxu0 %v5198
    %5367 = vmatmul.mubr.f32.gmra.mrb[0].mxu0 %v5191
    %v5368 = vpop.f32.mrb[0].mxu0
    %v5369 = vadd.f32 0.0, %v5368
    %v5370 = vpop.f32.mrb[0].mxu0
    %5371 = vdwg.mxu0
    %v5372 = vmul.f32 %v5369, 0.125
    %v5373 = vmul.f32 %v5301, %v5301
    %v5374 = vsub.f32 %v5372, %v5373
    %v5375 = vld [vmem:[%s55] sm:$0x1]
    %v5376 = vadd.f32 %v5374, 1e-05
    %v5377 = vrsqrt.pop %v5376
    %v5378 = vmul.f32 %v5375, %v5377
    %v5379 = vld [vmem:[%s55 + $0x1] sm:$0x1]
    %v5380 = vmul.f32 %v5301, %v5378
    %v5381 = vsub.f32 %v5379, %v5380
    %v5382 = vld [vmem:[%s59] sm:$0xff]
    %v5383 = vld [vmem:[%s59 + $0x8] sm:$0xff]
    %v5384 = vld [vmem:[%s59 + $0x10] sm:$0xff]
    %v5385 = vld [vmem:[%s59 + $0x18] sm:$0xff]
    %v5386 = vld [vmem:[%s59 + $0x20] sm:$0xff]
    %v5387 = vld [vmem:[%s59 + $0x28] sm:$0xff]
    %v5388 = vld [vmem:[%s59 + $0x30] sm:$0xff]
    %v5389 = vld [vmem:[%s59 + $0x38] sm:$0xff]
    %v5390 = vld [vmem:[%s59 + $0x40] sm:$0xff]
    %v5391 = vld [vmem:[%s59 + $0x48] sm:$0xff]
    %v5392 = vld [vmem:[%s59 + $0x50] sm:$0xff]
    %v5393 = vld [vmem:[%s59 + $0x58] sm:$0xff]
    %v5394 = vld [vmem:[%s59 + $0x60] sm:$0xff]
    %v5395 = vld [vmem:[%s59 + $0x68] sm:$0xff]
    %v5396 = vld [vmem:[%s59 + $0x70] sm:$0xff]
    %v5397 = vld [vmem:[%s59 + $0x78] sm:$0xff]
    %v5398 = vld [vmem:[%s59 + $0x80] sm:$0xff]
    %v5399 = vld [vmem:[%s59 + $0x88] sm:$0xff]
    %v5400 = vld [vmem:[%s59 + $0x90] sm:$0xff]
    %v5401 = vld [vmem:[%s59 + $0x98] sm:$0xff]
    %v5402 = vld [vmem:[%s59 + $0xa0] sm:$0xff]
    %v5403 = vld [vmem:[%s59 + $0xa8] sm:$0xff]
    %v5404 = vld [vmem:[%s59 + $0xb0] sm:$0xff]
    %v5405 = vld [vmem:[%s59 + $0xb8] sm:$0xff]
    %v5406 = vld [vmem:[%s59 + $0xc0] sm:$0xff]
    %v5407 = vld [vmem:[%s59 + $0xc8] sm:$0xff]
    %v5408 = vld [vmem:[%s59 + $0xd0] sm:$0xff]
    %v5409 = vld [vmem:[%s59 + $0xd8] sm:$0xff]
    %v5410 = vld [vmem:[%s59 + $0xe0] sm:$0xff]
    %v5411 = vld [vmem:[%s59 + $0xe8] sm:$0xff]
    %v5412 = vld [vmem:[%s59 + $0xf0] sm:$0xff]
    %v5413 = vld [vmem:[%s59 + $0xf8] sm:$0xff]
    %5414 = vmatprep.subr.mxu0 %v5383
    %5415 = vmatpush1.msra.mxu0 %v5382
    %5416 = vmatprep.subr.mxu0 %v5385
    %5417 = vmatpush1.msra.mxu0 %v5384
    %5418 = vmatprep.subr.mxu0 %v5387
    %5419 = vmatpush1.msra.mxu0 %v5386
    %5420 = vmatprep.subr.mxu0 %v5389
    %5421 = vmatpush1.msra.mxu0 %v5388
    %5422 = vmatprep.subr.mxu0 %v5391
    %5423 = vmatpush1.msra.mxu0 %v5390
    %5424 = vmatprep.subr.mxu0 %v5393
    %5425 = vmatpush1.msra.mxu0 %v5392
    %5426 = vmatprep.subr.mxu0 %v5395
    %5427 = vmatpush1.msra.mxu0 %v5394
    %5428 = vmatprep.subr.mxu0 %v5397
    %5429 = vmatpush1.msra.mxu0 %v5396
    %5430 = vmatprep.subr.mxu0 %v5399
    %5431 = vmatpush1.msra.mxu0 %v5398
    %5432 = vmatprep.subr.mxu0 %v5401
    %5433 = vmatpush1.msra.mxu0 %v5400
    %5434 = vmatprep.subr.mxu0 %v5403
    %5435 = vmatpush1.msra.mxu0 %v5402
    %5436 = vmatprep.subr.mxu0 %v5405
    %5437 = vmatpush1.msra.mxu0 %v5404
    %5438 = vmatprep.subr.mxu0 %v5407
    %5439 = vmatpush1.msra.mxu0 %v5406
    %5440 = vmatprep.subr.mxu0 %v5409
    %5441 = vmatpush1.msra.mxu0 %v5408
    %5442 = vmatprep.subr.mxu0 %v5411
    %5443 = vmatpush1.msra.mxu0 %v5410
    %5444 = vmatprep.subr.mxu0 %v5413
    %5445 = vmatpush1.msra.mxu0 %v5412
    %5446 = vmatprep.subr.mxu0 0.0
    %5447 = vmatpush1.msra.mxu0 0.0
    %5448 = vmatprep.subr.mxu0 0.0
    %5449 = vmatpush1.msra.mxu0 0.0
    %5450 = vmatprep.subr.mxu0 0.0
    %5451 = vmatpush1.msra.mxu0 0.0
    %5452 = vmatprep.subr.mxu0 0.0
    %5453 = vmatpush1.msra.mxu0 0.0
    %5454 = vmatprep.subr.mxu0 0.0
    %5455 = vmatpush1.msra.mxu0 0.0
    %5456 = vmatprep.subr.mxu0 0.0
    %5457 = vmatpush1.msra.mxu0 0.0
    %5458 = vmatprep.subr.mxu0 0.0
    %5459 = vmatpush1.msra.mxu0 0.0
    %5460 = vmatprep.subr.mxu0 0.0
    %5461 = vmatpush1.msra.mxu0 0.0
    %5462 = vmatprep.subr.mxu0 0.0
    %5463 = vmatpush1.msra.mxu0 0.0
    %5464 = vmatprep.subr.mxu0 0.0
    %5465 = vmatpush1.msra.mxu0 0.0
    %5466 = vmatprep.subr.mxu0 0.0
    %5467 = vmatpush1.msra.mxu0 0.0
    %5468 = vmatprep.subr.mxu0 0.0
    %5469 = vmatpush1.msra.mxu0 0.0
    %5470 = vmatprep.subr.mxu0 0.0
    %5471 = vmatpush1.msra.mxu0 0.0
    %5472 = vmatprep.subr.mxu0 0.0
    %5473 = vmatpush1.msra.mxu0 0.0
    %5474 = vmatprep.subr.mxu0 0.0
    %5475 = vmatpush1.msra.mxu0 0.0
    %5476 = vmatprep.subr.mxu0 0.0
    %5477 = vmatpush1.msra.mxu0 0.0
    %5478 = vmatprep.mubr.f32.mxu0 0.0
    %5479 = vmatmul.mubr.f32.gmra.mrb[0].mxu0 %v5378
    %v5480 = vpop.f32.mrb[0].mxu0
    %v5481 = vadd.f32 0.0, %v5480
    %v5482 = vpop.f32.mrb[0].mxu0
    %v5483 = vadd.f32 0.0, %v5482
    %5484 = vdwg.mxu0
    %v5485 = vlaneseq
    %v5486 = vshrl.u32 %v5485, 7
    %v5487 = vsub.s32 0, %v5486
    %v5488 = vrot.slane %v5481, %v5487
    %v5489 = vlaneseq
    %v5490 = vshrl.u32 %v5489, 7
    %v5491 = vsub.s32 0, %v5490
    %v5492 = vrot.slane %v5483, %v5491
    %v5493 = vmul.f32 %v5164, %v5488
    %v5494 = vmul.f32 %v5166, %v5492
    %5495 = vmatprep.subr.mxu0 %v5383
    %5496 = vmatpush1.msra.mxu0 %v5382
    %5497 = vmatprep.subr.mxu0 %v5385
    %5498 = vmatpush1.msra.mxu0 %v5384
    %5499 = vmatprep.subr.mxu0 %v5387
    %5500 = vmatpush1.msra.mxu0 %v5386
    %5501 = vmatprep.subr.mxu0 %v5389
    %5502 = vmatpush1.msra.mxu0 %v5388
    %5503 = vmatprep.subr.mxu0 %v5391
    %5504 = vmatpush1.msra.mxu0 %v5390
    %5505 = vmatprep.subr.mxu0 %v5393
    %5506 = vmatpush1.msra.mxu0 %v5392
    %5507 = vmatprep.subr.mxu0 %v5395
    %5508 = vmatpush1.msra.mxu0 %v5394
    %5509 = vmatprep.subr.mxu0 %v5397
    %5510 = vmatpush1.msra.mxu0 %v5396
    %5511 = vmatprep.subr.mxu0 %v5399
    %5512 = vmatpush1.msra.mxu0 %v5398
    %5513 = vmatprep.subr.mxu0 %v5401
    %5514 = vmatpush1.msra.mxu0 %v5400
    %5515 = vmatprep.subr.mxu0 %v5403
    %5516 = vmatpush1.msra.mxu0 %v5402
    %5517 = vmatprep.subr.mxu0 %v5405
    %5518 = vmatpush1.msra.mxu0 %v5404
    %5519 = vmatprep.subr.mxu0 %v5407
    %5520 = vmatpush1.msra.mxu0 %v5406
    %5521 = vmatprep.subr.mxu0 %v5409
    %5522 = vmatpush1.msra.mxu0 %v5408
    %5523 = vmatprep.subr.mxu0 %v5411
    %5524 = vmatpush1.msra.mxu0 %v5410
    %5525 = vmatprep.subr.mxu0 %v5413
    %5526 = vmatpush1.msra.mxu0 %v5412
    %5527 = vmatprep.subr.mxu0 0.0
    %5528 = vmatpush1.msra.mxu0 0.0
    %5529 = vmatprep.subr.mxu0 0.0
    %5530 = vmatpush1.msra.mxu0 0.0
    %5531 = vmatprep.subr.mxu0 0.0
    %5532 = vmatpush1.msra.mxu0 0.0
    %5533 = vmatprep.subr.mxu0 0.0
    %5534 = vmatpush1.msra.mxu0 0.0
    %5535 = vmatprep.subr.mxu0 0.0
    %5536 = vmatpush1.msra.mxu0 0.0
    %5537 = vmatprep.subr.mxu0 0.0
    %5538 = vmatpush1.msra.mxu0 0.0
    %5539 = vmatprep.subr.mxu0 0.0
    %5540 = vmatpush1.msra.mxu0 0.0
    %5541 = vmatprep.subr.mxu0 0.0
    %5542 = vmatpush1.msra.mxu0 0.0
    %5543 = vmatprep.subr.mxu0 0.0
    %5544 = vmatpush1.msra.mxu0 0.0
    %5545 = vmatprep.subr.mxu0 0.0
    %5546 = vmatpush1.msra.mxu0 0.0
    %5547 = vmatprep.subr.mxu0 0.0
    %5548 = vmatpush1.msra.mxu0 0.0
    %5549 = vmatprep.subr.mxu0 0.0
    %5550 = vmatpush1.msra.mxu0 0.0
    %5551 = vmatprep.subr.mxu0 0.0
    %5552 = vmatpush1.msra.mxu0 0.0
    %5553 = vmatprep.subr.mxu0 0.0
    %5554 = vmatpush1.msra.mxu0 0.0
    %5555 = vmatprep.subr.mxu0 0.0
    %5556 = vmatpush1.msra.mxu0 0.0
    %5557 = vmatprep.subr.mxu0 0.0
    %5558 = vmatpush1.msra.mxu0 0.0
    %5559 = vmatprep.mubr.f32.mxu0 0.0
    %5560 = vmatmul.mubr.f32.gmra.mrb[0].mxu0 %v5381
    %v5561 = vpop.f32.mrb[0].mxu0
    %v5562 = vadd.f32 0.0, %v5561
    %v5563 = vpop.f32.mrb[0].mxu0
    %v5564 = vadd.f32 0.0, %v5563
    %5565 = vdwg.mxu0
    %v5566 = vlaneseq
    %v5567 = vshrl.u32 %v5566, 7
    %v5568 = vsub.s32 0, %v5567
    %v5569 = vrot.slane %v5562, %v5568
    %v5570 = vlaneseq
    %v5571 = vshrl.u32 %v5570, 7
    %v5572 = vsub.s32 0, %v5571
    %v5573 = vrot.slane %v5564, %v5572
    %v5574 = vadd.f32 %v5493, %v5569
    %v5575 = vadd.f32 %v5494, %v5573
    %v5576 = vmax.f32 %v5574, 0.0
    %v5577 = vmax.f32 %v5575, 0.0
    %v5578 = vld [vmem:[%s61] sm:$0x3]
    %vm5579 = vcmask 31744
    %v5581 = vsel %vm5579, %v5578, 0
    %v5584 = vsel %vm5168, %v5576, 0
    %v5587 = vsel %vm5168, %v5577, 0
    %5589 = vmatprep.subr.mxu0 %v5587
    %5590 = vmatpush1.msra.mxu0 %v5584
    %5591 = vmatprep.subr.mxu0 0.0
    %5592 = vmatpush1.msra.mxu0 0.0
    %5593 = vmatprep.subr.mxu0 0.0
    %5594 = vmatpush1.msra.mxu0 0.0
    %5595 = vmatprep.subr.mxu0 0.0
    %5596 = vmatpush1.msra.mxu0 0.0
    %5597 = vmatprep.subr.mxu0 0.0
    %5598 = vmatpush1.msra.mxu0 0.0
    %5599 = vmatprep.subr.mxu0 0.0
    %5600 = vmatpush1.msra.mxu0 0.0
    %5601 = vmatprep.subr.mxu0 0.0
    %5602 = vmatpush1.msra.mxu0 0.0
    %5603 = vmatprep.subr.mxu0 0.0
    %5604 = vmatpush1.msra.mxu0 0.0
    %5605 = vmatprep.subr.mxu0 0.0
    %5606 = vmatpush1.msra.mxu0 0.0
    %5607 = vmatprep.subr.mxu0 0.0
    %5608 = vmatpush1.msra.mxu0 0.0
    %5609 = vmatprep.subr.mxu0 0.0
    %5610 = vmatpush1.msra.mxu0 0.0
    %5611 = vmatprep.subr.mxu0 0.0
    %5612 = vmatpush1.msra.mxu0 0.0
    %5613 = vmatprep.subr.mxu0 0.0
    %5614 = vmatpush1.msra.mxu0 0.0
    %5615 = vmatprep.subr.mxu0 0.0
    %5616 = vmatpush1.msra.mxu0 0.0
    %5617 = vmatprep.subr.mxu0 0.0
    %5618 = vmatpush1.msra.mxu0 0.0
    %5619 = vmatprep.subr.mxu0 0.0
    %5620 = vmatpush1.msra.mxu0 0.0
    %5621 = vmatprep.subr.mxu0 0.0
    %5622 = vmatpush1.msra.mxu0 0.0
    %5623 = vmatprep.subr.mxu0 0.0
    %5624 = vmatpush1.msra.mxu0 0.0
    %5625 = vmatprep.subr.mxu0 0.0
    %5626 = vmatpush1.msra.mxu0 0.0
    %5627 = vmatprep.subr.mxu0 0.0
    %5628 = vmatpush1.msra.mxu0 0.0
    %5629 = vmatprep.subr.mxu0 0.0
    %5630 = vmatpush1.msra.mxu0 0.0
    %5631 = vmatprep.subr.mxu0 0.0
    %5632 = vmatpush1.msra.mxu0 0.0
    %5633 = vmatprep.subr.mxu0 0.0
    %5634 = vmatpush1.msra.mxu0 0.0
    %5635 = vmatprep.subr.mxu0 0.0
    %5636 = vmatpush1.msra.mxu0 0.0
    %5637 = vmatprep.subr.mxu0 0.0
    %5638 = vmatpush1.msra.mxu0 0.0
    %5639 = vmatprep.subr.mxu0 0.0
    %5640 = vmatpush1.msra.mxu0 0.0
    %5641 = vmatprep.subr.mxu0 0.0
    %5642 = vmatpush1.msra.mxu0 0.0
    %5643 = vmatprep.subr.mxu0 0.0
    %5644 = vmatpush1.msra.mxu0 0.0
    %5645 = vmatprep.subr.mxu0 0.0
    %5646 = vmatpush1.msra.mxu0 0.0
    %5647 = vmatprep.subr.mxu0 0.0
    %5648 = vmatpush1.msra.mxu0 0.0
    %5649 = vmatprep.subr.mxu0 0.0
    %5650 = vmatpush1.msra.mxu0 0.0
    %5651 = vmatprep.subr.mxu0 0.0
    %5652 = vmatpush1.msra.mxu0 0.0
    %5653 = vmatprep.mubr.f32.mxu0 0.0
    %5654 = vmatmul.mubr.f32.gmra.mrb[0].mxu0 %v5581
    %v5655 = vpop.f32.mrb[0].mxu0
    %v5656 = vadd.f32 0.0, %v5655
    %v5657 = vpop.f32.mrb[0].mxu0
    %v5658 = vadd.f32 0.0, %v5657
    %5659 = vdwg.mxu0
    %5660 = vmatprep.subr.mxu0 0.0
    %5661 = vmatpush1.msra.mxu0 %v5199
    %5662 = vmatprep.subr.mxu0 0.0
    %5663 = vmatpush1.msra.mxu0 %v5200
    %5664 = vmatprep.subr.mxu0 0.0
    %5665 = vmatpush1.msra.mxu0 %v5201
    %5666 = vmatprep.subr.mxu0 0.0
    %5667 = vmatpush1.msra.mxu0 %v5202
    %5668 = vmatprep.subr.mxu0 0.0
    %5669 = vmatpush1.msra.mxu0 %v5203
    %5670 = vmatprep.subr.mxu0 0.0
    %5671 = vmatpush1.msra.mxu0 %v5204
    %5672 = vmatprep.subr.mxu0 0.0
    %5673 = vmatpush1.msra.mxu0 %v5205
    %5674 = vmatprep.subr.mxu0 0.0
    %5675 = vmatpush1.msra.mxu0 %v5206
    %5676 = vmatprep.subr.mxu0 0.0
    %5677 = vmatpush1.msra.mxu0 %v5207
    %5678 = vmatprep.subr.mxu0 0.0
    %5679 = vmatpush1.msra.mxu0 %v5208
    %5680 = vmatprep.subr.mxu0 0.0
    %5681 = vmatpush1.msra.mxu0 %v5209
    %5682 = vmatprep.subr.mxu0 0.0
    %5683 = vmatpush1.msra.mxu0 %v5210
    %5684 = vmatprep.subr.mxu0 0.0
    %5685 = vmatpush1.msra.mxu0 %v5211
    %5686 = vmatprep.subr.mxu0 0.0
    %5687 = vmatpush1.msra.mxu0 %v5212
    %5688 = vmatprep.subr.mxu0 0.0
    %5689 = vmatpush1.msra.mxu0 %v5213
    %5690 = vmatprep.subr.mxu0 0.0
    %5691 = vmatpush1.msra.mxu0 %v5214
    %5692 = vmatprep.subr.mxu0 0.0
    %5693 = vmatpush1.msra.mxu0 %v5215
    %5694 = vmatprep.subr.mxu0 0.0
    %5695 = vmatpush1.msra.mxu0 %v5216
    %5696 = vmatprep.subr.mxu0 0.0
    %5697 = vmatpush1.msra.mxu0 %v5217
    %5698 = vmatprep.subr.mxu0 0.0
    %5699 = vmatpush1.msra.mxu0 %v5218
    %5700 = vmatprep.subr.mxu0 0.0
    %5701 = vmatpush1.msra.mxu0 %v5219
    %5702 = vmatprep.subr.mxu0 0.0
    %5703 = vmatpush1.msra.mxu0 %v5220
    %5704 = vmatprep.subr.mxu0 0.0
    %5705 = vmatpush1.msra.mxu0 %v5221
    %5706 = vmatprep.subr.mxu0 0.0
    %5707 = vmatpush1.msra.mxu0 %v5222
    %5708 = vmatprep.subr.mxu0 0.0
    %5709 = vmatpush1.msra.mxu0 %v5223
    %5710 = vmatprep.subr.mxu0 0.0
    %5711 = vmatpush1.msra.mxu0 %v5224
    %5712 = vmatprep.subr.mxu0 0.0
    %5713 = vmatpush1.msra.mxu0 %v5225
    %5714 = vmatprep.subr.mxu0 0.0
    %5715 = vmatpush1.msra.mxu0 %v5226
    %5716 = vmatprep.subr.mxu0 0.0
    %5717 = vmatpush1.msra.mxu0 %v5227
    %5718 = vmatprep.subr.mxu0 0.0
    %5719 = vmatpush1.msra.mxu0 %v5228
    %5720 = vmatprep.subr.mxu0 0.0
    %5721 = vmatpush1.msra.mxu0 %v5229
    %5722 = vmatprep.subr.mxu0 0.0
    %5723 = vmatpush1.msra.mxu0 %v5230
    %5724 = vmatprep.mubr.f32.mxu0 %v5658
    %5725 = vmatmul.mubr.f32.gmra.mrb[0].mxu0 %v5656
    %v5726 = vpop.f32.mrb[0].mxu0
    %v5727 = vadd.f32 0.0, %v5726
    %v5728 = vpop.f32.mrb[0].mxu0
    %5729 = vdwg.mxu0
    %v5730 = vld [vmem:[%s63] sm:$0xff]
    %v5731 = vld [vmem:[%s63 + $0x8] sm:$0xff]
    %v5732 = vld [vmem:[%s63 + $0x10] sm:$0xff]
    %v5733 = vld [vmem:[%s63 + $0x18] sm:$0xff]
    %v5734 = vld [vmem:[%s63 + $0x20] sm:$0xff]
    %v5735 = vld [vmem:[%s63 + $0x28] sm:$0xff]
    %v5736 = vld [vmem:[%s63 + $0x30] sm:$0xff]
    %v5737 = vld [vmem:[%s63 + $0x38] sm:$0xff]
    %v5738 = vld [vmem:[%s63 + $0x40] sm:$0xff]
    %v5739 = vld [vmem:[%s63 + $0x48] sm:$0xff]
    %v5740 = vld [vmem:[%s63 + $0x50] sm:$0xff]
    %v5741 = vld [vmem:[%s63 + $0x58] sm:$0xff]
    %v5742 = vld [vmem:[%s63 + $0x60] sm:$0xff]
    %v5743 = vld [vmem:[%s63 + $0x68] sm:$0xff]
    %v5744 = vld [vmem:[%s63 + $0x70] sm:$0xff]
    %v5745 = vld [vmem:[%s63 + $0x78] sm:$0xff]
    %v5746 = vld [vmem:[%s65] sm:$0x1]
    %v5748 = vlaneseq
    %v5749 = vshrl.u32 %v5748, 7
    %v5750 = vsub.s32 0, %v5749
    %v5751 = vrot.slane %v5746, %v5750
    %5753 = vmatprep.subr.mxu0 0.0
    %5754 = vmatpush1.msra.mxu0 %v5730
    %5755 = vmatprep.subr.mxu0 0.0
    %5756 = vmatpush1.msra.mxu0 %v5731
    %5757 = vmatprep.subr.mxu0 0.0
    %5758 = vmatpush1.msra.mxu0 %v5732
    %5759 = vmatprep.subr.mxu0 0.0
    %5760 = vmatpush1.msra.mxu0 %v5733
    %5761 = vmatprep.subr.mxu0 0.0
    %5762 = vmatpush1.msra.mxu0 %v5734
    %5763 = vmatprep.subr.mxu0 0.0
    %5764 = vmatpush1.msra.mxu0 %v5735
    %5765 = vmatprep.subr.mxu0 0.0
    %5766 = vmatpush1.msra.mxu0 %v5736
    %5767 = vmatprep.subr.mxu0 0.0
    %5768 = vmatpush1.msra.mxu0 %v5737
    %5769 = vmatprep.subr.mxu0 0.0
    %5770 = vmatpush1.msra.mxu0 %v5738
    %5771 = vmatprep.subr.mxu0 0.0
    %5772 = vmatpush1.msra.mxu0 %v5739
    %5773 = vmatprep.subr.mxu0 0.0
    %5774 = vmatpush1.msra.mxu0 %v5740
    %5775 = vmatprep.subr.mxu0 0.0
    %5776 = vmatpush1.msra.mxu0 %v5741
    %5777 = vmatprep.subr.mxu0 0.0
    %5778 = vmatpush1.msra.mxu0 %v5742
    %5779 = vmatprep.subr.mxu0 0.0
    %5780 = vmatpush1.msra.mxu0 %v5743
    %5781 = vmatprep.subr.mxu0 0.0
    %5782 = vmatpush1.msra.mxu0 %v5744
    %5783 = vmatprep.subr.mxu0 0.0
    %5784 = vmatpush1.msra.mxu0 %v5745
    %5785 = vmatprep.subr.mxu0 0.0
    %5786 = vmatpush1.msra.mxu0 0.0
    %5787 = vmatprep.subr.mxu0 0.0
    %5788 = vmatpush1.msra.mxu0 0.0
    %5789 = vmatprep.subr.mxu0 0.0
    %5790 = vmatpush1.msra.mxu0 0.0
    %5791 = vmatprep.subr.mxu0 0.0
    %5792 = vmatpush1.msra.mxu0 0.0
    %5793 = vmatprep.subr.mxu0 0.0
    %5794 = vmatpush1.msra.mxu0 0.0
    %5795 = vmatprep.subr.mxu0 0.0
    %5796 = vmatpush1.msra.mxu0 0.0
    %5797 = vmatprep.subr.mxu0 0.0
    %5798 = vmatpush1.msra.mxu0 0.0
    %5799 = vmatprep.subr.mxu0 0.0
    %5800 = vmatpush1.msra.mxu0 0.0
    %5801 = vmatprep.subr.mxu0 0.0
    %5802 = vmatpush1.msra.mxu0 0.0
    %5803 = vmatprep.subr.mxu0 0.0
    %5804 = vmatpush1.msra.mxu0 0.0
    %5805 = vmatprep.subr.mxu0 0.0
    %5806 = vmatpush1.msra.mxu0 0.0
    %5807 = vmatprep.subr.mxu0 0.0
    %5808 = vmatpush1.msra.mxu0 0.0
    %5809 = vmatprep.subr.mxu0 0.0
    %5810 = vmatpush1.msra.mxu0 0.0
    %5811 = vmatprep.subr.mxu0 0.0
    %5812 = vmatpush1.msra.mxu0 0.0
    %5813 = vmatprep.subr.mxu0 0.0
    %5814 = vmatpush1.msra.mxu0 0.0
    %5815 = vmatprep.subr.mxu0 0.0
    %5816 = vmatpush1.msra.mxu0 0.0
    %5817 = vmatprep.mubr.f32.mxu0 0.0
    %5818 = vmatmul.mubr.f32.gmra.mrb[0].mxu0 %v5727
    %v5819 = vpop.f32.mrb[0].mxu0
    %v5820 = vadd.f32 %v5751, %v5819
    %v5821 = vpop.f32.mrb[0].mxu0
    %5822 = vdwg.mxu0
    %vm5823 = vcmask 9216
    %5824 = vst.msk [vmem:[#allocation4] sm:$0x3] %vm5823, %v5820
    // Predicated region
    $region134: #{xunet_forward.1} parent=1 // pred_check
      _
    $region135: #{xunet_forward.1} parent=1 // pred_check_branch
      %5826 = sbr.rel (0) target = $region137
    $region136: #{xunet_forward.1} parent=1 // pred_region
      %s5828 = ssub.s32 32, 32
      %5829 = vsyncadd [#allocation5], %s5828
      %s5831 = sshll.u32 [#allocation4], 4
      %s5832 = int_to_ptr.vmem [resolvable:$true] %s5831
      %5834 = dma.vmem_to_hbm [thread:$0]  %s5832, 32, %s67, [#allocation5]
    $region137: #{xunet_forward.1} parent=1 // pred_fallthru
      _
    // Predicated region
    $region138: #{xunet_forward.1} parent=1 // pred_check
      _
    $region139: #{xunet_forward.1} parent=1 // pred_check_branch
      %5836 = sbr.rel (0) target = $region141
    $region140: #{xunet_forward.1} parent=1 // pred_region
      %5837 = dma.done [#allocation5], 32
    $region141: #{xunet_forward.1} parent=1 // pred_fallthru
      _
    %5838 = vsyncpa [#allocation5], 1

</llo_original>
